<compile_context>
chip_gen: v6e
topology: v6e:2x2x1
jax: 0.10.0
libtpu: 0.0.40
codegen_flags: <defaults>
</compile_context>

<pallas_src>
import jax
import jax.numpy as jnp
from jax.experimental import pallas as pl
from jax.experimental.pallas import tpu as pltpu

# ---- static configuration (small but consistent with the module) -----------
B, S = 2, 16          # batch, sequence length
H = 128               # bert hidden size (synthetic tiny BERT)
I = 256               # bert FFN intermediate size
VOCAB = 100           # synthetic vocab
F = 256               # cnn_filters (as in the module)
KS = (3, 4, 5)        # conv kernel sizes (as in the module)
KSUM = sum(KS)        # 12 taps total
HID = 128             # LSTM hidden size (as in the module)
NC = 2                # num_classes
NC_PAD = 128          # lane-dense padded logits width

_SCALE = 1.0 / (H ** 0.5)


# ---------------------------------------------------------------------------
# Fused kernel: encoder -> conv/relu/maxpool -> BiLSTM(len-1) -> FC
# ---------------------------------------------------------------------------
def fused_kernel(emb_ref, mask_ref,
                 ge_ref, be_ref,
                 wqkv_ref, bqkv_ref, wo_ref, bo_ref,
                 g1_ref, b1_ref, w1_ref, c1_ref, w2_ref, c2_ref,
                 g2_ref, b2_ref,
                 convw_ref, cb3_ref, cb4_ref, cb5_ref,
                 lstmw_ref, lstmb_ref, fcw_ref, fcb_ref,
                 out_ref):
    bf16 = jnp.bfloat16
    f32 = jnp.float32

    def ln(v, g_ref, b_ref):
        # one-pass variance: E[x^2] - mean^2 (clamped), rsqrt on the EUP
        mu = jnp.mean(v, axis=-1, keepdims=True)
        var = jnp.maximum(jnp.mean(v * v, axis=-1, keepdims=True) - mu * mu, 0.0)
        return (v - mu) * jax.lax.rsqrt(var + 1e-12) * g_ref[...] + b_ref[...]

    # ---------------- BERT-style encoder (batch folded into M) --------------
    x = emb_ref[...].reshape(B * S, H)                     # (B*S, H) f32
    m = mask_ref[...]                                      # (B, 1, S) f32

    h = ln(x, ge_ref, be_ref)                              # embedding LayerNorm

    qkv = jnp.dot(h.astype(bf16), wqkv_ref[...],
                  preferred_element_type=f32) + bqkv_ref[...]   # (B*S, 3H)
    q = qkv[:, 0:H].reshape(B, S, H)
    k = qkv[:, H:2 * H].reshape(B, S, H)
    v = qkv[:, 2 * H:3 * H].reshape(B, S, H)

    # attention scores: contract the last (lane) axes, no explicit transpose
    s = jnp.einsum("bqd,bkd->bqk", q.astype(bf16), k.astype(bf16),
                   preferred_element_type=f32) * _SCALE         # (B, S, S) f32
    s = s + (m - 1.0) * 1e9                                     # mask padded keys
    s_max = jnp.max(s, axis=-1, keepdims=True)
    e = jnp.exp(s - s_max)
    pr = e * pl.reciprocal(jnp.sum(e, axis=-1, keepdims=True), approx=True)

    ctx = jnp.einsum("bqk,bkd->bqd", pr.astype(bf16), v.astype(bf16),
                     preferred_element_type=f32)                # (B, S, H)
    attn = jnp.dot(ctx.reshape(B * S, H).astype(bf16), wo_ref[...],
                   preferred_element_type=f32) + bo_ref[...]

    h1 = ln(h + attn, g1_ref, b1_ref)
    ff = jax.nn.gelu(
        jnp.dot(h1.astype(bf16), w1_ref[...], preferred_element_type=f32)
        + c1_ref[...],
        approximate=True)
    ff = jnp.dot(ff.astype(bf16), w2_ref[...],
                 preferred_element_type=f32) + c2_ref[...]
    seq = ln(h1 + ff, g2_ref, b2_ref)                           # (B*S, H)

    # ------------- CNN: one fused conv matmul + shifted adds + pool ---------
    # y[:, off_k + j*F : off_k + (j+1)*F] is tap j of kernel-size k applied
    # at each position; conv_k[t] = sum_j tap_j[t + j].
    y = jnp.dot(seq.astype(bf16), convw_ref[...],
                preferred_element_type=f32)                     # (B*S, KSUM*F)
    y3 = y.reshape(B, S, KSUM * F)

    feats = []                                                  # list of (B, F)
    off = 0
    for ksz, cb_ref in zip(KS, (cb3_ref, cb4_ref, cb5_ref)):
        L = S - ksz + 1
        acc = y3[:, 0:L, off:off + F]                           # (B, L, F)
        for j in range(1, ksz):
            acc = acc + y3[:, j:j + L, off + j * F:off + (j + 1) * F]
        acc = jnp.maximum(acc + cb_ref[...], 0.0)               # ReLU
        feats.append(jnp.max(acc, axis=1))                      # global max-pool
        off += ksz * F

    # ------------- BiLSTM over a length-1 sequence + FC ---------------------
    # h0 = c0 = 0 and seq_len == 1 so the recurrent term vanishes; the fused
    # fwd|bwd input projection is computed as three partial dots (one per CNN
    # feature block) summed in f32 -> no lane-axis concatenation needed.
    gates = lstmb_ref[...]                                      # (1, 8*HID) f32
    doff = 0
    for feat in feats:
        gates = gates + jnp.dot(feat.astype(bf16),
                                lstmw_ref[doff:doff + F, :],
                                preferred_element_type=f32)     # (B, 8*HID)
        doff += F

    def lstm_cell(g):
        i = jax.nn.sigmoid(g[:, 0:HID])
        # forget gate multiplies c0 == 0, so it is skipped
        gg = jnp.tanh(g[:, 2 * HID:3 * HID])
        o = jax.nn.sigmoid(g[:, 3 * HID:4 * HID])
        return o * jnp.tanh(i * gg)                             # (B, HID)

    h_f = lstm_cell(gates[:, 0:4 * HID])                        # forward dir
    h_b = lstm_cell(gates[:, 4 * HID:8 * HID])                  # backward dir

    # dropout: identity at inference.  FC split into fwd|bwd halves (avoids
    # concatenating h_f|h_b along lanes); output padded to 128 lanes.
    out_ref[...] = (jnp.dot(h_f.astype(bf16), fcw_ref[0:HID, :],
                            preferred_element_type=f32)
                    + jnp.dot(h_b.astype(bf16), fcw_ref[HID:2 * HID, :],
                              preferred_element_type=f32)
                    + fcb_ref[...])


def bert_cnn_bilstm_forward(input_ids, attention_mask, p):
    # glue: embedding lookup + positional embedding (plain JAX)
    emb = p["word_emb"][input_ids] + p["pos_emb"][None, :, :]   # (B, S, H) f32
    mask3 = attention_mask.reshape(B, 1, S).astype(jnp.float32)

    args = (emb, mask3,
            p["ln_e_g"], p["ln_e_b"],
            p["wqkv"], p["bqkv"], p["wo"], p["bo"],
            p["ln1_g"], p["ln1_b"], p["w1"], p["c1"], p["w2"], p["c2"],
            p["ln2_g"], p["ln2_b"],
            p["conv_w"], p["conv_b3"], p["conv_b4"], p["conv_b5"],
            p["lstm_w"], p["lstm_b"], p["fc_w"], p["fc_b"])

    out = pl.pallas_call(
        fused_kernel,
        out_shape=jax.ShapeDtypeStruct((B, NC_PAD), jnp.float32),
        compiler_params=pltpu.CompilerParams(vmem_limit_bytes=32 * 1024 * 1024),
    )(*args)
    return out[:, :NC]                                          # (B, NC) logits


# ---------------------------------------------------------------------------
# Parameters (deterministic, synthetic); matmul weights pre-cast to bf16
# ---------------------------------------------------------------------------
def init_params(key):
    keys = iter(jax.random.split(key, 32))

    def n(shape, scale=0.02, dtype=jnp.float32):
        return (scale * jax.random.normal(next(keys), shape,
                                          dtype=jnp.float32)).astype(dtype)

    p = {}
    p["word_emb"] = n((VOCAB, H))
    p["pos_emb"] = n((S, H))
    p["ln_e_g"] = jnp.ones((1, H), jnp.float32)
    p["ln_e_b"] = jnp.zeros((1, H), jnp.float32)

    # fused Q|K|V projection along N
    p["wqkv"] = n((H, 3 * H), dtype=jnp.bfloat16)
    p["bqkv"] = jnp.zeros((1, 3 * H), jnp.float32)
    p["wo"] = n((H, H), dtype=jnp.bfloat16)
    p["bo"] = jnp.zeros((1, H), jnp.float32)
    p["ln1_g"] = jnp.ones((1, H), jnp.float32)
    p["ln1_b"] = jnp.zeros((1, H), jnp.float32)
    p["w1"] = n((H, I), dtype=jnp.bfloat16)
    p["c1"] = jnp.zeros((1, I), jnp.float32)
    p["w2"] = n((I, H), dtype=jnp.bfloat16)
    p["c2"] = jnp.zeros((1, H), jnp.float32)
    p["ln2_g"] = jnp.ones((1, H), jnp.float32)
    p["ln2_b"] = jnp.zeros((1, H), jnp.float32)

    # fused Conv1d weights: columns laid out as
    # [k=3: taps 0..2 | k=4: taps 0..3 | k=5: taps 0..4], each tap (H, F)
    p["conv_w"] = n((H, KSUM * F), dtype=jnp.bfloat16)
    p["conv_b3"] = n((1, F), 0.01)
    p["conv_b4"] = n((1, F), 0.01)
    p["conv_b5"] = n((1, F), 0.01)

    D = F * len(KS)
    # fused fwd|bwd LSTM input projections; bias = (b_ih + b_hh) folded
    p["lstm_w"] = n((D, 8 * HID), dtype=jnp.bfloat16)
    p["lstm_b"] = n((1, 8 * HID), 0.01)

    # FC padded to a lane-dense 128-wide output; wrapper slices [:, :NC]
    fc_w = n((2 * HID, NC))
    p["fc_w"] = (jnp.zeros((2 * HID, NC_PAD), jnp.float32)
                 .at[:, :NC].set(fc_w).astype(jnp.bfloat16))
    p["fc_b"] = jnp.zeros((1, NC_PAD), jnp.float32)
    return p


if __name__ == "__main__":
    root = jax.random.PRNGKey(0)
    pkey, ikey = jax.random.split(root)
    params = init_params(pkey)

    input_ids = jax.random.randint(ikey, (B, S), 0, VOCAB, dtype=jnp.int32)
    lengths = jnp.array([S, S - 4], dtype=jnp.int32)
    attention_mask = (jnp.arange(S)[None, :] < lengths[:, None]).astype(jnp.float32)

    fwd = jax.jit(bert_cnn_bilstm_forward)
    logits = fwd(input_ids, attention_mask, params)
    logits = jax.block_until_ready(logits)
    assert logits.shape == (B, NC) and logits.dtype == jnp.float32
    assert bool(jnp.all(jnp.isfinite(logits)))
    print("KERNEL_OK")
</pallas_src>

<mosaic_0001>
module attributes {stable_mosaic.version = 11 : i64} {
  func.func @fused_kernel(%arg0: memref<2x16x128xf32, #tpu.memory_space<vmem>>, %arg1: memref<2x1x16xf32, #tpu.memory_space<vmem>>, %arg2: memref<1x128xf32, #tpu.memory_space<vmem>>, %arg3: memref<1x128xf32, #tpu.memory_space<vmem>>, %arg4: memref<128x384xbf16, #tpu.memory_space<vmem>>, %arg5: memref<1x384xf32, #tpu.memory_space<vmem>>, %arg6: memref<128x128xbf16, #tpu.memory_space<vmem>>, %arg7: memref<1x128xf32, #tpu.memory_space<vmem>>, %arg8: memref<1x128xf32, #tpu.memory_space<vmem>>, %arg9: memref<1x128xf32, #tpu.memory_space<vmem>>, %arg10: memref<128x256xbf16, #tpu.memory_space<vmem>>, %arg11: memref<1x256xf32, #tpu.memory_space<vmem>>, %arg12: memref<256x128xbf16, #tpu.memory_space<vmem>>, %arg13: memref<1x128xf32, #tpu.memory_space<vmem>>, %arg14: memref<1x128xf32, #tpu.memory_space<vmem>>, %arg15: memref<1x128xf32, #tpu.memory_space<vmem>>, %arg16: memref<128x3072xbf16, #tpu.memory_space<vmem>>, %arg17: memref<1x256xf32, #tpu.memory_space<vmem>>, %arg18: memref<1x256xf32, #tpu.memory_space<vmem>>, %arg19: memref<1x256xf32, #tpu.memory_space<vmem>>, %arg20: memref<768x1024xbf16, #tpu.memory_space<vmem>>, %arg21: memref<1x1024xf32, #tpu.memory_space<vmem>>, %arg22: memref<256x128xbf16, #tpu.memory_space<vmem>>, %arg23: memref<1x128xf32, #tpu.memory_space<vmem>>, %arg24: memref<2x128xf32, #tpu.memory_space<vmem>>) attributes {dimension_semantics = [], scalar_prefetch = 0 : i64, scratch_operands = 0 : i64, tpu.core_type = #tpu.core_type<tc>} {
    %c0 = arith.constant 0 : index
    %c0_0 = arith.constant 0 : index
    %c0_1 = arith.constant 0 : index
    %0 = vector.load %arg0[%c0, %c0_0, %c0_1] : memref<2x16x128xf32, #tpu.memory_space<vmem>>, vector<2x16x128xf32>
    %1 = vector.shape_cast %0 : vector<2x16x128xf32> to vector<32x128xf32>
    %c0_2 = arith.constant 0 : index
    %c0_3 = arith.constant 0 : index
    %c0_4 = arith.constant 0 : index
    %2 = vector.load %arg1[%c0_2, %c0_3, %c0_4] : memref<2x1x16xf32, #tpu.memory_space<vmem>>, vector<2x1x16xf32>
    %cst = arith.constant dense<0.000000e+00> : vector<32xf32>
    %3 = vector.multi_reduction <add>, %1, %cst [1] : vector<32x128xf32> to vector<32xf32>
    %4 = vector.shape_cast %3 : vector<32xf32> to vector<32x1xf32>
    %cst_5 = arith.constant 1.280000e+02 : f32
    %5 = vector.broadcast %cst_5 : f32 to vector<32x1xf32>
    %6 = arith.divf %4, %5 : vector<32x1xf32>
    %7 = arith.mulf %1, %1 : vector<32x128xf32>
    %cst_6 = arith.constant dense<0.000000e+00> : vector<32xf32>
    %8 = vector.multi_reduction <add>, %7, %cst_6 [1] : vector<32x128xf32> to vector<32xf32>
    %9 = vector.shape_cast %8 : vector<32xf32> to vector<32x1xf32>
    %cst_7 = arith.constant 1.280000e+02 : f32
    %10 = vector.broadcast %cst_7 : f32 to vector<32x1xf32>
    %11 = arith.divf %9, %10 : vector<32x1xf32>
    %12 = arith.mulf %6, %6 : vector<32x1xf32>
    %13 = arith.subf %11, %12 : vector<32x1xf32>
    %cst_8 = arith.constant 0.000000e+00 : f32
    %14 = vector.broadcast %cst_8 : f32 to vector<32x1xf32>
    %15 = arith.maximumf %13, %14 : vector<32x1xf32>
    %16 = vector.broadcast %6 : vector<32x1xf32> to vector<32x128xf32>
    %17 = arith.subf %1, %16 : vector<32x128xf32>
    %cst_9 = arith.constant 9.99999996E-13 : f32
    %18 = vector.broadcast %cst_9 : f32 to vector<32x1xf32>
    %19 = arith.addf %15, %18 : vector<32x1xf32>
    %20 = math.rsqrt %19 : vector<32x1xf32>
    %21 = vector.broadcast %20 : vector<32x1xf32> to vector<32x128xf32>
    %22 = arith.mulf %17, %21 : vector<32x128xf32>
    %c0_10 = arith.constant 0 : index
    %c0_11 = arith.constant 0 : index
    %23 = vector.load %arg2[%c0_10, %c0_11] : memref<1x128xf32, #tpu.memory_space<vmem>>, vector<1x128xf32>
    %24 = vector.broadcast %23 : vector<1x128xf32> to vector<32x128xf32>
    %25 = arith.mulf %22, %24 : vector<32x128xf32>
    %c0_12 = arith.constant 0 : index
    %c0_13 = arith.constant 0 : index
    %26 = vector.load %arg3[%c0_12, %c0_13] : memref<1x128xf32, #tpu.memory_space<vmem>>, vector<1x128xf32>
    %27 = vector.broadcast %26 : vector<1x128xf32> to vector<32x128xf32>
    %28 = arith.addf %25, %27 : vector<32x128xf32>
    %29 = arith.truncf %28 : vector<32x128xf32> to vector<32x128xbf16>
    %c0_14 = arith.constant 0 : index
    %c0_15 = arith.constant 0 : index
    %30 = vector.load %arg4[%c0_14, %c0_15] : memref<128x384xbf16, #tpu.memory_space<vmem>>, vector<128x384xbf16>
    %cst_16 = arith.constant dense<0.000000e+00> : vector<32x384xf32>
    %31 = tpu.matmul %29, %30, %cst_16 {dimension_numbers = #tpu.dot_dimension_numbers<[1], [0], [0], [1], [0, 0, 1, 1], [], []>} : vector<32x128xbf16>, vector<128x384xbf16>, vector<32x384xf32> -> vector<32x384xf32>
    %c0_17 = arith.constant 0 : index
    %c0_18 = arith.constant 0 : index
    %32 = vector.load %arg5[%c0_17, %c0_18] : memref<1x384xf32, #tpu.memory_space<vmem>>, vector<1x384xf32>
    %33 = vector.broadcast %32 : vector<1x384xf32> to vector<32x384xf32>
    %34 = arith.addf %31, %33 : vector<32x384xf32>
    %35 = vector.extract_strided_slice %34 {offsets = [0, 0], sizes = [32, 128], strides = [1, 1]} : vector<32x384xf32> to vector<32x128xf32>
    %36 = vector.shape_cast %35 : vector<32x128xf32> to vector<2x16x128xf32>
    %37 = vector.extract_strided_slice %34 {offsets = [0, 128], sizes = [32, 128], strides = [1, 1]} : vector<32x384xf32> to vector<32x128xf32>
    %38 = vector.shape_cast %37 : vector<32x128xf32> to vector<2x16x128xf32>
    %39 = vector.extract_strided_slice %34 {offsets = [0, 256], sizes = [32, 128], strides = [1, 1]} : vector<32x384xf32> to vector<32x128xf32>
    %40 = vector.shape_cast %39 : vector<32x128xf32> to vector<2x16x128xf32>
    %41 = arith.truncf %36 : vector<2x16x128xf32> to vector<2x16x128xbf16>
    %42 = arith.truncf %38 : vector<2x16x128xf32> to vector<2x16x128xbf16>
    "tpu.trace_start"() <{level = 10 : i32, message = "bqd,bkd->bqk"}> : () -> ()
    %cst_19 = arith.constant dense<0.000000e+00> : vector<2x16x16xf32>
    %43 = tpu.matmul %41, %42, %cst_19 {dimension_numbers = #tpu.dot_dimension_numbers<[2], [2], [1], [1], [0, 0, 0, 1, 1, 1], [0], [0]>} : vector<2x16x128xbf16>, vector<2x16x128xbf16>, vector<2x16x16xf32> -> vector<2x16x16xf32>
    "tpu.trace_stop"() : () -> ()
    %cst_20 = arith.constant 0.0883883461 : f32
    %44 = vector.broadcast %cst_20 : f32 to vector<2x16x16xf32>
    %45 = arith.mulf %43, %44 : vector<2x16x16xf32>
    %cst_21 = arith.constant 1.000000e+00 : f32
    %46 = vector.broadcast %cst_21 : f32 to vector<2x1x16xf32>
    %47 = arith.subf %2, %46 : vector<2x1x16xf32>
    %cst_22 = arith.constant 1.000000e+09 : f32
    %48 = vector.broadcast %cst_22 : f32 to vector<2x1x16xf32>
    %49 = arith.mulf %47, %48 : vector<2x1x16xf32>
    %50 = vector.broadcast %49 : vector<2x1x16xf32> to vector<2x16x16xf32>
    %51 = arith.addf %45, %50 : vector<2x16x16xf32>
    %cst_23 = arith.constant dense<0xFF800000> : vector<2x16xf32>
    %52 = vector.multi_reduction <maximumf>, %51, %cst_23 [2] : vector<2x16x16xf32> to vector<2x16xf32>
    %53 = vector.shape_cast %52 : vector<2x16xf32> to vector<2x16x1xf32>
    %54 = vector.broadcast %53 : vector<2x16x1xf32> to vector<2x16x16xf32>
    %55 = arith.subf %51, %54 : vector<2x16x16xf32>
    %56 = math.exp %55 : vector<2x16x16xf32>
    %cst_24 = arith.constant dense<0.000000e+00> : vector<2x16xf32>
    %57 = vector.multi_reduction <add>, %56, %cst_24 [2] : vector<2x16x16xf32> to vector<2x16xf32>
    %58 = vector.shape_cast %57 : vector<2x16xf32> to vector<2x16x1xf32>
    %59 = tpu.reciprocal %58 {approx = true} : vector<2x16x1xf32> -> vector<2x16x1xf32>
    %60 = vector.broadcast %59 : vector<2x16x1xf32> to vector<2x16x16xf32>
    %61 = arith.mulf %56, %60 : vector<2x16x16xf32>
    %62 = arith.truncf %61 : vector<2x16x16xf32> to vector<2x16x16xbf16>
    %63 = arith.truncf %40 : vector<2x16x128xf32> to vector<2x16x128xbf16>
    "tpu.trace_start"() <{level = 10 : i32, message = "bqk,bkd->bqd"}> : () -> ()
    %cst_25 = arith.constant dense<0.000000e+00> : vector<2x16x128xf32>
    %64 = tpu.matmul %62, %63, %cst_25 {dimension_numbers = #tpu.dot_dimension_numbers<[2], [1], [1], [2], [0, 0, 0, 1, 1, 2], [0], [0]>} : vector<2x16x16xbf16>, vector<2x16x128xbf16>, vector<2x16x128xf32> -> vector<2x16x128xf32>
    "tpu.trace_stop"() : () -> ()
    %65 = vector.shape_cast %64 : vector<2x16x128xf32> to vector<32x128xf32>
    %66 = arith.truncf %65 : vector<32x128xf32> to vector<32x128xbf16>
    %c0_26 = arith.constant 0 : index
    %c0_27 = arith.constant 0 : index
    %67 = vector.load %arg6[%c0_26, %c0_27] : memref<128x128xbf16, #tpu.memory_space<vmem>>, vector<128x128xbf16>
    %cst_28 = arith.constant dense<0.000000e+00> : vector<32x128xf32>
    %68 = tpu.matmul %66, %67, %cst_28 {dimension_numbers = #tpu.dot_dimension_numbers<[1], [0], [0], [1], [0, 0, 1, 1], [], []>} : vector<32x128xbf16>, vector<128x128xbf16>, vector<32x128xf32> -> vector<32x128xf32>
    %c0_29 = arith.constant 0 : index
    %c0_30 = arith.constant 0 : index
    %69 = vector.load %arg7[%c0_29, %c0_30] : memref<1x128xf32, #tpu.memory_space<vmem>>, vector<1x128xf32>
    %70 = vector.broadcast %69 : vector<1x128xf32> to vector<32x128xf32>
    %71 = arith.addf %68, %70 : vector<32x128xf32>
    %72 = arith.addf %28, %71 : vector<32x128xf32>
    %cst_31 = arith.constant dense<0.000000e+00> : vector<32xf32>
    %73 = vector.multi_reduction <add>, %72, %cst_31 [1] : vector<32x128xf32> to vector<32xf32>
    %74 = vector.shape_cast %73 : vector<32xf32> to vector<32x1xf32>
    %cst_32 = arith.constant 1.280000e+02 : f32
    %75 = vector.broadcast %cst_32 : f32 to vector<32x1xf32>
    %76 = arith.divf %74, %75 : vector<32x1xf32>
    %77 = arith.mulf %72, %72 : vector<32x128xf32>
    %cst_33 = arith.constant dense<0.000000e+00> : vector<32xf32>
    %78 = vector.multi_reduction <add>, %77, %cst_33 [1] : vector<32x128xf32> to vector<32xf32>
    %79 = vector.shape_cast %78 : vector<32xf32> to vector<32x1xf32>
    %cst_34 = arith.constant 1.280000e+02 : f32
    %80 = vector.broadcast %cst_34 : f32 to vector<32x1xf32>
    %81 = arith.divf %79, %80 : vector<32x1xf32>
    %82 = arith.mulf %76, %76 : vector<32x1xf32>
    %83 = arith.subf %81, %82 : vector<32x1xf32>
    %cst_35 = arith.constant 0.000000e+00 : f32
    %84 = vector.broadcast %cst_35 : f32 to vector<32x1xf32>
    %85 = arith.maximumf %83, %84 : vector<32x1xf32>
    %86 = vector.broadcast %76 : vector<32x1xf32> to vector<32x128xf32>
    %87 = arith.subf %72, %86 : vector<32x128xf32>
    %cst_36 = arith.constant 9.99999996E-13 : f32
    %88 = vector.broadcast %cst_36 : f32 to vector<32x1xf32>
    %89 = arith.addf %85, %88 : vector<32x1xf32>
    %90 = math.rsqrt %89 : vector<32x1xf32>
    %91 = vector.broadcast %90 : vector<32x1xf32> to vector<32x128xf32>
    %92 = arith.mulf %87, %91 : vector<32x128xf32>
    %c0_37 = arith.constant 0 : index
    %c0_38 = arith.constant 0 : index
    %93 = vector.load %arg8[%c0_37, %c0_38] : memref<1x128xf32, #tpu.memory_space<vmem>>, vector<1x128xf32>
    %94 = vector.broadcast %93 : vector<1x128xf32> to vector<32x128xf32>
    %95 = arith.mulf %92, %94 : vector<32x128xf32>
    %c0_39 = arith.constant 0 : index
    %c0_40 = arith.constant 0 : index
    %96 = vector.load %arg9[%c0_39, %c0_40] : memref<1x128xf32, #tpu.memory_space<vmem>>, vector<1x128xf32>
    %97 = vector.broadcast %96 : vector<1x128xf32> to vector<32x128xf32>
    %98 = arith.addf %95, %97 : vector<32x128xf32>
    %99 = arith.truncf %98 : vector<32x128xf32> to vector<32x128xbf16>
    %c0_41 = arith.constant 0 : index
    %c0_42 = arith.constant 0 : index
    %100 = vector.load %arg10[%c0_41, %c0_42] : memref<128x256xbf16, #tpu.memory_space<vmem>>, vector<128x256xbf16>
    %cst_43 = arith.constant dense<0.000000e+00> : vector<32x256xf32>
    %101 = tpu.matmul %99, %100, %cst_43 {dimension_numbers = #tpu.dot_dimension_numbers<[1], [0], [0], [1], [0, 0, 1, 1], [], []>} : vector<32x128xbf16>, vector<128x256xbf16>, vector<32x256xf32> -> vector<32x256xf32>
    %c0_44 = arith.constant 0 : index
    %c0_45 = arith.constant 0 : index
    %102 = vector.load %arg11[%c0_44, %c0_45] : memref<1x256xf32, #tpu.memory_space<vmem>>, vector<1x256xf32>
    %103 = vector.broadcast %102 : vector<1x256xf32> to vector<32x256xf32>
    %104 = arith.addf %101, %103 : vector<32x256xf32>
    %105 = arith.mulf %104, %104 : vector<32x256xf32>
    %106 = arith.mulf %104, %105 : vector<32x256xf32>
    %cst_46 = arith.constant 4.471500e-02 : f32
    %107 = vector.broadcast %cst_46 : f32 to vector<32x256xf32>
    %108 = arith.mulf %107, %106 : vector<32x256xf32>
    %109 = arith.addf %104, %108 : vector<32x256xf32>
    %cst_47 = arith.constant 0.797884583 : f32
    %110 = vector.broadcast %cst_47 : f32 to vector<32x256xf32>
    %111 = arith.mulf %110, %109 : vector<32x256xf32>
    %112 = math.tanh %111 : vector<32x256xf32>
    %cst_48 = arith.constant 1.000000e+00 : f32
    %113 = vector.broadcast %cst_48 : f32 to vector<32x256xf32>
    %114 = arith.addf %113, %112 : vector<32x256xf32>
    %cst_49 = arith.constant 5.000000e-01 : f32
    %115 = vector.broadcast %cst_49 : f32 to vector<32x256xf32>
    %116 = arith.mulf %115, %114 : vector<32x256xf32>
    %117 = arith.mulf %104, %116 : vector<32x256xf32>
    %118 = arith.truncf %117 : vector<32x256xf32> to vector<32x256xbf16>
    %c0_50 = arith.constant 0 : index
    %c0_51 = arith.constant 0 : index
    %119 = vector.load %arg12[%c0_50, %c0_51] : memref<256x128xbf16, #tpu.memory_space<vmem>>, vector<256x128xbf16>
    %cst_52 = arith.constant dense<0.000000e+00> : vector<32x128xf32>
    %120 = tpu.matmul %118, %119, %cst_52 {dimension_numbers = #tpu.dot_dimension_numbers<[1], [0], [0], [1], [0, 0, 1, 1], [], []>} : vector<32x256xbf16>, vector<256x128xbf16>, vector<32x128xf32> -> vector<32x128xf32>
    %c0_53 = arith.constant 0 : index
    %c0_54 = arith.constant 0 : index
    %121 = vector.load %arg13[%c0_53, %c0_54] : memref<1x128xf32, #tpu.memory_space<vmem>>, vector<1x128xf32>
    %122 = vector.broadcast %121 : vector<1x128xf32> to vector<32x128xf32>
    %123 = arith.addf %120, %122 : vector<32x128xf32>
    %124 = arith.addf %98, %123 : vector<32x128xf32>
    %cst_55 = arith.constant dense<0.000000e+00> : vector<32xf32>
    %125 = vector.multi_reduction <add>, %124, %cst_55 [1] : vector<32x128xf32> to vector<32xf32>
    %126 = vector.shape_cast %125 : vector<32xf32> to vector<32x1xf32>
    %cst_56 = arith.constant 1.280000e+02 : f32
    %127 = vector.broadcast %cst_56 : f32 to vector<32x1xf32>
    %128 = arith.divf %126, %127 : vector<32x1xf32>
    %129 = arith.mulf %124, %124 : vector<32x128xf32>
    %cst_57 = arith.constant dense<0.000000e+00> : vector<32xf32>
    %130 = vector.multi_reduction <add>, %129, %cst_57 [1] : vector<32x128xf32> to vector<32xf32>
    %131 = vector.shape_cast %130 : vector<32xf32> to vector<32x1xf32>
    %cst_58 = arith.constant 1.280000e+02 : f32
    %132 = vector.broadcast %cst_58 : f32 to vector<32x1xf32>
    %133 = arith.divf %131, %132 : vector<32x1xf32>
    %134 = arith.mulf %128, %128 : vector<32x1xf32>
    %135 = arith.subf %133, %134 : vector<32x1xf32>
    %cst_59 = arith.constant 0.000000e+00 : f32
    %136 = vector.broadcast %cst_59 : f32 to vector<32x1xf32>
    %137 = arith.maximumf %135, %136 : vector<32x1xf32>
    %138 = vector.broadcast %128 : vector<32x1xf32> to vector<32x128xf32>
    %139 = arith.subf %124, %138 : vector<32x128xf32>
    %cst_60 = arith.constant 9.99999996E-13 : f32
    %140 = vector.broadcast %cst_60 : f32 to vector<32x1xf32>
    %141 = arith.addf %137, %140 : vector<32x1xf32>
    %142 = math.rsqrt %141 : vector<32x1xf32>
    %143 = vector.broadcast %142 : vector<32x1xf32> to vector<32x128xf32>
    %144 = arith.mulf %139, %143 : vector<32x128xf32>
    %c0_61 = arith.constant 0 : index
    %c0_62 = arith.constant 0 : index
    %145 = vector.load %arg14[%c0_61, %c0_62] : memref<1x128xf32, #tpu.memory_space<vmem>>, vector<1x128xf32>
    %146 = vector.broadcast %145 : vector<1x128xf32> to vector<32x128xf32>
    %147 = arith.mulf %144, %146 : vector<32x128xf32>
    %c0_63 = arith.constant 0 : index
    %c0_64 = arith.constant 0 : index
    %148 = vector.load %arg15[%c0_63, %c0_64] : memref<1x128xf32, #tpu.memory_space<vmem>>, vector<1x128xf32>
    %149 = vector.broadcast %148 : vector<1x128xf32> to vector<32x128xf32>
    %150 = arith.addf %147, %149 : vector<32x128xf32>
    %151 = arith.truncf %150 : vector<32x128xf32> to vector<32x128xbf16>
    %c0_65 = arith.constant 0 : index
    %c0_66 = arith.constant 0 : index
    %152 = vector.load %arg16[%c0_65, %c0_66] : memref<128x3072xbf16, #tpu.memory_space<vmem>>, vector<128x3072xbf16>
    %cst_67 = arith.constant dense<0.000000e+00> : vector<32x3072xf32>
    %153 = tpu.matmul %151, %152, %cst_67 {dimension_numbers = #tpu.dot_dimension_numbers<[1], [0], [0], [1], [0, 0, 1, 1], [], []>} : vector<32x128xbf16>, vector<128x3072xbf16>, vector<32x3072xf32> -> vector<32x3072xf32>
    %154 = vector.shape_cast %153 : vector<32x3072xf32> to vector<2x16x3072xf32>
    %155 = vector.extract_strided_slice %154 {offsets = [0, 0, 0], sizes = [2, 14, 256], strides = [1, 1, 1]} : vector<2x16x3072xf32> to vector<2x14x256xf32>
    %156 = vector.extract_strided_slice %154 {offsets = [0, 1, 256], sizes = [2, 14, 256], strides = [1, 1, 1]} : vector<2x16x3072xf32> to vector<2x14x256xf32>
    %157 = arith.addf %155, %156 : vector<2x14x256xf32>
    %158 = vector.extract_strided_slice %154 {offsets = [0, 2, 512], sizes = [2, 14, 256], strides = [1, 1, 1]} : vector<2x16x3072xf32> to vector<2x14x256xf32>
    %159 = arith.addf %157, %158 : vector<2x14x256xf32>
    %c0_68 = arith.constant 0 : index
    %c0_69 = arith.constant 0 : index
    %160 = vector.load %arg17[%c0_68, %c0_69] : memref<1x256xf32, #tpu.memory_space<vmem>>, vector<1x256xf32>
    %161 = vector.shape_cast %160 : vector<1x256xf32> to vector<1x1x256xf32>
    %162 = vector.broadcast %161 : vector<1x1x256xf32> to vector<2x14x256xf32>
    %163 = arith.addf %159, %162 : vector<2x14x256xf32>
    %cst_70 = arith.constant 0.000000e+00 : f32
    %164 = vector.broadcast %cst_70 : f32 to vector<2x14x256xf32>
    %165 = arith.maximumf %163, %164 : vector<2x14x256xf32>
    %cst_71 = arith.constant dense<0xFF800000> : vector<2x256xf32>
    %166 = vector.multi_reduction <maximumf>, %165, %cst_71 [1] : vector<2x14x256xf32> to vector<2x256xf32>
    %167 = vector.extract_strided_slice %154 {offsets = [0, 0, 768], sizes = [2, 13, 256], strides = [1, 1, 1]} : vector<2x16x3072xf32> to vector<2x13x256xf32>
    %168 = vector.extract_strided_slice %154 {offsets = [0, 1, 1024], sizes = [2, 13, 256], strides = [1, 1, 1]} : vector<2x16x3072xf32> to vector<2x13x256xf32>
    %169 = arith.addf %167, %168 : vector<2x13x256xf32>
    %170 = vector.extract_strided_slice %154 {offsets = [0, 2, 1280], sizes = [2, 13, 256], strides = [1, 1, 1]} : vector<2x16x3072xf32> to vector<2x13x256xf32>
    %171 = arith.addf %169, %170 : vector<2x13x256xf32>
    %172 = vector.extract_strided_slice %154 {offsets = [0, 3, 1536], sizes = [2, 13, 256], strides = [1, 1, 1]} : vector<2x16x3072xf32> to vector<2x13x256xf32>
    %173 = arith.addf %171, %172 : vector<2x13x256xf32>
    %c0_72 = arith.constant 0 : index
    %c0_73 = arith.constant 0 : index
    %174 = vector.load %arg18[%c0_72, %c0_73] : memref<1x256xf32, #tpu.memory_space<vmem>>, vector<1x256xf32>
    %175 = vector.shape_cast %174 : vector<1x256xf32> to vector<1x1x256xf32>
    %176 = vector.broadcast %175 : vector<1x1x256xf32> to vector<2x13x256xf32>
    %177 = arith.addf %173, %176 : vector<2x13x256xf32>
    %cst_74 = arith.constant 0.000000e+00 : f32
    %178 = vector.broadcast %cst_74 : f32 to vector<2x13x256xf32>
    %179 = arith.maximumf %177, %178 : vector<2x13x256xf32>
    %cst_75 = arith.constant dense<0xFF800000> : vector<2x256xf32>
    %180 = vector.multi_reduction <maximumf>, %179, %cst_75 [1] : vector<2x13x256xf32> to vector<2x256xf32>
    %181 = vector.extract_strided_slice %154 {offsets = [0, 0, 1792], sizes = [2, 12, 256], strides = [1, 1, 1]} : vector<2x16x3072xf32> to vector<2x12x256xf32>
    %182 = vector.extract_strided_slice %154 {offsets = [0, 1, 2048], sizes = [2, 12, 256], strides = [1, 1, 1]} : vector<2x16x3072xf32> to vector<2x12x256xf32>
    %183 = arith.addf %181, %182 : vector<2x12x256xf32>
    %184 = vector.extract_strided_slice %154 {offsets = [0, 2, 2304], sizes = [2, 12, 256], strides = [1, 1, 1]} : vector<2x16x3072xf32> to vector<2x12x256xf32>
    %185 = arith.addf %183, %184 : vector<2x12x256xf32>
    %186 = vector.extract_strided_slice %154 {offsets = [0, 3, 2560], sizes = [2, 12, 256], strides = [1, 1, 1]} : vector<2x16x3072xf32> to vector<2x12x256xf32>
    %187 = arith.addf %185, %186 : vector<2x12x256xf32>
    %188 = vector.extract_strided_slice %154 {offsets = [0, 4, 2816], sizes = [2, 12, 256], strides = [1, 1, 1]} : vector<2x16x3072xf32> to vector<2x12x256xf32>
    %189 = arith.addf %187, %188 : vector<2x12x256xf32>
    %c0_76 = arith.constant 0 : index
    %c0_77 = arith.constant 0 : index
    %190 = vector.load %arg19[%c0_76, %c0_77] : memref<1x256xf32, #tpu.memory_space<vmem>>, vector<1x256xf32>
    %191 = vector.shape_cast %190 : vector<1x256xf32> to vector<1x1x256xf32>
    %192 = vector.broadcast %191 : vector<1x1x256xf32> to vector<2x12x256xf32>
    %193 = arith.addf %189, %192 : vector<2x12x256xf32>
    %cst_78 = arith.constant 0.000000e+00 : f32
    %194 = vector.broadcast %cst_78 : f32 to vector<2x12x256xf32>
    %195 = arith.maximumf %193, %194 : vector<2x12x256xf32>
    %cst_79 = arith.constant dense<0xFF800000> : vector<2x256xf32>
    %196 = vector.multi_reduction <maximumf>, %195, %cst_79 [1] : vector<2x12x256xf32> to vector<2x256xf32>
    %c0_80 = arith.constant 0 : index
    %c0_81 = arith.constant 0 : index
    %197 = vector.load %arg21[%c0_80, %c0_81] : memref<1x1024xf32, #tpu.memory_space<vmem>>, vector<1x1024xf32>
    %198 = arith.truncf %166 : vector<2x256xf32> to vector<2x256xbf16>
    %c0_82 = arith.constant 0 : index
    %c0_83 = arith.constant 0 : index
    %199 = vector.load %arg20[%c0_82, %c0_83] : memref<768x1024xbf16, #tpu.memory_space<vmem>>, vector<256x1024xbf16>
    %cst_84 = arith.constant dense<0.000000e+00> : vector<2x1024xf32>
    %200 = tpu.matmul %198, %199, %cst_84 {dimension_numbers = #tpu.dot_dimension_numbers<[1], [0], [0], [1], [0, 0, 1, 1], [], []>} : vector<2x256xbf16>, vector<256x1024xbf16>, vector<2x1024xf32> -> vector<2x1024xf32>
    %201 = vector.broadcast %197 : vector<1x1024xf32> to vector<2x1024xf32>
    %202 = arith.addf %201, %200 : vector<2x1024xf32>
    %203 = arith.truncf %180 : vector<2x256xf32> to vector<2x256xbf16>
    %c256 = arith.constant 256 : index
    %c0_85 = arith.constant 0 : index
    %204 = vector.load %arg20[%c256, %c0_85] : memref<768x1024xbf16, #tpu.memory_space<vmem>>, vector<256x1024xbf16>
    %cst_86 = arith.constant dense<0.000000e+00> : vector<2x1024xf32>
    %205 = tpu.matmul %203, %204, %cst_86 {dimension_numbers = #tpu.dot_dimension_numbers<[1], [0], [0], [1], [0, 0, 1, 1], [], []>} : vector<2x256xbf16>, vector<256x1024xbf16>, vector<2x1024xf32> -> vector<2x1024xf32>
    %206 = arith.addf %202, %205 : vector<2x1024xf32>
    %207 = arith.truncf %196 : vector<2x256xf32> to vector<2x256xbf16>
    %c512 = arith.constant 512 : index
    %c0_87 = arith.constant 0 : index
    %208 = vector.load %arg20[%c512, %c0_87] : memref<768x1024xbf16, #tpu.memory_space<vmem>>, vector<256x1024xbf16>
    %cst_88 = arith.constant dense<0.000000e+00> : vector<2x1024xf32>
    %209 = tpu.matmul %207, %208, %cst_88 {dimension_numbers = #tpu.dot_dimension_numbers<[1], [0], [0], [1], [0, 0, 1, 1], [], []>} : vector<2x256xbf16>, vector<256x1024xbf16>, vector<2x1024xf32> -> vector<2x1024xf32>
    %210 = arith.addf %206, %209 : vector<2x1024xf32>
    %211 = vector.extract_strided_slice %210 {offsets = [0, 0], sizes = [2, 512], strides = [1, 1]} : vector<2x1024xf32> to vector<2x512xf32>
    %212 = vector.extract_strided_slice %211 {offsets = [0, 0], sizes = [2, 128], strides = [1, 1]} : vector<2x512xf32> to vector<2x128xf32>
    %213 = arith.negf %212 : vector<2x128xf32>
    %214 = math.exp %213 : vector<2x128xf32>
    %cst_89 = arith.constant 1.000000e+00 : f32
    %215 = vector.broadcast %cst_89 : f32 to vector<2x128xf32>
    %216 = arith.addf %215, %214 : vector<2x128xf32>
    %217 = arith.divf %215, %216 : vector<2x128xf32>
    %218 = vector.extract_strided_slice %211 {offsets = [0, 256], sizes = [2, 128], strides = [1, 1]} : vector<2x512xf32> to vector<2x128xf32>
    %219 = math.tanh %218 : vector<2x128xf32>
    %220 = vector.extract_strided_slice %211 {offsets = [0, 384], sizes = [2, 128], strides = [1, 1]} : vector<2x512xf32> to vector<2x128xf32>
    %221 = arith.negf %220 : vector<2x128xf32>
    %222 = math.exp %221 : vector<2x128xf32>
    %cst_90 = arith.constant 1.000000e+00 : f32
    %223 = vector.broadcast %cst_90 : f32 to vector<2x128xf32>
    %224 = arith.addf %223, %222 : vector<2x128xf32>
    %225 = arith.divf %223, %224 : vector<2x128xf32>
    %226 = arith.mulf %217, %219 : vector<2x128xf32>
    %227 = math.tanh %226 : vector<2x128xf32>
    %228 = arith.mulf %225, %227 : vector<2x128xf32>
    %229 = vector.extract_strided_slice %210 {offsets = [0, 512], sizes = [2, 512], strides = [1, 1]} : vector<2x1024xf32> to vector<2x512xf32>
    %230 = vector.extract_strided_slice %229 {offsets = [0, 0], sizes = [2, 128], strides = [1, 1]} : vector<2x512xf32> to vector<2x128xf32>
    %231 = arith.negf %230 : vector<2x128xf32>
    %232 = math.exp %231 : vector<2x128xf32>
    %cst_91 = arith.constant 1.000000e+00 : f32
    %233 = vector.broadcast %cst_91 : f32 to vector<2x128xf32>
    %234 = arith.addf %233, %232 : vector<2x128xf32>
    %235 = arith.divf %233, %234 : vector<2x128xf32>
    %236 = vector.extract_strided_slice %229 {offsets = [0, 256], sizes = [2, 128], strides = [1, 1]} : vector<2x512xf32> to vector<2x128xf32>
    %237 = math.tanh %236 : vector<2x128xf32>
    %238 = vector.extract_strided_slice %229 {offsets = [0, 384], sizes = [2, 128], strides = [1, 1]} : vector<2x512xf32> to vector<2x128xf32>
    %239 = arith.negf %238 : vector<2x128xf32>
    %240 = math.exp %239 : vector<2x128xf32>
    %cst_92 = arith.constant 1.000000e+00 : f32
    %241 = vector.broadcast %cst_92 : f32 to vector<2x128xf32>
    %242 = arith.addf %241, %240 : vector<2x128xf32>
    %243 = arith.divf %241, %242 : vector<2x128xf32>
    %244 = arith.mulf %235, %237 : vector<2x128xf32>
    %245 = math.tanh %244 : vector<2x128xf32>
    %246 = arith.mulf %243, %245 : vector<2x128xf32>
    %247 = arith.truncf %228 : vector<2x128xf32> to vector<2x128xbf16>
    %c0_93 = arith.constant 0 : index
    %c0_94 = arith.constant 0 : index
    %248 = vector.load %arg22[%c0_93, %c0_94] : memref<256x128xbf16, #tpu.memory_space<vmem>>, vector<128x128xbf16>
    %cst_95 = arith.constant dense<0.000000e+00> : vector<2x128xf32>
    %249 = tpu.matmul %247, %248, %cst_95 {dimension_numbers = #tpu.dot_dimension_numbers<[1], [0], [0], [1], [0, 0, 1, 1], [], []>} : vector<2x128xbf16>, vector<128x128xbf16>, vector<2x128xf32> -> vector<2x128xf32>
    %250 = arith.truncf %246 : vector<2x128xf32> to vector<2x128xbf16>
    %c128 = arith.constant 128 : index
    %c0_96 = arith.constant 0 : index
    %251 = vector.load %arg22[%c128, %c0_96] : memref<256x128xbf16, #tpu.memory_space<vmem>>, vector<128x128xbf16>
    %cst_97 = arith.constant dense<0.000000e+00> : vector<2x128xf32>
    %252 = tpu.matmul %250, %251, %cst_97 {dimension_numbers = #tpu.dot_dimension_numbers<[1], [0], [0], [1], [0, 0, 1, 1], [], []>} : vector<2x128xbf16>, vector<128x128xbf16>, vector<2x128xf32> -> vector<2x128xf32>
    %253 = arith.addf %249, %252 : vector<2x128xf32>
    %c0_98 = arith.constant 0 : index
    %c0_99 = arith.constant 0 : index
    %254 = vector.load %arg23[%c0_98, %c0_99] : memref<1x128xf32, #tpu.memory_space<vmem>>, vector<1x128xf32>
    %255 = vector.broadcast %254 : vector<1x128xf32> to vector<2x128xf32>
    %256 = arith.addf %253, %255 : vector<2x128xf32>
    %c0_100 = arith.constant 0 : index
    %c0_101 = arith.constant 0 : index
    %257 = vector.load %arg24[%c0_100, %c0_101] : memref<2x128xf32, #tpu.memory_space<vmem>>, vector<2x128xf32>
    tpu.vector_store %arg24[%c0_100, %c0_101], %256 {strides = array<i32>} : memref<2x128xf32, #tpu.memory_space<vmem>>, vector<2x128xf32>,
    return
  }
}

</mosaic_0001>

<llo_original>
// kernel: bert_cnn_bilstm_forward.1
$region0: #{bert_cnn_bilstm_forward.1}
  #allocation0 [shape = 'u32[]', space=smem, size = 0x4, offset = 0x4, fixed_abs, tag = 'smem constant byte address 0x4 - core index']
  #allocation1 [shape = 'u32[144,128]{1,0:T(1,128)}', space=vmem, size = 0x12000, scoped, tag = 'internal scratch']
  %s0 = inlined_call_operand.vmem [shape: f32[2,16,128], index: 0, kind: input, shape index: {}]
  %s1 = inlined_call_operand.hbm [shape: f32[2,1,16], index: 1, kind: input, shape index: {}]
  %s2 = inlined_call_operand.hbm [shape: f32[1,128], index: 2, kind: input, shape index: {}]
  %s3 = inlined_call_operand.hbm [shape: f32[1,128], index: 3, kind: input, shape index: {}]
  %s4 = inlined_call_operand.hbm [shape: bf16[128,384], index: 4, kind: input, shape index: {}]
  %s5 = inlined_call_operand.hbm [shape: f32[1,384], index: 5, kind: input, shape index: {}]
  %s6 = inlined_call_operand.hbm [shape: bf16[128,128], index: 6, kind: input, shape index: {}]
  %s7 = inlined_call_operand.hbm [shape: f32[1,128], index: 7, kind: input, shape index: {}]
  %s8 = inlined_call_operand.hbm [shape: f32[1,128], index: 8, kind: input, shape index: {}]
  %s9 = inlined_call_operand.hbm [shape: f32[1,128], index: 9, kind: input, shape index: {}]
  %s10 = inlined_call_operand.hbm [shape: bf16[128,256], index: 10, kind: input, shape index: {}]
  %s11 = inlined_call_operand.hbm [shape: f32[1,256], index: 11, kind: input, shape index: {}]
  %s12 = inlined_call_operand.hbm [shape: bf16[256,128], index: 12, kind: input, shape index: {}]
  %s13 = inlined_call_operand.hbm [shape: f32[1,128], index: 13, kind: input, shape index: {}]
  %s14 = inlined_call_operand.hbm [shape: f32[1,128], index: 14, kind: input, shape index: {}]
  %s15 = inlined_call_operand.hbm [shape: f32[1,128], index: 15, kind: input, shape index: {}]
  %s16 = inlined_call_operand.hbm [shape: bf16[128,3072], index: 16, kind: input, shape index: {}]
  %s17 = inlined_call_operand.hbm [shape: f32[1,256], index: 17, kind: input, shape index: {}]
  %s18 = inlined_call_operand.hbm [shape: f32[1,256], index: 18, kind: input, shape index: {}]
  %s19 = inlined_call_operand.hbm [shape: f32[1,256], index: 19, kind: input, shape index: {}]
  %s20 = inlined_call_operand.hbm [shape: bf16[768,1024], index: 20, kind: input, shape index: {}]
  %s21 = inlined_call_operand.hbm [shape: f32[1,1024], index: 21, kind: input, shape index: {}]
  %s22 = inlined_call_operand.hbm [shape: bf16[256,128], index: 22, kind: input, shape index: {}]
  %s23 = inlined_call_operand.hbm [shape: f32[1,128], index: 23, kind: input, shape index: {}]
  %s24 = inlined_call_operand.hbm [shape: f32[2,128], index: 24, kind: output, shape index: {}]
  %s25 = sld [smem:[#allocation0]]
  $region198: #{bert_cnn_bilstm_forward.1} parent=0
    _
  %s27 = ssub.s32 1, %s25
  %s28 = scalar_select 0, %s27, %s25
  $region1: #{bert_cnn_bilstm_forward.1} parent=0
    #allocation2 [shape = 'u8[1024]{0}', space=vmem, size = 0x400, scoped, tag = 'input window, operand 1, single buffered']
    #allocation3 [shape = 's32[1]{0}', space=sflag, size = 0x4, scoped, tag = 'scoped memory for bert_cnn_bilstm_forward.1']
    #allocation4 [shape = 's32[1]{0}', space=sflag, size = 0x4, scoped, tag = 'scoped memory for bert_cnn_bilstm_forward.1']
    #allocation5 [shape = 'u8[512]{0}', space=vmem, size = 0x400, scoped, tag = 'input window, operand 2, single buffered']
    #allocation6 [shape = 's32[1]{0}', space=sflag, size = 0x4, scoped, tag = 'scoped memory for bert_cnn_bilstm_forward.1']
    #allocation7 [shape = 'u8[512]{0}', space=vmem, size = 0x400, scoped, tag = 'input window, operand 3, single buffered']
    #allocation8 [shape = 'u8[98304]{0}', space=vmem, size = 0x18000, scoped, tag = 'input window, operand 4, single buffered']
    #allocation9 [shape = 's32[1]{0}', space=sflag, size = 0x4, scoped, tag = 'scoped memory for bert_cnn_bilstm_forward.1']
    #allocation10 [shape = 'u8[1536]{0}', space=vmem, size = 0x800, scoped, tag = 'input window, operand 5, single buffered']
    #allocation11 [shape = 'u8[32768]{0}', space=vmem, size = 0x8000, scoped, tag = 'input window, operand 6, single buffered']
    #allocation12 [shape = 's32[1]{0}', space=sflag, size = 0x4, scoped, tag = 'scoped memory for bert_cnn_bilstm_forward.1']
    #allocation13 [shape = 'u8[512]{0}', space=vmem, size = 0x400, scoped, tag = 'input window, operand 7, single buffered']
    #allocation14 [shape = 'u8[512]{0}', space=vmem, size = 0x400, scoped, tag = 'input window, operand 8, single buffered']
    #allocation15 [shape = 's32[1]{0}', space=sflag, size = 0x4, scoped, tag = 'scoped memory for bert_cnn_bilstm_forward.1']
    #allocation16 [shape = 'u8[512]{0}', space=vmem, size = 0x400, scoped, tag = 'input window, operand 9, single buffered']
    #allocation17 [shape = 'u8[65536]{0}', space=vmem, size = 0x10000, scoped, tag = 'input window, operand 10, single buffered']
    #allocation18 [shape = 's32[1]{0}', space=sflag, size = 0x4, scoped, tag = 'scoped memory for bert_cnn_bilstm_forward.1']
    #allocation19 [shape = 'u8[1024]{0}', space=vmem, size = 0x400, scoped, tag = 'input window, operand 11, single buffered']
    #allocation20 [shape = 'u8[65536]{0}', space=vmem, size = 0x10000, scoped, tag = 'input window, operand 12, single buffered']
    #allocation21 [shape = 's32[1]{0}', space=sflag, size = 0x4, scoped, tag = 'scoped memory for bert_cnn_bilstm_forward.1']
    #allocation22 [shape = 'u8[512]{0}', space=vmem, size = 0x400, scoped, tag = 'input window, operand 13, single buffered']
    #allocation23 [shape = 'u8[512]{0}', space=vmem, size = 0x400, scoped, tag = 'input window, operand 14, single buffered']
    #allocation24 [shape = 's32[1]{0}', space=sflag, size = 0x4, scoped, tag = 'scoped memory for bert_cnn_bilstm_forward.1']
    #allocation25 [shape = 'u8[512]{0}', space=vmem, size = 0x400, scoped, tag = 'input window, operand 15, single buffered']
    #allocation26 [shape = 'u8[786432]{0}', space=vmem, size = 0xc0000, scoped, tag = 'input window, operand 16, single buffered']
    #allocation27 [shape = 's32[1]{0}', space=sflag, size = 0x4, scoped, tag = 'scoped memory for bert_cnn_bilstm_forward.1']
    #allocation28 [shape = 'u8[1024]{0}', space=vmem, size = 0x400, scoped, tag = 'input window, operand 17, single buffered']
    #allocation29 [shape = 'u8[1024]{0}', space=vmem, size = 0x400, scoped, tag = 'input window, operand 18, single buffered']
    #allocation30 [shape = 's32[1]{0}', space=sflag, size = 0x4, scoped, tag = 'scoped memory for bert_cnn_bilstm_forward.1']
    #allocation31 [shape = 'u8[1024]{0}', space=vmem, size = 0x400, scoped, tag = 'input window, operand 19, single buffered']
    #allocation32 [shape = 'u8[1572864]{0}', space=vmem, size = 0x180000, scoped, tag = 'input window, operand 20, single buffered']
    #allocation33 [shape = 's32[1]{0}', space=sflag, size = 0x4, scoped, tag = 'scoped memory for bert_cnn_bilstm_forward.1']
    #allocation34 [shape = 'u8[4096]{0}', space=vmem, size = 0x1000, scoped, tag = 'input window, operand 21, single buffered']
    #allocation35 [shape = 'u8[65536]{0}', space=vmem, size = 0x10000, scoped, tag = 'input window, operand 22, single buffered']
    #allocation36 [shape = 's32[1]{0}', space=sflag, size = 0x4, scoped, tag = 'scoped memory for bert_cnn_bilstm_forward.1']
    #allocation37 [shape = 'u8[512]{0}', space=vmem, size = 0x400, scoped, tag = 'input window, operand 23, single buffered']
    #allocation38 [shape = 'u8[1024]{0}', space=vmem, size = 0x400, scoped, tag = 'output window, operand 0, single buffered']
    %29 = vsyncpa [#allocation3], 0
    %30 = vsyncpa [#allocation6], 0
    %31 = vsyncpa [#allocation9], 0
    %32 = vsyncpa [#allocation12], 0
    %33 = vsyncpa [#allocation15], 0
    %34 = vsyncpa [#allocation18], 0
    %35 = vsyncpa [#allocation21], 0
    %36 = vsyncpa [#allocation24], 0
    %37 = vsyncpa [#allocation27], 0
    %38 = vsyncpa [#allocation30], 0
    %39 = vsyncpa [#allocation33], 0
    %40 = vsyncpa [#allocation36], 0
    %41 = vsyncpa [#allocation4], 0
    // Predicated region
    $region2: #{bert_cnn_bilstm_forward.1} parent=1 // pred_check
      _
    $region3: #{bert_cnn_bilstm_forward.1} parent=1 // pred_check_branch
      %43 = sbr.rel (0) target = $region5
    $region4: #{bert_cnn_bilstm_forward.1} parent=1 // pred_region
      _
    $region5: #{bert_cnn_bilstm_forward.1} parent=1 // pred_fallthru
      _
    // Predicated region
    $region6: #{bert_cnn_bilstm_forward.1} parent=1 // pred_check
      _
    $region7: #{bert_cnn_bilstm_forward.1} parent=1 // pred_check_branch
      %45 = sbr.rel (0) target = $region9
    $region8: #{bert_cnn_bilstm_forward.1} parent=1 // pred_region
      %s47 = ssub.s32 32, 32
      %48 = vsyncadd [#allocation3], %s47
      %s49 = sshll.u32 [#allocation2], 4
      %s50 = int_to_ptr.vmem [resolvable:$true] %s49
      %55 = dma.hbm_to_vmem [thread:$0]  %s1, 32, %s50, [#allocation3], 16, 16, 1
    $region9: #{bert_cnn_bilstm_forward.1} parent=1 // pred_fallthru
      _
    // Predicated region
    $region10: #{bert_cnn_bilstm_forward.1} parent=1 // pred_check
      _
    $region11: #{bert_cnn_bilstm_forward.1} parent=1 // pred_check_branch
      %57 = sbr.rel (0) target = $region13
    $region12: #{bert_cnn_bilstm_forward.1} parent=1 // pred_region
      %s59 = ssub.s32 16, 16
      %60 = vsyncadd [#allocation6], %s59
      %s62 = sshll.u32 [#allocation5], 4
      %s63 = int_to_ptr.vmem [resolvable:$true] %s62
      %65 = dma.hbm_to_vmem [thread:$0]  %s2, 16, %s63, [#allocation6]
    $region13: #{bert_cnn_bilstm_forward.1} parent=1 // pred_fallthru
      _
    // Predicated region
    $region14: #{bert_cnn_bilstm_forward.1} parent=1 // pred_check
      _
    $region15: #{bert_cnn_bilstm_forward.1} parent=1 // pred_check_branch
      %67 = sbr.rel (0) target = $region17
    $region16: #{bert_cnn_bilstm_forward.1} parent=1 // pred_region
      %s69 = ssub.s32 16, 16
      %70 = vsyncadd [#allocation6], %s69
      %s72 = sshll.u32 [#allocation7], 4
      %s73 = int_to_ptr.vmem [resolvable:$true] %s72
      %75 = dma.hbm_to_vmem [thread:$0]  %s3, 16, %s73, [#allocation6]
    $region17: #{bert_cnn_bilstm_forward.1} parent=1 // pred_fallthru
      _
    // Predicated region
    $region18: #{bert_cnn_bilstm_forward.1} parent=1 // pred_check
      _
    $region19: #{bert_cnn_bilstm_forward.1} parent=1 // pred_check_branch
      %77 = sbr.rel (0) target = $region21
    $region20: #{bert_cnn_bilstm_forward.1} parent=1 // pred_region
      %s79 = ssub.s32 3072, 3072
      %80 = vsyncadd [#allocation9], %s79
      %s81 = sshll.u32 [#allocation8], 4
      %s82 = int_to_ptr.vmem [resolvable:$true] %s81
      %87 = dma.hbm_to_vmem [thread:$0]  %s4, 3072, %s82, [#allocation9], 192, 192, 12
    $region21: #{bert_cnn_bilstm_forward.1} parent=1 // pred_fallthru
      _
    // Predicated region
    $region22: #{bert_cnn_bilstm_forward.1} parent=1 // pred_check
      _
    $region23: #{bert_cnn_bilstm_forward.1} parent=1 // pred_check_branch
      %89 = sbr.rel (0) target = $region25
    $region24: #{bert_cnn_bilstm_forward.1} parent=1 // pred_region
      %s91 = ssub.s32 48, 48
      %92 = vsyncadd [#allocation9], %s91
      %s94 = sshll.u32 [#allocation10], 4
      %s95 = int_to_ptr.vmem [resolvable:$true] %s94
      %97 = dma.hbm_to_vmem [thread:$0]  %s5, 48, %s95, [#allocation9]
    $region25: #{bert_cnn_bilstm_forward.1} parent=1 // pred_fallthru
      _
    // Predicated region
    $region26: #{bert_cnn_bilstm_forward.1} parent=1 // pred_check
      _
    $region27: #{bert_cnn_bilstm_forward.1} parent=1 // pred_check_branch
      %99 = sbr.rel (0) target = $region29
    $region28: #{bert_cnn_bilstm_forward.1} parent=1 // pred_region
      %s101 = ssub.s32 1024, 1024
      %102 = vsyncadd [#allocation12], %s101
      %s103 = sshll.u32 [#allocation11], 4
      %s104 = int_to_ptr.vmem [resolvable:$true] %s103
      %109 = dma.hbm_to_vmem [thread:$0]  %s6, 1024, %s104, [#allocation12], 64, 64, 4
    $region29: #{bert_cnn_bilstm_forward.1} parent=1 // pred_fallthru
      _
    // Predicated region
    $region30: #{bert_cnn_bilstm_forward.1} parent=1 // pred_check
      _
    $region31: #{bert_cnn_bilstm_forward.1} parent=1 // pred_check_branch
      %111 = sbr.rel (0) target = $region33
    $region32: #{bert_cnn_bilstm_forward.1} parent=1 // pred_region
      %s113 = ssub.s32 16, 16
      %114 = vsyncadd [#allocation12], %s113
      %s116 = sshll.u32 [#allocation13], 4
      %s117 = int_to_ptr.vmem [resolvable:$true] %s116
      %119 = dma.hbm_to_vmem [thread:$0]  %s7, 16, %s117, [#allocation12]
    $region33: #{bert_cnn_bilstm_forward.1} parent=1 // pred_fallthru
      _
    // Predicated region
    $region34: #{bert_cnn_bilstm_forward.1} parent=1 // pred_check
      _
    $region35: #{bert_cnn_bilstm_forward.1} parent=1 // pred_check_branch
      %121 = sbr.rel (0) target = $region37
    $region36: #{bert_cnn_bilstm_forward.1} parent=1 // pred_region
      %s123 = ssub.s32 16, 16
      %124 = vsyncadd [#allocation15], %s123
      %s126 = sshll.u32 [#allocation14], 4
      %s127 = int_to_ptr.vmem [resolvable:$true] %s126
      %129 = dma.hbm_to_vmem [thread:$0]  %s8, 16, %s127, [#allocation15]
    $region37: #{bert_cnn_bilstm_forward.1} parent=1 // pred_fallthru
      _
    // Predicated region
    $region38: #{bert_cnn_bilstm_forward.1} parent=1 // pred_check
      _
    $region39: #{bert_cnn_bilstm_forward.1} parent=1 // pred_check_branch
      %131 = sbr.rel (0) target = $region41
    $region40: #{bert_cnn_bilstm_forward.1} parent=1 // pred_region
      %s133 = ssub.s32 16, 16
      %134 = vsyncadd [#allocation15], %s133
      %s136 = sshll.u32 [#allocation16], 4
      %s137 = int_to_ptr.vmem [resolvable:$true] %s136
      %139 = dma.hbm_to_vmem [thread:$0]  %s9, 16, %s137, [#allocation15]
    $region41: #{bert_cnn_bilstm_forward.1} parent=1 // pred_fallthru
      _
    // Predicated region
    $region42: #{bert_cnn_bilstm_forward.1} parent=1 // pred_check
      _
    $region43: #{bert_cnn_bilstm_forward.1} parent=1 // pred_check_branch
      %141 = sbr.rel (0) target = $region45
    $region44: #{bert_cnn_bilstm_forward.1} parent=1 // pred_region
      %s143 = ssub.s32 2048, 2048
      %144 = vsyncadd [#allocation18], %s143
      %s145 = sshll.u32 [#allocation17], 4
      %s146 = int_to_ptr.vmem [resolvable:$true] %s145
      %151 = dma.hbm_to_vmem [thread:$0]  %s10, 2048, %s146, [#allocation18], 128, 128, 8
    $region45: #{bert_cnn_bilstm_forward.1} parent=1 // pred_fallthru
      _
    // Predicated region
    $region46: #{bert_cnn_bilstm_forward.1} parent=1 // pred_check
      _
    $region47: #{bert_cnn_bilstm_forward.1} parent=1 // pred_check_branch
      %153 = sbr.rel (0) target = $region49
    $region48: #{bert_cnn_bilstm_forward.1} parent=1 // pred_region
      %s155 = ssub.s32 32, 32
      %156 = vsyncadd [#allocation18], %s155
      %s158 = sshll.u32 [#allocation19], 4
      %s159 = int_to_ptr.vmem [resolvable:$true] %s158
      %161 = dma.hbm_to_vmem [thread:$0]  %s11, 32, %s159, [#allocation18]
    $region49: #{bert_cnn_bilstm_forward.1} parent=1 // pred_fallthru
      _
    // Predicated region
    $region50: #{bert_cnn_bilstm_forward.1} parent=1 // pred_check
      _
    $region51: #{bert_cnn_bilstm_forward.1} parent=1 // pred_check_branch
      %163 = sbr.rel (0) target = $region53
    $region52: #{bert_cnn_bilstm_forward.1} parent=1 // pred_region
      %s165 = ssub.s32 2048, 2048
      %166 = vsyncadd [#allocation21], %s165
      %s167 = sshll.u32 [#allocation20], 4
      %s168 = int_to_ptr.vmem [resolvable:$true] %s167
      %173 = dma.hbm_to_vmem [thread:$0]  %s12, 2048, %s168, [#allocation21], 64, 64, 4
    $region53: #{bert_cnn_bilstm_forward.1} parent=1 // pred_fallthru
      _
    // Predicated region
    $region54: #{bert_cnn_bilstm_forward.1} parent=1 // pred_check
      _
    $region55: #{bert_cnn_bilstm_forward.1} parent=1 // pred_check_branch
      %175 = sbr.rel (0) target = $region57
    $region56: #{bert_cnn_bilstm_forward.1} parent=1 // pred_region
      %s177 = ssub.s32 16, 16
      %178 = vsyncadd [#allocation21], %s177
      %s180 = sshll.u32 [#allocation22], 4
      %s181 = int_to_ptr.vmem [resolvable:$true] %s180
      %183 = dma.hbm_to_vmem [thread:$0]  %s13, 16, %s181, [#allocation21]
    $region57: #{bert_cnn_bilstm_forward.1} parent=1 // pred_fallthru
      _
    // Predicated region
    $region58: #{bert_cnn_bilstm_forward.1} parent=1 // pred_check
      _
    $region59: #{bert_cnn_bilstm_forward.1} parent=1 // pred_check_branch
      %185 = sbr.rel (0) target = $region61
    $region60: #{bert_cnn_bilstm_forward.1} parent=1 // pred_region
      %s187 = ssub.s32 16, 16
      %188 = vsyncadd [#allocation24], %s187
      %s190 = sshll.u32 [#allocation23], 4
      %s191 = int_to_ptr.vmem [resolvable:$true] %s190
      %193 = dma.hbm_to_vmem [thread:$0]  %s14, 16, %s191, [#allocation24]
    $region61: #{bert_cnn_bilstm_forward.1} parent=1 // pred_fallthru
      _
    // Predicated region
    $region62: #{bert_cnn_bilstm_forward.1} parent=1 // pred_check
      _
    $region63: #{bert_cnn_bilstm_forward.1} parent=1 // pred_check_branch
      %195 = sbr.rel (0) target = $region65
    $region64: #{bert_cnn_bilstm_forward.1} parent=1 // pred_region
      %s197 = ssub.s32 16, 16
      %198 = vsyncadd [#allocation24], %s197
      %s200 = sshll.u32 [#allocation25], 4
      %s201 = int_to_ptr.vmem [resolvable:$true] %s200
      %203 = dma.hbm_to_vmem [thread:$0]  %s15, 16, %s201, [#allocation24]
    $region65: #{bert_cnn_bilstm_forward.1} parent=1 // pred_fallthru
      _
    // Predicated region
    $region66: #{bert_cnn_bilstm_forward.1} parent=1 // pred_check
      _
    $region67: #{bert_cnn_bilstm_forward.1} parent=1 // pred_check_branch
      %205 = sbr.rel (0) target = $region69
    $region68: #{bert_cnn_bilstm_forward.1} parent=1 // pred_region
      %s207 = ssub.s32 24576, 24576
      %208 = vsyncadd [#allocation27], %s207
      %s209 = sshll.u32 [#allocation26], 4
      %s210 = int_to_ptr.vmem [resolvable:$true] %s209
      %215 = dma.hbm_to_vmem [thread:$0]  %s16, 24576, %s210, [#allocation27], 1536, 1536, 96
    $region69: #{bert_cnn_bilstm_forward.1} parent=1 // pred_fallthru
      _
    // Predicated region
    $region70: #{bert_cnn_bilstm_forward.1} parent=1 // pred_check
      _
    $region71: #{bert_cnn_bilstm_forward.1} parent=1 // pred_check_branch
      %217 = sbr.rel (0) target = $region73
    $region72: #{bert_cnn_bilstm_forward.1} parent=1 // pred_region
      %s219 = ssub.s32 32, 32
      %220 = vsyncadd [#allocation27], %s219
      %s222 = sshll.u32 [#allocation28], 4
      %s223 = int_to_ptr.vmem [resolvable:$true] %s222
      %225 = dma.hbm_to_vmem [thread:$0]  %s17, 32, %s223, [#allocation27]
    $region73: #{bert_cnn_bilstm_forward.1} parent=1 // pred_fallthru
      _
    // Predicated region
    $region74: #{bert_cnn_bilstm_forward.1} parent=1 // pred_check
      _
    $region75: #{bert_cnn_bilstm_forward.1} parent=1 // pred_check_branch
      %227 = sbr.rel (0) target = $region77
    $region76: #{bert_cnn_bilstm_forward.1} parent=1 // pred_region
      %s229 = ssub.s32 32, 32
      %230 = vsyncadd [#allocation30], %s229
      %s232 = sshll.u32 [#allocation29], 4
      %s233 = int_to_ptr.vmem [resolvable:$true] %s232
      %235 = dma.hbm_to_vmem [thread:$0]  %s18, 32, %s233, [#allocation30]
    $region77: #{bert_cnn_bilstm_forward.1} parent=1 // pred_fallthru
      _
    // Predicated region
    $region78: #{bert_cnn_bilstm_forward.1} parent=1 // pred_check
      _
    $region79: #{bert_cnn_bilstm_forward.1} parent=1 // pred_check_branch
      %237 = sbr.rel (0) target = $region81
    $region80: #{bert_cnn_bilstm_forward.1} parent=1 // pred_region
      %s239 = ssub.s32 32, 32
      %240 = vsyncadd [#allocation30], %s239
      %s242 = sshll.u32 [#allocation31], 4
      %s243 = int_to_ptr.vmem [resolvable:$true] %s242
      %245 = dma.hbm_to_vmem [thread:$0]  %s19, 32, %s243, [#allocation30]
    $region81: #{bert_cnn_bilstm_forward.1} parent=1 // pred_fallthru
      _
    // Predicated region
    $region82: #{bert_cnn_bilstm_forward.1} parent=1 // pred_check
      _
    $region83: #{bert_cnn_bilstm_forward.1} parent=1 // pred_check_branch
      %247 = sbr.rel (0) target = $region85
    $region84: #{bert_cnn_bilstm_forward.1} parent=1 // pred_region
      %s249 = ssub.s32 49152, 49152
      %250 = vsyncadd [#allocation33], %s249
      %s251 = sshll.u32 [#allocation32], 4
      %s252 = int_to_ptr.vmem [resolvable:$true] %s251
      %257 = dma.hbm_to_vmem [thread:$0]  %s20, 49152, %s252, [#allocation33], 512, 512, 32
    $region85: #{bert_cnn_bilstm_forward.1} parent=1 // pred_fallthru
      _
    // Predicated region
    $region86: #{bert_cnn_bilstm_forward.1} parent=1 // pred_check
      _
    $region87: #{bert_cnn_bilstm_forward.1} parent=1 // pred_check_branch
      %259 = sbr.rel (0) target = $region89
    $region88: #{bert_cnn_bilstm_forward.1} parent=1 // pred_region
      %s261 = ssub.s32 128, 128
      %262 = vsyncadd [#allocation33], %s261
      %s264 = sshll.u32 [#allocation34], 4
      %s265 = int_to_ptr.vmem [resolvable:$true] %s264
      %267 = dma.hbm_to_vmem [thread:$0]  %s21, 128, %s265, [#allocation33]
    $region89: #{bert_cnn_bilstm_forward.1} parent=1 // pred_fallthru
      _
    // Predicated region
    $region90: #{bert_cnn_bilstm_forward.1} parent=1 // pred_check
      _
    $region91: #{bert_cnn_bilstm_forward.1} parent=1 // pred_check_branch
      %269 = sbr.rel (0) target = $region93
    $region92: #{bert_cnn_bilstm_forward.1} parent=1 // pred_region
      %s271 = ssub.s32 2048, 2048
      %272 = vsyncadd [#allocation36], %s271
      %s273 = sshll.u32 [#allocation35], 4
      %s274 = int_to_ptr.vmem [resolvable:$true] %s273
      %279 = dma.hbm_to_vmem [thread:$0]  %s22, 2048, %s274, [#allocation36], 64, 64, 4
    $region93: #{bert_cnn_bilstm_forward.1} parent=1 // pred_fallthru
      _
    // Predicated region
    $region94: #{bert_cnn_bilstm_forward.1} parent=1 // pred_check
      _
    $region95: #{bert_cnn_bilstm_forward.1} parent=1 // pred_check_branch
      %281 = sbr.rel (0) target = $region97
    $region96: #{bert_cnn_bilstm_forward.1} parent=1 // pred_region
      %s283 = ssub.s32 16, 16
      %284 = vsyncadd [#allocation36], %s283
      %s286 = sshll.u32 [#allocation37], 4
      %s287 = int_to_ptr.vmem [resolvable:$true] %s286
      %289 = dma.hbm_to_vmem [thread:$0]  %s23, 16, %s287, [#allocation36]
    $region97: #{bert_cnn_bilstm_forward.1} parent=1 // pred_fallthru
      _
    // Predicated region
    $region98: #{bert_cnn_bilstm_forward.1} parent=1 // pred_check
      _
    $region99: #{bert_cnn_bilstm_forward.1} parent=1 // pred_check_branch
      %291 = sbr.rel (0) target = $region101
    $region100: #{bert_cnn_bilstm_forward.1} parent=1 // pred_region
      %292 = dma.done [#allocation3], 32
    $region101: #{bert_cnn_bilstm_forward.1} parent=1 // pred_fallthru
      _
    // Predicated region
    $region102: #{bert_cnn_bilstm_forward.1} parent=1 // pred_check
      _
    $region103: #{bert_cnn_bilstm_forward.1} parent=1 // pred_check_branch
      %294 = sbr.rel (0) target = $region105
    $region104: #{bert_cnn_bilstm_forward.1} parent=1 // pred_region
      %295 = dma.done [#allocation6], 16
    $region105: #{bert_cnn_bilstm_forward.1} parent=1 // pred_fallthru
      _
    // Predicated region
    $region106: #{bert_cnn_bilstm_forward.1} parent=1 // pred_check
      _
    $region107: #{bert_cnn_bilstm_forward.1} parent=1 // pred_check_branch
      %297 = sbr.rel (0) target = $region109
    $region108: #{bert_cnn_bilstm_forward.1} parent=1 // pred_region
      %298 = dma.done [#allocation6], 16
    $region109: #{bert_cnn_bilstm_forward.1} parent=1 // pred_fallthru
      _
    // Predicated region
    $region110: #{bert_cnn_bilstm_forward.1} parent=1 // pred_check
      _
    $region111: #{bert_cnn_bilstm_forward.1} parent=1 // pred_check_branch
      %300 = sbr.rel (0) target = $region113
    $region112: #{bert_cnn_bilstm_forward.1} parent=1 // pred_region
      %301 = dma.done [#allocation9], 3072
    $region113: #{bert_cnn_bilstm_forward.1} parent=1 // pred_fallthru
      _
    // Predicated region
    $region114: #{bert_cnn_bilstm_forward.1} parent=1 // pred_check
      _
    $region115: #{bert_cnn_bilstm_forward.1} parent=1 // pred_check_branch
      %303 = sbr.rel (0) target = $region117
    $region116: #{bert_cnn_bilstm_forward.1} parent=1 // pred_region
      %304 = dma.done [#allocation9], 48
    $region117: #{bert_cnn_bilstm_forward.1} parent=1 // pred_fallthru
      _
    // Predicated region
    $region118: #{bert_cnn_bilstm_forward.1} parent=1 // pred_check
      _
    $region119: #{bert_cnn_bilstm_forward.1} parent=1 // pred_check_branch
      %306 = sbr.rel (0) target = $region121
    $region120: #{bert_cnn_bilstm_forward.1} parent=1 // pred_region
      %307 = dma.done [#allocation12], 1024
    $region121: #{bert_cnn_bilstm_forward.1} parent=1 // pred_fallthru
      _
    // Predicated region
    $region122: #{bert_cnn_bilstm_forward.1} parent=1 // pred_check
      _
    $region123: #{bert_cnn_bilstm_forward.1} parent=1 // pred_check_branch
      %309 = sbr.rel (0) target = $region125
    $region124: #{bert_cnn_bilstm_forward.1} parent=1 // pred_region
      %310 = dma.done [#allocation12], 16
    $region125: #{bert_cnn_bilstm_forward.1} parent=1 // pred_fallthru
      _
    // Predicated region
    $region126: #{bert_cnn_bilstm_forward.1} parent=1 // pred_check
      _
    $region127: #{bert_cnn_bilstm_forward.1} parent=1 // pred_check_branch
      %312 = sbr.rel (0) target = $region129
    $region128: #{bert_cnn_bilstm_forward.1} parent=1 // pred_region
      %313 = dma.done [#allocation15], 16
    $region129: #{bert_cnn_bilstm_forward.1} parent=1 // pred_fallthru
      _
    // Predicated region
    $region130: #{bert_cnn_bilstm_forward.1} parent=1 // pred_check
      _
    $region131: #{bert_cnn_bilstm_forward.1} parent=1 // pred_check_branch
      %315 = sbr.rel (0) target = $region133
    $region132: #{bert_cnn_bilstm_forward.1} parent=1 // pred_region
      %316 = dma.done [#allocation15], 16
    $region133: #{bert_cnn_bilstm_forward.1} parent=1 // pred_fallthru
      _
    // Predicated region
    $region134: #{bert_cnn_bilstm_forward.1} parent=1 // pred_check
      _
    $region135: #{bert_cnn_bilstm_forward.1} parent=1 // pred_check_branch
      %318 = sbr.rel (0) target = $region137
    $region136: #{bert_cnn_bilstm_forward.1} parent=1 // pred_region
      %319 = dma.done [#allocation18], 2048
    $region137: #{bert_cnn_bilstm_forward.1} parent=1 // pred_fallthru
      _
    // Predicated region
    $region138: #{bert_cnn_bilstm_forward.1} parent=1 // pred_check
      _
    $region139: #{bert_cnn_bilstm_forward.1} parent=1 // pred_check_branch
      %321 = sbr.rel (0) target = $region141
    $region140: #{bert_cnn_bilstm_forward.1} parent=1 // pred_region
      %322 = dma.done [#allocation18], 32
    $region141: #{bert_cnn_bilstm_forward.1} parent=1 // pred_fallthru
      _
    // Predicated region
    $region142: #{bert_cnn_bilstm_forward.1} parent=1 // pred_check
      _
    $region143: #{bert_cnn_bilstm_forward.1} parent=1 // pred_check_branch
      %324 = sbr.rel (0) target = $region145
    $region144: #{bert_cnn_bilstm_forward.1} parent=1 // pred_region
      %325 = dma.done [#allocation21], 2048
    $region145: #{bert_cnn_bilstm_forward.1} parent=1 // pred_fallthru
      _
    // Predicated region
    $region146: #{bert_cnn_bilstm_forward.1} parent=1 // pred_check
      _
    $region147: #{bert_cnn_bilstm_forward.1} parent=1 // pred_check_branch
      %327 = sbr.rel (0) target = $region149
    $region148: #{bert_cnn_bilstm_forward.1} parent=1 // pred_region
      %328 = dma.done [#allocation21], 16
    $region149: #{bert_cnn_bilstm_forward.1} parent=1 // pred_fallthru
      _
    // Predicated region
    $region150: #{bert_cnn_bilstm_forward.1} parent=1 // pred_check
      _
    $region151: #{bert_cnn_bilstm_forward.1} parent=1 // pred_check_branch
      %330 = sbr.rel (0) target = $region153
    $region152: #{bert_cnn_bilstm_forward.1} parent=1 // pred_region
      %331 = dma.done [#allocation24], 16
    $region153: #{bert_cnn_bilstm_forward.1} parent=1 // pred_fallthru
      _
    // Predicated region
    $region154: #{bert_cnn_bilstm_forward.1} parent=1 // pred_check
      _
    $region155: #{bert_cnn_bilstm_forward.1} parent=1 // pred_check_branch
      %333 = sbr.rel (0) target = $region157
    $region156: #{bert_cnn_bilstm_forward.1} parent=1 // pred_region
      %334 = dma.done [#allocation24], 16
    $region157: #{bert_cnn_bilstm_forward.1} parent=1 // pred_fallthru
      _
    // Predicated region
    $region158: #{bert_cnn_bilstm_forward.1} parent=1 // pred_check
      _
    $region159: #{bert_cnn_bilstm_forward.1} parent=1 // pred_check_branch
      %336 = sbr.rel (0) target = $region161
    $region160: #{bert_cnn_bilstm_forward.1} parent=1 // pred_region
      %337 = dma.done [#allocation27], 24576
    $region161: #{bert_cnn_bilstm_forward.1} parent=1 // pred_fallthru
      _
    // Predicated region
    $region162: #{bert_cnn_bilstm_forward.1} parent=1 // pred_check
      _
    $region163: #{bert_cnn_bilstm_forward.1} parent=1 // pred_check_branch
      %339 = sbr.rel (0) target = $region165
    $region164: #{bert_cnn_bilstm_forward.1} parent=1 // pred_region
      %340 = dma.done [#allocation27], 32
    $region165: #{bert_cnn_bilstm_forward.1} parent=1 // pred_fallthru
      _
    // Predicated region
    $region166: #{bert_cnn_bilstm_forward.1} parent=1 // pred_check
      _
    $region167: #{bert_cnn_bilstm_forward.1} parent=1 // pred_check_branch
      %342 = sbr.rel (0) target = $region169
    $region168: #{bert_cnn_bilstm_forward.1} parent=1 // pred_region
      %343 = dma.done [#allocation30], 32
    $region169: #{bert_cnn_bilstm_forward.1} parent=1 // pred_fallthru
      _
    // Predicated region
    $region170: #{bert_cnn_bilstm_forward.1} parent=1 // pred_check
      _
    $region171: #{bert_cnn_bilstm_forward.1} parent=1 // pred_check_branch
      %345 = sbr.rel (0) target = $region173
    $region172: #{bert_cnn_bilstm_forward.1} parent=1 // pred_region
      %346 = dma.done [#allocation30], 32
    $region173: #{bert_cnn_bilstm_forward.1} parent=1 // pred_fallthru
      _
    // Predicated region
    $region174: #{bert_cnn_bilstm_forward.1} parent=1 // pred_check
      _
    $region175: #{bert_cnn_bilstm_forward.1} parent=1 // pred_check_branch
      %348 = sbr.rel (0) target = $region177
    $region176: #{bert_cnn_bilstm_forward.1} parent=1 // pred_region
      %349 = dma.done [#allocation33], 49152
    $region177: #{bert_cnn_bilstm_forward.1} parent=1 // pred_fallthru
      _
    // Predicated region
    $region178: #{bert_cnn_bilstm_forward.1} parent=1 // pred_check
      _
    $region179: #{bert_cnn_bilstm_forward.1} parent=1 // pred_check_branch
      %351 = sbr.rel (0) target = $region181
    $region180: #{bert_cnn_bilstm_forward.1} parent=1 // pred_region
      %352 = dma.done [#allocation33], 128
    $region181: #{bert_cnn_bilstm_forward.1} parent=1 // pred_fallthru
      _
    // Predicated region
    $region182: #{bert_cnn_bilstm_forward.1} parent=1 // pred_check
      _
    $region183: #{bert_cnn_bilstm_forward.1} parent=1 // pred_check_branch
      %354 = sbr.rel (0) target = $region185
    $region184: #{bert_cnn_bilstm_forward.1} parent=1 // pred_region
      %355 = dma.done [#allocation36], 2048
    $region185: #{bert_cnn_bilstm_forward.1} parent=1 // pred_fallthru
      _
    // Predicated region
    $region186: #{bert_cnn_bilstm_forward.1} parent=1 // pred_check
      _
    $region187: #{bert_cnn_bilstm_forward.1} parent=1 // pred_check_branch
      %357 = sbr.rel (0) target = $region189
    $region188: #{bert_cnn_bilstm_forward.1} parent=1 // pred_region
      %358 = dma.done [#allocation36], 16
    $region189: #{bert_cnn_bilstm_forward.1} parent=1 // pred_fallthru
      _
    %v360 = vld [vmem:[%s0] sm:$0xff]
    %v361 = vld [vmem:[%s0 + $0x8] sm:$0xff]
    %v362 = vld [vmem:[%s0 + $0x10] sm:$0xff]
    %v363 = vld [vmem:[%s0 + $0x18] sm:$0xff]
    %v364 = vld [vmem:[#allocation2] sm:$0x1]
    %v365 = vld [vmem:[#allocation2 + $0x1] sm:$0x1]
    %366 = vadd.xlane.f32.xlu0 %v360
    %v367 = vpop.xlane.xlu0 %366
    %368 = vadd.xlane.f32.xlu0 %v361
    %v369 = vpop.xlane.xlu0 %368
    %370 = vadd.xlane.f32.xlu0 %v362
    %v371 = vpop.xlane.xlu0 %370
    %372 = vadd.xlane.f32.xlu0 %v363
    %v373 = vpop.xlane.xlu0 %372
    %v374 = vrcp.pop 128.0
    %v375 = vmul.f32 %v367, %v374
    %v376 = vmul.f32 %v369, %v374
    %v377 = vmul.f32 %v371, %v374
    %v378 = vmul.f32 %v373, %v374
    %v379 = vmul.f32 %v360, %v360
    %v380 = vmul.f32 %v361, %v361
    %v381 = vmul.f32 %v362, %v362
    %v382 = vmul.f32 %v363, %v363
    %383 = vadd.xlane.f32.xlu0 %v379
    %v384 = vpop.xlane.xlu0 %383
    %385 = vadd.xlane.f32.xlu0 %v380
    %v386 = vpop.xlane.xlu0 %385
    %387 = vadd.xlane.f32.xlu0 %v381
    %v388 = vpop.xlane.xlu0 %387
    %389 = vadd.xlane.f32.xlu0 %v382
    %v390 = vpop.xlane.xlu0 %389
    %v391 = vmul.f32 %v384, %v374
    %v392 = vmul.f32 %v386, %v374
    %v393 = vmul.f32 %v388, %v374
    %v394 = vmul.f32 %v390, %v374
    %v395 = vmul.f32 %v375, %v375
    %v396 = vmul.f32 %v376, %v376
    %v397 = vmul.f32 %v377, %v377
    %v398 = vmul.f32 %v378, %v378
    %v399 = vsub.f32 %v391, %v395
    %v400 = vsub.f32 %v392, %v396
    %v401 = vsub.f32 %v393, %v397
    %v402 = vsub.f32 %v394, %v398
    %v403 = vmax.f32 %v399, 0.0
    %v404 = vmax.f32 %v400, 0.0
    %v405 = vmax.f32 %v401, 0.0
    %v406 = vmax.f32 %v402, 0.0
    %v407 = vsub.f32 %v360, %v375
    %v408 = vsub.f32 %v361, %v376
    %v409 = vsub.f32 %v362, %v377
    %v410 = vsub.f32 %v363, %v378
    %v411 = vadd.f32 %v403, 1e-12
    %v412 = vadd.f32 %v404, 1e-12
    %v413 = vadd.f32 %v405, 1e-12
    %v414 = vadd.f32 %v406, 1e-12
    %v415 = vrsqrt.pop %v411
    %v416 = vrsqrt.pop %v412
    %v417 = vrsqrt.pop %v413
    %v418 = vrsqrt.pop %v414
    %v419 = vmul.f32 %v407, %v415
    %v420 = vmul.f32 %v408, %v416
    %v421 = vmul.f32 %v409, %v417
    %v422 = vmul.f32 %v410, %v418
    %v423 = vld [vmem:[#allocation5] sm:$0x1]
    %v425 = vlaneseq
    %v426 = vshrl.u32 %v425, 7
    %v427 = vsub.s32 0, %v426
    %v428 = vrot.slane %v423, %v427
    %v430 = vmul.f32 %v419, %v428
    %v431 = vmul.f32 %v420, %v428
    %v432 = vmul.f32 %v421, %v428
    %v433 = vmul.f32 %v422, %v428
    %v434 = vld [vmem:[#allocation7] sm:$0x1]
    %v436 = vlaneseq
    %v437 = vshrl.u32 %v436, 7
    %v438 = vsub.s32 0, %v437
    %v439 = vrot.slane %v434, %v438
    %v441 = vadd.f32 %v430, %v439
    %v442 = vadd.f32 %v431, %v439
    %v443 = vadd.f32 %v432, %v439
    %v444 = vadd.f32 %v433, %v439
    %v445 = vpack.c.bf16 %v442, %v441
    %v446 = vpack.c.bf16 %v444, %v443
    %v447 = vld [vmem:[#allocation8] sm:$0xff]
    %v448 = vld [vmem:[#allocation8 + $0x8] sm:$0xf]
    %v449 = vld [vmem:[#allocation8 + $0xc] sm:$0xff]
    %v450 = vld [vmem:[#allocation8 + $0x14] sm:$0xf]
    %v451 = vld [vmem:[#allocation8 + $0x18] sm:$0xff]
    %v452 = vld [vmem:[#allocation8 + $0x20] sm:$0xf]
    %v453 = vld [vmem:[#allocation8 + $0x24] sm:$0xff]
    %v454 = vld [vmem:[#allocation8 + $0x2c] sm:$0xf]
    %v455 = vld [vmem:[#allocation8 + $0x30] sm:$0xff]
    %v456 = vld [vmem:[#allocation8 + $0x38] sm:$0xf]
    %v457 = vld [vmem:[#allocation8 + $0x3c] sm:$0xff]
    %v458 = vld [vmem:[#allocation8 + $0x44] sm:$0xf]
    %v459 = vld [vmem:[#allocation8 + $0x48] sm:$0xff]
    %v460 = vld [vmem:[#allocation8 + $0x50] sm:$0xf]
    %v461 = vld [vmem:[#allocation8 + $0x54] sm:$0xff]
    %v462 = vld [vmem:[#allocation8 + $0x5c] sm:$0xf]
    %v463 = vld [vmem:[#allocation8 + $0x60] sm:$0xff]
    %v464 = vld [vmem:[#allocation8 + $0x68] sm:$0xf]
    %v465 = vld [vmem:[#allocation8 + $0x6c] sm:$0xff]
    %v466 = vld [vmem:[#allocation8 + $0x74] sm:$0xf]
    %v467 = vld [vmem:[#allocation8 + $0x78] sm:$0xff]
    %v468 = vld [vmem:[#allocation8 + $0x80] sm:$0xf]
    %v469 = vld [vmem:[#allocation8 + $0x84] sm:$0xff]
    %v470 = vld [vmem:[#allocation8 + $0x8c] sm:$0xf]
    %v471 = vld [vmem:[#allocation8 + $0x90] sm:$0xff]
    %v472 = vld [vmem:[#allocation8 + $0x98] sm:$0xf]
    %v473 = vld [vmem:[#allocation8 + $0x9c] sm:$0xff]
    %v474 = vld [vmem:[#allocation8 + $0xa4] sm:$0xf]
    %v475 = vld [vmem:[#allocation8 + $0xa8] sm:$0xff]
    %v476 = vld [vmem:[#allocation8 + $0xb0] sm:$0xf]
    %v477 = vld [vmem:[#allocation8 + $0xb4] sm:$0xff]
    %v478 = vld [vmem:[#allocation8 + $0xbc] sm:$0xf]
    %v479 = vld [vmem:[#allocation10] sm:$0x7]
    %v481 = vlaneseq
    %v482 = vshrl.u32 %v481, 7
    %v483 = vsub.s32 0, %v482
    %v484 = vrot.slane %v479, %v483
    %v485 = vlaneseq
    %v486 = vshrl.u32 %v485, 7
    %v487 = vsub.s32 1, %v486
    %v488 = vrot.slane %v479, %v487
    %v489 = vlaneseq
    %v490 = vshrl.u32 %v489, 7
    %v491 = vsub.s32 2, %v490
    %v492 = vrot.slane %v479, %v491
    %v528 = vunpack.c.l.b16 %v447
    %v529 = vunpack.c.h.b16 %v447
    %v530 = vunpack.c.l.b16 %v448
    %v531 = vunpack.c.l.b16 %v449
    %v532 = vunpack.c.h.b16 %v449
    %v533 = vunpack.c.l.b16 %v450
    %v534 = vunpack.c.l.b16 %v451
    %v535 = vunpack.c.h.b16 %v451
    %v536 = vunpack.c.l.b16 %v452
    %v537 = vunpack.c.l.b16 %v453
    %v538 = vunpack.c.h.b16 %v453
    %v539 = vunpack.c.l.b16 %v454
    %v540 = vunpack.c.l.b16 %v455
    %v541 = vunpack.c.h.b16 %v455
    %v542 = vunpack.c.l.b16 %v456
    %v543 = vunpack.c.l.b16 %v457
    %v544 = vunpack.c.h.b16 %v457
    %v545 = vunpack.c.l.b16 %v458
    %v546 = vunpack.c.l.b16 %v459
    %v547 = vunpack.c.h.b16 %v459
    %v548 = vunpack.c.l.b16 %v460
    %v549 = vunpack.c.l.b16 %v461
    %v550 = vunpack.c.h.b16 %v461
    %v551 = vunpack.c.l.b16 %v462
    %v552 = vunpack.c.l.b16 %v463
    %v553 = vunpack.c.h.b16 %v463
    %v554 = vunpack.c.l.b16 %v464
    %v555 = vunpack.c.l.b16 %v465
    %v556 = vunpack.c.h.b16 %v465
    %v557 = vunpack.c.l.b16 %v466
    %v558 = vunpack.c.l.b16 %v467
    %v559 = vunpack.c.h.b16 %v467
    %v560 = vunpack.c.l.b16 %v468
    %v561 = vunpack.c.l.b16 %v469
    %v562 = vunpack.c.h.b16 %v469
    %v563 = vunpack.c.l.b16 %v470
    %v564 = vunpack.c.l.b16 %v471
    %v565 = vunpack.c.h.b16 %v471
    %v566 = vunpack.c.l.b16 %v472
    %v567 = vunpack.c.l.b16 %v473
    %v568 = vunpack.c.h.b16 %v473
    %v569 = vunpack.c.l.b16 %v474
    %v570 = vunpack.c.l.b16 %v475
    %v571 = vunpack.c.h.b16 %v475
    %v572 = vunpack.c.l.b16 %v476
    %v573 = vunpack.c.l.b16 %v477
    %v574 = vunpack.c.h.b16 %v477
    %v575 = vunpack.c.l.b16 %v478
    %v576 = vpack.c.b16 %v531, %v528
    %v577 = vpack.c.b16 %v532, %v529
    %v578 = vpack.c.b16 %v533, %v530
    %v579 = vpack.c.b16 %v537, %v534
    %v580 = vpack.c.b16 %v538, %v535
    %v581 = vpack.c.b16 %v539, %v536
    %v582 = vpack.c.b16 %v543, %v540
    %v583 = vpack.c.b16 %v544, %v541
    %v584 = vpack.c.b16 %v545, %v542
    %v585 = vpack.c.b16 %v549, %v546
    %v586 = vpack.c.b16 %v550, %v547
    %v587 = vpack.c.b16 %v551, %v548
    %v588 = vpack.c.b16 %v555, %v552
    %v589 = vpack.c.b16 %v556, %v553
    %v590 = vpack.c.b16 %v557, %v554
    %v591 = vpack.c.b16 %v561, %v558
    %v592 = vpack.c.b16 %v562, %v559
    %v593 = vpack.c.b16 %v563, %v560
    %v594 = vpack.c.b16 %v567, %v564
    %v595 = vpack.c.b16 %v568, %v565
    %v596 = vpack.c.b16 %v569, %v566
    %v597 = vpack.c.b16 %v573, %v570
    %v598 = vpack.c.b16 %v574, %v571
    %v599 = vpack.c.b16 %v575, %v572
    %624 = vmatprep.subr.bf16.mxu0 %v598
    %625 = vmatpush1.bf16.msra.mxu0 %v597
    %626 = vmatprep.subr.bf16.mxu0 %v595
    %627 = vmatpush1.bf16.msra.mxu0 %v594
    %628 = vmatprep.subr.bf16.mxu0 %v592
    %629 = vmatpush1.bf16.msra.mxu0 %v591
    %630 = vmatprep.subr.bf16.mxu0 %v589
    %631 = vmatpush1.bf16.msra.mxu0 %v588
    %632 = vmatprep.subr.bf16.mxu0 %v586
    %633 = vmatpush1.bf16.msra.mxu0 %v585
    %634 = vmatprep.subr.bf16.mxu0 %v583
    %635 = vmatpush1.bf16.msra.mxu0 %v582
    %636 = vmatprep.subr.bf16.mxu0 %v580
    %637 = vmatpush1.bf16.msra.mxu0 %v579
    %638 = vmatprep.subr.bf16.mxu0 %v577
    %639 = vmatpush1.bf16.msra.mxu0 %v576
    %640 = vmatprep.subr.bf16.mxu0 0
    %641 = vmatpush2.bf16.msra.mxu0 0
    %642 = vmatprep.subr.bf16.mxu0 0
    %643 = vmatpush2.bf16.msra.mxu0 0
    %644 = vmatprep.subr.bf16.mxu0 0
    %645 = vmatpush2.bf16.msra.mxu0 0
    %646 = vmatprep.subr.bf16.mxu0 0
    %647 = vmatpush2.bf16.msra.mxu0 0
    %648 = vmatprep.subr.bf16.mxu0 0
    %649 = vmatpush2.bf16.msra.mxu0 0
    %650 = vmatprep.subr.bf16.mxu0 0
    %651 = vmatpush2.bf16.msra.mxu0 0
    %652 = vmatprep.subr.bf16.mxu0 0
    %653 = vmatpush2.bf16.msra.mxu0 0
    %654 = vmatprep.subr.bf16.mxu0 0
    %655 = vmatpush2.bf16.msra.mxu0 0
    %656 = vmatprep.mubr.bf16.mxu0 0
    %657 = vmatmul.mubr.bf16.gmra.mxu0 %v445
    %v658 = vpop.f32.mrf.mxu0
    %v659 = vadd.f32 %v484, %v658
    %v660 = vpop.f32.mrf.mxu0
    %v661 = vadd.f32 %v488, %v660
    %v662 = vpop.f32.mrf.mxu0
    %v663 = vadd.f32 %v484, %v662
    %v664 = vpop.f32.mrf.mxu0
    %v665 = vadd.f32 %v488, %v664
    %666 = vmatprep.mubr.bf16.mxu0 0
    %667 = vmatmul.mubr.bf16.gmra.mxu0 %v446
    %v668 = vpop.f32.mrf.mxu0
    %v669 = vadd.f32 %v484, %v668
    %v670 = vpop.f32.mrf.mxu0
    %v671 = vadd.f32 %v488, %v670
    %v672 = vpop.f32.mrf.mxu0
    %v673 = vadd.f32 %v484, %v672
    %v674 = vpop.f32.mrf.mxu0
    %v675 = vadd.f32 %v488, %v674
    %676 = vdwg.mxu0
    %677 = vmatprep.subr.bf16.mxu0 0
    %678 = vmatpush1.bf16.msra.mxu0 %v599
    %679 = vmatprep.subr.bf16.mxu0 0
    %680 = vmatpush1.bf16.msra.mxu0 %v596
    %681 = vmatprep.subr.bf16.mxu0 0
    %682 = vmatpush1.bf16.msra.mxu0 %v593
    %683 = vmatprep.subr.bf16.mxu0 0
    %684 = vmatpush1.bf16.msra.mxu0 %v590
    %685 = vmatprep.subr.bf16.mxu0 0
    %686 = vmatpush1.bf16.msra.mxu0 %v587
    %687 = vmatprep.subr.bf16.mxu0 0
    %688 = vmatpush1.bf16.msra.mxu0 %v584
    %689 = vmatprep.subr.bf16.mxu0 0
    %690 = vmatpush1.bf16.msra.mxu0 %v581
    %691 = vmatprep.subr.bf16.mxu0 0
    %692 = vmatpush1.bf16.msra.mxu0 %v578
    %693 = vmatprep.subr.bf16.mxu0 0
    %694 = vmatpush2.bf16.msra.mxu0 0
    %695 = vmatprep.subr.bf16.mxu0 0
    %696 = vmatpush2.bf16.msra.mxu0 0
    %697 = vmatprep.subr.bf16.mxu0 0
    %698 = vmatpush2.bf16.msra.mxu0 0
    %699 = vmatprep.subr.bf16.mxu0 0
    %700 = vmatpush2.bf16.msra.mxu0 0
    %701 = vmatprep.subr.bf16.mxu0 0
    %702 = vmatpush2.bf16.msra.mxu0 0
    %703 = vmatprep.subr.bf16.mxu0 0
    %704 = vmatpush2.bf16.msra.mxu0 0
    %705 = vmatprep.subr.bf16.mxu0 0
    %706 = vmatpush2.bf16.msra.mxu0 0
    %707 = vmatprep.subr.bf16.mxu0 0
    %708 = vmatpush2.bf16.msra.mxu0 0
    %709 = vmatprep.mubr.bf16.mxu0 0
    %710 = vmatmul.mubr.bf16.gmra.mxu0 %v445
    %v711 = vpop.f32.mrf.mxu0
    %v712 = vadd.f32 %v492, %v711
    %v713 = vpop.f32.mrf.mxu0
    %v714 = vpop.f32.mrf.mxu0
    %v715 = vadd.f32 %v492, %v714
    %v716 = vpop.f32.mrf.mxu0
    %717 = vmatprep.mubr.bf16.mxu0 0
    %718 = vmatmul.mubr.bf16.gmra.mxu0 %v446
    %v719 = vpop.f32.mrf.mxu0
    %v720 = vadd.f32 %v492, %v719
    %v721 = vpop.f32.mrf.mxu0
    %v722 = vpop.f32.mrf.mxu0
    %v723 = vadd.f32 %v492, %v722
    %v724 = vpop.f32.mrf.mxu0
    %725 = vdwg.mxu0
    %v726 = vpack.c.bf16 %v663, %v659
    %v727 = vpack.c.bf16 %v673, %v669
    %v728 = vpack.c.bf16 %v665, %v661
    %v729 = vpack.c.bf16 %v675, %v671
    %730 = vmatprep.subr.bf16.mxu0 0
    %731 = vmatpush1.bf16.xpose.msra.mxu0 0
    %732 = vmatprep.subr.bf16.mxu0 0
    %733 = vmatpush1.bf16.xpose.msra.mxu0 0
    %734 = vmatprep.subr.bf16.mxu0 0
    %735 = vmatpush1.bf16.xpose.msra.mxu0 0
    %736 = vmatprep.subr.bf16.mxu0 0
    %737 = vmatpush1.bf16.xpose.msra.mxu0 0
    %738 = vmatprep.subr.bf16.mxu0 0
    %739 = vmatpush1.bf16.xpose.msra.mxu0 0
    %740 = vmatprep.subr.bf16.mxu0 0
    %741 = vmatpush1.bf16.xpose.msra.mxu0 0
    %742 = vmatprep.subr.bf16.mxu0 0
    %743 = vmatpush1.bf16.xpose.msra.mxu0 0
    %744 = vmatprep.subr.bf16.mxu0 0
    %745 = vmatpush1.bf16.xpose.msra.mxu0 %v728
    %746 = vmatprep.subr.bf16.mxu0 0
    %747 = vmatpush2.bf16.xpose.msra.mxu0 0
    %748 = vmatprep.subr.bf16.mxu0 0
    %749 = vmatpush2.bf16.xpose.msra.mxu0 0
    %750 = vmatprep.subr.bf16.mxu0 0
    %751 = vmatpush2.bf16.xpose.msra.mxu0 0
    %752 = vmatprep.subr.bf16.mxu0 0
    %753 = vmatpush2.bf16.xpose.msra.mxu0 0
    %754 = vmatprep.subr.bf16.mxu0 0
    %755 = vmatpush2.bf16.xpose.msra.mxu0 0
    %756 = vmatprep.subr.bf16.mxu0 0
    %757 = vmatpush2.bf16.xpose.msra.mxu0 0
    %758 = vmatprep.subr.bf16.mxu0 0
    %759 = vmatpush2.bf16.xpose.msra.mxu0 0
    %760 = vmatprep.subr.bf16.mxu0 0
    %761 = vmatpush2.bf16.xpose.msra.mxu0 0
    %762 = vmatprep.mubr.bf16.mxu0 0
    %763 = vmatmul.mubr.bf16.gmra.mxu0 %v726
    %v764 = vpop.f32.mrf.mxu0
    %v765 = vadd.f32 0.0, %v764
    %v766 = vpop.f32.mrf.mxu0
    %v767 = vpop.f32.mrf.mxu0
    %v768 = vadd.f32 0.0, %v767
    %v769 = vpop.f32.mrf.mxu0
    %770 = vdwg.mxu0
    %771 = vmatprep.subr.bf16.mxu0 0
    %772 = vmatpush1.bf16.xpose.msra.mxu0 0
    %773 = vmatprep.subr.bf16.mxu0 0
    %774 = vmatpush1.bf16.xpose.msra.mxu0 0
    %775 = vmatprep.subr.bf16.mxu0 0
    %776 = vmatpush1.bf16.xpose.msra.mxu0 0
    %777 = vmatprep.subr.bf16.mxu0 0
    %778 = vmatpush1.bf16.xpose.msra.mxu0 0
    %779 = vmatprep.subr.bf16.mxu0 0
    %780 = vmatpush1.bf16.xpose.msra.mxu0 0
    %781 = vmatprep.subr.bf16.mxu0 0
    %782 = vmatpush1.bf16.xpose.msra.mxu0 0
    %783 = vmatprep.subr.bf16.mxu0 0
    %784 = vmatpush1.bf16.xpose.msra.mxu0 0
    %785 = vmatprep.subr.bf16.mxu0 0
    %786 = vmatpush1.bf16.xpose.msra.mxu0 %v729
    %787 = vmatprep.subr.bf16.mxu0 0
    %788 = vmatpush2.bf16.xpose.msra.mxu0 0
    %789 = vmatprep.subr.bf16.mxu0 0
    %790 = vmatpush2.bf16.xpose.msra.mxu0 0
    %791 = vmatprep.subr.bf16.mxu0 0
    %792 = vmatpush2.bf16.xpose.msra.mxu0 0
    %793 = vmatprep.subr.bf16.mxu0 0
    %794 = vmatpush2.bf16.xpose.msra.mxu0 0
    %795 = vmatprep.subr.bf16.mxu0 0
    %796 = vmatpush2.bf16.xpose.msra.mxu0 0
    %797 = vmatprep.subr.bf16.mxu0 0
    %798 = vmatpush2.bf16.xpose.msra.mxu0 0
    %799 = vmatprep.subr.bf16.mxu0 0
    %800 = vmatpush2.bf16.xpose.msra.mxu0 0
    %801 = vmatprep.subr.bf16.mxu0 0
    %802 = vmatpush2.bf16.xpose.msra.mxu0 0
    %803 = vmatprep.mubr.bf16.mxu0 0
    %804 = vmatmul.mubr.bf16.gmra.mxu0 %v727
    %v805 = vpop.f32.mrf.mxu0
    %v806 = vadd.f32 0.0, %v805
    %v807 = vpop.f32.mrf.mxu0
    %v808 = vpop.f32.mrf.mxu0
    %v809 = vadd.f32 0.0, %v808
    %v810 = vpop.f32.mrf.mxu0
    %811 = vdwg.mxu0
    %v812 = vmul.f32 %v765, 0.088388346
    %v813 = vmul.f32 %v768, 0.088388346
    %v814 = vmul.f32 %v806, 0.088388346
    %v815 = vmul.f32 %v809, 0.088388346
    %v816 = vsub.f32 %v364, 1.0
    %v817 = vsub.f32 %v365, 1.0
    %v818 = vmul.f32 %v816, 1e+09
    %v819 = vmul.f32 %v817, 1e+09
    %v822 = vlaneseq
    %v823 = vshrl.u32 %v822, 7
    %v824 = vsub.s32 0, %v823
    %v825 = vrot.slane %v818, %v824
    %v826 = vlaneseq
    %v827 = vshrl.u32 %v826, 7
    %v828 = vsub.s32 0, %v827
    %v829 = vrot.slane %v819, %v828
    %v832 = vadd.f32 %v812, %v825
    %v833 = vadd.f32 %v813, %v825
    %v834 = vadd.f32 %v814, %v829
    %v835 = vadd.f32 %v815, %v829
    %vm836 = vcmask 130048
    %v837 = vsel %vm836, %v832, -inf
    %838 = vmax.xlane.f32.xlu0 %v837
    %v839 = vpop.xlane.xlu0 %838
    %v840 = vsel %vm836, %v833, -inf
    %841 = vmax.xlane.f32.xlu0 %v840
    %v842 = vpop.xlane.xlu0 %841
    %v843 = vsel %vm836, %v834, -inf
    %844 = vmax.xlane.f32.xlu0 %v843
    %v845 = vpop.xlane.xlu0 %844
    %v846 = vsel %vm836, %v835, -inf
    %847 = vmax.xlane.f32.xlu0 %v846
    %v848 = vpop.xlane.xlu0 %847
    %v849 = vsub.f32 %v832, %v839
    %v850 = vsub.f32 %v833, %v842
    %v851 = vsub.f32 %v834, %v845
    %v852 = vsub.f32 %v835, %v848
    %v853 = vmul.f32 %v849, 1.442695
    %v854 = vpow.pop %v853
    %v855 = vmul.f32 %v850, 1.442695
    %v856 = vpow.pop %v855
    %v857 = vmul.f32 %v851, 1.442695
    %v858 = vpow.pop %v857
    %v859 = vmul.f32 %v852, 1.442695
    %v860 = vpow.pop %v859
    %v861 = vsel %vm836, %v854, 0.0
    %862 = vadd.xlane.f32.xlu0 %v861
    %v863 = vpop.xlane.xlu0 %862
    %v864 = vsel %vm836, %v856, 0.0
    %865 = vadd.xlane.f32.xlu0 %v864
    %v866 = vpop.xlane.xlu0 %865
    %v867 = vsel %vm836, %v858, 0.0
    %868 = vadd.xlane.f32.xlu0 %v867
    %v869 = vpop.xlane.xlu0 %868
    %v870 = vsel %vm836, %v860, 0.0
    %871 = vadd.xlane.f32.xlu0 %v870
    %v872 = vpop.xlane.xlu0 %871
    %v873 = vrcp.pop %v863
    %v874 = vrcp.pop %v866
    %v875 = vrcp.pop %v869
    %v876 = vrcp.pop %v872
    %v877 = vmul.f32 %v854, %v873
    %v878 = vmul.f32 %v856, %v874
    %v879 = vmul.f32 %v858, %v875
    %v880 = vmul.f32 %v860, %v876
    %v881 = vpack.c.bf16 %v878, %v877
    %v882 = vpack.c.bf16 %v880, %v879
    %v883 = vpack.c.bf16 %v715, %v712
    %v884 = vpack.c.bf16 %v723, %v720
    %v886 = vsel %vm836, %v881, 0
    %888 = vmatprep.subr.bf16.mxu0 0
    %889 = vmatpush1.bf16.msra.mxu0 0
    %890 = vmatprep.subr.bf16.mxu0 0
    %891 = vmatpush1.bf16.msra.mxu0 0
    %892 = vmatprep.subr.bf16.mxu0 0
    %893 = vmatpush1.bf16.msra.mxu0 0
    %894 = vmatprep.subr.bf16.mxu0 0
    %895 = vmatpush1.bf16.msra.mxu0 0
    %896 = vmatprep.subr.bf16.mxu0 0
    %897 = vmatpush1.bf16.msra.mxu0 0
    %898 = vmatprep.subr.bf16.mxu0 0
    %899 = vmatpush1.bf16.msra.mxu0 0
    %900 = vmatprep.subr.bf16.mxu0 0
    %901 = vmatpush1.bf16.msra.mxu0 0
    %902 = vmatprep.subr.bf16.mxu0 0
    %903 = vmatpush1.bf16.msra.mxu0 %v883
    %904 = vmatprep.subr.bf16.mxu0 0
    %905 = vmatpush2.bf16.msra.mxu0 0
    %906 = vmatprep.subr.bf16.mxu0 0
    %907 = vmatpush2.bf16.msra.mxu0 0
    %908 = vmatprep.subr.bf16.mxu0 0
    %909 = vmatpush2.bf16.msra.mxu0 0
    %910 = vmatprep.subr.bf16.mxu0 0
    %911 = vmatpush2.bf16.msra.mxu0 0
    %912 = vmatprep.subr.bf16.mxu0 0
    %913 = vmatpush2.bf16.msra.mxu0 0
    %914 = vmatprep.subr.bf16.mxu0 0
    %915 = vmatpush2.bf16.msra.mxu0 0
    %916 = vmatprep.subr.bf16.mxu0 0
    %917 = vmatpush2.bf16.msra.mxu0 0
    %918 = vmatprep.subr.bf16.mxu0 0
    %919 = vmatpush2.bf16.msra.mxu0 0
    %920 = vmatprep.mubr.bf16.mxu0 0
    %921 = vmatmul.mubr.bf16.gmra.mxu0 %v886
    %v922 = vpop.f32.mrf.mxu0
    %v923 = vadd.f32 0.0, %v922
    %v924 = vpop.f32.mrf.mxu0
    %v925 = vpop.f32.mrf.mxu0
    %v926 = vadd.f32 0.0, %v925
    %v927 = vpop.f32.mrf.mxu0
    %928 = vdwg.mxu0
    %v930 = vsel %vm836, %v882, 0
    %932 = vmatprep.subr.bf16.mxu0 0
    %933 = vmatpush1.bf16.msra.mxu0 0
    %934 = vmatprep.subr.bf16.mxu0 0
    %935 = vmatpush1.bf16.msra.mxu0 0
    %936 = vmatprep.subr.bf16.mxu0 0
    %937 = vmatpush1.bf16.msra.mxu0 0
    %938 = vmatprep.subr.bf16.mxu0 0
    %939 = vmatpush1.bf16.msra.mxu0 0
    %940 = vmatprep.subr.bf16.mxu0 0
    %941 = vmatpush1.bf16.msra.mxu0 0
    %942 = vmatprep.subr.bf16.mxu0 0
    %943 = vmatpush1.bf16.msra.mxu0 0
    %944 = vmatprep.subr.bf16.mxu0 0
    %945 = vmatpush1.bf16.msra.mxu0 0
    %946 = vmatprep.subr.bf16.mxu0 0
    %947 = vmatpush1.bf16.msra.mxu0 %v884
    %948 = vmatprep.subr.bf16.mxu0 0
    %949 = vmatpush2.bf16.msra.mxu0 0
    %950 = vmatprep.subr.bf16.mxu0 0
    %951 = vmatpush2.bf16.msra.mxu0 0
    %952 = vmatprep.subr.bf16.mxu0 0
    %953 = vmatpush2.bf16.msra.mxu0 0
    %954 = vmatprep.subr.bf16.mxu0 0
    %955 = vmatpush2.bf16.msra.mxu0 0
    %956 = vmatprep.subr.bf16.mxu0 0
    %957 = vmatpush2.bf16.msra.mxu0 0
    %958 = vmatprep.subr.bf16.mxu0 0
    %959 = vmatpush2.bf16.msra.mxu0 0
    %960 = vmatprep.subr.bf16.mxu0 0
    %961 = vmatpush2.bf16.msra.mxu0 0
    %962 = vmatprep.subr.bf16.mxu0 0
    %963 = vmatpush2.bf16.msra.mxu0 0
    %964 = vmatprep.mubr.bf16.mxu0 0
    %965 = vmatmul.mubr.bf16.gmra.mxu0 %v930
    %v966 = vpop.f32.mrf.mxu0
    %v967 = vadd.f32 0.0, %v966
    %v968 = vpop.f32.mrf.mxu0
    %v969 = vpop.f32.mrf.mxu0
    %v970 = vadd.f32 0.0, %v969
    %v971 = vpop.f32.mrf.mxu0
    %972 = vdwg.mxu0
    %v973 = vpack.c.bf16 %v926, %v923
    %v974 = vpack.c.bf16 %v970, %v967
    %v975 = vld [vmem:[#allocation11] sm:$0xf]
    %v976 = vld [vmem:[#allocation11 + $0x4] sm:$0xf]
    %v977 = vld [vmem:[#allocation11 + $0x8] sm:$0xf]
    %v978 = vld [vmem:[#allocation11 + $0xc] sm:$0xf]
    %v979 = vld [vmem:[#allocation11 + $0x10] sm:$0xf]
    %v980 = vld [vmem:[#allocation11 + $0x14] sm:$0xf]
    %v981 = vld [vmem:[#allocation11 + $0x18] sm:$0xf]
    %v982 = vld [vmem:[#allocation11 + $0x1c] sm:$0xf]
    %v983 = vld [vmem:[#allocation11 + $0x20] sm:$0xf]
    %v984 = vld [vmem:[#allocation11 + $0x24] sm:$0xf]
    %v985 = vld [vmem:[#allocation11 + $0x28] sm:$0xf]
    %v986 = vld [vmem:[#allocation11 + $0x2c] sm:$0xf]
    %v987 = vld [vmem:[#allocation11 + $0x30] sm:$0xf]
    %v988 = vld [vmem:[#allocation11 + $0x34] sm:$0xf]
    %v989 = vld [vmem:[#allocation11 + $0x38] sm:$0xf]
    %v990 = vld [vmem:[#allocation11 + $0x3c] sm:$0xf]
    %v991 = vld [vmem:[#allocation13] sm:$0x1]
    %v993 = vlaneseq
    %v994 = vshrl.u32 %v993, 7
    %v995 = vsub.s32 0, %v994
    %v996 = vrot.slane %v991, %v995
    %v1014 = vunpack.c.l.b16 %v975
    %v1015 = vunpack.c.l.b16 %v976
    %v1016 = vunpack.c.l.b16 %v977
    %v1017 = vunpack.c.l.b16 %v978
    %v1018 = vunpack.c.l.b16 %v979
    %v1019 = vunpack.c.l.b16 %v980
    %v1020 = vunpack.c.l.b16 %v981
    %v1021 = vunpack.c.l.b16 %v982
    %v1022 = vunpack.c.l.b16 %v983
    %v1023 = vunpack.c.l.b16 %v984
    %v1024 = vunpack.c.l.b16 %v985
    %v1025 = vunpack.c.l.b16 %v986
    %v1026 = vunpack.c.l.b16 %v987
    %v1027 = vunpack.c.l.b16 %v988
    %v1028 = vunpack.c.l.b16 %v989
    %v1029 = vunpack.c.l.b16 %v990
    %v1030 = vpack.c.b16 %v1015, %v1014
    %v1031 = vpack.c.b16 %v1017, %v1016
    %v1032 = vpack.c.b16 %v1019, %v1018
    %v1033 = vpack.c.b16 %v1021, %v1020
    %v1034 = vpack.c.b16 %v1023, %v1022
    %v1035 = vpack.c.b16 %v1025, %v1024
    %v1036 = vpack.c.b16 %v1027, %v1026
    %v1037 = vpack.c.b16 %v1029, %v1028
    %1046 = vmatprep.subr.bf16.mxu0 0
    %1047 = vmatpush1.bf16.msra.mxu0 %v1037
    %1048 = vmatprep.subr.bf16.mxu0 0
    %1049 = vmatpush1.bf16.msra.mxu0 %v1036
    %1050 = vmatprep.subr.bf16.mxu0 0
    %1051 = vmatpush1.bf16.msra.mxu0 %v1035
    %1052 = vmatprep.subr.bf16.mxu0 0
    %1053 = vmatpush1.bf16.msra.mxu0 %v1034
    %1054 = vmatprep.subr.bf16.mxu0 0
    %1055 = vmatpush1.bf16.msra.mxu0 %v1033
    %1056 = vmatprep.subr.bf16.mxu0 0
    %1057 = vmatpush1.bf16.msra.mxu0 %v1032
    %1058 = vmatprep.subr.bf16.mxu0 0
    %1059 = vmatpush1.bf16.msra.mxu0 %v1031
    %1060 = vmatprep.subr.bf16.mxu0 0
    %1061 = vmatpush1.bf16.msra.mxu0 %v1030
    %1062 = vmatprep.subr.bf16.mxu0 0
    %1063 = vmatpush2.bf16.msra.mxu0 0
    %1064 = vmatprep.subr.bf16.mxu0 0
    %1065 = vmatpush2.bf16.msra.mxu0 0
    %1066 = vmatprep.subr.bf16.mxu0 0
    %1067 = vmatpush2.bf16.msra.mxu0 0
    %1068 = vmatprep.subr.bf16.mxu0 0
    %1069 = vmatpush2.bf16.msra.mxu0 0
    %1070 = vmatprep.subr.bf16.mxu0 0
    %1071 = vmatpush2.bf16.msra.mxu0 0
    %1072 = vmatprep.subr.bf16.mxu0 0
    %1073 = vmatpush2.bf16.msra.mxu0 0
    %1074 = vmatprep.subr.bf16.mxu0 0
    %1075 = vmatpush2.bf16.msra.mxu0 0
    %1076 = vmatprep.subr.bf16.mxu0 0
    %1077 = vmatpush2.bf16.msra.mxu0 0
    %1078 = vmatprep.mubr.bf16.mxu0 0
    %1079 = vmatmul.mubr.bf16.gmra.mxu0 %v973
    %v1080 = vpop.f32.mrf.mxu0
    %v1081 = vadd.f32 %v996, %v1080
    %v1082 = vpop.f32.mrf.mxu0
    %v1083 = vpop.f32.mrf.mxu0
    %v1084 = vadd.f32 %v996, %v1083
    %v1085 = vpop.f32.mrf.mxu0
    %1086 = vmatprep.mubr.bf16.mxu0 0
    %1087 = vmatmul.mubr.bf16.gmra.mxu0 %v974
    %v1088 = vpop.f32.mrf.mxu0
    %v1089 = vadd.f32 %v996, %v1088
    %v1090 = vpop.f32.mrf.mxu0
    %v1091 = vpop.f32.mrf.mxu0
    %v1092 = vadd.f32 %v996, %v1091
    %v1093 = vpop.f32.mrf.mxu0
    %1094 = vdwg.mxu0
    %v1095 = vadd.f32 %v441, %v1081
    %v1096 = vadd.f32 %v442, %v1084
    %v1097 = vadd.f32 %v443, %v1089
    %v1098 = vadd.f32 %v444, %v1092
    %1099 = vadd.xlane.f32.xlu0 %v1095
    %v1100 = vpop.xlane.xlu0 %1099
    %1101 = vadd.xlane.f32.xlu0 %v1096
    %v1102 = vpop.xlane.xlu0 %1101
    %1103 = vadd.xlane.f32.xlu0 %v1097
    %v1104 = vpop.xlane.xlu0 %1103
    %1105 = vadd.xlane.f32.xlu0 %v1098
    %v1106 = vpop.xlane.xlu0 %1105
    %v1107 = vmul.f32 %v1100, %v374
    %v1108 = vmul.f32 %v1102, %v374
    %v1109 = vmul.f32 %v1104, %v374
    %v1110 = vmul.f32 %v1106, %v374
    %v1111 = vmul.f32 %v1095, %v1095
    %v1112 = vmul.f32 %v1096, %v1096
    %v1113 = vmul.f32 %v1097, %v1097
    %v1114 = vmul.f32 %v1098, %v1098
    %1115 = vadd.xlane.f32.xlu0 %v1111
    %v1116 = vpop.xlane.xlu0 %1115
    %1117 = vadd.xlane.f32.xlu0 %v1112
    %v1118 = vpop.xlane.xlu0 %1117
    %1119 = vadd.xlane.f32.xlu0 %v1113
    %v1120 = vpop.xlane.xlu0 %1119
    %1121 = vadd.xlane.f32.xlu0 %v1114
    %v1122 = vpop.xlane.xlu0 %1121
    %v1123 = vmul.f32 %v1116, %v374
    %v1124 = vmul.f32 %v1118, %v374
    %v1125 = vmul.f32 %v1120, %v374
    %v1126 = vmul.f32 %v1122, %v374
    %v1127 = vmul.f32 %v1107, %v1107
    %v1128 = vmul.f32 %v1108, %v1108
    %v1129 = vmul.f32 %v1109, %v1109
    %v1130 = vmul.f32 %v1110, %v1110
    %v1131 = vsub.f32 %v1123, %v1127
    %v1132 = vsub.f32 %v1124, %v1128
    %v1133 = vsub.f32 %v1125, %v1129
    %v1134 = vsub.f32 %v1126, %v1130
    %v1135 = vmax.f32 %v1131, 0.0
    %v1136 = vmax.f32 %v1132, 0.0
    %v1137 = vmax.f32 %v1133, 0.0
    %v1138 = vmax.f32 %v1134, 0.0
    %v1139 = vsub.f32 %v1095, %v1107
    %v1140 = vsub.f32 %v1096, %v1108
    %v1141 = vsub.f32 %v1097, %v1109
    %v1142 = vsub.f32 %v1098, %v1110
    %v1143 = vadd.f32 %v1135, 1e-12
    %v1144 = vadd.f32 %v1136, 1e-12
    %v1145 = vadd.f32 %v1137, 1e-12
    %v1146 = vadd.f32 %v1138, 1e-12
    %v1147 = vrsqrt.pop %v1143
    %v1148 = vrsqrt.pop %v1144
    %v1149 = vrsqrt.pop %v1145
    %v1150 = vrsqrt.pop %v1146
    %v1151 = vmul.f32 %v1139, %v1147
    %v1152 = vmul.f32 %v1140, %v1148
    %v1153 = vmul.f32 %v1141, %v1149
    %v1154 = vmul.f32 %v1142, %v1150
    %v1155 = vld [vmem:[#allocation14] sm:$0x1]
    %v1157 = vlaneseq
    %v1158 = vshrl.u32 %v1157, 7
    %v1159 = vsub.s32 0, %v1158
    %v1160 = vrot.slane %v1155, %v1159
    %v1162 = vmul.f32 %v1151, %v1160
    %v1163 = vmul.f32 %v1152, %v1160
    %v1164 = vmul.f32 %v1153, %v1160
    %v1165 = vmul.f32 %v1154, %v1160
    %v1166 = vld [vmem:[#allocation16] sm:$0x1]
    %v1168 = vlaneseq
    %v1169 = vshrl.u32 %v1168, 7
    %v1170 = vsub.s32 0, %v1169
    %v1171 = vrot.slane %v1166, %v1170
    %v1173 = vadd.f32 %v1162, %v1171
    %v1174 = vadd.f32 %v1163, %v1171
    %v1175 = vadd.f32 %v1164, %v1171
    %v1176 = vadd.f32 %v1165, %v1171
    %v1177 = vpack.c.bf16 %v1174, %v1173
    %v1178 = vpack.c.bf16 %v1176, %v1175
    %v1179 = vld [vmem:[#allocation17] sm:$0xff]
    %v1180 = vld [vmem:[#allocation17 + $0x8] sm:$0xff]
    %v1181 = vld [vmem:[#allocation17 + $0x10] sm:$0xff]
    %v1182 = vld [vmem:[#allocation17 + $0x18] sm:$0xff]
    %v1183 = vld [vmem:[#allocation17 + $0x20] sm:$0xff]
    %v1184 = vld [vmem:[#allocation17 + $0x28] sm:$0xff]
    %v1185 = vld [vmem:[#allocation17 + $0x30] sm:$0xff]
    %v1186 = vld [vmem:[#allocation17 + $0x38] sm:$0xff]
    %v1187 = vld [vmem:[#allocation17 + $0x40] sm:$0xff]
    %v1188 = vld [vmem:[#allocation17 + $0x48] sm:$0xff]
    %v1189 = vld [vmem:[#allocation17 + $0x50] sm:$0xff]
    %v1190 = vld [vmem:[#allocation17 + $0x58] sm:$0xff]
    %v1191 = vld [vmem:[#allocation17 + $0x60] sm:$0xff]
    %v1192 = vld [vmem:[#allocation17 + $0x68] sm:$0xff]
    %v1193 = vld [vmem:[#allocation17 + $0x70] sm:$0xff]
    %v1194 = vld [vmem:[#allocation17 + $0x78] sm:$0xff]
    %v1195 = vld [vmem:[#allocation19] sm:$0x3]
    %v1197 = vlaneseq
    %v1198 = vshrl.u32 %v1197, 7
    %v1199 = vsub.s32 0, %v1198
    %v1200 = vrot.slane %v1195, %v1199
    %v1201 = vlaneseq
    %v1202 = vshrl.u32 %v1201, 7
    %v1203 = vsub.s32 1, %v1202
    %v1204 = vrot.slane %v1195, %v1203
    %v1223 = vunpack.c.l.b16 %v1179
    %v1224 = vunpack.c.h.b16 %v1179
    %v1225 = vunpack.c.l.b16 %v1180
    %v1226 = vunpack.c.h.b16 %v1180
    %v1227 = vunpack.c.l.b16 %v1181
    %v1228 = vunpack.c.h.b16 %v1181
    %v1229 = vunpack.c.l.b16 %v1182
    %v1230 = vunpack.c.h.b16 %v1182
    %v1231 = vunpack.c.l.b16 %v1183
    %v1232 = vunpack.c.h.b16 %v1183
    %v1233 = vunpack.c.l.b16 %v1184
    %v1234 = vunpack.c.h.b16 %v1184
    %v1235 = vunpack.c.l.b16 %v1185
    %v1236 = vunpack.c.h.b16 %v1185
    %v1237 = vunpack.c.l.b16 %v1186
    %v1238 = vunpack.c.h.b16 %v1186
    %v1239 = vunpack.c.l.b16 %v1187
    %v1240 = vunpack.c.h.b16 %v1187
    %v1241 = vunpack.c.l.b16 %v1188
    %v1242 = vunpack.c.h.b16 %v1188
    %v1243 = vunpack.c.l.b16 %v1189
    %v1244 = vunpack.c.h.b16 %v1189
    %v1245 = vunpack.c.l.b16 %v1190
    %v1246 = vunpack.c.h.b16 %v1190
    %v1247 = vunpack.c.l.b16 %v1191
    %v1248 = vunpack.c.h.b16 %v1191
    %v1249 = vunpack.c.l.b16 %v1192
    %v1250 = vunpack.c.h.b16 %v1192
    %v1251 = vunpack.c.l.b16 %v1193
    %v1252 = vunpack.c.h.b16 %v1193
    %v1253 = vunpack.c.l.b16 %v1194
    %v1254 = vunpack.c.h.b16 %v1194
    %v1255 = vpack.c.b16 %v1225, %v1223
    %v1256 = vpack.c.b16 %v1226, %v1224
    %v1257 = vpack.c.b16 %v1229, %v1227
    %v1258 = vpack.c.b16 %v1230, %v1228
    %v1259 = vpack.c.b16 %v1233, %v1231
    %v1260 = vpack.c.b16 %v1234, %v1232
    %v1261 = vpack.c.b16 %v1237, %v1235
    %v1262 = vpack.c.b16 %v1238, %v1236
    %v1263 = vpack.c.b16 %v1241, %v1239
    %v1264 = vpack.c.b16 %v1242, %v1240
    %v1265 = vpack.c.b16 %v1245, %v1243
    %v1266 = vpack.c.b16 %v1246, %v1244
    %v1267 = vpack.c.b16 %v1249, %v1247
    %v1268 = vpack.c.b16 %v1250, %v1248
    %v1269 = vpack.c.b16 %v1253, %v1251
    %v1270 = vpack.c.b16 %v1254, %v1252
    %1287 = vmatprep.subr.bf16.mxu0 %v1270
    %1288 = vmatpush1.bf16.msra.mxu0 %v1269
    %1289 = vmatprep.subr.bf16.mxu0 %v1268
    %1290 = vmatpush1.bf16.msra.mxu0 %v1267
    %1291 = vmatprep.subr.bf16.mxu0 %v1266
    %1292 = vmatpush1.bf16.msra.mxu0 %v1265
    %1293 = vmatprep.subr.bf16.mxu0 %v1264
    %1294 = vmatpush1.bf16.msra.mxu0 %v1263
    %1295 = vmatprep.subr.bf16.mxu0 %v1262
    %1296 = vmatpush1.bf16.msra.mxu0 %v1261
    %1297 = vmatprep.subr.bf16.mxu0 %v1260
    %1298 = vmatpush1.bf16.msra.mxu0 %v1259
    %1299 = vmatprep.subr.bf16.mxu0 %v1258
    %1300 = vmatpush1.bf16.msra.mxu0 %v1257
    %1301 = vmatprep.subr.bf16.mxu0 %v1256
    %1302 = vmatpush1.bf16.msra.mxu0 %v1255
    %1303 = vmatprep.subr.bf16.mxu0 0
    %1304 = vmatpush2.bf16.msra.mxu0 0
    %1305 = vmatprep.subr.bf16.mxu0 0
    %1306 = vmatpush2.bf16.msra.mxu0 0
    %1307 = vmatprep.subr.bf16.mxu0 0
    %1308 = vmatpush2.bf16.msra.mxu0 0
    %1309 = vmatprep.subr.bf16.mxu0 0
    %1310 = vmatpush2.bf16.msra.mxu0 0
    %1311 = vmatprep.subr.bf16.mxu0 0
    %1312 = vmatpush2.bf16.msra.mxu0 0
    %1313 = vmatprep.subr.bf16.mxu0 0
    %1314 = vmatpush2.bf16.msra.mxu0 0
    %1315 = vmatprep.subr.bf16.mxu0 0
    %1316 = vmatpush2.bf16.msra.mxu0 0
    %1317 = vmatprep.subr.bf16.mxu0 0
    %1318 = vmatpush2.bf16.msra.mxu0 0
    %1319 = vmatprep.mubr.bf16.mxu0 0
    %1320 = vmatmul.mubr.bf16.gmra.mxu0 %v1177
    %v1321 = vpop.f32.mrf.mxu0
    %v1322 = vadd.f32 %v1200, %v1321
    %v1323 = vpop.f32.mrf.mxu0
    %v1324 = vadd.f32 %v1204, %v1323
    %v1325 = vpop.f32.mrf.mxu0
    %v1326 = vadd.f32 %v1200, %v1325
    %v1327 = vpop.f32.mrf.mxu0
    %v1328 = vadd.f32 %v1204, %v1327
    %1329 = vmatprep.mubr.bf16.mxu0 0
    %1330 = vmatmul.mubr.bf16.gmra.mxu0 %v1178
    %v1331 = vpop.f32.mrf.mxu0
    %v1332 = vadd.f32 %v1200, %v1331
    %v1333 = vpop.f32.mrf.mxu0
    %v1334 = vadd.f32 %v1204, %v1333
    %v1335 = vpop.f32.mrf.mxu0
    %v1336 = vadd.f32 %v1200, %v1335
    %v1337 = vpop.f32.mrf.mxu0
    %v1338 = vadd.f32 %v1204, %v1337
    %1339 = vdwg.mxu0
    %v1340 = vmul.f32 %v1322, %v1322
    %v1341 = vmul.f32 %v1324, %v1324
    %v1342 = vmul.f32 %v1326, %v1326
    %v1343 = vmul.f32 %v1328, %v1328
    %v1344 = vmul.f32 %v1332, %v1332
    %v1345 = vmul.f32 %v1334, %v1334
    %v1346 = vmul.f32 %v1336, %v1336
    %v1347 = vmul.f32 %v1338, %v1338
    %v1348 = vmul.f32 %v1322, %v1340
    %v1349 = vmul.f32 %v1324, %v1341
    %v1350 = vmul.f32 %v1326, %v1342
    %v1351 = vmul.f32 %v1328, %v1343
    %v1352 = vmul.f32 %v1332, %v1344
    %v1353 = vmul.f32 %v1334, %v1345
    %v1354 = vmul.f32 %v1336, %v1346
    %v1355 = vmul.f32 %v1338, %v1347
    %v1356 = vmul.f32 %v1348, 0.044715
    %v1357 = vmul.f32 %v1349, 0.044715
    %v1358 = vmul.f32 %v1350, 0.044715
    %v1359 = vmul.f32 %v1351, 0.044715
    %v1360 = vmul.f32 %v1352, 0.044715
    %v1361 = vmul.f32 %v1353, 0.044715
    %v1362 = vmul.f32 %v1354, 0.044715
    %v1363 = vmul.f32 %v1355, 0.044715
    %v1364 = vadd.f32 %v1322, %v1356
    %v1365 = vadd.f32 %v1324, %v1357
    %v1366 = vadd.f32 %v1326, %v1358
    %v1367 = vadd.f32 %v1328, %v1359
    %v1368 = vadd.f32 %v1332, %v1360
    %v1369 = vadd.f32 %v1334, %v1361
    %v1370 = vadd.f32 %v1336, %v1362
    %v1371 = vadd.f32 %v1338, %v1363
    %v1372 = vmul.f32 %v1364, 0.7978846
    %v1373 = vmul.f32 %v1365, 0.7978846
    %v1374 = vmul.f32 %v1366, 0.7978846
    %v1375 = vmul.f32 %v1367, 0.7978846
    %v1376 = vmul.f32 %v1368, 0.7978846
    %v1377 = vmul.f32 %v1369, 0.7978846
    %v1378 = vmul.f32 %v1370, 0.7978846
    %v1379 = vmul.f32 %v1371, 0.7978846
    %v1380 = vtanh.pop %v1372
    %v1381 = vtanh.pop %v1373
    %v1382 = vtanh.pop %v1374
    %v1383 = vtanh.pop %v1375
    %v1384 = vtanh.pop %v1376
    %v1385 = vtanh.pop %v1377
    %v1386 = vtanh.pop %v1378
    %v1387 = vtanh.pop %v1379
    %v1388 = vadd.f32 %v1380, 1.0
    %v1389 = vadd.f32 %v1381, 1.0
    %v1390 = vadd.f32 %v1382, 1.0
    %v1391 = vadd.f32 %v1383, 1.0
    %v1392 = vadd.f32 %v1384, 1.0
    %v1393 = vadd.f32 %v1385, 1.0
    %v1394 = vadd.f32 %v1386, 1.0
    %v1395 = vadd.f32 %v1387, 1.0
    %v1396 = vmul.f32 %v1388, 0.5
    %v1397 = vmul.f32 %v1389, 0.5
    %v1398 = vmul.f32 %v1390, 0.5
    %v1399 = vmul.f32 %v1391, 0.5
    %v1400 = vmul.f32 %v1392, 0.5
    %v1401 = vmul.f32 %v1393, 0.5
    %v1402 = vmul.f32 %v1394, 0.5
    %v1403 = vmul.f32 %v1395, 0.5
    %v1404 = vmul.f32 %v1322, %v1396
    %v1405 = vmul.f32 %v1324, %v1397
    %v1406 = vmul.f32 %v1326, %v1398
    %v1407 = vmul.f32 %v1328, %v1399
    %v1408 = vmul.f32 %v1332, %v1400
    %v1409 = vmul.f32 %v1334, %v1401
    %v1410 = vmul.f32 %v1336, %v1402
    %v1411 = vmul.f32 %v1338, %v1403
    %v1412 = vpack.c.bf16 %v1406, %v1404
    %v1413 = vpack.c.bf16 %v1407, %v1405
    %v1414 = vpack.c.bf16 %v1410, %v1408
    %v1415 = vpack.c.bf16 %v1411, %v1409
    %v1416 = vld [vmem:[#allocation20] sm:$0xf]
    %v1417 = vld [vmem:[#allocation20 + $0x4] sm:$0xf]
    %v1418 = vld [vmem:[#allocation20 + $0x8] sm:$0xf]
    %v1419 = vld [vmem:[#allocation20 + $0xc] sm:$0xf]
    %v1420 = vld [vmem:[#allocation20 + $0x10] sm:$0xf]
    %v1421 = vld [vmem:[#allocation20 + $0x14] sm:$0xf]
    %v1422 = vld [vmem:[#allocation20 + $0x18] sm:$0xf]
    %v1423 = vld [vmem:[#allocation20 + $0x1c] sm:$0xf]
    %v1424 = vld [vmem:[#allocation20 + $0x20] sm:$0xf]
    %v1425 = vld [vmem:[#allocation20 + $0x24] sm:$0xf]
    %v1426 = vld [vmem:[#allocation20 + $0x28] sm:$0xf]
    %v1427 = vld [vmem:[#allocation20 + $0x2c] sm:$0xf]
    %v1428 = vld [vmem:[#allocation20 + $0x30] sm:$0xf]
    %v1429 = vld [vmem:[#allocation20 + $0x34] sm:$0xf]
    %v1430 = vld [vmem:[#allocation20 + $0x38] sm:$0xf]
    %v1431 = vld [vmem:[#allocation20 + $0x3c] sm:$0xf]
    %v1432 = vld [vmem:[#allocation20 + $0x40] sm:$0xf]
    %v1433 = vld [vmem:[#allocation20 + $0x44] sm:$0xf]
    %v1434 = vld [vmem:[#allocation20 + $0x48] sm:$0xf]
    %v1435 = vld [vmem:[#allocation20 + $0x4c] sm:$0xf]
    %v1436 = vld [vmem:[#allocation20 + $0x50] sm:$0xf]
    %v1437 = vld [vmem:[#allocation20 + $0x54] sm:$0xf]
    %v1438 = vld [vmem:[#allocation20 + $0x58] sm:$0xf]
    %v1439 = vld [vmem:[#allocation20 + $0x5c] sm:$0xf]
    %v1440 = vld [vmem:[#allocation20 + $0x60] sm:$0xf]
    %v1441 = vld [vmem:[#allocation20 + $0x64] sm:$0xf]
    %v1442 = vld [vmem:[#allocation20 + $0x68] sm:$0xf]
    %v1443 = vld [vmem:[#allocation20 + $0x6c] sm:$0xf]
    %v1444 = vld [vmem:[#allocation20 + $0x70] sm:$0xf]
    %v1445 = vld [vmem:[#allocation20 + $0x74] sm:$0xf]
    %v1446 = vld [vmem:[#allocation20 + $0x78] sm:$0xf]
    %v1447 = vld [vmem:[#allocation20 + $0x7c] sm:$0xf]
    %v1448 = vld [vmem:[#allocation22] sm:$0x1]
    %v1450 = vlaneseq
    %v1451 = vshrl.u32 %v1450, 7
    %v1452 = vsub.s32 0, %v1451
    %v1453 = vrot.slane %v1448, %v1452
    %v1487 = vunpack.c.l.b16 %v1416
    %v1488 = vunpack.c.l.b16 %v1417
    %v1489 = vunpack.c.l.b16 %v1418
    %v1490 = vunpack.c.l.b16 %v1419
    %v1491 = vunpack.c.l.b16 %v1420
    %v1492 = vunpack.c.l.b16 %v1421
    %v1493 = vunpack.c.l.b16 %v1422
    %v1494 = vunpack.c.l.b16 %v1423
    %v1495 = vunpack.c.l.b16 %v1424
    %v1496 = vunpack.c.l.b16 %v1425
    %v1497 = vunpack.c.l.b16 %v1426
    %v1498 = vunpack.c.l.b16 %v1427
    %v1499 = vunpack.c.l.b16 %v1428
    %v1500 = vunpack.c.l.b16 %v1429
    %v1501 = vunpack.c.l.b16 %v1430
    %v1502 = vunpack.c.l.b16 %v1431
    %v1503 = vunpack.c.l.b16 %v1432
    %v1504 = vunpack.c.l.b16 %v1433
    %v1505 = vunpack.c.l.b16 %v1434
    %v1506 = vunpack.c.l.b16 %v1435
    %v1507 = vunpack.c.l.b16 %v1436
    %v1508 = vunpack.c.l.b16 %v1437
    %v1509 = vunpack.c.l.b16 %v1438
    %v1510 = vunpack.c.l.b16 %v1439
    %v1511 = vunpack.c.l.b16 %v1440
    %v1512 = vunpack.c.l.b16 %v1441
    %v1513 = vunpack.c.l.b16 %v1442
    %v1514 = vunpack.c.l.b16 %v1443
    %v1515 = vunpack.c.l.b16 %v1444
    %v1516 = vunpack.c.l.b16 %v1445
    %v1517 = vunpack.c.l.b16 %v1446
    %v1518 = vunpack.c.l.b16 %v1447
    %v1519 = vpack.c.b16 %v1488, %v1487
    %v1520 = vpack.c.b16 %v1490, %v1489
    %v1521 = vpack.c.b16 %v1492, %v1491
    %v1522 = vpack.c.b16 %v1494, %v1493
    %v1523 = vpack.c.b16 %v1496, %v1495
    %v1524 = vpack.c.b16 %v1498, %v1497
    %v1525 = vpack.c.b16 %v1500, %v1499
    %v1526 = vpack.c.b16 %v1502, %v1501
    %v1527 = vpack.c.b16 %v1504, %v1503
    %v1528 = vpack.c.b16 %v1506, %v1505
    %v1529 = vpack.c.b16 %v1508, %v1507
    %v1530 = vpack.c.b16 %v1510, %v1509
    %v1531 = vpack.c.b16 %v1512, %v1511
    %v1532 = vpack.c.b16 %v1514, %v1513
    %v1533 = vpack.c.b16 %v1516, %v1515
    %v1534 = vpack.c.b16 %v1518, %v1517
    %1551 = vmatprep.subr.bf16.mxu0 0
    %1552 = vmatpush1.bf16.msra.mxu0 %v1526
    %1553 = vmatprep.subr.bf16.mxu0 0
    %1554 = vmatpush1.bf16.msra.mxu0 %v1525
    %1555 = vmatprep.subr.bf16.mxu0 0
    %1556 = vmatpush1.bf16.msra.mxu0 %v1524
    %1557 = vmatprep.subr.bf16.mxu0 0
    %1558 = vmatpush1.bf16.msra.mxu0 %v1523
    %1559 = vmatprep.subr.bf16.mxu0 0
    %1560 = vmatpush1.bf16.msra.mxu0 %v1522
    %1561 = vmatprep.subr.bf16.mxu0 0
    %1562 = vmatpush1.bf16.msra.mxu0 %v1521
    %1563 = vmatprep.subr.bf16.mxu0 0
    %1564 = vmatpush1.bf16.msra.mxu0 %v1520
    %1565 = vmatprep.subr.bf16.mxu0 0
    %1566 = vmatpush1.bf16.msra.mxu0 %v1519
    %1567 = vmatprep.subr.bf16.mxu0 0
    %1568 = vmatpush2.bf16.msra.mxu0 %v1534
    %1569 = vmatprep.subr.bf16.mxu0 0
    %1570 = vmatpush2.bf16.msra.mxu0 %v1533
    %1571 = vmatprep.subr.bf16.mxu0 0
    %1572 = vmatpush2.bf16.msra.mxu0 %v1532
    %1573 = vmatprep.subr.bf16.mxu0 0
    %1574 = vmatpush2.bf16.msra.mxu0 %v1531
    %1575 = vmatprep.subr.bf16.mxu0 0
    %1576 = vmatpush2.bf16.msra.mxu0 %v1530
    %1577 = vmatprep.subr.bf16.mxu0 0
    %1578 = vmatpush2.bf16.msra.mxu0 %v1529
    %1579 = vmatprep.subr.bf16.mxu0 0
    %1580 = vmatpush2.bf16.msra.mxu0 %v1528
    %1581 = vmatprep.subr.bf16.mxu0 0
    %1582 = vmatpush2.bf16.msra.mxu0 %v1527
    %1583 = vmatprep.mubr.bf16.mxu0 %v1413
    %1584 = vmatmul.mubr.bf16.gmra.mxu0 %v1412
    %v1585 = vpop.f32.mrf.mxu0
    %v1586 = vadd.f32 %v1453, %v1585
    %v1587 = vpop.f32.mrf.mxu0
    %v1588 = vpop.f32.mrf.mxu0
    %v1589 = vadd.f32 %v1453, %v1588
    %v1590 = vpop.f32.mrf.mxu0
    %1591 = vmatprep.mubr.bf16.mxu0 %v1415
    %1592 = vmatmul.mubr.bf16.gmra.mxu0 %v1414
    %v1593 = vpop.f32.mrf.mxu0
    %v1594 = vadd.f32 %v1453, %v1593
    %v1595 = vpop.f32.mrf.mxu0
    %v1596 = vpop.f32.mrf.mxu0
    %v1597 = vadd.f32 %v1453, %v1596
    %v1598 = vpop.f32.mrf.mxu0
    %1599 = vdwg.mxu0
    %v1600 = vadd.f32 %v1173, %v1586
    %v1601 = vadd.f32 %v1174, %v1589
    %v1602 = vadd.f32 %v1175, %v1594
    %v1603 = vadd.f32 %v1176, %v1597
    %1604 = vadd.xlane.f32.xlu0 %v1600
    %v1605 = vpop.xlane.xlu0 %1604
    %1606 = vadd.xlane.f32.xlu0 %v1601
    %v1607 = vpop.xlane.xlu0 %1606
    %1608 = vadd.xlane.f32.xlu0 %v1602
    %v1609 = vpop.xlane.xlu0 %1608
    %1610 = vadd.xlane.f32.xlu0 %v1603
    %v1611 = vpop.xlane.xlu0 %1610
    %v1612 = vmul.f32 %v1605, %v374
    %v1613 = vmul.f32 %v1607, %v374
    %v1614 = vmul.f32 %v1609, %v374
    %v1615 = vmul.f32 %v1611, %v374
    %v1616 = vmul.f32 %v1600, %v1600
    %v1617 = vmul.f32 %v1601, %v1601
    %v1618 = vmul.f32 %v1602, %v1602
    %v1619 = vmul.f32 %v1603, %v1603
    %1620 = vadd.xlane.f32.xlu0 %v1616
    %v1621 = vpop.xlane.xlu0 %1620
    %1622 = vadd.xlane.f32.xlu0 %v1617
    %v1623 = vpop.xlane.xlu0 %1622
    %1624 = vadd.xlane.f32.xlu0 %v1618
    %v1625 = vpop.xlane.xlu0 %1624
    %1626 = vadd.xlane.f32.xlu0 %v1619
    %v1627 = vpop.xlane.xlu0 %1626
    %v1628 = vmul.f32 %v1621, %v374
    %v1629 = vmul.f32 %v1623, %v374
    %v1630 = vmul.f32 %v1625, %v374
    %v1631 = vmul.f32 %v1627, %v374
    %v1632 = vmul.f32 %v1612, %v1612
    %v1633 = vmul.f32 %v1613, %v1613
    %v1634 = vmul.f32 %v1614, %v1614
    %v1635 = vmul.f32 %v1615, %v1615
    %v1636 = vsub.f32 %v1628, %v1632
    %v1637 = vsub.f32 %v1629, %v1633
    %v1638 = vsub.f32 %v1630, %v1634
    %v1639 = vsub.f32 %v1631, %v1635
    %v1640 = vmax.f32 %v1636, 0.0
    %v1641 = vmax.f32 %v1637, 0.0
    %v1642 = vmax.f32 %v1638, 0.0
    %v1643 = vmax.f32 %v1639, 0.0
    %v1644 = vsub.f32 %v1600, %v1612
    %v1645 = vsub.f32 %v1601, %v1613
    %v1646 = vsub.f32 %v1602, %v1614
    %v1647 = vsub.f32 %v1603, %v1615
    %v1648 = vadd.f32 %v1640, 1e-12
    %v1649 = vadd.f32 %v1641, 1e-12
    %v1650 = vadd.f32 %v1642, 1e-12
    %v1651 = vadd.f32 %v1643, 1e-12
    %v1652 = vrsqrt.pop %v1648
    %v1653 = vrsqrt.pop %v1649
    %v1654 = vrsqrt.pop %v1650
    %v1655 = vrsqrt.pop %v1651
    %v1656 = vmul.f32 %v1644, %v1652
    %v1657 = vmul.f32 %v1645, %v1653
    %v1658 = vmul.f32 %v1646, %v1654
    %v1659 = vmul.f32 %v1647, %v1655
    %v1660 = vld [vmem:[#allocation23] sm:$0x1]
    %v1662 = vlaneseq
    %v1663 = vshrl.u32 %v1662, 7
    %v1664 = vsub.s32 0, %v1663
    %v1665 = vrot.slane %v1660, %v1664
    %v1667 = vmul.f32 %v1656, %v1665
    %v1668 = vmul.f32 %v1657, %v1665
    %v1669 = vmul.f32 %v1658, %v1665
    %v1670 = vmul.f32 %v1659, %v1665
    %v1671 = vld [vmem:[#allocation25] sm:$0x1]
    %v1673 = vlaneseq
    %v1674 = vshrl.u32 %v1673, 7
    %v1675 = vsub.s32 0, %v1674
    %v1676 = vrot.slane %v1671, %v1675
    %v1678 = vadd.f32 %v1667, %v1676
    %v1679 = vadd.f32 %v1668, %v1676
    %v1680 = vadd.f32 %v1669, %v1676
    %v1681 = vadd.f32 %v1670, %v1676
    %v1682 = vpack.c.bf16 %v1679, %v1678
    %v1683 = vpack.c.bf16 %v1681, %v1680
    %v1684 = vld [vmem:[#allocation26] sm:$0xff]
    %v1685 = vld [vmem:[#allocation26 + $0x8] sm:$0xff]
    %v1686 = vld [vmem:[#allocation26 + $0x10] sm:$0xff]
    %v1687 = vld [vmem:[#allocation26 + $0x18] sm:$0xff]
    %v1688 = vld [vmem:[#allocation26 + $0x20] sm:$0xff]
    %v1689 = vld [vmem:[#allocation26 + $0x28] sm:$0xff]
    %v1690 = vld [vmem:[#allocation26 + $0x30] sm:$0xff]
    %v1691 = vld [vmem:[#allocation26 + $0x38] sm:$0xff]
    %v1692 = vld [vmem:[#allocation26 + $0x40] sm:$0xff]
    %v1693 = vld [vmem:[#allocation26 + $0x48] sm:$0xff]
    %v1694 = vld [vmem:[#allocation26 + $0x50] sm:$0xff]
    %v1695 = vld [vmem:[#allocation26 + $0x58] sm:$0xff]
    %v1696 = vld [vmem:[#allocation26 + $0x60] sm:$0xff]
    %v1697 = vld [vmem:[#allocation26 + $0x68] sm:$0xff]
    %v1698 = vld [vmem:[#allocation26 + $0x70] sm:$0xff]
    %v1699 = vld [vmem:[#allocation26 + $0x78] sm:$0xff]
    %v1700 = vld [vmem:[#allocation26 + $0x80] sm:$0xff]
    %v1701 = vld [vmem:[#allocation26 + $0x88] sm:$0xff]
    %v1702 = vld [vmem:[#allocation26 + $0x90] sm:$0xff]
    %v1703 = vld [vmem:[#allocation26 + $0x98] sm:$0xff]
    %v1704 = vld [vmem:[#allocation26 + $0xa0] sm:$0xff]
    %v1705 = vld [vmem:[#allocation26 + $0xa8] sm:$0xff]
    %v1706 = vld [vmem:[#allocation26 + $0xb0] sm:$0xff]
    %v1707 = vld [vmem:[#allocation26 + $0xb8] sm:$0xff]
    %v1708 = vld [vmem:[#allocation26 + $0xc0] sm:$0xff]
    %v1709 = vld [vmem:[#allocation26 + $0xc8] sm:$0xff]
    %v1710 = vld [vmem:[#allocation26 + $0xd0] sm:$0xff]
    %v1711 = vld [vmem:[#allocation26 + $0xd8] sm:$0xff]
    %v1712 = vld [vmem:[#allocation26 + $0xe0] sm:$0xff]
    %v1713 = vld [vmem:[#allocation26 + $0xe8] sm:$0xff]
    %v1714 = vld [vmem:[#allocation26 + $0xf0] sm:$0xff]
    %v1715 = vld [vmem:[#allocation26 + $0xf8] sm:$0xff]
    %v1716 = vld [vmem:[#allocation26 + $0x100] sm:$0xff]
    %v1717 = vld [vmem:[#allocation26 + $0x108] sm:$0xff]
    %v1718 = vld [vmem:[#allocation26 + $0x110] sm:$0xff]
    %v1719 = vld [vmem:[#allocation26 + $0x118] sm:$0xff]
    %v1720 = vld [vmem:[#allocation26 + $0x120] sm:$0xff]
    %v1721 = vld [vmem:[#allocation26 + $0x128] sm:$0xff]
    %v1722 = vld [vmem:[#allocation26 + $0x130] sm:$0xff]
    %v1723 = vld [vmem:[#allocation26 + $0x138] sm:$0xff]
    %v1724 = vld [vmem:[#allocation26 + $0x140] sm:$0xff]
    %v1725 = vld [vmem:[#allocation26 + $0x148] sm:$0xff]
    %v1726 = vld [vmem:[#allocation26 + $0x150] sm:$0xff]
    %v1727 = vld [vmem:[#allocation26 + $0x158] sm:$0xff]
    %v1728 = vld [vmem:[#allocation26 + $0x160] sm:$0xff]
    %v1729 = vld [vmem:[#allocation26 + $0x168] sm:$0xff]
    %v1730 = vld [vmem:[#allocation26 + $0x170] sm:$0xff]
    %v1731 = vld [vmem:[#allocation26 + $0x178] sm:$0xff]
    %v1732 = vld [vmem:[#allocation26 + $0x180] sm:$0xff]
    %v1733 = vld [vmem:[#allocation26 + $0x188] sm:$0xff]
    %v1734 = vld [vmem:[#allocation26 + $0x190] sm:$0xff]
    %v1735 = vld [vmem:[#allocation26 + $0x198] sm:$0xff]
    %v1736 = vld [vmem:[#allocation26 + $0x1a0] sm:$0xff]
    %v1737 = vld [vmem:[#allocation26 + $0x1a8] sm:$0xff]
    %v1738 = vld [vmem:[#allocation26 + $0x1b0] sm:$0xff]
    %v1739 = vld [vmem:[#allocation26 + $0x1b8] sm:$0xff]
    %v1740 = vld [vmem:[#allocation26 + $0x1c0] sm:$0xff]
    %v1741 = vld [vmem:[#allocation26 + $0x1c8] sm:$0xff]
    %v1742 = vld [vmem:[#allocation26 + $0x1d0] sm:$0xff]
    %v1743 = vld [vmem:[#allocation26 + $0x1d8] sm:$0xff]
    %v1744 = vld [vmem:[#allocation26 + $0x1e0] sm:$0xff]
    %v1745 = vld [vmem:[#allocation26 + $0x1e8] sm:$0xff]
    %v1746 = vld [vmem:[#allocation26 + $0x1f0] sm:$0xff]
    %v1747 = vld [vmem:[#allocation26 + $0x1f8] sm:$0xff]
    %v1748 = vld [vmem:[#allocation26 + $0x200] sm:$0xff]
    %v1749 = vld [vmem:[#allocation26 + $0x208] sm:$0xff]
    %v1750 = vld [vmem:[#allocation26 + $0x210] sm:$0xff]
    %v1751 = vld [vmem:[#allocation26 + $0x218] sm:$0xff]
    %v1752 = vld [vmem:[#allocation26 + $0x220] sm:$0xff]
    %v1753 = vld [vmem:[#allocation26 + $0x228] sm:$0xff]
    %v1754 = vld [vmem:[#allocation26 + $0x230] sm:$0xff]
    %v1755 = vld [vmem:[#allocation26 + $0x238] sm:$0xff]
    %v1756 = vld [vmem:[#allocation26 + $0x240] sm:$0xff]
    %v1757 = vld [vmem:[#allocation26 + $0x248] sm:$0xff]
    %v1758 = vld [vmem:[#allocation26 + $0x250] sm:$0xff]
    %v1759 = vld [vmem:[#allocation26 + $0x258] sm:$0xff]
    %v1760 = vld [vmem:[#allocation26 + $0x260] sm:$0xff]
    %v1761 = vld [vmem:[#allocation26 + $0x268] sm:$0xff]
    %v1762 = vld [vmem:[#allocation26 + $0x270] sm:$0xff]
    %v1763 = vld [vmem:[#allocation26 + $0x278] sm:$0xff]
    %v1764 = vld [vmem:[#allocation26 + $0x280] sm:$0xff]
    %v1765 = vld [vmem:[#allocation26 + $0x288] sm:$0xff]
    %v1766 = vld [vmem:[#allocation26 + $0x290] sm:$0xff]
    %v1767 = vld [vmem:[#allocation26 + $0x298] sm:$0xff]
    %v1768 = vld [vmem:[#allocation26 + $0x2a0] sm:$0xff]
    %v1769 = vld [vmem:[#allocation26 + $0x2a8] sm:$0xff]
    %v1770 = vld [vmem:[#allocation26 + $0x2b0] sm:$0xff]
    %v1771 = vld [vmem:[#allocation26 + $0x2b8] sm:$0xff]
    %v1772 = vld [vmem:[#allocation26 + $0x2c0] sm:$0xff]
    %v1773 = vld [vmem:[#allocation26 + $0x2c8] sm:$0xff]
    %v1774 = vld [vmem:[#allocation26 + $0x2d0] sm:$0xff]
    %v1775 = vld [vmem:[#allocation26 + $0x2d8] sm:$0xff]
    %v1776 = vld [vmem:[#allocation26 + $0x2e0] sm:$0xff]
    %v1777 = vld [vmem:[#allocation26 + $0x2e8] sm:$0xff]
    %v1778 = vld [vmem:[#allocation26 + $0x2f0] sm:$0xff]
    %v1779 = vld [vmem:[#allocation26 + $0x2f8] sm:$0xff]
    %v1780 = vld [vmem:[#allocation26 + $0x300] sm:$0xff]
    %v1781 = vld [vmem:[#allocation26 + $0x308] sm:$0xff]
    %v1782 = vld [vmem:[#allocation26 + $0x310] sm:$0xff]
    %v1783 = vld [vmem:[#allocation26 + $0x318] sm:$0xff]
    %v1784 = vld [vmem:[#allocation26 + $0x320] sm:$0xff]
    %v1785 = vld [vmem:[#allocation26 + $0x328] sm:$0xff]
    %v1786 = vld [vmem:[#allocation26 + $0x330] sm:$0xff]
    %v1787 = vld [vmem:[#allocation26 + $0x338] sm:$0xff]
    %v1788 = vld [vmem:[#allocation26 + $0x340] sm:$0xff]
    %v1789 = vld [vmem:[#allocation26 + $0x348] sm:$0xff]
    %v1790 = vld [vmem:[#allocation26 + $0x350] sm:$0xff]
    %v1791 = vld [vmem:[#allocation26 + $0x358] sm:$0xff]
    %v1792 = vld [vmem:[#allocation26 + $0x360] sm:$0xff]
    %v1793 = vld [vmem:[#allocation26 + $0x368] sm:$0xff]
    %v1794 = vld [vmem:[#allocation26 + $0x370] sm:$0xff]
    %v1795 = vld [vmem:[#allocation26 + $0x378] sm:$0xff]
    %v1796 = vld [vmem:[#allocation26 + $0x380] sm:$0xff]
    %v1797 = vld [vmem:[#allocation26 + $0x388] sm:$0xff]
    %v1798 = vld [vmem:[#allocation26 + $0x390] sm:$0xff]
    %v1799 = vld [vmem:[#allocation26 + $0x398] sm:$0xff]
    %v1800 = vld [vmem:[#allocation26 + $0x3a0] sm:$0xff]
    %v1801 = vld [vmem:[#allocation26 + $0x3a8] sm:$0xff]
    %v1802 = vld [vmem:[#allocation26 + $0x3b0] sm:$0xff]
    %v1803 = vld [vmem:[#allocation26 + $0x3b8] sm:$0xff]
    %v1804 = vld [vmem:[#allocation26 + $0x3c0] sm:$0xff]
    %v1805 = vld [vmem:[#allocation26 + $0x3c8] sm:$0xff]
    %v1806 = vld [vmem:[#allocation26 + $0x3d0] sm:$0xff]
    %v1807 = vld [vmem:[#allocation26 + $0x3d8] sm:$0xff]
    %v1808 = vld [vmem:[#allocation26 + $0x3e0] sm:$0xff]
    %v1809 = vld [vmem:[#allocation26 + $0x3e8] sm:$0xff]
    %v1810 = vld [vmem:[#allocation26 + $0x3f0] sm:$0xff]
    %v1811 = vld [vmem:[#allocation26 + $0x3f8] sm:$0xff]
    %v1812 = vld [vmem:[#allocation26 + $0x400] sm:$0xff]
    %v1813 = vld [vmem:[#allocation26 + $0x408] sm:$0xff]
    %v1814 = vld [vmem:[#allocation26 + $0x410] sm:$0xff]
    %v1815 = vld [vmem:[#allocation26 + $0x418] sm:$0xff]
    %v1816 = vld [vmem:[#allocation26 + $0x420] sm:$0xff]
    %v1817 = vld [vmem:[#allocation26 + $0x428] sm:$0xff]
    %v1818 = vld [vmem:[#allocation26 + $0x430] sm:$0xff]
    %v1819 = vld [vmem:[#allocation26 + $0x438] sm:$0xff]
    %v1820 = vld [vmem:[#allocation26 + $0x440] sm:$0xff]
    %v1821 = vld [vmem:[#allocation26 + $0x448] sm:$0xff]
    %v1822 = vld [vmem:[#allocation26 + $0x450] sm:$0xff]
    %v1823 = vld [vmem:[#allocation26 + $0x458] sm:$0xff]
    %v1824 = vld [vmem:[#allocation26 + $0x460] sm:$0xff]
    %v1825 = vld [vmem:[#allocation26 + $0x468] sm:$0xff]
    %v1826 = vld [vmem:[#allocation26 + $0x470] sm:$0xff]
    %v1827 = vld [vmem:[#allocation26 + $0x478] sm:$0xff]
    %v1828 = vld [vmem:[#allocation26 + $0x480] sm:$0xff]
    %v1829 = vld [vmem:[#allocation26 + $0x488] sm:$0xff]
    %v1830 = vld [vmem:[#allocation26 + $0x490] sm:$0xff]
    %v1831 = vld [vmem:[#allocation26 + $0x498] sm:$0xff]
    %v1832 = vld [vmem:[#allocation26 + $0x4a0] sm:$0xff]
    %v1833 = vld [vmem:[#allocation26 + $0x4a8] sm:$0xff]
    %v1834 = vld [vmem:[#allocation26 + $0x4b0] sm:$0xff]
    %v1835 = vld [vmem:[#allocation26 + $0x4b8] sm:$0xff]
    %v1836 = vld [vmem:[#allocation26 + $0x4c0] sm:$0xff]
    %v1837 = vld [vmem:[#allocation26 + $0x4c8] sm:$0xff]
    %v1838 = vld [vmem:[#allocation26 + $0x4d0] sm:$0xff]
    %v1839 = vld [vmem:[#allocation26 + $0x4d8] sm:$0xff]
    %v1840 = vld [vmem:[#allocation26 + $0x4e0] sm:$0xff]
    %v1841 = vld [vmem:[#allocation26 + $0x4e8] sm:$0xff]
    %v1842 = vld [vmem:[#allocation26 + $0x4f0] sm:$0xff]
    %v1843 = vld [vmem:[#allocation26 + $0x4f8] sm:$0xff]
    %v1844 = vld [vmem:[#allocation26 + $0x500] sm:$0xff]
    %v1845 = vld [vmem:[#allocation26 + $0x508] sm:$0xff]
    %v1846 = vld [vmem:[#allocation26 + $0x510] sm:$0xff]
    %v1847 = vld [vmem:[#allocation26 + $0x518] sm:$0xff]
    %v1848 = vld [vmem:[#allocation26 + $0x520] sm:$0xff]
    %v1849 = vld [vmem:[#allocation26 + $0x528] sm:$0xff]
    %v1850 = vld [vmem:[#allocation26 + $0x530] sm:$0xff]
    %v1851 = vld [vmem:[#allocation26 + $0x538] sm:$0xff]
    %v1852 = vld [vmem:[#allocation26 + $0x540] sm:$0xff]
    %v1853 = vld [vmem:[#allocation26 + $0x548] sm:$0xff]
    %v1854 = vld [vmem:[#allocation26 + $0x550] sm:$0xff]
    %v1855 = vld [vmem:[#allocation26 + $0x558] sm:$0xff]
    %v1856 = vld [vmem:[#allocation26 + $0x560] sm:$0xff]
    %v1857 = vld [vmem:[#allocation26 + $0x568] sm:$0xff]
    %v1858 = vld [vmem:[#allocation26 + $0x570] sm:$0xff]
    %v1859 = vld [vmem:[#allocation26 + $0x578] sm:$0xff]
    %v1860 = vld [vmem:[#allocation26 + $0x580] sm:$0xff]
    %v1861 = vld [vmem:[#allocation26 + $0x588] sm:$0xff]
    %v1862 = vld [vmem:[#allocation26 + $0x590] sm:$0xff]
    %v1863 = vld [vmem:[#allocation26 + $0x598] sm:$0xff]
    %v1864 = vld [vmem:[#allocation26 + $0x5a0] sm:$0xff]
    %v1865 = vld [vmem:[#allocation26 + $0x5a8] sm:$0xff]
    %v1866 = vld [vmem:[#allocation26 + $0x5b0] sm:$0xff]
    %v1867 = vld [vmem:[#allocation26 + $0x5b8] sm:$0xff]
    %v1868 = vld [vmem:[#allocation26 + $0x5c0] sm:$0xff]
    %v1869 = vld [vmem:[#allocation26 + $0x5c8] sm:$0xff]
    %v1870 = vld [vmem:[#allocation26 + $0x5d0] sm:$0xff]
    %v1871 = vld [vmem:[#allocation26 + $0x5d8] sm:$0xff]
    %v1872 = vld [vmem:[#allocation26 + $0x5e0] sm:$0xff]
    %v1873 = vld [vmem:[#allocation26 + $0x5e8] sm:$0xff]
    %v1874 = vld [vmem:[#allocation26 + $0x5f0] sm:$0xff]
    %v1875 = vld [vmem:[#allocation26 + $0x5f8] sm:$0xff]
    %v2068 = vunpack.c.l.b16 %v1684
    %v2069 = vunpack.c.h.b16 %v1684
    %v2070 = vunpack.c.l.b16 %v1685
    %v2071 = vunpack.c.h.b16 %v1685
    %v2072 = vunpack.c.l.b16 %v1686
    %v2073 = vunpack.c.h.b16 %v1686
    %v2074 = vunpack.c.l.b16 %v1687
    %v2075 = vunpack.c.h.b16 %v1687
    %v2076 = vunpack.c.l.b16 %v1688
    %v2077 = vunpack.c.h.b16 %v1688
    %v2078 = vunpack.c.l.b16 %v1689
    %v2079 = vunpack.c.h.b16 %v1689
    %v2080 = vunpack.c.l.b16 %v1690
    %v2081 = vunpack.c.h.b16 %v1690
    %v2082 = vunpack.c.l.b16 %v1691
    %v2083 = vunpack.c.h.b16 %v1691
    %v2084 = vunpack.c.l.b16 %v1692
    %v2085 = vunpack.c.h.b16 %v1692
    %v2086 = vunpack.c.l.b16 %v1693
    %v2087 = vunpack.c.h.b16 %v1693
    %v2088 = vunpack.c.l.b16 %v1694
    %v2089 = vunpack.c.h.b16 %v1694
    %v2090 = vunpack.c.l.b16 %v1695
    %v2091 = vunpack.c.h.b16 %v1695
    %v2092 = vunpack.c.l.b16 %v1696
    %v2093 = vunpack.c.h.b16 %v1696
    %v2094 = vunpack.c.l.b16 %v1697
    %v2095 = vunpack.c.h.b16 %v1697
    %v2096 = vunpack.c.l.b16 %v1698
    %v2097 = vunpack.c.h.b16 %v1698
    %v2098 = vunpack.c.l.b16 %v1699
    %v2099 = vunpack.c.h.b16 %v1699
    %v2100 = vunpack.c.l.b16 %v1700
    %v2101 = vunpack.c.h.b16 %v1700
    %v2102 = vunpack.c.l.b16 %v1701
    %v2103 = vunpack.c.h.b16 %v1701
    %v2104 = vunpack.c.l.b16 %v1702
    %v2105 = vunpack.c.h.b16 %v1702
    %v2106 = vunpack.c.l.b16 %v1703
    %v2107 = vunpack.c.h.b16 %v1703
    %v2108 = vunpack.c.l.b16 %v1704
    %v2109 = vunpack.c.h.b16 %v1704
    %v2110 = vunpack.c.l.b16 %v1705
    %v2111 = vunpack.c.h.b16 %v1705
    %v2112 = vunpack.c.l.b16 %v1706
    %v2113 = vunpack.c.h.b16 %v1706
    %v2114 = vunpack.c.l.b16 %v1707
    %v2115 = vunpack.c.h.b16 %v1707
    %v2116 = vunpack.c.l.b16 %v1708
    %v2117 = vunpack.c.h.b16 %v1708
    %v2118 = vunpack.c.l.b16 %v1709
    %v2119 = vunpack.c.h.b16 %v1709
    %v2120 = vunpack.c.l.b16 %v1710
    %v2121 = vunpack.c.h.b16 %v1710
    %v2122 = vunpack.c.l.b16 %v1711
    %v2123 = vunpack.c.h.b16 %v1711
    %v2124 = vunpack.c.l.b16 %v1712
    %v2125 = vunpack.c.h.b16 %v1712
    %v2126 = vunpack.c.l.b16 %v1713
    %v2127 = vunpack.c.h.b16 %v1713
    %v2128 = vunpack.c.l.b16 %v1714
    %v2129 = vunpack.c.h.b16 %v1714
    %v2130 = vunpack.c.l.b16 %v1715
    %v2131 = vunpack.c.h.b16 %v1715
    %v2132 = vunpack.c.l.b16 %v1716
    %v2133 = vunpack.c.h.b16 %v1716
    %v2134 = vunpack.c.l.b16 %v1717
    %v2135 = vunpack.c.h.b16 %v1717
    %v2136 = vunpack.c.l.b16 %v1718
    %v2137 = vunpack.c.h.b16 %v1718
    %v2138 = vunpack.c.l.b16 %v1719
    %v2139 = vunpack.c.h.b16 %v1719
    %v2140 = vunpack.c.l.b16 %v1720
    %v2141 = vunpack.c.h.b16 %v1720
    %v2142 = vunpack.c.l.b16 %v1721
    %v2143 = vunpack.c.h.b16 %v1721
    %v2144 = vunpack.c.l.b16 %v1722
    %v2145 = vunpack.c.h.b16 %v1722
    %v2146 = vunpack.c.l.b16 %v1723
    %v2147 = vunpack.c.h.b16 %v1723
    %v2148 = vunpack.c.l.b16 %v1724
    %v2149 = vunpack.c.h.b16 %v1724
    %v2150 = vunpack.c.l.b16 %v1725
    %v2151 = vunpack.c.h.b16 %v1725
    %v2152 = vunpack.c.l.b16 %v1726
    %v2153 = vunpack.c.h.b16 %v1726
    %v2154 = vunpack.c.l.b16 %v1727
    %v2155 = vunpack.c.h.b16 %v1727
    %v2156 = vunpack.c.l.b16 %v1728
    %v2157 = vunpack.c.h.b16 %v1728
    %v2158 = vunpack.c.l.b16 %v1729
    %v2159 = vunpack.c.h.b16 %v1729
    %v2160 = vunpack.c.l.b16 %v1730
    %v2161 = vunpack.c.h.b16 %v1730
    %v2162 = vunpack.c.l.b16 %v1731
    %v2163 = vunpack.c.h.b16 %v1731
    %v2164 = vunpack.c.l.b16 %v1732
    %v2165 = vunpack.c.h.b16 %v1732
    %v2166 = vunpack.c.l.b16 %v1733
    %v2167 = vunpack.c.h.b16 %v1733
    %v2168 = vunpack.c.l.b16 %v1734
    %v2169 = vunpack.c.h.b16 %v1734
    %v2170 = vunpack.c.l.b16 %v1735
    %v2171 = vunpack.c.h.b16 %v1735
    %v2172 = vunpack.c.l.b16 %v1736
    %v2173 = vunpack.c.h.b16 %v1736
    %v2174 = vunpack.c.l.b16 %v1737
    %v2175 = vunpack.c.h.b16 %v1737
    %v2176 = vunpack.c.l.b16 %v1738
    %v2177 = vunpack.c.h.b16 %v1738
    %v2178 = vunpack.c.l.b16 %v1739
    %v2179 = vunpack.c.h.b16 %v1739
    %v2180 = vunpack.c.l.b16 %v1740
    %v2181 = vunpack.c.h.b16 %v1740
    %v2182 = vunpack.c.l.b16 %v1741
    %v2183 = vunpack.c.h.b16 %v1741
    %v2184 = vunpack.c.l.b16 %v1742
    %v2185 = vunpack.c.h.b16 %v1742
    %v2186 = vunpack.c.l.b16 %v1743
    %v2187 = vunpack.c.h.b16 %v1743
    %v2188 = vunpack.c.l.b16 %v1744
    %v2189 = vunpack.c.h.b16 %v1744
    %v2190 = vunpack.c.l.b16 %v1745
    %v2191 = vunpack.c.h.b16 %v1745
    %v2192 = vunpack.c.l.b16 %v1746
    %v2193 = vunpack.c.h.b16 %v1746
    %v2194 = vunpack.c.l.b16 %v1747
    %v2195 = vunpack.c.h.b16 %v1747
    %v2196 = vunpack.c.l.b16 %v1748
    %v2197 = vunpack.c.h.b16 %v1748
    %v2198 = vunpack.c.l.b16 %v1749
    %v2199 = vunpack.c.h.b16 %v1749
    %v2200 = vunpack.c.l.b16 %v1750
    %v2201 = vunpack.c.h.b16 %v1750
    %v2202 = vunpack.c.l.b16 %v1751
    %v2203 = vunpack.c.h.b16 %v1751
    %v2204 = vunpack.c.l.b16 %v1752
    %v2205 = vunpack.c.h.b16 %v1752
    %v2206 = vunpack.c.l.b16 %v1753
    %v2207 = vunpack.c.h.b16 %v1753
    %v2208 = vunpack.c.l.b16 %v1754
    %v2209 = vunpack.c.h.b16 %v1754
    %v2210 = vunpack.c.l.b16 %v1755
    %v2211 = vunpack.c.h.b16 %v1755
    %v2212 = vunpack.c.l.b16 %v1756
    %v2213 = vunpack.c.h.b16 %v1756
    %v2214 = vunpack.c.l.b16 %v1757
    %v2215 = vunpack.c.h.b16 %v1757
    %v2216 = vunpack.c.l.b16 %v1758
    %v2217 = vunpack.c.h.b16 %v1758
    %v2218 = vunpack.c.l.b16 %v1759
    %v2219 = vunpack.c.h.b16 %v1759
    %v2220 = vunpack.c.l.b16 %v1760
    %v2221 = vunpack.c.h.b16 %v1760
    %v2222 = vunpack.c.l.b16 %v1761
    %v2223 = vunpack.c.h.b16 %v1761
    %v2224 = vunpack.c.l.b16 %v1762
    %v2225 = vunpack.c.h.b16 %v1762
    %v2226 = vunpack.c.l.b16 %v1763
    %v2227 = vunpack.c.h.b16 %v1763
    %v2228 = vunpack.c.l.b16 %v1764
    %v2229 = vunpack.c.h.b16 %v1764
    %v2230 = vunpack.c.l.b16 %v1765
    %v2231 = vunpack.c.h.b16 %v1765
    %v2232 = vunpack.c.l.b16 %v1766
    %v2233 = vunpack.c.h.b16 %v1766
    %v2234 = vunpack.c.l.b16 %v1767
    %v2235 = vunpack.c.h.b16 %v1767
    %v2236 = vunpack.c.l.b16 %v1768
    %v2237 = vunpack.c.h.b16 %v1768
    %v2238 = vunpack.c.l.b16 %v1769
    %v2239 = vunpack.c.h.b16 %v1769
    %v2240 = vunpack.c.l.b16 %v1770
    %v2241 = vunpack.c.h.b16 %v1770
    %v2242 = vunpack.c.l.b16 %v1771
    %v2243 = vunpack.c.h.b16 %v1771
    %v2244 = vunpack.c.l.b16 %v1772
    %v2245 = vunpack.c.h.b16 %v1772
    %v2246 = vunpack.c.l.b16 %v1773
    %v2247 = vunpack.c.h.b16 %v1773
    %v2248 = vunpack.c.l.b16 %v1774
    %v2249 = vunpack.c.h.b16 %v1774
    %v2250 = vunpack.c.l.b16 %v1775
    %v2251 = vunpack.c.h.b16 %v1775
    %v2252 = vunpack.c.l.b16 %v1776
    %v2253 = vunpack.c.h.b16 %v1776
    %v2254 = vunpack.c.l.b16 %v1777
    %v2255 = vunpack.c.h.b16 %v1777
    %v2256 = vunpack.c.l.b16 %v1778
    %v2257 = vunpack.c.h.b16 %v1778
    %v2258 = vunpack.c.l.b16 %v1779
    %v2259 = vunpack.c.h.b16 %v1779
    %v2260 = vunpack.c.l.b16 %v1780
    %v2261 = vunpack.c.h.b16 %v1780
    %v2262 = vunpack.c.l.b16 %v1781
    %v2263 = vunpack.c.h.b16 %v1781
    %v2264 = vunpack.c.l.b16 %v1782
    %v2265 = vunpack.c.h.b16 %v1782
    %v2266 = vunpack.c.l.b16 %v1783
    %v2267 = vunpack.c.h.b16 %v1783
    %v2268 = vunpack.c.l.b16 %v1784
    %v2269 = vunpack.c.h.b16 %v1784
    %v2270 = vunpack.c.l.b16 %v1785
    %v2271 = vunpack.c.h.b16 %v1785
    %v2272 = vunpack.c.l.b16 %v1786
    %v2273 = vunpack.c.h.b16 %v1786
    %v2274 = vunpack.c.l.b16 %v1787
    %v2275 = vunpack.c.h.b16 %v1787
    %v2276 = vunpack.c.l.b16 %v1788
    %v2277 = vunpack.c.h.b16 %v1788
    %v2278 = vunpack.c.l.b16 %v1789
    %v2279 = vunpack.c.h.b16 %v1789
    %v2280 = vunpack.c.l.b16 %v1790
    %v2281 = vunpack.c.h.b16 %v1790
    %v2282 = vunpack.c.l.b16 %v1791
    %v2283 = vunpack.c.h.b16 %v1791
    %v2284 = vunpack.c.l.b16 %v1792
    %v2285 = vunpack.c.h.b16 %v1792
    %v2286 = vunpack.c.l.b16 %v1793
    %v2287 = vunpack.c.h.b16 %v1793
    %v2288 = vunpack.c.l.b16 %v1794
    %v2289 = vunpack.c.h.b16 %v1794
    %v2290 = vunpack.c.l.b16 %v1795
    %v2291 = vunpack.c.h.b16 %v1795
    %v2292 = vunpack.c.l.b16 %v1796
    %v2293 = vunpack.c.h.b16 %v1796
    %v2294 = vunpack.c.l.b16 %v1797
    %v2295 = vunpack.c.h.b16 %v1797
    %v2296 = vunpack.c.l.b16 %v1798
    %v2297 = vunpack.c.h.b16 %v1798
    %v2298 = vunpack.c.l.b16 %v1799
    %v2299 = vunpack.c.h.b16 %v1799
    %v2300 = vunpack.c.l.b16 %v1800
    %v2301 = vunpack.c.h.b16 %v1800
    %v2302 = vunpack.c.l.b16 %v1801
    %v2303 = vunpack.c.h.b16 %v1801
    %v2304 = vunpack.c.l.b16 %v1802
    %v2305 = vunpack.c.h.b16 %v1802
    %v2306 = vunpack.c.l.b16 %v1803
    %v2307 = vunpack.c.h.b16 %v1803
    %v2308 = vunpack.c.l.b16 %v1804
    %v2309 = vunpack.c.h.b16 %v1804
    %v2310 = vunpack.c.l.b16 %v1805
    %v2311 = vunpack.c.h.b16 %v1805
    %v2312 = vunpack.c.l.b16 %v1806
    %v2313 = vunpack.c.h.b16 %v1806
    %v2314 = vunpack.c.l.b16 %v1807
    %v2315 = vunpack.c.h.b16 %v1807
    %v2316 = vunpack.c.l.b16 %v1808
    %v2317 = vunpack.c.h.b16 %v1808
    %v2318 = vunpack.c.l.b16 %v1809
    %v2319 = vunpack.c.h.b16 %v1809
    %v2320 = vunpack.c.l.b16 %v1810
    %v2321 = vunpack.c.h.b16 %v1810
    %v2322 = vunpack.c.l.b16 %v1811
    %v2323 = vunpack.c.h.b16 %v1811
    %v2324 = vunpack.c.l.b16 %v1812
    %v2325 = vunpack.c.h.b16 %v1812
    %v2326 = vunpack.c.l.b16 %v1813
    %v2327 = vunpack.c.h.b16 %v1813
    %v2328 = vunpack.c.l.b16 %v1814
    %v2329 = vunpack.c.h.b16 %v1814
    %v2330 = vunpack.c.l.b16 %v1815
    %v2331 = vunpack.c.h.b16 %v1815
    %v2332 = vunpack.c.l.b16 %v1816
    %v2333 = vunpack.c.h.b16 %v1816
    %v2334 = vunpack.c.l.b16 %v1817
    %v2335 = vunpack.c.h.b16 %v1817
    %v2336 = vunpack.c.l.b16 %v1818
    %v2337 = vunpack.c.h.b16 %v1818
    %v2338 = vunpack.c.l.b16 %v1819
    %v2339 = vunpack.c.h.b16 %v1819
    %v2340 = vunpack.c.l.b16 %v1820
    %v2341 = vunpack.c.h.b16 %v1820
    %v2342 = vunpack.c.l.b16 %v1821
    %v2343 = vunpack.c.h.b16 %v1821
    %v2344 = vunpack.c.l.b16 %v1822
    %v2345 = vunpack.c.h.b16 %v1822
    %v2346 = vunpack.c.l.b16 %v1823
    %v2347 = vunpack.c.h.b16 %v1823
    %v2348 = vunpack.c.l.b16 %v1824
    %v2349 = vunpack.c.h.b16 %v1824
    %v2350 = vunpack.c.l.b16 %v1825
    %v2351 = vunpack.c.h.b16 %v1825
    %v2352 = vunpack.c.l.b16 %v1826
    %v2353 = vunpack.c.h.b16 %v1826
    %v2354 = vunpack.c.l.b16 %v1827
    %v2355 = vunpack.c.h.b16 %v1827
    %v2356 = vunpack.c.l.b16 %v1828
    %v2357 = vunpack.c.h.b16 %v1828
    %v2358 = vunpack.c.l.b16 %v1829
    %v2359 = vunpack.c.h.b16 %v1829
    %v2360 = vunpack.c.l.b16 %v1830
    %v2361 = vunpack.c.h.b16 %v1830
    %v2362 = vunpack.c.l.b16 %v1831
    %v2363 = vunpack.c.h.b16 %v1831
    %v2364 = vunpack.c.l.b16 %v1832
    %v2365 = vunpack.c.h.b16 %v1832
    %v2366 = vunpack.c.l.b16 %v1833
    %v2367 = vunpack.c.h.b16 %v1833
    %v2368 = vunpack.c.l.b16 %v1834
    %v2369 = vunpack.c.h.b16 %v1834
    %v2370 = vunpack.c.l.b16 %v1835
    %v2371 = vunpack.c.h.b16 %v1835
    %v2372 = vunpack.c.l.b16 %v1836
    %v2373 = vunpack.c.h.b16 %v1836
    %v2374 = vunpack.c.l.b16 %v1837
    %v2375 = vunpack.c.h.b16 %v1837
    %v2376 = vunpack.c.l.b16 %v1838
    %v2377 = vunpack.c.h.b16 %v1838
    %v2378 = vunpack.c.l.b16 %v1839
    %v2379 = vunpack.c.h.b16 %v1839
    %v2380 = vunpack.c.l.b16 %v1840
    %v2381 = vunpack.c.h.b16 %v1840
    %v2382 = vunpack.c.l.b16 %v1841
    %v2383 = vunpack.c.h.b16 %v1841
    %v2384 = vunpack.c.l.b16 %v1842
    %v2385 = vunpack.c.h.b16 %v1842
    %v2386 = vunpack.c.l.b16 %v1843
    %v2387 = vunpack.c.h.b16 %v1843
    %v2388 = vunpack.c.l.b16 %v1844
    %v2389 = vunpack.c.h.b16 %v1844
    %v2390 = vunpack.c.l.b16 %v1845
    %v2391 = vunpack.c.h.b16 %v1845
    %v2392 = vunpack.c.l.b16 %v1846
    %v2393 = vunpack.c.h.b16 %v1846
    %v2394 = vunpack.c.l.b16 %v1847
    %v2395 = vunpack.c.h.b16 %v1847
    %v2396 = vunpack.c.l.b16 %v1848
    %v2397 = vunpack.c.h.b16 %v1848
    %v2398 = vunpack.c.l.b16 %v1849
    %v2399 = vunpack.c.h.b16 %v1849
    %v2400 = vunpack.c.l.b16 %v1850
    %v2401 = vunpack.c.h.b16 %v1850
    %v2402 = vunpack.c.l.b16 %v1851
    %v2403 = vunpack.c.h.b16 %v1851
    %v2404 = vunpack.c.l.b16 %v1852
    %v2405 = vunpack.c.h.b16 %v1852
    %v2406 = vunpack.c.l.b16 %v1853
    %v2407 = vunpack.c.h.b16 %v1853
    %v2408 = vunpack.c.l.b16 %v1854
    %v2409 = vunpack.c.h.b16 %v1854
    %v2410 = vunpack.c.l.b16 %v1855
    %v2411 = vunpack.c.h.b16 %v1855
    %v2412 = vunpack.c.l.b16 %v1856
    %v2413 = vunpack.c.h.b16 %v1856
    %v2414 = vunpack.c.l.b16 %v1857
    %v2415 = vunpack.c.h.b16 %v1857
    %v2416 = vunpack.c.l.b16 %v1858
    %v2417 = vunpack.c.h.b16 %v1858
    %v2418 = vunpack.c.l.b16 %v1859
    %v2419 = vunpack.c.h.b16 %v1859
    %v2420 = vunpack.c.l.b16 %v1860
    %v2421 = vunpack.c.h.b16 %v1860
    %v2422 = vunpack.c.l.b16 %v1861
    %v2423 = vunpack.c.h.b16 %v1861
    %v2424 = vunpack.c.l.b16 %v1862
    %v2425 = vunpack.c.h.b16 %v1862
    %v2426 = vunpack.c.l.b16 %v1863
    %v2427 = vunpack.c.h.b16 %v1863
    %v2428 = vunpack.c.l.b16 %v1864
    %v2429 = vunpack.c.h.b16 %v1864
    %v2430 = vunpack.c.l.b16 %v1865
    %v2431 = vunpack.c.h.b16 %v1865
    %v2432 = vunpack.c.l.b16 %v1866
    %v2433 = vunpack.c.h.b16 %v1866
    %v2434 = vunpack.c.l.b16 %v1867
    %v2435 = vunpack.c.h.b16 %v1867
    %v2436 = vunpack.c.l.b16 %v1868
    %v2437 = vunpack.c.h.b16 %v1868
    %v2438 = vunpack.c.l.b16 %v1869
    %v2439 = vunpack.c.h.b16 %v1869
    %v2440 = vunpack.c.l.b16 %v1870
    %v2441 = vunpack.c.h.b16 %v1870
    %v2442 = vunpack.c.l.b16 %v1871
    %v2443 = vunpack.c.h.b16 %v1871
    %v2444 = vunpack.c.l.b16 %v1872
    %v2445 = vunpack.c.h.b16 %v1872
    %v2446 = vunpack.c.l.b16 %v1873
    %v2447 = vunpack.c.h.b16 %v1873
    %v2448 = vunpack.c.l.b16 %v1874
    %v2449 = vunpack.c.h.b16 %v1874
    %v2450 = vunpack.c.l.b16 %v1875
    %v2451 = vunpack.c.h.b16 %v1875
    %v2452 = vpack.c.b16 %v2092, %v2068
    %v2453 = vpack.c.b16 %v2093, %v2069
    %v2454 = vpack.c.b16 %v2094, %v2070
    %v2455 = vpack.c.b16 %v2095, %v2071
    %v2456 = vpack.c.b16 %v2096, %v2072
    %v2457 = vpack.c.b16 %v2097, %v2073
    %v2458 = vpack.c.b16 %v2098, %v2074
    %v2459 = vpack.c.b16 %v2099, %v2075
    %v2460 = vpack.c.b16 %v2100, %v2076
    %v2461 = vpack.c.b16 %v2101, %v2077
    %v2462 = vpack.c.b16 %v2102, %v2078
    %v2463 = vpack.c.b16 %v2103, %v2079
    %v2464 = vpack.c.b16 %v2104, %v2080
    %v2465 = vpack.c.b16 %v2105, %v2081
    %v2466 = vpack.c.b16 %v2106, %v2082
    %v2467 = vpack.c.b16 %v2107, %v2083
    %v2468 = vpack.c.b16 %v2108, %v2084
    %v2469 = vpack.c.b16 %v2109, %v2085
    %v2470 = vpack.c.b16 %v2110, %v2086
    %v2471 = vpack.c.b16 %v2111, %v2087
    %v2472 = vpack.c.b16 %v2112, %v2088
    %v2473 = vpack.c.b16 %v2113, %v2089
    %v2474 = vpack.c.b16 %v2114, %v2090
    %v2475 = vpack.c.b16 %v2115, %v2091
    %v2476 = vpack.c.b16 %v2140, %v2116
    %v2477 = vpack.c.b16 %v2141, %v2117
    %v2478 = vpack.c.b16 %v2142, %v2118
    %v2479 = vpack.c.b16 %v2143, %v2119
    %v2480 = vpack.c.b16 %v2144, %v2120
    %v2481 = vpack.c.b16 %v2145, %v2121
    %v2482 = vpack.c.b16 %v2146, %v2122
    %v2483 = vpack.c.b16 %v2147, %v2123
    %v2484 = vpack.c.b16 %v2148, %v2124
    %v2485 = vpack.c.b16 %v2149, %v2125
    %v2486 = vpack.c.b16 %v2150, %v2126
    %v2487 = vpack.c.b16 %v2151, %v2127
    %v2488 = vpack.c.b16 %v2152, %v2128
    %v2489 = vpack.c.b16 %v2153, %v2129
    %v2490 = vpack.c.b16 %v2154, %v2130
    %v2491 = vpack.c.b16 %v2155, %v2131
    %v2492 = vpack.c.b16 %v2156, %v2132
    %v2493 = vpack.c.b16 %v2157, %v2133
    %v2494 = vpack.c.b16 %v2158, %v2134
    %v2495 = vpack.c.b16 %v2159, %v2135
    %v2496 = vpack.c.b16 %v2160, %v2136
    %v2497 = vpack.c.b16 %v2161, %v2137
    %v2498 = vpack.c.b16 %v2162, %v2138
    %v2499 = vpack.c.b16 %v2163, %v2139
    %v2500 = vpack.c.b16 %v2188, %v2164
    %v2501 = vpack.c.b16 %v2189, %v2165
    %v2502 = vpack.c.b16 %v2190, %v2166
    %v2503 = vpack.c.b16 %v2191, %v2167
    %v2504 = vpack.c.b16 %v2192, %v2168
    %v2505 = vpack.c.b16 %v2193, %v2169
    %v2506 = vpack.c.b16 %v2194, %v2170
    %v2507 = vpack.c.b16 %v2195, %v2171
    %v2508 = vpack.c.b16 %v2196, %v2172
    %v2509 = vpack.c.b16 %v2197, %v2173
    %v2510 = vpack.c.b16 %v2198, %v2174
    %v2511 = vpack.c.b16 %v2199, %v2175
    %v2512 = vpack.c.b16 %v2200, %v2176
    %v2513 = vpack.c.b16 %v2201, %v2177
    %v2514 = vpack.c.b16 %v2202, %v2178
    %v2515 = vpack.c.b16 %v2203, %v2179
    %v2516 = vpack.c.b16 %v2204, %v2180
    %v2517 = vpack.c.b16 %v2205, %v2181
    %v2518 = vpack.c.b16 %v2206, %v2182
    %v2519 = vpack.c.b16 %v2207, %v2183
    %v2520 = vpack.c.b16 %v2208, %v2184
    %v2521 = vpack.c.b16 %v2209, %v2185
    %v2522 = vpack.c.b16 %v2210, %v2186
    %v2523 = vpack.c.b16 %v2211, %v2187
    %v2524 = vpack.c.b16 %v2236, %v2212
    %v2525 = vpack.c.b16 %v2237, %v2213
    %v2526 = vpack.c.b16 %v2238, %v2214
    %v2527 = vpack.c.b16 %v2239, %v2215
    %v2528 = vpack.c.b16 %v2240, %v2216
    %v2529 = vpack.c.b16 %v2241, %v2217
    %v2530 = vpack.c.b16 %v2242, %v2218
    %v2531 = vpack.c.b16 %v2243, %v2219
    %v2532 = vpack.c.b16 %v2244, %v2220
    %v2533 = vpack.c.b16 %v2245, %v2221
    %v2534 = vpack.c.b16 %v2246, %v2222
    %v2535 = vpack.c.b16 %v2247, %v2223
    %v2536 = vpack.c.b16 %v2248, %v2224
    %v2537 = vpack.c.b16 %v2249, %v2225
    %v2538 = vpack.c.b16 %v2250, %v2226
    %v2539 = vpack.c.b16 %v2251, %v2227
    %v2540 = vpack.c.b16 %v2252, %v2228
    %v2541 = vpack.c.b16 %v2253, %v2229
    %v2542 = vpack.c.b16 %v2254, %v2230
    %v2543 = vpack.c.b16 %v2255, %v2231
    %v2544 = vpack.c.b16 %v2256, %v2232
    %v2545 = vpack.c.b16 %v2257, %v2233
    %v2546 = vpack.c.b16 %v2258, %v2234
    %v2547 = vpack.c.b16 %v2259, %v2235
    %v2548 = vpack.c.b16 %v2284, %v2260
    %v2549 = vpack.c.b16 %v2285, %v2261
    %v2550 = vpack.c.b16 %v2286, %v2262
    %v2551 = vpack.c.b16 %v2287, %v2263
    %v2552 = vpack.c.b16 %v2288, %v2264
    %v2553 = vpack.c.b16 %v2289, %v2265
    %v2554 = vpack.c.b16 %v2290, %v2266
    %v2555 = vpack.c.b16 %v2291, %v2267
    %v2556 = vpack.c.b16 %v2292, %v2268
    %v2557 = vpack.c.b16 %v2293, %v2269
    %v2558 = vpack.c.b16 %v2294, %v2270
    %v2559 = vpack.c.b16 %v2295, %v2271
    %v2560 = vpack.c.b16 %v2296, %v2272
    %v2561 = vpack.c.b16 %v2297, %v2273
    %v2562 = vpack.c.b16 %v2298, %v2274
    %v2563 = vpack.c.b16 %v2299, %v2275
    %v2564 = vpack.c.b16 %v2300, %v2276
    %v2565 = vpack.c.b16 %v2301, %v2277
    %v2566 = vpack.c.b16 %v2302, %v2278
    %v2567 = vpack.c.b16 %v2303, %v2279
    %v2568 = vpack.c.b16 %v2304, %v2280
    %v2569 = vpack.c.b16 %v2305, %v2281
    %v2570 = vpack.c.b16 %v2306, %v2282
    %v2571 = vpack.c.b16 %v2307, %v2283
    %v2572 = vpack.c.b16 %v2332, %v2308
    %v2573 = vpack.c.b16 %v2333, %v2309
    %v2574 = vpack.c.b16 %v2334, %v2310
    %v2575 = vpack.c.b16 %v2335, %v2311
    %v2576 = vpack.c.b16 %v2336, %v2312
    %v2577 = vpack.c.b16 %v2337, %v2313
    %v2578 = vpack.c.b16 %v2338, %v2314
    %v2579 = vpack.c.b16 %v2339, %v2315
    %v2580 = vpack.c.b16 %v2340, %v2316
    %v2581 = vpack.c.b16 %v2341, %v2317
    %v2582 = vpack.c.b16 %v2342, %v2318
    %v2583 = vpack.c.b16 %v2343, %v2319
    %v2584 = vpack.c.b16 %v2344, %v2320
    %v2585 = vpack.c.b16 %v2345, %v2321
    %v2586 = vpack.c.b16 %v2346, %v2322
    %v2587 = vpack.c.b16 %v2347, %v2323
    %v2588 = vpack.c.b16 %v2348, %v2324
    %v2589 = vpack.c.b16 %v2349, %v2325
    %v2590 = vpack.c.b16 %v2350, %v2326
    %v2591 = vpack.c.b16 %v2351, %v2327
    %v2592 = vpack.c.b16 %v2352, %v2328
    %v2593 = vpack.c.b16 %v2353, %v2329
    %v2594 = vpack.c.b16 %v2354, %v2330
    %v2595 = vpack.c.b16 %v2355, %v2331
    %v2596 = vpack.c.b16 %v2380, %v2356
    %v2597 = vpack.c.b16 %v2381, %v2357
    %v2598 = vpack.c.b16 %v2382, %v2358
    %v2599 = vpack.c.b16 %v2383, %v2359
    %v2600 = vpack.c.b16 %v2384, %v2360
    %v2601 = vpack.c.b16 %v2385, %v2361
    %v2602 = vpack.c.b16 %v2386, %v2362
    %v2603 = vpack.c.b16 %v2387, %v2363
    %v2604 = vpack.c.b16 %v2388, %v2364
    %v2605 = vpack.c.b16 %v2389, %v2365
    %v2606 = vpack.c.b16 %v2390, %v2366
    %v2607 = vpack.c.b16 %v2391, %v2367
    %v2608 = vpack.c.b16 %v2392, %v2368
    %v2609 = vpack.c.b16 %v2393, %v2369
    %v2610 = vpack.c.b16 %v2394, %v2370
    %v2611 = vpack.c.b16 %v2395, %v2371
    %v2612 = vpack.c.b16 %v2396, %v2372
    %v2613 = vpack.c.b16 %v2397, %v2373
    %v2614 = vpack.c.b16 %v2398, %v2374
    %v2615 = vpack.c.b16 %v2399, %v2375
    %v2616 = vpack.c.b16 %v2400, %v2376
    %v2617 = vpack.c.b16 %v2401, %v2377
    %v2618 = vpack.c.b16 %v2402, %v2378
    %v2619 = vpack.c.b16 %v2403, %v2379
    %v2620 = vpack.c.b16 %v2428, %v2404
    %v2621 = vpack.c.b16 %v2429, %v2405
    %v2622 = vpack.c.b16 %v2430, %v2406
    %v2623 = vpack.c.b16 %v2431, %v2407
    %v2624 = vpack.c.b16 %v2432, %v2408
    %v2625 = vpack.c.b16 %v2433, %v2409
    %v2626 = vpack.c.b16 %v2434, %v2410
    %v2627 = vpack.c.b16 %v2435, %v2411
    %v2628 = vpack.c.b16 %v2436, %v2412
    %v2629 = vpack.c.b16 %v2437, %v2413
    %v2630 = vpack.c.b16 %v2438, %v2414
    %v2631 = vpack.c.b16 %v2439, %v2415
    %v2632 = vpack.c.b16 %v2440, %v2416
    %v2633 = vpack.c.b16 %v2441, %v2417
    %v2634 = vpack.c.b16 %v2442, %v2418
    %v2635 = vpack.c.b16 %v2443, %v2419
    %v2636 = vpack.c.b16 %v2444, %v2420
    %v2637 = vpack.c.b16 %v2445, %v2421
    %v2638 = vpack.c.b16 %v2446, %v2422
    %v2639 = vpack.c.b16 %v2447, %v2423
    %v2640 = vpack.c.b16 %v2448, %v2424
    %v2641 = vpack.c.b16 %v2449, %v2425
    %v2642 = vpack.c.b16 %v2450, %v2426
    %v2643 = vpack.c.b16 %v2451, %v2427
    %2836 = vmatprep.subr.bf16.mxu0 %v2621
    %2837 = vmatpush1.bf16.msra.mxu0 %v2620
    %2838 = vmatprep.subr.bf16.mxu0 %v2597
    %2839 = vmatpush1.bf16.msra.mxu0 %v2596
    %2840 = vmatprep.subr.bf16.mxu0 %v2573
    %2841 = vmatpush1.bf16.msra.mxu0 %v2572
    %2842 = vmatprep.subr.bf16.mxu0 %v2549
    %2843 = vmatpush1.bf16.msra.mxu0 %v2548
    %2844 = vmatprep.subr.bf16.mxu0 %v2525
    %2845 = vmatpush1.bf16.msra.mxu0 %v2524
    %2846 = vmatprep.subr.bf16.mxu0 %v2501
    %2847 = vmatpush1.bf16.msra.mxu0 %v2500
    %2848 = vmatprep.subr.bf16.mxu0 %v2477
    %2849 = vmatpush1.bf16.msra.mxu0 %v2476
    %2850 = vmatprep.subr.bf16.mxu0 %v2453
    %2851 = vmatpush1.bf16.msra.mxu0 %v2452
    %2852 = vmatprep.subr.bf16.mxu0 0
    %2853 = vmatpush2.bf16.msra.mxu0 0
    %2854 = vmatprep.subr.bf16.mxu0 0
    %2855 = vmatpush2.bf16.msra.mxu0 0
    %2856 = vmatprep.subr.bf16.mxu0 0
    %2857 = vmatpush2.bf16.msra.mxu0 0
    %2858 = vmatprep.subr.bf16.mxu0 0
    %2859 = vmatpush2.bf16.msra.mxu0 0
    %2860 = vmatprep.subr.bf16.mxu0 0
    %2861 = vmatpush2.bf16.msra.mxu0 0
    %2862 = vmatprep.subr.bf16.mxu0 0
    %2863 = vmatpush2.bf16.msra.mxu0 0
    %2864 = vmatprep.subr.bf16.mxu0 0
    %2865 = vmatpush2.bf16.msra.mxu0 0
    %2866 = vmatprep.subr.bf16.mxu0 0
    %2867 = vmatpush2.bf16.msra.mxu0 0
    %2868 = vmatprep.mubr.bf16.mxu0 0
    %2869 = vmatmul.mubr.bf16.gmra.mxu0 %v1682
    %v2870 = vpop.f32.mrf.mxu0
    %v2871 = vadd.f32 0.0, %v2870
    %v2872 = vpop.f32.mrf.mxu0
    %v2873 = vadd.f32 0.0, %v2872
    %v2874 = vpop.f32.mrf.mxu0
    %v2875 = vadd.f32 0.0, %v2874
    %v2876 = vpop.f32.mrf.mxu0
    %v2877 = vadd.f32 0.0, %v2876
    %2878 = vmatprep.mubr.bf16.mxu0 0
    %2879 = vmatmul.mubr.bf16.gmra.mxu0 %v1683
    %v2880 = vpop.f32.mrf.mxu0
    %v2881 = vadd.f32 0.0, %v2880
    %v2882 = vpop.f32.mrf.mxu0
    %v2883 = vadd.f32 0.0, %v2882
    %v2884 = vpop.f32.mrf.mxu0
    %v2885 = vadd.f32 0.0, %v2884
    %v2886 = vpop.f32.mrf.mxu0
    %v2887 = vadd.f32 0.0, %v2886
    %2888 = vdwg.mxu0
    %2889 = vmatprep.subr.bf16.mxu0 %v2623
    %2890 = vmatpush1.bf16.msra.mxu0 %v2622
    %2891 = vmatprep.subr.bf16.mxu0 %v2599
    %2892 = vmatpush1.bf16.msra.mxu0 %v2598
    %2893 = vmatprep.subr.bf16.mxu0 %v2575
    %2894 = vmatpush1.bf16.msra.mxu0 %v2574
    %2895 = vmatprep.subr.bf16.mxu0 %v2551
    %2896 = vmatpush1.bf16.msra.mxu0 %v2550
    %2897 = vmatprep.subr.bf16.mxu0 %v2527
    %2898 = vmatpush1.bf16.msra.mxu0 %v2526
    %2899 = vmatprep.subr.bf16.mxu0 %v2503
    %2900 = vmatpush1.bf16.msra.mxu0 %v2502
    %2901 = vmatprep.subr.bf16.mxu0 %v2479
    %2902 = vmatpush1.bf16.msra.mxu0 %v2478
    %2903 = vmatprep.subr.bf16.mxu0 %v2455
    %2904 = vmatpush1.bf16.msra.mxu0 %v2454
    %2905 = vmatprep.subr.bf16.mxu0 0
    %2906 = vmatpush2.bf16.msra.mxu0 0
    %2907 = vmatprep.subr.bf16.mxu0 0
    %2908 = vmatpush2.bf16.msra.mxu0 0
    %2909 = vmatprep.subr.bf16.mxu0 0
    %2910 = vmatpush2.bf16.msra.mxu0 0
    %2911 = vmatprep.subr.bf16.mxu0 0
    %2912 = vmatpush2.bf16.msra.mxu0 0
    %2913 = vmatprep.subr.bf16.mxu0 0
    %2914 = vmatpush2.bf16.msra.mxu0 0
    %2915 = vmatprep.subr.bf16.mxu0 0
    %2916 = vmatpush2.bf16.msra.mxu0 0
    %2917 = vmatprep.subr.bf16.mxu0 0
    %2918 = vmatpush2.bf16.msra.mxu0 0
    %2919 = vmatprep.subr.bf16.mxu0 0
    %2920 = vmatpush2.bf16.msra.mxu0 0
    %2921 = vmatprep.mubr.bf16.mxu0 0
    %2922 = vmatmul.mubr.bf16.gmra.mxu0 %v1682
    %v2923 = vpop.f32.mrf.mxu0
    %v2924 = vadd.f32 0.0, %v2923
    %v2925 = vpop.f32.mrf.mxu0
    %v2926 = vadd.f32 0.0, %v2925
    %v2927 = vpop.f32.mrf.mxu0
    %v2928 = vadd.f32 0.0, %v2927
    %v2929 = vpop.f32.mrf.mxu0
    %v2930 = vadd.f32 0.0, %v2929
    %2931 = vmatprep.mubr.bf16.mxu0 0
    %2932 = vmatmul.mubr.bf16.gmra.mxu0 %v1683
    %v2933 = vpop.f32.mrf.mxu0
    %v2934 = vadd.f32 0.0, %v2933
    %v2935 = vpop.f32.mrf.mxu0
    %v2936 = vadd.f32 0.0, %v2935
    %v2937 = vpop.f32.mrf.mxu0
    %v2938 = vadd.f32 0.0, %v2937
    %v2939 = vpop.f32.mrf.mxu0
    %v2940 = vadd.f32 0.0, %v2939
    %2941 = vdwg.mxu0
    %2942 = vmatprep.subr.bf16.mxu0 %v2625
    %2943 = vmatpush1.bf16.msra.mxu0 %v2624
    %2944 = vmatprep.subr.bf16.mxu0 %v2601
    %2945 = vmatpush1.bf16.msra.mxu0 %v2600
    %2946 = vmatprep.subr.bf16.mxu0 %v2577
    %2947 = vmatpush1.bf16.msra.mxu0 %v2576
    %2948 = vmatprep.subr.bf16.mxu0 %v2553
    %2949 = vmatpush1.bf16.msra.mxu0 %v2552
    %2950 = vmatprep.subr.bf16.mxu0 %v2529
    %2951 = vmatpush1.bf16.msra.mxu0 %v2528
    %2952 = vmatprep.subr.bf16.mxu0 %v2505
    %2953 = vmatpush1.bf16.msra.mxu0 %v2504
    %2954 = vmatprep.subr.bf16.mxu0 %v2481
    %2955 = vmatpush1.bf16.msra.mxu0 %v2480
    %2956 = vmatprep.subr.bf16.mxu0 %v2457
    %2957 = vmatpush1.bf16.msra.mxu0 %v2456
    %2958 = vmatprep.subr.bf16.mxu0 0
    %2959 = vmatpush2.bf16.msra.mxu0 0
    %2960 = vmatprep.subr.bf16.mxu0 0
    %2961 = vmatpush2.bf16.msra.mxu0 0
    %2962 = vmatprep.subr.bf16.mxu0 0
    %2963 = vmatpush2.bf16.msra.mxu0 0
    %2964 = vmatprep.subr.bf16.mxu0 0
    %2965 = vmatpush2.bf16.msra.mxu0 0
    %2966 = vmatprep.subr.bf16.mxu0 0
    %2967 = vmatpush2.bf16.msra.mxu0 0
    %2968 = vmatprep.subr.bf16.mxu0 0
    %2969 = vmatpush2.bf16.msra.mxu0 0
    %2970 = vmatprep.subr.bf16.mxu0 0
    %2971 = vmatpush2.bf16.msra.mxu0 0
    %2972 = vmatprep.subr.bf16.mxu0 0
    %2973 = vmatpush2.bf16.msra.mxu0 0
    %2974 = vmatprep.mubr.bf16.mxu0 0
    %2975 = vmatmul.mubr.bf16.gmra.mxu0 %v1682
    %v2976 = vpop.f32.mrf.mxu0
    %v2977 = vadd.f32 0.0, %v2976
    %v2978 = vpop.f32.mrf.mxu0
    %v2979 = vadd.f32 0.0, %v2978
    %v2980 = vpop.f32.mrf.mxu0
    %v2981 = vadd.f32 0.0, %v2980
    %v2982 = vpop.f32.mrf.mxu0
    %v2983 = vadd.f32 0.0, %v2982
    %2984 = vmatprep.mubr.bf16.mxu0 0
    %2985 = vmatmul.mubr.bf16.gmra.mxu0 %v1683
    %v2986 = vpop.f32.mrf.mxu0
    %v2987 = vadd.f32 0.0, %v2986
    %v2988 = vpop.f32.mrf.mxu0
    %v2989 = vadd.f32 0.0, %v2988
    %v2990 = vpop.f32.mrf.mxu0
    %v2991 = vadd.f32 0.0, %v2990
    %v2992 = vpop.f32.mrf.mxu0
    %v2993 = vadd.f32 0.0, %v2992
    %2994 = vdwg.mxu0
    %2995 = vmatprep.subr.bf16.mxu0 %v2627
    %2996 = vmatpush1.bf16.msra.mxu0 %v2626
    %2997 = vmatprep.subr.bf16.mxu0 %v2603
    %2998 = vmatpush1.bf16.msra.mxu0 %v2602
    %2999 = vmatprep.subr.bf16.mxu0 %v2579
    %3000 = vmatpush1.bf16.msra.mxu0 %v2578
    %3001 = vmatprep.subr.bf16.mxu0 %v2555
    %3002 = vmatpush1.bf16.msra.mxu0 %v2554
    %3003 = vmatprep.subr.bf16.mxu0 %v2531
    %3004 = vmatpush1.bf16.msra.mxu0 %v2530
    %3005 = vmatprep.subr.bf16.mxu0 %v2507
    %3006 = vmatpush1.bf16.msra.mxu0 %v2506
    %3007 = vmatprep.subr.bf16.mxu0 %v2483
    %3008 = vmatpush1.bf16.msra.mxu0 %v2482
    %3009 = vmatprep.subr.bf16.mxu0 %v2459
    %3010 = vmatpush1.bf16.msra.mxu0 %v2458
    %3011 = vmatprep.subr.bf16.mxu0 0
    %3012 = vmatpush2.bf16.msra.mxu0 0
    %3013 = vmatprep.subr.bf16.mxu0 0
    %3014 = vmatpush2.bf16.msra.mxu0 0
    %3015 = vmatprep.subr.bf16.mxu0 0
    %3016 = vmatpush2.bf16.msra.mxu0 0
    %3017 = vmatprep.subr.bf16.mxu0 0
    %3018 = vmatpush2.bf16.msra.mxu0 0
    %3019 = vmatprep.subr.bf16.mxu0 0
    %3020 = vmatpush2.bf16.msra.mxu0 0
    %3021 = vmatprep.subr.bf16.mxu0 0
    %3022 = vmatpush2.bf16.msra.mxu0 0
    %3023 = vmatprep.subr.bf16.mxu0 0
    %3024 = vmatpush2.bf16.msra.mxu0 0
    %3025 = vmatprep.subr.bf16.mxu0 0
    %3026 = vmatpush2.bf16.msra.mxu0 0
    %3027 = vmatprep.mubr.bf16.mxu0 0
    %3028 = vmatmul.mubr.bf16.gmra.mxu0 %v1682
    %v3029 = vpop.f32.mrf.mxu0
    %v3030 = vadd.f32 0.0, %v3029
    %v3031 = vpop.f32.mrf.mxu0
    %v3032 = vadd.f32 0.0, %v3031
    %v3033 = vpop.f32.mrf.mxu0
    %v3034 = vadd.f32 0.0, %v3033
    %v3035 = vpop.f32.mrf.mxu0
    %v3036 = vadd.f32 0.0, %v3035
    %3037 = vmatprep.mubr.bf16.mxu0 0
    %3038 = vmatmul.mubr.bf16.gmra.mxu0 %v1683
    %v3039 = vpop.f32.mrf.mxu0
    %v3040 = vadd.f32 0.0, %v3039
    %v3041 = vpop.f32.mrf.mxu0
    %v3042 = vadd.f32 0.0, %v3041
    %v3043 = vpop.f32.mrf.mxu0
    %v3044 = vadd.f32 0.0, %v3043
    %v3045 = vpop.f32.mrf.mxu0
    %v3046 = vadd.f32 0.0, %v3045
    %3047 = vdwg.mxu0
    %3048 = vmatprep.subr.bf16.mxu0 %v2629
    %3049 = vmatpush1.bf16.msra.mxu0 %v2628
    %3050 = vmatprep.subr.bf16.mxu0 %v2605
    %3051 = vmatpush1.bf16.msra.mxu0 %v2604
    %3052 = vmatprep.subr.bf16.mxu0 %v2581
    %3053 = vmatpush1.bf16.msra.mxu0 %v2580
    %3054 = vmatprep.subr.bf16.mxu0 %v2557
    %3055 = vmatpush1.bf16.msra.mxu0 %v2556
    %3056 = vmatprep.subr.bf16.mxu0 %v2533
    %3057 = vmatpush1.bf16.msra.mxu0 %v2532
    %3058 = vmatprep.subr.bf16.mxu0 %v2509
    %3059 = vmatpush1.bf16.msra.mxu0 %v2508
    %3060 = vmatprep.subr.bf16.mxu0 %v2485
    %3061 = vmatpush1.bf16.msra.mxu0 %v2484
    %3062 = vmatprep.subr.bf16.mxu0 %v2461
    %3063 = vmatpush1.bf16.msra.mxu0 %v2460
    %3064 = vmatprep.subr.bf16.mxu0 0
    %3065 = vmatpush2.bf16.msra.mxu0 0
    %3066 = vmatprep.subr.bf16.mxu0 0
    %3067 = vmatpush2.bf16.msra.mxu0 0
    %3068 = vmatprep.subr.bf16.mxu0 0
    %3069 = vmatpush2.bf16.msra.mxu0 0
    %3070 = vmatprep.subr.bf16.mxu0 0
    %3071 = vmatpush2.bf16.msra.mxu0 0
    %3072 = vmatprep.subr.bf16.mxu0 0
    %3073 = vmatpush2.bf16.msra.mxu0 0
    %3074 = vmatprep.subr.bf16.mxu0 0
    %3075 = vmatpush2.bf16.msra.mxu0 0
    %3076 = vmatprep.subr.bf16.mxu0 0
    %3077 = vmatpush2.bf16.msra.mxu0 0
    %3078 = vmatprep.subr.bf16.mxu0 0
    %3079 = vmatpush2.bf16.msra.mxu0 0
    %3080 = vmatprep.mubr.bf16.mxu0 0
    %3081 = vmatmul.mubr.bf16.gmra.mxu0 %v1682
    %v3082 = vpop.f32.mrf.mxu0
    %v3083 = vadd.f32 0.0, %v3082
    %v3084 = vpop.f32.mrf.mxu0
    %v3085 = vadd.f32 0.0, %v3084
    %v3086 = vpop.f32.mrf.mxu0
    %v3087 = vadd.f32 0.0, %v3086
    %v3088 = vpop.f32.mrf.mxu0
    %v3089 = vadd.f32 0.0, %v3088
    %3090 = vmatprep.mubr.bf16.mxu0 0
    %3091 = vmatmul.mubr.bf16.gmra.mxu0 %v1683
    %v3092 = vpop.f32.mrf.mxu0
    %v3093 = vadd.f32 0.0, %v3092
    %v3094 = vpop.f32.mrf.mxu0
    %v3095 = vadd.f32 0.0, %v3094
    %v3096 = vpop.f32.mrf.mxu0
    %v3097 = vadd.f32 0.0, %v3096
    %v3098 = vpop.f32.mrf.mxu0
    %v3099 = vadd.f32 0.0, %v3098
    %3100 = vdwg.mxu0
    %3101 = vmatprep.subr.bf16.mxu0 %v2631
    %3102 = vmatpush1.bf16.msra.mxu0 %v2630
    %3103 = vmatprep.subr.bf16.mxu0 %v2607
    %3104 = vmatpush1.bf16.msra.mxu0 %v2606
    %3105 = vmatprep.subr.bf16.mxu0 %v2583
    %3106 = vmatpush1.bf16.msra.mxu0 %v2582
    %3107 = vmatprep.subr.bf16.mxu0 %v2559
    %3108 = vmatpush1.bf16.msra.mxu0 %v2558
    %3109 = vmatprep.subr.bf16.mxu0 %v2535
    %3110 = vmatpush1.bf16.msra.mxu0 %v2534
    %3111 = vmatprep.subr.bf16.mxu0 %v2511
    %3112 = vmatpush1.bf16.msra.mxu0 %v2510
    %3113 = vmatprep.subr.bf16.mxu0 %v2487
    %3114 = vmatpush1.bf16.msra.mxu0 %v2486
    %3115 = vmatprep.subr.bf16.mxu0 %v2463
    %3116 = vmatpush1.bf16.msra.mxu0 %v2462
    %3117 = vmatprep.subr.bf16.mxu0 0
    %3118 = vmatpush2.bf16.msra.mxu0 0
    %3119 = vmatprep.subr.bf16.mxu0 0
    %3120 = vmatpush2.bf16.msra.mxu0 0
    %3121 = vmatprep.subr.bf16.mxu0 0
    %3122 = vmatpush2.bf16.msra.mxu0 0
    %3123 = vmatprep.subr.bf16.mxu0 0
    %3124 = vmatpush2.bf16.msra.mxu0 0
    %3125 = vmatprep.subr.bf16.mxu0 0
    %3126 = vmatpush2.bf16.msra.mxu0 0
    %3127 = vmatprep.subr.bf16.mxu0 0
    %3128 = vmatpush2.bf16.msra.mxu0 0
    %3129 = vmatprep.subr.bf16.mxu0 0
    %3130 = vmatpush2.bf16.msra.mxu0 0
    %3131 = vmatprep.subr.bf16.mxu0 0
    %3132 = vmatpush2.bf16.msra.mxu0 0
    %3133 = vmatprep.mubr.bf16.mxu0 0
    %3134 = vmatmul.mubr.bf16.gmra.mxu0 %v1682
    %v3135 = vpop.f32.mrf.mxu0
    %v3136 = vadd.f32 0.0, %v3135
    %v3137 = vpop.f32.mrf.mxu0
    %v3138 = vadd.f32 0.0, %v3137
    %v3139 = vpop.f32.mrf.mxu0
    %v3140 = vadd.f32 0.0, %v3139
    %v3141 = vpop.f32.mrf.mxu0
    %v3142 = vadd.f32 0.0, %v3141
    %3143 = vmatprep.mubr.bf16.mxu0 0
    %3144 = vmatmul.mubr.bf16.gmra.mxu0 %v1683
    %v3145 = vpop.f32.mrf.mxu0
    %v3146 = vadd.f32 0.0, %v3145
    %v3147 = vpop.f32.mrf.mxu0
    %v3148 = vadd.f32 0.0, %v3147
    %v3149 = vpop.f32.mrf.mxu0
    %v3150 = vadd.f32 0.0, %v3149
    %v3151 = vpop.f32.mrf.mxu0
    %v3152 = vadd.f32 0.0, %v3151
    %3153 = vdwg.mxu0
    %3154 = vmatprep.subr.bf16.mxu0 %v2633
    %3155 = vmatpush1.bf16.msra.mxu0 %v2632
    %3156 = vmatprep.subr.bf16.mxu0 %v2609
    %3157 = vmatpush1.bf16.msra.mxu0 %v2608
    %3158 = vmatprep.subr.bf16.mxu0 %v2585
    %3159 = vmatpush1.bf16.msra.mxu0 %v2584
    %3160 = vmatprep.subr.bf16.mxu0 %v2561
    %3161 = vmatpush1.bf16.msra.mxu0 %v2560
    %3162 = vmatprep.subr.bf16.mxu0 %v2537
    %3163 = vmatpush1.bf16.msra.mxu0 %v2536
    %3164 = vmatprep.subr.bf16.mxu0 %v2513
    %3165 = vmatpush1.bf16.msra.mxu0 %v2512
    %3166 = vmatprep.subr.bf16.mxu0 %v2489
    %3167 = vmatpush1.bf16.msra.mxu0 %v2488
    %3168 = vmatprep.subr.bf16.mxu0 %v2465
    %3169 = vmatpush1.bf16.msra.mxu0 %v2464
    %3170 = vmatprep.subr.bf16.mxu0 0
    %3171 = vmatpush2.bf16.msra.mxu0 0
    %3172 = vmatprep.subr.bf16.mxu0 0
    %3173 = vmatpush2.bf16.msra.mxu0 0
    %3174 = vmatprep.subr.bf16.mxu0 0
    %3175 = vmatpush2.bf16.msra.mxu0 0
    %3176 = vmatprep.subr.bf16.mxu0 0
    %3177 = vmatpush2.bf16.msra.mxu0 0
    %3178 = vmatprep.subr.bf16.mxu0 0
    %3179 = vmatpush2.bf16.msra.mxu0 0
    %3180 = vmatprep.subr.bf16.mxu0 0
    %3181 = vmatpush2.bf16.msra.mxu0 0
    %3182 = vmatprep.subr.bf16.mxu0 0
    %3183 = vmatpush2.bf16.msra.mxu0 0
    %3184 = vmatprep.subr.bf16.mxu0 0
    %3185 = vmatpush2.bf16.msra.mxu0 0
    %3186 = vmatprep.mubr.bf16.mxu0 0
    %3187 = vmatmul.mubr.bf16.gmra.mxu0 %v1682
    %v3188 = vpop.f32.mrf.mxu0
    %v3189 = vadd.f32 0.0, %v3188
    %v3190 = vpop.f32.mrf.mxu0
    %v3191 = vadd.f32 0.0, %v3190
    %v3192 = vpop.f32.mrf.mxu0
    %v3193 = vadd.f32 0.0, %v3192
    %v3194 = vpop.f32.mrf.mxu0
    %v3195 = vadd.f32 0.0, %v3194
    %3196 = vmatprep.mubr.bf16.mxu0 0
    %3197 = vmatmul.mubr.bf16.gmra.mxu0 %v1683
    %v3198 = vpop.f32.mrf.mxu0
    %v3199 = vadd.f32 0.0, %v3198
    %v3200 = vpop.f32.mrf.mxu0
    %v3201 = vadd.f32 0.0, %v3200
    %v3202 = vpop.f32.mrf.mxu0
    %v3203 = vadd.f32 0.0, %v3202
    %v3204 = vpop.f32.mrf.mxu0
    %v3205 = vadd.f32 0.0, %v3204
    %3206 = vdwg.mxu0
    %3207 = vmatprep.subr.bf16.mxu0 %v2635
    %3208 = vmatpush1.bf16.msra.mxu0 %v2634
    %3209 = vmatprep.subr.bf16.mxu0 %v2611
    %3210 = vmatpush1.bf16.msra.mxu0 %v2610
    %3211 = vmatprep.subr.bf16.mxu0 %v2587
    %3212 = vmatpush1.bf16.msra.mxu0 %v2586
    %3213 = vmatprep.subr.bf16.mxu0 %v2563
    %3214 = vmatpush1.bf16.msra.mxu0 %v2562
    %3215 = vmatprep.subr.bf16.mxu0 %v2539
    %3216 = vmatpush1.bf16.msra.mxu0 %v2538
    %3217 = vmatprep.subr.bf16.mxu0 %v2515
    %3218 = vmatpush1.bf16.msra.mxu0 %v2514
    %3219 = vmatprep.subr.bf16.mxu0 %v2491
    %3220 = vmatpush1.bf16.msra.mxu0 %v2490
    %3221 = vmatprep.subr.bf16.mxu0 %v2467
    %3222 = vmatpush1.bf16.msra.mxu0 %v2466
    %3223 = vmatprep.subr.bf16.mxu0 0
    %3224 = vmatpush2.bf16.msra.mxu0 0
    %3225 = vmatprep.subr.bf16.mxu0 0
    %3226 = vmatpush2.bf16.msra.mxu0 0
    %3227 = vmatprep.subr.bf16.mxu0 0
    %3228 = vmatpush2.bf16.msra.mxu0 0
    %3229 = vmatprep.subr.bf16.mxu0 0
    %3230 = vmatpush2.bf16.msra.mxu0 0
    %3231 = vmatprep.subr.bf16.mxu0 0
    %3232 = vmatpush2.bf16.msra.mxu0 0
    %3233 = vmatprep.subr.bf16.mxu0 0
    %3234 = vmatpush2.bf16.msra.mxu0 0
    %3235 = vmatprep.subr.bf16.mxu0 0
    %3236 = vmatpush2.bf16.msra.mxu0 0
    %3237 = vmatprep.subr.bf16.mxu0 0
    %3238 = vmatpush2.bf16.msra.mxu0 0
    %3239 = vmatprep.mubr.bf16.mxu0 0
    %3240 = vmatmul.mubr.bf16.gmra.mxu0 %v1682
    %v3241 = vpop.f32.mrf.mxu0
    %v3242 = vadd.f32 0.0, %v3241
    %v3243 = vpop.f32.mrf.mxu0
    %v3244 = vadd.f32 0.0, %v3243
    %v3245 = vpop.f32.mrf.mxu0
    %v3246 = vadd.f32 0.0, %v3245
    %v3247 = vpop.f32.mrf.mxu0
    %v3248 = vadd.f32 0.0, %v3247
    %3249 = vmatprep.mubr.bf16.mxu0 0
    %3250 = vmatmul.mubr.bf16.gmra.mxu0 %v1683
    %v3251 = vpop.f32.mrf.mxu0
    %v3252 = vadd.f32 0.0, %v3251
    %v3253 = vpop.f32.mrf.mxu0
    %v3254 = vadd.f32 0.0, %v3253
    %v3255 = vpop.f32.mrf.mxu0
    %v3256 = vadd.f32 0.0, %v3255
    %v3257 = vpop.f32.mrf.mxu0
    %v3258 = vadd.f32 0.0, %v3257
    %3259 = vdwg.mxu0
    %3260 = vmatprep.subr.bf16.mxu0 %v2637
    %3261 = vmatpush1.bf16.msra.mxu0 %v2636
    %3262 = vmatprep.subr.bf16.mxu0 %v2613
    %3263 = vmatpush1.bf16.msra.mxu0 %v2612
    %3264 = vmatprep.subr.bf16.mxu0 %v2589
    %3265 = vmatpush1.bf16.msra.mxu0 %v2588
    %3266 = vmatprep.subr.bf16.mxu0 %v2565
    %3267 = vmatpush1.bf16.msra.mxu0 %v2564
    %3268 = vmatprep.subr.bf16.mxu0 %v2541
    %3269 = vmatpush1.bf16.msra.mxu0 %v2540
    %3270 = vmatprep.subr.bf16.mxu0 %v2517
    %3271 = vmatpush1.bf16.msra.mxu0 %v2516
    %3272 = vmatprep.subr.bf16.mxu0 %v2493
    %3273 = vmatpush1.bf16.msra.mxu0 %v2492
    %3274 = vmatprep.subr.bf16.mxu0 %v2469
    %3275 = vmatpush1.bf16.msra.mxu0 %v2468
    %3276 = vmatprep.subr.bf16.mxu0 0
    %3277 = vmatpush2.bf16.msra.mxu0 0
    %3278 = vmatprep.subr.bf16.mxu0 0
    %3279 = vmatpush2.bf16.msra.mxu0 0
    %3280 = vmatprep.subr.bf16.mxu0 0
    %3281 = vmatpush2.bf16.msra.mxu0 0
    %3282 = vmatprep.subr.bf16.mxu0 0
    %3283 = vmatpush2.bf16.msra.mxu0 0
    %3284 = vmatprep.subr.bf16.mxu0 0
    %3285 = vmatpush2.bf16.msra.mxu0 0
    %3286 = vmatprep.subr.bf16.mxu0 0
    %3287 = vmatpush2.bf16.msra.mxu0 0
    %3288 = vmatprep.subr.bf16.mxu0 0
    %3289 = vmatpush2.bf16.msra.mxu0 0
    %3290 = vmatprep.subr.bf16.mxu0 0
    %3291 = vmatpush2.bf16.msra.mxu0 0
    %3292 = vmatprep.mubr.bf16.mxu0 0
    %3293 = vmatmul.mubr.bf16.gmra.mxu0 %v1682
    %v3294 = vpop.f32.mrf.mxu0
    %v3295 = vadd.f32 0.0, %v3294
    %v3296 = vpop.f32.mrf.mxu0
    %v3297 = vadd.f32 0.0, %v3296
    %v3298 = vpop.f32.mrf.mxu0
    %v3299 = vadd.f32 0.0, %v3298
    %v3300 = vpop.f32.mrf.mxu0
    %v3301 = vadd.f32 0.0, %v3300
    %3302 = vmatprep.mubr.bf16.mxu0 0
    %3303 = vmatmul.mubr.bf16.gmra.mxu0 %v1683
    %v3304 = vpop.f32.mrf.mxu0
    %v3305 = vadd.f32 0.0, %v3304
    %v3306 = vpop.f32.mrf.mxu0
    %v3307 = vadd.f32 0.0, %v3306
    %v3308 = vpop.f32.mrf.mxu0
    %v3309 = vadd.f32 0.0, %v3308
    %v3310 = vpop.f32.mrf.mxu0
    %v3311 = vadd.f32 0.0, %v3310
    %3312 = vdwg.mxu0
    %3313 = vmatprep.subr.bf16.mxu0 %v2639
    %3314 = vmatpush1.bf16.msra.mxu0 %v2638
    %3315 = vmatprep.subr.bf16.mxu0 %v2615
    %3316 = vmatpush1.bf16.msra.mxu0 %v2614
    %3317 = vmatprep.subr.bf16.mxu0 %v2591
    %3318 = vmatpush1.bf16.msra.mxu0 %v2590
    %3319 = vmatprep.subr.bf16.mxu0 %v2567
    %3320 = vmatpush1.bf16.msra.mxu0 %v2566
    %3321 = vmatprep.subr.bf16.mxu0 %v2543
    %3322 = vmatpush1.bf16.msra.mxu0 %v2542
    %3323 = vmatprep.subr.bf16.mxu0 %v2519
    %3324 = vmatpush1.bf16.msra.mxu0 %v2518
    %3325 = vmatprep.subr.bf16.mxu0 %v2495
    %3326 = vmatpush1.bf16.msra.mxu0 %v2494
    %3327 = vmatprep.subr.bf16.mxu0 %v2471
    %3328 = vmatpush1.bf16.msra.mxu0 %v2470
    %3329 = vmatprep.subr.bf16.mxu0 0
    %3330 = vmatpush2.bf16.msra.mxu0 0
    %3331 = vmatprep.subr.bf16.mxu0 0
    %3332 = vmatpush2.bf16.msra.mxu0 0
    %3333 = vmatprep.subr.bf16.mxu0 0
    %3334 = vmatpush2.bf16.msra.mxu0 0
    %3335 = vmatprep.subr.bf16.mxu0 0
    %3336 = vmatpush2.bf16.msra.mxu0 0
    %3337 = vmatprep.subr.bf16.mxu0 0
    %3338 = vmatpush2.bf16.msra.mxu0 0
    %3339 = vmatprep.subr.bf16.mxu0 0
    %3340 = vmatpush2.bf16.msra.mxu0 0
    %3341 = vmatprep.subr.bf16.mxu0 0
    %3342 = vmatpush2.bf16.msra.mxu0 0
    %3343 = vmatprep.subr.bf16.mxu0 0
    %3344 = vmatpush2.bf16.msra.mxu0 0
    %3345 = vmatprep.mubr.bf16.mxu0 0
    %3346 = vmatmul.mubr.bf16.gmra.mxu0 %v1682
    %v3347 = vpop.f32.mrf.mxu0
    %v3348 = vadd.f32 0.0, %v3347
    %v3349 = vpop.f32.mrf.mxu0
    %v3350 = vadd.f32 0.0, %v3349
    %v3351 = vpop.f32.mrf.mxu0
    %v3352 = vadd.f32 0.0, %v3351
    %v3353 = vpop.f32.mrf.mxu0
    %v3354 = vadd.f32 0.0, %v3353
    %3355 = vmatprep.mubr.bf16.mxu0 0
    %3356 = vmatmul.mubr.bf16.gmra.mxu0 %v1683
    %v3357 = vpop.f32.mrf.mxu0
    %v3358 = vadd.f32 0.0, %v3357
    %v3359 = vpop.f32.mrf.mxu0
    %v3360 = vadd.f32 0.0, %v3359
    %v3361 = vpop.f32.mrf.mxu0
    %v3362 = vadd.f32 0.0, %v3361
    %v3363 = vpop.f32.mrf.mxu0
    %v3364 = vadd.f32 0.0, %v3363
    %3365 = vdwg.mxu0
    %3366 = vmatprep.subr.bf16.mxu0 %v2641
    %3367 = vmatpush1.bf16.msra.mxu0 %v2640
    %3368 = vmatprep.subr.bf16.mxu0 %v2617
    %3369 = vmatpush1.bf16.msra.mxu0 %v2616
    %3370 = vmatprep.subr.bf16.mxu0 %v2593
    %3371 = vmatpush1.bf16.msra.mxu0 %v2592
    %3372 = vmatprep.subr.bf16.mxu0 %v2569
    %3373 = vmatpush1.bf16.msra.mxu0 %v2568
    %3374 = vmatprep.subr.bf16.mxu0 %v2545
    %3375 = vmatpush1.bf16.msra.mxu0 %v2544
    %3376 = vmatprep.subr.bf16.mxu0 %v2521
    %3377 = vmatpush1.bf16.msra.mxu0 %v2520
    %3378 = vmatprep.subr.bf16.mxu0 %v2497
    %3379 = vmatpush1.bf16.msra.mxu0 %v2496
    %3380 = vmatprep.subr.bf16.mxu0 %v2473
    %3381 = vmatpush1.bf16.msra.mxu0 %v2472
    %3382 = vmatprep.subr.bf16.mxu0 0
    %3383 = vmatpush2.bf16.msra.mxu0 0
    %3384 = vmatprep.subr.bf16.mxu0 0
    %3385 = vmatpush2.bf16.msra.mxu0 0
    %3386 = vmatprep.subr.bf16.mxu0 0
    %3387 = vmatpush2.bf16.msra.mxu0 0
    %3388 = vmatprep.subr.bf16.mxu0 0
    %3389 = vmatpush2.bf16.msra.mxu0 0
    %3390 = vmatprep.subr.bf16.mxu0 0
    %3391 = vmatpush2.bf16.msra.mxu0 0
    %3392 = vmatprep.subr.bf16.mxu0 0
    %3393 = vmatpush2.bf16.msra.mxu0 0
    %3394 = vmatprep.subr.bf16.mxu0 0
    %3395 = vmatpush2.bf16.msra.mxu0 0
    %3396 = vmatprep.subr.bf16.mxu0 0
    %3397 = vmatpush2.bf16.msra.mxu0 0
    %3398 = vmatprep.mubr.bf16.mxu0 0
    %3399 = vmatmul.mubr.bf16.gmra.mxu0 %v1682
    %v3400 = vpop.f32.mrf.mxu0
    %v3401 = vadd.f32 0.0, %v3400
    %v3402 = vpop.f32.mrf.mxu0
    %v3403 = vadd.f32 0.0, %v3402
    %v3404 = vpop.f32.mrf.mxu0
    %v3405 = vadd.f32 0.0, %v3404
    %v3406 = vpop.f32.mrf.mxu0
    %v3407 = vadd.f32 0.0, %v3406
    %3408 = vmatprep.mubr.bf16.mxu0 0
    %3409 = vmatmul.mubr.bf16.gmra.mxu0 %v1683
    %v3410 = vpop.f32.mrf.mxu0
    %v3411 = vadd.f32 0.0, %v3410
    %v3412 = vpop.f32.mrf.mxu0
    %v3413 = vadd.f32 0.0, %v3412
    %v3414 = vpop.f32.mrf.mxu0
    %v3415 = vadd.f32 0.0, %v3414
    %v3416 = vpop.f32.mrf.mxu0
    %v3417 = vadd.f32 0.0, %v3416
    %3418 = vdwg.mxu0
    %3419 = vmatprep.subr.bf16.mxu0 %v2643
    %3420 = vmatpush1.bf16.msra.mxu0 %v2642
    %3421 = vmatprep.subr.bf16.mxu0 %v2619
    %3422 = vmatpush1.bf16.msra.mxu0 %v2618
    %3423 = vmatprep.subr.bf16.mxu0 %v2595
    %3424 = vmatpush1.bf16.msra.mxu0 %v2594
    %3425 = vmatprep.subr.bf16.mxu0 %v2571
    %3426 = vmatpush1.bf16.msra.mxu0 %v2570
    %3427 = vmatprep.subr.bf16.mxu0 %v2547
    %3428 = vmatpush1.bf16.msra.mxu0 %v2546
    %3429 = vmatprep.subr.bf16.mxu0 %v2523
    %3430 = vmatpush1.bf16.msra.mxu0 %v2522
    %3431 = vmatprep.subr.bf16.mxu0 %v2499
    %3432 = vmatpush1.bf16.msra.mxu0 %v2498
    %3433 = vmatprep.subr.bf16.mxu0 %v2475
    %3434 = vmatpush1.bf16.msra.mxu0 %v2474
    %3435 = vmatprep.subr.bf16.mxu0 0
    %3436 = vmatpush2.bf16.msra.mxu0 0
    %3437 = vmatprep.subr.bf16.mxu0 0
    %3438 = vmatpush2.bf16.msra.mxu0 0
    %3439 = vmatprep.subr.bf16.mxu0 0
    %3440 = vmatpush2.bf16.msra.mxu0 0
    %3441 = vmatprep.subr.bf16.mxu0 0
    %3442 = vmatpush2.bf16.msra.mxu0 0
    %3443 = vmatprep.subr.bf16.mxu0 0
    %3444 = vmatpush2.bf16.msra.mxu0 0
    %3445 = vmatprep.subr.bf16.mxu0 0
    %3446 = vmatpush2.bf16.msra.mxu0 0
    %3447 = vmatprep.subr.bf16.mxu0 0
    %3448 = vmatpush2.bf16.msra.mxu0 0
    %3449 = vmatprep.subr.bf16.mxu0 0
    %3450 = vmatpush2.bf16.msra.mxu0 0
    %3451 = vmatprep.mubr.bf16.mxu0 0
    %3452 = vmatmul.mubr.bf16.gmra.mxu0 %v1682
    %v3453 = vpop.f32.mrf.mxu0
    %v3454 = vadd.f32 0.0, %v3453
    %v3455 = vpop.f32.mrf.mxu0
    %v3456 = vadd.f32 0.0, %v3455
    %v3457 = vpop.f32.mrf.mxu0
    %v3458 = vadd.f32 0.0, %v3457
    %v3459 = vpop.f32.mrf.mxu0
    %v3460 = vadd.f32 0.0, %v3459
    %3461 = vmatprep.mubr.bf16.mxu0 0
    %3462 = vmatmul.mubr.bf16.gmra.mxu0 %v1683
    %v3463 = vpop.f32.mrf.mxu0
    %v3464 = vadd.f32 0.0, %v3463
    %v3465 = vpop.f32.mrf.mxu0
    %v3466 = vadd.f32 0.0, %v3465
    %v3467 = vpop.f32.mrf.mxu0
    %v3468 = vadd.f32 0.0, %v3467
    %v3469 = vpop.f32.mrf.mxu0
    %v3470 = vadd.f32 0.0, %v3469
    %3471 = vdwg.mxu0
    %vm3480 = vcmask 1046528
    %v3481 = vrot.slane %v2924, 1
    %v3482 = vrot.slane %v2928, 1
    %v3483 = vsel %vm3480, %v3481, %v3482
    %v3484 = vrot.slane %v2926, 1
    %v3485 = vrot.slane %v2930, 1
    %v3486 = vsel %vm3480, %v3484, %v3485
    %v3487 = vrot.slane %v2934, 1
    %v3488 = vrot.slane %v2938, 1
    %v3489 = vsel %vm3480, %v3487, %v3488
    %v3490 = vrot.slane %v2936, 1
    %v3491 = vrot.slane %v2940, 1
    %v3492 = vsel %vm3480, %v3490, %v3491
    %v3501 = vadd.f32 %v2871, %v3483
    %v3502 = vadd.f32 %v2873, %v3486
    %v3503 = vadd.f32 %v2875, %v3482
    %v3504 = vadd.f32 %v2877, %v3485
    %v3505 = vadd.f32 %v2881, %v3489
    %v3506 = vadd.f32 %v2883, %v3492
    %v3507 = vadd.f32 %v2885, %v3488
    %v3508 = vadd.f32 %v2887, %v3491
    %vm3517 = vcmask 1045504
    %v3518 = vrot.slane %v2977, 2
    %v3519 = vrot.slane %v2981, 2
    %v3520 = vsel %vm3517, %v3518, %v3519
    %v3521 = vrot.slane %v2979, 2
    %v3522 = vrot.slane %v2983, 2
    %v3523 = vsel %vm3517, %v3521, %v3522
    %v3524 = vrot.slane %v2987, 2
    %v3525 = vrot.slane %v2991, 2
    %v3526 = vsel %vm3517, %v3524, %v3525
    %v3527 = vrot.slane %v2989, 2
    %v3528 = vrot.slane %v2993, 2
    %v3529 = vsel %vm3517, %v3527, %v3528
    %v3538 = vadd.f32 %v3501, %v3520
    %v3539 = vadd.f32 %v3502, %v3523
    %v3540 = vadd.f32 %v3503, %v3519
    %v3541 = vadd.f32 %v3504, %v3522
    %v3542 = vadd.f32 %v3505, %v3526
    %v3543 = vadd.f32 %v3506, %v3529
    %v3544 = vadd.f32 %v3507, %v3525
    %v3545 = vadd.f32 %v3508, %v3528
    %v3546 = vld [vmem:[#allocation28] sm:$0x3]
    %v3548 = vlaneseq
    %v3549 = vshrl.u32 %v3548, 7
    %v3550 = vsub.s32 0, %v3549
    %v3551 = vrot.slane %v3546, %v3550
    %v3552 = vlaneseq
    %v3553 = vshrl.u32 %v3552, 7
    %v3554 = vsub.s32 1, %v3553
    %v3555 = vrot.slane %v3546, %v3554
    %v3558 = vadd.f32 %v3538, %v3551
    %v3559 = vadd.f32 %v3539, %v3555
    %v3560 = vadd.f32 %v3540, %v3551
    %v3561 = vadd.f32 %v3541, %v3555
    %v3562 = vadd.f32 %v3542, %v3551
    %v3563 = vadd.f32 %v3543, %v3555
    %v3564 = vadd.f32 %v3544, %v3551
    %v3565 = vadd.f32 %v3545, %v3555
    %v3566 = vmax.f32 %v3558, 0.0
    %v3567 = vmax.f32 %v3559, 0.0
    %v3568 = vmax.f32 %v3560, 0.0
    %v3569 = vmax.f32 %v3561, 0.0
    %v3570 = vmax.f32 %v3562, 0.0
    %v3571 = vmax.f32 %v3563, 0.0
    %v3572 = vmax.f32 %v3564, 0.0
    %v3573 = vmax.f32 %v3565, 0.0
    %v3574 = vsel %vm3517, %v3568, -inf
    %v3575 = vmax.f32 %v3566, %v3574
    %v3576 = vrot.slane %v3575, 4
    %v3577 = vmax.f32 %v3575, %v3576
    %v3578 = vrot.slane %v3577, 2
    %v3579 = vmax.f32 %v3577, %v3578
    %v3580 = vrot.slane %v3579, 1
    %v3581 = vmax.f32 %v3579, %v3580
    %v3582 = vsel %vm3517, %v3569, -inf
    %v3583 = vmax.f32 %v3567, %v3582
    %v3584 = vrot.slane %v3583, 4
    %v3585 = vmax.f32 %v3583, %v3584
    %v3586 = vrot.slane %v3585, 2
    %v3587 = vmax.f32 %v3585, %v3586
    %v3588 = vrot.slane %v3587, 1
    %v3589 = vmax.f32 %v3587, %v3588
    %v3590 = vsel %vm3517, %v3572, -inf
    %v3591 = vmax.f32 %v3570, %v3590
    %v3592 = vrot.slane %v3591, 4
    %v3593 = vmax.f32 %v3591, %v3592
    %v3594 = vrot.slane %v3593, 2
    %v3595 = vmax.f32 %v3593, %v3594
    %v3596 = vrot.slane %v3595, 1
    %v3597 = vmax.f32 %v3595, %v3596
    %v3598 = vsel %vm3517, %v3573, -inf
    %v3599 = vmax.f32 %v3571, %v3598
    %v3600 = vrot.slane %v3599, 4
    %v3601 = vmax.f32 %v3599, %v3600
    %v3602 = vrot.slane %v3601, 2
    %v3603 = vmax.f32 %v3601, %v3602
    %v3604 = vrot.slane %v3603, 1
    %v3605 = vmax.f32 %v3603, %v3604
    %v3614 = vrot.slane %v3083, 1
    %v3615 = vrot.slane %v3087, 1
    %v3616 = vsel %vm3480, %v3614, %v3615
    %v3617 = vrot.slane %v3085, 1
    %v3618 = vrot.slane %v3089, 1
    %v3619 = vsel %vm3480, %v3617, %v3618
    %v3620 = vrot.slane %v3093, 1
    %v3621 = vrot.slane %v3097, 1
    %v3622 = vsel %vm3480, %v3620, %v3621
    %v3623 = vrot.slane %v3095, 1
    %v3624 = vrot.slane %v3099, 1
    %v3625 = vsel %vm3480, %v3623, %v3624
    %v3634 = vadd.f32 %v3030, %v3616
    %v3635 = vadd.f32 %v3032, %v3619
    %v3636 = vadd.f32 %v3034, %v3615
    %v3637 = vadd.f32 %v3036, %v3618
    %v3638 = vadd.f32 %v3040, %v3622
    %v3639 = vadd.f32 %v3042, %v3625
    %v3640 = vadd.f32 %v3044, %v3621
    %v3641 = vadd.f32 %v3046, %v3624
    %v3650 = vrot.slane %v3136, 2
    %v3651 = vrot.slane %v3140, 2
    %v3652 = vsel %vm3517, %v3650, %v3651
    %v3653 = vrot.slane %v3138, 2
    %v3654 = vrot.slane %v3142, 2
    %v3655 = vsel %vm3517, %v3653, %v3654
    %v3656 = vrot.slane %v3146, 2
    %v3657 = vrot.slane %v3150, 2
    %v3658 = vsel %vm3517, %v3656, %v3657
    %v3659 = vrot.slane %v3148, 2
    %v3660 = vrot.slane %v3152, 2
    %v3661 = vsel %vm3517, %v3659, %v3660
    %v3670 = vadd.f32 %v3634, %v3652
    %v3671 = vadd.f32 %v3635, %v3655
    %v3672 = vadd.f32 %v3636, %v3651
    %v3673 = vadd.f32 %v3637, %v3654
    %v3674 = vadd.f32 %v3638, %v3658
    %v3675 = vadd.f32 %v3639, %v3661
    %v3676 = vadd.f32 %v3640, %v3657
    %v3677 = vadd.f32 %v3641, %v3660
    %vm3686 = vcmask 1044480
    %v3687 = vrot.slane %v3189, 3
    %v3688 = vrot.slane %v3193, 3
    %v3689 = vsel %vm3686, %v3687, %v3688
    %v3690 = vrot.slane %v3191, 3
    %v3691 = vrot.slane %v3195, 3
    %v3692 = vsel %vm3686, %v3690, %v3691
    %v3693 = vrot.slane %v3199, 3
    %v3694 = vrot.slane %v3203, 3
    %v3695 = vsel %vm3686, %v3693, %v3694
    %v3696 = vrot.slane %v3201, 3
    %v3697 = vrot.slane %v3205, 3
    %v3698 = vsel %vm3686, %v3696, %v3697
    %v3707 = vadd.f32 %v3670, %v3689
    %v3708 = vadd.f32 %v3671, %v3692
    %v3709 = vadd.f32 %v3672, %v3688
    %v3710 = vadd.f32 %v3673, %v3691
    %v3711 = vadd.f32 %v3674, %v3695
    %v3712 = vadd.f32 %v3675, %v3698
    %v3713 = vadd.f32 %v3676, %v3694
    %v3714 = vadd.f32 %v3677, %v3697
    %v3715 = vld [vmem:[#allocation29] sm:$0x3]
    %v3717 = vlaneseq
    %v3718 = vshrl.u32 %v3717, 7
    %v3719 = vsub.s32 0, %v3718
    %v3720 = vrot.slane %v3715, %v3719
    %v3721 = vlaneseq
    %v3722 = vshrl.u32 %v3721, 7
    %v3723 = vsub.s32 1, %v3722
    %v3724 = vrot.slane %v3715, %v3723
    %v3727 = vadd.f32 %v3707, %v3720
    %v3728 = vadd.f32 %v3708, %v3724
    %v3729 = vadd.f32 %v3709, %v3720
    %v3730 = vadd.f32 %v3710, %v3724
    %v3731 = vadd.f32 %v3711, %v3720
    %v3732 = vadd.f32 %v3712, %v3724
    %v3733 = vadd.f32 %v3713, %v3720
    %v3734 = vadd.f32 %v3714, %v3724
    %v3735 = vmax.f32 %v3727, 0.0
    %v3736 = vmax.f32 %v3728, 0.0
    %v3737 = vmax.f32 %v3729, 0.0
    %v3738 = vmax.f32 %v3730, 0.0
    %v3739 = vmax.f32 %v3731, 0.0
    %v3740 = vmax.f32 %v3732, 0.0
    %v3741 = vmax.f32 %v3733, 0.0
    %v3742 = vmax.f32 %v3734, 0.0
    %v3743 = vsel %vm3686, %v3737, -inf
    %v3744 = vmax.f32 %v3735, %v3743
    %v3745 = vrot.slane %v3744, 4
    %v3746 = vmax.f32 %v3744, %v3745
    %v3747 = vrot.slane %v3746, 2
    %v3748 = vmax.f32 %v3746, %v3747
    %v3749 = vrot.slane %v3748, 1
    %v3750 = vmax.f32 %v3748, %v3749
    %v3751 = vsel %vm3686, %v3738, -inf
    %v3752 = vmax.f32 %v3736, %v3751
    %v3753 = vrot.slane %v3752, 4
    %v3754 = vmax.f32 %v3752, %v3753
    %v3755 = vrot.slane %v3754, 2
    %v3756 = vmax.f32 %v3754, %v3755
    %v3757 = vrot.slane %v3756, 1
    %v3758 = vmax.f32 %v3756, %v3757
    %v3759 = vsel %vm3686, %v3741, -inf
    %v3760 = vmax.f32 %v3739, %v3759
    %v3761 = vrot.slane %v3760, 4
    %v3762 = vmax.f32 %v3760, %v3761
    %v3763 = vrot.slane %v3762, 2
    %v3764 = vmax.f32 %v3762, %v3763
    %v3765 = vrot.slane %v3764, 1
    %v3766 = vmax.f32 %v3764, %v3765
    %v3767 = vsel %vm3686, %v3742, -inf
    %v3768 = vmax.f32 %v3740, %v3767
    %v3769 = vrot.slane %v3768, 4
    %v3770 = vmax.f32 %v3768, %v3769
    %v3771 = vrot.slane %v3770, 2
    %v3772 = vmax.f32 %v3770, %v3771
    %v3773 = vrot.slane %v3772, 1
    %v3774 = vmax.f32 %v3772, %v3773
    %v3783 = vrot.slane %v3295, 1
    %v3784 = vrot.slane %v3299, 1
    %v3785 = vsel %vm3480, %v3783, %v3784
    %v3786 = vrot.slane %v3297, 1
    %v3787 = vrot.slane %v3301, 1
    %v3788 = vsel %vm3480, %v3786, %v3787
    %v3789 = vrot.slane %v3305, 1
    %v3790 = vrot.slane %v3309, 1
    %v3791 = vsel %vm3480, %v3789, %v3790
    %v3792 = vrot.slane %v3307, 1
    %v3793 = vrot.slane %v3311, 1
    %v3794 = vsel %vm3480, %v3792, %v3793
    %v3803 = vadd.f32 %v3242, %v3785
    %v3804 = vadd.f32 %v3244, %v3788
    %v3805 = vadd.f32 %v3246, %v3784
    %v3806 = vadd.f32 %v3248, %v3787
    %v3807 = vadd.f32 %v3252, %v3791
    %v3808 = vadd.f32 %v3254, %v3794
    %v3809 = vadd.f32 %v3256, %v3790
    %v3810 = vadd.f32 %v3258, %v3793
    %v3819 = vrot.slane %v3348, 2
    %v3820 = vrot.slane %v3352, 2
    %v3821 = vsel %vm3517, %v3819, %v3820
    %v3822 = vrot.slane %v3350, 2
    %v3823 = vrot.slane %v3354, 2
    %v3824 = vsel %vm3517, %v3822, %v3823
    %v3825 = vrot.slane %v3358, 2
    %v3826 = vrot.slane %v3362, 2
    %v3827 = vsel %vm3517, %v3825, %v3826
    %v3828 = vrot.slane %v3360, 2
    %v3829 = vrot.slane %v3364, 2
    %v3830 = vsel %vm3517, %v3828, %v3829
    %v3839 = vadd.f32 %v3803, %v3821
    %v3840 = vadd.f32 %v3804, %v3824
    %v3841 = vadd.f32 %v3805, %v3820
    %v3842 = vadd.f32 %v3806, %v3823
    %v3843 = vadd.f32 %v3807, %v3827
    %v3844 = vadd.f32 %v3808, %v3830
    %v3845 = vadd.f32 %v3809, %v3826
    %v3846 = vadd.f32 %v3810, %v3829
    %v3855 = vrot.slane %v3401, 3
    %v3856 = vrot.slane %v3405, 3
    %v3857 = vsel %vm3686, %v3855, %v3856
    %v3858 = vrot.slane %v3403, 3
    %v3859 = vrot.slane %v3407, 3
    %v3860 = vsel %vm3686, %v3858, %v3859
    %v3861 = vrot.slane %v3411, 3
    %v3862 = vrot.slane %v3415, 3
    %v3863 = vsel %vm3686, %v3861, %v3862
    %v3864 = vrot.slane %v3413, 3
    %v3865 = vrot.slane %v3417, 3
    %v3866 = vsel %vm3686, %v3864, %v3865
    %v3875 = vadd.f32 %v3839, %v3857
    %v3876 = vadd.f32 %v3840, %v3860
    %v3877 = vadd.f32 %v3841, %v3856
    %v3878 = vadd.f32 %v3842, %v3859
    %v3879 = vadd.f32 %v3843, %v3863
    %v3880 = vadd.f32 %v3844, %v3866
    %v3881 = vadd.f32 %v3845, %v3862
    %v3882 = vadd.f32 %v3846, %v3865
    %vm3891 = vcmask 1043456
    %v3892 = vrot.slane %v3454, 4
    %v3893 = vrot.slane %v3458, 4
    %v3894 = vsel %vm3891, %v3892, %v3893
    %v3895 = vrot.slane %v3456, 4
    %v3896 = vrot.slane %v3460, 4
    %v3897 = vsel %vm3891, %v3895, %v3896
    %v3898 = vrot.slane %v3464, 4
    %v3899 = vrot.slane %v3468, 4
    %v3900 = vsel %vm3891, %v3898, %v3899
    %v3901 = vrot.slane %v3466, 4
    %v3902 = vrot.slane %v3470, 4
    %v3903 = vsel %vm3891, %v3901, %v3902
    %v3912 = vadd.f32 %v3875, %v3894
    %v3913 = vadd.f32 %v3876, %v3897
    %v3914 = vadd.f32 %v3877, %v3893
    %v3915 = vadd.f32 %v3878, %v3896
    %v3916 = vadd.f32 %v3879, %v3900
    %v3917 = vadd.f32 %v3880, %v3903
    %v3918 = vadd.f32 %v3881, %v3899
    %v3919 = vadd.f32 %v3882, %v3902
    %v3920 = vld [vmem:[#allocation31] sm:$0x3]
    %v3922 = vlaneseq
    %v3923 = vshrl.u32 %v3922, 7
    %v3924 = vsub.s32 0, %v3923
    %v3925 = vrot.slane %v3920, %v3924
    %v3926 = vlaneseq
    %v3927 = vshrl.u32 %v3926, 7
    %v3928 = vsub.s32 1, %v3927
    %v3929 = vrot.slane %v3920, %v3928
    %v3932 = vadd.f32 %v3912, %v3925
    %v3933 = vadd.f32 %v3913, %v3929
    %v3934 = vadd.f32 %v3914, %v3925
    %v3935 = vadd.f32 %v3915, %v3929
    %v3936 = vadd.f32 %v3916, %v3925
    %v3937 = vadd.f32 %v3917, %v3929
    %v3938 = vadd.f32 %v3918, %v3925
    %v3939 = vadd.f32 %v3919, %v3929
    %v3940 = vmax.f32 %v3932, 0.0
    %v3941 = vmax.f32 %v3933, 0.0
    %v3942 = vmax.f32 %v3934, 0.0
    %v3943 = vmax.f32 %v3935, 0.0
    %v3944 = vmax.f32 %v3936, 0.0
    %v3945 = vmax.f32 %v3937, 0.0
    %v3946 = vmax.f32 %v3938, 0.0
    %v3947 = vmax.f32 %v3939, 0.0
    %v3948 = vsel %vm3891, %v3942, -inf
    %v3949 = vmax.f32 %v3940, %v3948
    %v3950 = vrot.slane %v3949, 4
    %v3951 = vmax.f32 %v3949, %v3950
    %v3952 = vrot.slane %v3951, 2
    %v3953 = vmax.f32 %v3951, %v3952
    %v3954 = vrot.slane %v3953, 1
    %v3955 = vmax.f32 %v3953, %v3954
    %v3956 = vsel %vm3891, %v3943, -inf
    %v3957 = vmax.f32 %v3941, %v3956
    %v3958 = vrot.slane %v3957, 4
    %v3959 = vmax.f32 %v3957, %v3958
    %v3960 = vrot.slane %v3959, 2
    %v3961 = vmax.f32 %v3959, %v3960
    %v3962 = vrot.slane %v3961, 1
    %v3963 = vmax.f32 %v3961, %v3962
    %v3964 = vsel %vm3891, %v3946, -inf
    %v3965 = vmax.f32 %v3944, %v3964
    %v3966 = vrot.slane %v3965, 4
    %v3967 = vmax.f32 %v3965, %v3966
    %v3968 = vrot.slane %v3967, 2
    %v3969 = vmax.f32 %v3967, %v3968
    %v3970 = vrot.slane %v3969, 1
    %v3971 = vmax.f32 %v3969, %v3970
    %v3972 = vsel %vm3891, %v3947, -inf
    %v3973 = vmax.f32 %v3945, %v3972
    %v3974 = vrot.slane %v3973, 4
    %v3975 = vmax.f32 %v3973, %v3974
    %v3976 = vrot.slane %v3975, 2
    %v3977 = vmax.f32 %v3975, %v3976
    %v3978 = vrot.slane %v3977, 1
    %v3979 = vmax.f32 %v3977, %v3978
    %v3980 = vld [vmem:[#allocation34] sm:$0xff]
    %v3981 = vpack.c.bf16 %v3581, %v3581
    %v3982 = vpack.c.bf16 %v3589, %v3589
    %v3983 = vpack.c.bf16 %v3597, %v3597
    %v3984 = vpack.c.bf16 %v3605, %v3605
    %v3985 = vld [vmem:[#allocation32] sm:$0xff]
    %v3986 = vld [vmem:[#allocation32 + $0x8] sm:$0xff]
    %v3987 = vld [vmem:[#allocation32 + $0x10] sm:$0xff]
    %v3988 = vld [vmem:[#allocation32 + $0x18] sm:$0xff]
    %v3989 = vld [vmem:[#allocation32 + $0x20] sm:$0xff]
    %v3990 = vld [vmem:[#allocation32 + $0x28] sm:$0xff]
    %v3991 = vld [vmem:[#allocation32 + $0x30] sm:$0xff]
    %v3992 = vld [vmem:[#allocation32 + $0x38] sm:$0xff]
    %v3993 = vld [vmem:[#allocation32 + $0x40] sm:$0xff]
    %v3994 = vld [vmem:[#allocation32 + $0x48] sm:$0xff]
    %v3995 = vld [vmem:[#allocation32 + $0x50] sm:$0xff]
    %v3996 = vld [vmem:[#allocation32 + $0x58] sm:$0xff]
    %v3997 = vld [vmem:[#allocation32 + $0x60] sm:$0xff]
    %v3998 = vld [vmem:[#allocation32 + $0x68] sm:$0xff]
    %v3999 = vld [vmem:[#allocation32 + $0x70] sm:$0xff]
    %v4000 = vld [vmem:[#allocation32 + $0x78] sm:$0xff]
    %v4001 = vld [vmem:[#allocation32 + $0x80] sm:$0xff]
    %v4002 = vld [vmem:[#allocation32 + $0x88] sm:$0xff]
    %v4003 = vld [vmem:[#allocation32 + $0x90] sm:$0xff]
    %v4004 = vld [vmem:[#allocation32 + $0x98] sm:$0xff]
    %v4005 = vld [vmem:[#allocation32 + $0xa0] sm:$0xff]
    %v4006 = vld [vmem:[#allocation32 + $0xa8] sm:$0xff]
    %v4007 = vld [vmem:[#allocation32 + $0xb0] sm:$0xff]
    %v4008 = vld [vmem:[#allocation32 + $0xb8] sm:$0xff]
    %v4009 = vld [vmem:[#allocation32 + $0xc0] sm:$0xff]
    %v4010 = vld [vmem:[#allocation32 + $0xc8] sm:$0xff]
    %v4011 = vld [vmem:[#allocation32 + $0xd0] sm:$0xff]
    %v4012 = vld [vmem:[#allocation32 + $0xd8] sm:$0xff]
    %v4013 = vld [vmem:[#allocation32 + $0xe0] sm:$0xff]
    %v4014 = vld [vmem:[#allocation32 + $0xe8] sm:$0xff]
    %v4015 = vld [vmem:[#allocation32 + $0xf0] sm:$0xff]
    %v4016 = vld [vmem:[#allocation32 + $0xf8] sm:$0xff]
    %v4017 = vld [vmem:[#allocation32 + $0x100] sm:$0xff]
    %v4018 = vld [vmem:[#allocation32 + $0x108] sm:$0xff]
    %v4019 = vld [vmem:[#allocation32 + $0x110] sm:$0xff]
    %v4020 = vld [vmem:[#allocation32 + $0x118] sm:$0xff]
    %v4021 = vld [vmem:[#allocation32 + $0x120] sm:$0xff]
    %v4022 = vld [vmem:[#allocation32 + $0x128] sm:$0xff]
    %v4023 = vld [vmem:[#allocation32 + $0x130] sm:$0xff]
    %v4024 = vld [vmem:[#allocation32 + $0x138] sm:$0xff]
    %v4025 = vld [vmem:[#allocation32 + $0x140] sm:$0xff]
    %v4026 = vld [vmem:[#allocation32 + $0x148] sm:$0xff]
    %v4027 = vld [vmem:[#allocation32 + $0x150] sm:$0xff]
    %v4028 = vld [vmem:[#allocation32 + $0x158] sm:$0xff]
    %v4029 = vld [vmem:[#allocation32 + $0x160] sm:$0xff]
    %v4030 = vld [vmem:[#allocation32 + $0x168] sm:$0xff]
    %v4031 = vld [vmem:[#allocation32 + $0x170] sm:$0xff]
    %v4032 = vld [vmem:[#allocation32 + $0x178] sm:$0xff]
    %v4033 = vld [vmem:[#allocation32 + $0x180] sm:$0xff]
    %v4034 = vld [vmem:[#allocation32 + $0x188] sm:$0xff]
    %v4035 = vld [vmem:[#allocation32 + $0x190] sm:$0xff]
    %v4036 = vld [vmem:[#allocation32 + $0x198] sm:$0xff]
    %v4037 = vld [vmem:[#allocation32 + $0x1a0] sm:$0xff]
    %v4038 = vld [vmem:[#allocation32 + $0x1a8] sm:$0xff]
    %v4039 = vld [vmem:[#allocation32 + $0x1b0] sm:$0xff]
    %v4040 = vld [vmem:[#allocation32 + $0x1b8] sm:$0xff]
    %v4041 = vld [vmem:[#allocation32 + $0x1c0] sm:$0xff]
    %v4042 = vld [vmem:[#allocation32 + $0x1c8] sm:$0xff]
    %v4043 = vld [vmem:[#allocation32 + $0x1d0] sm:$0xff]
    %v4044 = vld [vmem:[#allocation32 + $0x1d8] sm:$0xff]
    %v4045 = vld [vmem:[#allocation32 + $0x1e0] sm:$0xff]
    %v4046 = vld [vmem:[#allocation32 + $0x1e8] sm:$0xff]
    %v4047 = vld [vmem:[#allocation32 + $0x1f0] sm:$0xff]
    %v4048 = vld [vmem:[#allocation32 + $0x1f8] sm:$0xff]
    %v4049 = vld [vmem:[#allocation32 + $0x200] sm:$0xff]
    %v4050 = vld [vmem:[#allocation32 + $0x208] sm:$0xff]
    %v4051 = vld [vmem:[#allocation32 + $0x210] sm:$0xff]
    %v4052 = vld [vmem:[#allocation32 + $0x218] sm:$0xff]
    %v4053 = vld [vmem:[#allocation32 + $0x220] sm:$0xff]
    %v4054 = vld [vmem:[#allocation32 + $0x228] sm:$0xff]
    %v4055 = vld [vmem:[#allocation32 + $0x230] sm:$0xff]
    %v4056 = vld [vmem:[#allocation32 + $0x238] sm:$0xff]
    %v4057 = vld [vmem:[#allocation32 + $0x240] sm:$0xff]
    %v4058 = vld [vmem:[#allocation32 + $0x248] sm:$0xff]
    %v4059 = vld [vmem:[#allocation32 + $0x250] sm:$0xff]
    %v4060 = vld [vmem:[#allocation32 + $0x258] sm:$0xff]
    %v4061 = vld [vmem:[#allocation32 + $0x260] sm:$0xff]
    %v4062 = vld [vmem:[#allocation32 + $0x268] sm:$0xff]
    %v4063 = vld [vmem:[#allocation32 + $0x270] sm:$0xff]
    %v4064 = vld [vmem:[#allocation32 + $0x278] sm:$0xff]
    %v4065 = vld [vmem:[#allocation32 + $0x280] sm:$0xff]
    %v4066 = vld [vmem:[#allocation32 + $0x288] sm:$0xff]
    %v4067 = vld [vmem:[#allocation32 + $0x290] sm:$0xff]
    %v4068 = vld [vmem:[#allocation32 + $0x298] sm:$0xff]
    %v4069 = vld [vmem:[#allocation32 + $0x2a0] sm:$0xff]
    %v4070 = vld [vmem:[#allocation32 + $0x2a8] sm:$0xff]
    %v4071 = vld [vmem:[#allocation32 + $0x2b0] sm:$0xff]
    %v4072 = vld [vmem:[#allocation32 + $0x2b8] sm:$0xff]
    %v4073 = vld [vmem:[#allocation32 + $0x2c0] sm:$0xff]
    %v4074 = vld [vmem:[#allocation32 + $0x2c8] sm:$0xff]
    %v4075 = vld [vmem:[#allocation32 + $0x2d0] sm:$0xff]
    %v4076 = vld [vmem:[#allocation32 + $0x2d8] sm:$0xff]
    %v4077 = vld [vmem:[#allocation32 + $0x2e0] sm:$0xff]
    %v4078 = vld [vmem:[#allocation32 + $0x2e8] sm:$0xff]
    %v4079 = vld [vmem:[#allocation32 + $0x2f0] sm:$0xff]
    %v4080 = vld [vmem:[#allocation32 + $0x2f8] sm:$0xff]
    %v4081 = vld [vmem:[#allocation32 + $0x300] sm:$0xff]
    %v4082 = vld [vmem:[#allocation32 + $0x308] sm:$0xff]
    %v4083 = vld [vmem:[#allocation32 + $0x310] sm:$0xff]
    %v4084 = vld [vmem:[#allocation32 + $0x318] sm:$0xff]
    %v4085 = vld [vmem:[#allocation32 + $0x320] sm:$0xff]
    %v4086 = vld [vmem:[#allocation32 + $0x328] sm:$0xff]
    %v4087 = vld [vmem:[#allocation32 + $0x330] sm:$0xff]
    %v4088 = vld [vmem:[#allocation32 + $0x338] sm:$0xff]
    %v4089 = vld [vmem:[#allocation32 + $0x340] sm:$0xff]
    %v4090 = vld [vmem:[#allocation32 + $0x348] sm:$0xff]
    %v4091 = vld [vmem:[#allocation32 + $0x350] sm:$0xff]
    %v4092 = vld [vmem:[#allocation32 + $0x358] sm:$0xff]
    %v4093 = vld [vmem:[#allocation32 + $0x360] sm:$0xff]
    %v4094 = vld [vmem:[#allocation32 + $0x368] sm:$0xff]
    %v4095 = vld [vmem:[#allocation32 + $0x370] sm:$0xff]
    %v4096 = vld [vmem:[#allocation32 + $0x378] sm:$0xff]
    %v4097 = vld [vmem:[#allocation32 + $0x380] sm:$0xff]
    %v4098 = vld [vmem:[#allocation32 + $0x388] sm:$0xff]
    %v4099 = vld [vmem:[#allocation32 + $0x390] sm:$0xff]
    %v4100 = vld [vmem:[#allocation32 + $0x398] sm:$0xff]
    %v4101 = vld [vmem:[#allocation32 + $0x3a0] sm:$0xff]
    %v4102 = vld [vmem:[#allocation32 + $0x3a8] sm:$0xff]
    %v4103 = vld [vmem:[#allocation32 + $0x3b0] sm:$0xff]
    %v4104 = vld [vmem:[#allocation32 + $0x3b8] sm:$0xff]
    %v4105 = vld [vmem:[#allocation32 + $0x3c0] sm:$0xff]
    %v4106 = vld [vmem:[#allocation32 + $0x3c8] sm:$0xff]
    %v4107 = vld [vmem:[#allocation32 + $0x3d0] sm:$0xff]
    %v4108 = vld [vmem:[#allocation32 + $0x3d8] sm:$0xff]
    %v4109 = vld [vmem:[#allocation32 + $0x3e0] sm:$0xff]
    %v4110 = vld [vmem:[#allocation32 + $0x3e8] sm:$0xff]
    %v4111 = vld [vmem:[#allocation32 + $0x3f0] sm:$0xff]
    %v4112 = vld [vmem:[#allocation32 + $0x3f8] sm:$0xff]
    %v4117 = vunpack.c.l.b16 %v3981
    %v4118 = vunpack.c.l.b16 %v3982
    %v4119 = vunpack.c.l.b16 %v3983
    %v4120 = vunpack.c.l.b16 %v3984
    %vm4121 = vcmask 1041409
    %v4122 = vsel %vm4121, %v4119, %v4117
    %v4123 = vsel %vm4121, %v4120, %v4118
    %v4124 = vpack.c.b16 %v4122, %v4122
    %v4125 = vpack.c.b16 %v4123, %v4123
    %v4256 = vunpack.c.l.b16 %v3985
    %v4257 = vunpack.c.h.b16 %v3985
    %v4258 = vunpack.c.l.b16 %v3986
    %v4259 = vunpack.c.h.b16 %v3986
    %v4260 = vunpack.c.l.b16 %v3987
    %v4261 = vunpack.c.h.b16 %v3987
    %v4262 = vunpack.c.l.b16 %v3988
    %v4263 = vunpack.c.h.b16 %v3988
    %v4264 = vunpack.c.l.b16 %v3989
    %v4265 = vunpack.c.h.b16 %v3989
    %v4266 = vunpack.c.l.b16 %v3990
    %v4267 = vunpack.c.h.b16 %v3990
    %v4268 = vunpack.c.l.b16 %v3991
    %v4269 = vunpack.c.h.b16 %v3991
    %v4270 = vunpack.c.l.b16 %v3992
    %v4271 = vunpack.c.h.b16 %v3992
    %v4272 = vunpack.c.l.b16 %v3993
    %v4273 = vunpack.c.h.b16 %v3993
    %v4274 = vunpack.c.l.b16 %v3994
    %v4275 = vunpack.c.h.b16 %v3994
    %v4276 = vunpack.c.l.b16 %v3995
    %v4277 = vunpack.c.h.b16 %v3995
    %v4278 = vunpack.c.l.b16 %v3996
    %v4279 = vunpack.c.h.b16 %v3996
    %v4280 = vunpack.c.l.b16 %v3997
    %v4281 = vunpack.c.h.b16 %v3997
    %v4282 = vunpack.c.l.b16 %v3998
    %v4283 = vunpack.c.h.b16 %v3998
    %v4284 = vunpack.c.l.b16 %v3999
    %v4285 = vunpack.c.h.b16 %v3999
    %v4286 = vunpack.c.l.b16 %v4000
    %v4287 = vunpack.c.h.b16 %v4000
    %v4288 = vunpack.c.l.b16 %v4001
    %v4289 = vunpack.c.h.b16 %v4001
    %v4290 = vunpack.c.l.b16 %v4002
    %v4291 = vunpack.c.h.b16 %v4002
    %v4292 = vunpack.c.l.b16 %v4003
    %v4293 = vunpack.c.h.b16 %v4003
    %v4294 = vunpack.c.l.b16 %v4004
    %v4295 = vunpack.c.h.b16 %v4004
    %v4296 = vunpack.c.l.b16 %v4005
    %v4297 = vunpack.c.h.b16 %v4005
    %v4298 = vunpack.c.l.b16 %v4006
    %v4299 = vunpack.c.h.b16 %v4006
    %v4300 = vunpack.c.l.b16 %v4007
    %v4301 = vunpack.c.h.b16 %v4007
    %v4302 = vunpack.c.l.b16 %v4008
    %v4303 = vunpack.c.h.b16 %v4008
    %v4304 = vunpack.c.l.b16 %v4009
    %v4305 = vunpack.c.h.b16 %v4009
    %v4306 = vunpack.c.l.b16 %v4010
    %v4307 = vunpack.c.h.b16 %v4010
    %v4308 = vunpack.c.l.b16 %v4011
    %v4309 = vunpack.c.h.b16 %v4011
    %v4310 = vunpack.c.l.b16 %v4012
    %v4311 = vunpack.c.h.b16 %v4012
    %v4312 = vunpack.c.l.b16 %v4013
    %v4313 = vunpack.c.h.b16 %v4013
    %v4314 = vunpack.c.l.b16 %v4014
    %v4315 = vunpack.c.h.b16 %v4014
    %v4316 = vunpack.c.l.b16 %v4015
    %v4317 = vunpack.c.h.b16 %v4015
    %v4318 = vunpack.c.l.b16 %v4016
    %v4319 = vunpack.c.h.b16 %v4016
    %v4320 = vunpack.c.l.b16 %v4017
    %v4321 = vunpack.c.h.b16 %v4017
    %v4322 = vunpack.c.l.b16 %v4018
    %v4323 = vunpack.c.h.b16 %v4018
    %v4324 = vunpack.c.l.b16 %v4019
    %v4325 = vunpack.c.h.b16 %v4019
    %v4326 = vunpack.c.l.b16 %v4020
    %v4327 = vunpack.c.h.b16 %v4020
    %v4328 = vunpack.c.l.b16 %v4021
    %v4329 = vunpack.c.h.b16 %v4021
    %v4330 = vunpack.c.l.b16 %v4022
    %v4331 = vunpack.c.h.b16 %v4022
    %v4332 = vunpack.c.l.b16 %v4023
    %v4333 = vunpack.c.h.b16 %v4023
    %v4334 = vunpack.c.l.b16 %v4024
    %v4335 = vunpack.c.h.b16 %v4024
    %v4336 = vunpack.c.l.b16 %v4025
    %v4337 = vunpack.c.h.b16 %v4025
    %v4338 = vunpack.c.l.b16 %v4026
    %v4339 = vunpack.c.h.b16 %v4026
    %v4340 = vunpack.c.l.b16 %v4027
    %v4341 = vunpack.c.h.b16 %v4027
    %v4342 = vunpack.c.l.b16 %v4028
    %v4343 = vunpack.c.h.b16 %v4028
    %v4344 = vunpack.c.l.b16 %v4029
    %v4345 = vunpack.c.h.b16 %v4029
    %v4346 = vunpack.c.l.b16 %v4030
    %v4347 = vunpack.c.h.b16 %v4030
    %v4348 = vunpack.c.l.b16 %v4031
    %v4349 = vunpack.c.h.b16 %v4031
    %v4350 = vunpack.c.l.b16 %v4032
    %v4351 = vunpack.c.h.b16 %v4032
    %v4352 = vunpack.c.l.b16 %v4033
    %v4353 = vunpack.c.h.b16 %v4033
    %v4354 = vunpack.c.l.b16 %v4034
    %v4355 = vunpack.c.h.b16 %v4034
    %v4356 = vunpack.c.l.b16 %v4035
    %v4357 = vunpack.c.h.b16 %v4035
    %v4358 = vunpack.c.l.b16 %v4036
    %v4359 = vunpack.c.h.b16 %v4036
    %v4360 = vunpack.c.l.b16 %v4037
    %v4361 = vunpack.c.h.b16 %v4037
    %v4362 = vunpack.c.l.b16 %v4038
    %v4363 = vunpack.c.h.b16 %v4038
    %v4364 = vunpack.c.l.b16 %v4039
    %v4365 = vunpack.c.h.b16 %v4039
    %v4366 = vunpack.c.l.b16 %v4040
    %v4367 = vunpack.c.h.b16 %v4040
    %v4368 = vunpack.c.l.b16 %v4041
    %v4369 = vunpack.c.h.b16 %v4041
    %v4370 = vunpack.c.l.b16 %v4042
    %v4371 = vunpack.c.h.b16 %v4042
    %v4372 = vunpack.c.l.b16 %v4043
    %v4373 = vunpack.c.h.b16 %v4043
    %v4374 = vunpack.c.l.b16 %v4044
    %v4375 = vunpack.c.h.b16 %v4044
    %v4376 = vunpack.c.l.b16 %v4045
    %v4377 = vunpack.c.h.b16 %v4045
    %v4378 = vunpack.c.l.b16 %v4046
    %v4379 = vunpack.c.h.b16 %v4046
    %v4380 = vunpack.c.l.b16 %v4047
    %v4381 = vunpack.c.h.b16 %v4047
    %v4382 = vunpack.c.l.b16 %v4048
    %v4383 = vunpack.c.h.b16 %v4048
    %v4384 = vunpack.c.l.b16 %v4049
    %v4385 = vunpack.c.h.b16 %v4049
    %v4386 = vunpack.c.l.b16 %v4050
    %v4387 = vunpack.c.h.b16 %v4050
    %v4388 = vunpack.c.l.b16 %v4051
    %v4389 = vunpack.c.h.b16 %v4051
    %v4390 = vunpack.c.l.b16 %v4052
    %v4391 = vunpack.c.h.b16 %v4052
    %v4392 = vunpack.c.l.b16 %v4053
    %v4393 = vunpack.c.h.b16 %v4053
    %v4394 = vunpack.c.l.b16 %v4054
    %v4395 = vunpack.c.h.b16 %v4054
    %v4396 = vunpack.c.l.b16 %v4055
    %v4397 = vunpack.c.h.b16 %v4055
    %v4398 = vunpack.c.l.b16 %v4056
    %v4399 = vunpack.c.h.b16 %v4056
    %v4400 = vunpack.c.l.b16 %v4057
    %v4401 = vunpack.c.h.b16 %v4057
    %v4402 = vunpack.c.l.b16 %v4058
    %v4403 = vunpack.c.h.b16 %v4058
    %v4404 = vunpack.c.l.b16 %v4059
    %v4405 = vunpack.c.h.b16 %v4059
    %v4406 = vunpack.c.l.b16 %v4060
    %v4407 = vunpack.c.h.b16 %v4060
    %v4408 = vunpack.c.l.b16 %v4061
    %v4409 = vunpack.c.h.b16 %v4061
    %v4410 = vunpack.c.l.b16 %v4062
    %v4411 = vunpack.c.h.b16 %v4062
    %v4412 = vunpack.c.l.b16 %v4063
    %v4413 = vunpack.c.h.b16 %v4063
    %v4414 = vunpack.c.l.b16 %v4064
    %v4415 = vunpack.c.h.b16 %v4064
    %v4416 = vunpack.c.l.b16 %v4065
    %v4417 = vunpack.c.h.b16 %v4065
    %v4418 = vunpack.c.l.b16 %v4066
    %v4419 = vunpack.c.h.b16 %v4066
    %v4420 = vunpack.c.l.b16 %v4067
    %v4421 = vunpack.c.h.b16 %v4067
    %v4422 = vunpack.c.l.b16 %v4068
    %v4423 = vunpack.c.h.b16 %v4068
    %v4424 = vunpack.c.l.b16 %v4069
    %v4425 = vunpack.c.h.b16 %v4069
    %v4426 = vunpack.c.l.b16 %v4070
    %v4427 = vunpack.c.h.b16 %v4070
    %v4428 = vunpack.c.l.b16 %v4071
    %v4429 = vunpack.c.h.b16 %v4071
    %v4430 = vunpack.c.l.b16 %v4072
    %v4431 = vunpack.c.h.b16 %v4072
    %v4432 = vunpack.c.l.b16 %v4073
    %v4433 = vunpack.c.h.b16 %v4073
    %v4434 = vunpack.c.l.b16 %v4074
    %v4435 = vunpack.c.h.b16 %v4074
    %v4436 = vunpack.c.l.b16 %v4075
    %v4437 = vunpack.c.h.b16 %v4075
    %v4438 = vunpack.c.l.b16 %v4076
    %v4439 = vunpack.c.h.b16 %v4076
    %v4440 = vunpack.c.l.b16 %v4077
    %v4441 = vunpack.c.h.b16 %v4077
    %v4442 = vunpack.c.l.b16 %v4078
    %v4443 = vunpack.c.h.b16 %v4078
    %v4444 = vunpack.c.l.b16 %v4079
    %v4445 = vunpack.c.h.b16 %v4079
    %v4446 = vunpack.c.l.b16 %v4080
    %v4447 = vunpack.c.h.b16 %v4080
    %v4448 = vunpack.c.l.b16 %v4081
    %v4449 = vunpack.c.h.b16 %v4081
    %v4450 = vunpack.c.l.b16 %v4082
    %v4451 = vunpack.c.h.b16 %v4082
    %v4452 = vunpack.c.l.b16 %v4083
    %v4453 = vunpack.c.h.b16 %v4083
    %v4454 = vunpack.c.l.b16 %v4084
    %v4455 = vunpack.c.h.b16 %v4084
    %v4456 = vunpack.c.l.b16 %v4085
    %v4457 = vunpack.c.h.b16 %v4085
    %v4458 = vunpack.c.l.b16 %v4086
    %v4459 = vunpack.c.h.b16 %v4086
    %v4460 = vunpack.c.l.b16 %v4087
    %v4461 = vunpack.c.h.b16 %v4087
    %v4462 = vunpack.c.l.b16 %v4088
    %v4463 = vunpack.c.h.b16 %v4088
    %v4464 = vunpack.c.l.b16 %v4089
    %v4465 = vunpack.c.h.b16 %v4089
    %v4466 = vunpack.c.l.b16 %v4090
    %v4467 = vunpack.c.h.b16 %v4090
    %v4468 = vunpack.c.l.b16 %v4091
    %v4469 = vunpack.c.h.b16 %v4091
    %v4470 = vunpack.c.l.b16 %v4092
    %v4471 = vunpack.c.h.b16 %v4092
    %v4472 = vunpack.c.l.b16 %v4093
    %v4473 = vunpack.c.h.b16 %v4093
    %v4474 = vunpack.c.l.b16 %v4094
    %v4475 = vunpack.c.h.b16 %v4094
    %v4476 = vunpack.c.l.b16 %v4095
    %v4477 = vunpack.c.h.b16 %v4095
    %v4478 = vunpack.c.l.b16 %v4096
    %v4479 = vunpack.c.h.b16 %v4096
    %v4480 = vunpack.c.l.b16 %v4097
    %v4481 = vunpack.c.h.b16 %v4097
    %v4482 = vunpack.c.l.b16 %v4098
    %v4483 = vunpack.c.h.b16 %v4098
    %v4484 = vunpack.c.l.b16 %v4099
    %v4485 = vunpack.c.h.b16 %v4099
    %v4486 = vunpack.c.l.b16 %v4100
    %v4487 = vunpack.c.h.b16 %v4100
    %v4488 = vunpack.c.l.b16 %v4101
    %v4489 = vunpack.c.h.b16 %v4101
    %v4490 = vunpack.c.l.b16 %v4102
    %v4491 = vunpack.c.h.b16 %v4102
    %v4492 = vunpack.c.l.b16 %v4103
    %v4493 = vunpack.c.h.b16 %v4103
    %v4494 = vunpack.c.l.b16 %v4104
    %v4495 = vunpack.c.h.b16 %v4104
    %v4496 = vunpack.c.l.b16 %v4105
    %v4497 = vunpack.c.h.b16 %v4105
    %v4498 = vunpack.c.l.b16 %v4106
    %v4499 = vunpack.c.h.b16 %v4106
    %v4500 = vunpack.c.l.b16 %v4107
    %v4501 = vunpack.c.h.b16 %v4107
    %v4502 = vunpack.c.l.b16 %v4108
    %v4503 = vunpack.c.h.b16 %v4108
    %v4504 = vunpack.c.l.b16 %v4109
    %v4505 = vunpack.c.h.b16 %v4109
    %v4506 = vunpack.c.l.b16 %v4110
    %v4507 = vunpack.c.h.b16 %v4110
    %v4508 = vunpack.c.l.b16 %v4111
    %v4509 = vunpack.c.h.b16 %v4111
    %v4510 = vunpack.c.l.b16 %v4112
    %v4511 = vunpack.c.h.b16 %v4112
    %v4512 = vpack.c.b16 %v4264, %v4256
    %v4513 = vpack.c.b16 %v4265, %v4257
    %v4514 = vpack.c.b16 %v4266, %v4258
    %v4515 = vpack.c.b16 %v4267, %v4259
    %v4516 = vpack.c.b16 %v4268, %v4260
    %v4517 = vpack.c.b16 %v4269, %v4261
    %v4518 = vpack.c.b16 %v4270, %v4262
    %v4519 = vpack.c.b16 %v4271, %v4263
    %v4520 = vpack.c.b16 %v4280, %v4272
    %v4521 = vpack.c.b16 %v4281, %v4273
    %v4522 = vpack.c.b16 %v4282, %v4274
    %v4523 = vpack.c.b16 %v4283, %v4275
    %v4524 = vpack.c.b16 %v4284, %v4276
    %v4525 = vpack.c.b16 %v4285, %v4277
    %v4526 = vpack.c.b16 %v4286, %v4278
    %v4527 = vpack.c.b16 %v4287, %v4279
    %v4528 = vpack.c.b16 %v4296, %v4288
    %v4529 = vpack.c.b16 %v4297, %v4289
    %v4530 = vpack.c.b16 %v4298, %v4290
    %v4531 = vpack.c.b16 %v4299, %v4291
    %v4532 = vpack.c.b16 %v4300, %v4292
    %v4533 = vpack.c.b16 %v4301, %v4293
    %v4534 = vpack.c.b16 %v4302, %v4294
    %v4535 = vpack.c.b16 %v4303, %v4295
    %v4536 = vpack.c.b16 %v4312, %v4304
    %v4537 = vpack.c.b16 %v4313, %v4305
    %v4538 = vpack.c.b16 %v4314, %v4306
    %v4539 = vpack.c.b16 %v4315, %v4307
    %v4540 = vpack.c.b16 %v4316, %v4308
    %v4541 = vpack.c.b16 %v4317, %v4309
    %v4542 = vpack.c.b16 %v4318, %v4310
    %v4543 = vpack.c.b16 %v4319, %v4311
    %v4544 = vpack.c.b16 %v4328, %v4320
    %v4545 = vpack.c.b16 %v4329, %v4321
    %v4546 = vpack.c.b16 %v4330, %v4322
    %v4547 = vpack.c.b16 %v4331, %v4323
    %v4548 = vpack.c.b16 %v4332, %v4324
    %v4549 = vpack.c.b16 %v4333, %v4325
    %v4550 = vpack.c.b16 %v4334, %v4326
    %v4551 = vpack.c.b16 %v4335, %v4327
    %v4552 = vpack.c.b16 %v4344, %v4336
    %v4553 = vpack.c.b16 %v4345, %v4337
    %v4554 = vpack.c.b16 %v4346, %v4338
    %v4555 = vpack.c.b16 %v4347, %v4339
    %v4556 = vpack.c.b16 %v4348, %v4340
    %v4557 = vpack.c.b16 %v4349, %v4341
    %v4558 = vpack.c.b16 %v4350, %v4342
    %v4559 = vpack.c.b16 %v4351, %v4343
    %v4560 = vpack.c.b16 %v4360, %v4352
    %v4561 = vpack.c.b16 %v4361, %v4353
    %v4562 = vpack.c.b16 %v4362, %v4354
    %v4563 = vpack.c.b16 %v4363, %v4355
    %v4564 = vpack.c.b16 %v4364, %v4356
    %v4565 = vpack.c.b16 %v4365, %v4357
    %v4566 = vpack.c.b16 %v4366, %v4358
    %v4567 = vpack.c.b16 %v4367, %v4359
    %v4568 = vpack.c.b16 %v4376, %v4368
    %v4569 = vpack.c.b16 %v4377, %v4369
    %v4570 = vpack.c.b16 %v4378, %v4370
    %v4571 = vpack.c.b16 %v4379, %v4371
    %v4572 = vpack.c.b16 %v4380, %v4372
    %v4573 = vpack.c.b16 %v4381, %v4373
    %v4574 = vpack.c.b16 %v4382, %v4374
    %v4575 = vpack.c.b16 %v4383, %v4375
    %v4576 = vpack.c.b16 %v4392, %v4384
    %v4577 = vpack.c.b16 %v4393, %v4385
    %v4578 = vpack.c.b16 %v4394, %v4386
    %v4579 = vpack.c.b16 %v4395, %v4387
    %v4580 = vpack.c.b16 %v4396, %v4388
    %v4581 = vpack.c.b16 %v4397, %v4389
    %v4582 = vpack.c.b16 %v4398, %v4390
    %v4583 = vpack.c.b16 %v4399, %v4391
    %v4584 = vpack.c.b16 %v4408, %v4400
    %v4585 = vpack.c.b16 %v4409, %v4401
    %v4586 = vpack.c.b16 %v4410, %v4402
    %v4587 = vpack.c.b16 %v4411, %v4403
    %v4588 = vpack.c.b16 %v4412, %v4404
    %v4589 = vpack.c.b16 %v4413, %v4405
    %v4590 = vpack.c.b16 %v4414, %v4406
    %v4591 = vpack.c.b16 %v4415, %v4407
    %v4592 = vpack.c.b16 %v4424, %v4416
    %v4593 = vpack.c.b16 %v4425, %v4417
    %v4594 = vpack.c.b16 %v4426, %v4418
    %v4595 = vpack.c.b16 %v4427, %v4419
    %v4596 = vpack.c.b16 %v4428, %v4420
    %v4597 = vpack.c.b16 %v4429, %v4421
    %v4598 = vpack.c.b16 %v4430, %v4422
    %v4599 = vpack.c.b16 %v4431, %v4423
    %v4600 = vpack.c.b16 %v4440, %v4432
    %v4601 = vpack.c.b16 %v4441, %v4433
    %v4602 = vpack.c.b16 %v4442, %v4434
    %v4603 = vpack.c.b16 %v4443, %v4435
    %v4604 = vpack.c.b16 %v4444, %v4436
    %v4605 = vpack.c.b16 %v4445, %v4437
    %v4606 = vpack.c.b16 %v4446, %v4438
    %v4607 = vpack.c.b16 %v4447, %v4439
    %v4608 = vpack.c.b16 %v4456, %v4448
    %v4609 = vpack.c.b16 %v4457, %v4449
    %v4610 = vpack.c.b16 %v4458, %v4450
    %v4611 = vpack.c.b16 %v4459, %v4451
    %v4612 = vpack.c.b16 %v4460, %v4452
    %v4613 = vpack.c.b16 %v4461, %v4453
    %v4614 = vpack.c.b16 %v4462, %v4454
    %v4615 = vpack.c.b16 %v4463, %v4455
    %v4616 = vpack.c.b16 %v4472, %v4464
    %v4617 = vpack.c.b16 %v4473, %v4465
    %v4618 = vpack.c.b16 %v4474, %v4466
    %v4619 = vpack.c.b16 %v4475, %v4467
    %v4620 = vpack.c.b16 %v4476, %v4468
    %v4621 = vpack.c.b16 %v4477, %v4469
    %v4622 = vpack.c.b16 %v4478, %v4470
    %v4623 = vpack.c.b16 %v4479, %v4471
    %v4624 = vpack.c.b16 %v4488, %v4480
    %v4625 = vpack.c.b16 %v4489, %v4481
    %v4626 = vpack.c.b16 %v4490, %v4482
    %v4627 = vpack.c.b16 %v4491, %v4483
    %v4628 = vpack.c.b16 %v4492, %v4484
    %v4629 = vpack.c.b16 %v4493, %v4485
    %v4630 = vpack.c.b16 %v4494, %v4486
    %v4631 = vpack.c.b16 %v4495, %v4487
    %v4632 = vpack.c.b16 %v4504, %v4496
    %v4633 = vpack.c.b16 %v4505, %v4497
    %v4634 = vpack.c.b16 %v4506, %v4498
    %v4635 = vpack.c.b16 %v4507, %v4499
    %v4636 = vpack.c.b16 %v4508, %v4500
    %v4637 = vpack.c.b16 %v4509, %v4501
    %v4638 = vpack.c.b16 %v4510, %v4502
    %v4639 = vpack.c.b16 %v4511, %v4503
    %4768 = vmatprep.subr.bf16.mxu0 %v4569
    %4769 = vmatpush1.bf16.msra.mxu0 %v4568
    %4770 = vmatprep.subr.bf16.mxu0 %v4561
    %4771 = vmatpush1.bf16.msra.mxu0 %v4560
    %4772 = vmatprep.subr.bf16.mxu0 %v4553
    %4773 = vmatpush1.bf16.msra.mxu0 %v4552
    %4774 = vmatprep.subr.bf16.mxu0 %v4545
    %4775 = vmatpush1.bf16.msra.mxu0 %v4544
    %4776 = vmatprep.subr.bf16.mxu0 %v4537
    %4777 = vmatpush1.bf16.msra.mxu0 %v4536
    %4778 = vmatprep.subr.bf16.mxu0 %v4529
    %4779 = vmatpush1.bf16.msra.mxu0 %v4528
    %4780 = vmatprep.subr.bf16.mxu0 %v4521
    %4781 = vmatpush1.bf16.msra.mxu0 %v4520
    %4782 = vmatprep.subr.bf16.mxu0 %v4513
    %4783 = vmatpush1.bf16.msra.mxu0 %v4512
    %4784 = vmatprep.subr.bf16.mxu0 %v4633
    %4785 = vmatpush2.bf16.msra.mxu0 %v4632
    %4786 = vmatprep.subr.bf16.mxu0 %v4625
    %4787 = vmatpush2.bf16.msra.mxu0 %v4624
    %4788 = vmatprep.subr.bf16.mxu0 %v4617
    %4789 = vmatpush2.bf16.msra.mxu0 %v4616
    %4790 = vmatprep.subr.bf16.mxu0 %v4609
    %4791 = vmatpush2.bf16.msra.mxu0 %v4608
    %4792 = vmatprep.subr.bf16.mxu0 %v4601
    %4793 = vmatpush2.bf16.msra.mxu0 %v4600
    %4794 = vmatprep.subr.bf16.mxu0 %v4593
    %4795 = vmatpush2.bf16.msra.mxu0 %v4592
    %4796 = vmatprep.subr.bf16.mxu0 %v4585
    %4797 = vmatpush2.bf16.msra.mxu0 %v4584
    %4798 = vmatprep.subr.bf16.mxu0 %v4577
    %4799 = vmatpush2.bf16.msra.mxu0 %v4576
    %4800 = vmatprep.mubr.bf16.mxu0 %v4125
    %4801 = vmatmul.mubr.bf16.gmra.mxu0 %v4124
    %v4802 = vpop.f32.mrf.mxu0
    %v4803 = vadd.f32 0.0, %v4802
    %v4804 = vpop.f32.mrf.mxu0
    %v4805 = vpop.f32.mrf.mxu0
    %v4806 = vpop.f32.mrf.mxu0
    %4807 = vdwg.mxu0
    %4808 = vmatprep.subr.bf16.mxu0 %v4571
    %4809 = vmatpush1.bf16.msra.mxu0 %v4570
    %4810 = vmatprep.subr.bf16.mxu0 %v4563
    %4811 = vmatpush1.bf16.msra.mxu0 %v4562
    %4812 = vmatprep.subr.bf16.mxu0 %v4555
    %4813 = vmatpush1.bf16.msra.mxu0 %v4554
    %4814 = vmatprep.subr.bf16.mxu0 %v4547
    %4815 = vmatpush1.bf16.msra.mxu0 %v4546
    %4816 = vmatprep.subr.bf16.mxu0 %v4539
    %4817 = vmatpush1.bf16.msra.mxu0 %v4538
    %4818 = vmatprep.subr.bf16.mxu0 %v4531
    %4819 = vmatpush1.bf16.msra.mxu0 %v4530
    %4820 = vmatprep.subr.bf16.mxu0 %v4523
    %4821 = vmatpush1.bf16.msra.mxu0 %v4522
    %4822 = vmatprep.subr.bf16.mxu0 %v4515
    %4823 = vmatpush1.bf16.msra.mxu0 %v4514
    %4824 = vmatprep.subr.bf16.mxu0 %v4635
    %4825 = vmatpush2.bf16.msra.mxu0 %v4634
    %4826 = vmatprep.subr.bf16.mxu0 %v4627
    %4827 = vmatpush2.bf16.msra.mxu0 %v4626
    %4828 = vmatprep.subr.bf16.mxu0 %v4619
    %4829 = vmatpush2.bf16.msra.mxu0 %v4618
    %4830 = vmatprep.subr.bf16.mxu0 %v4611
    %4831 = vmatpush2.bf16.msra.mxu0 %v4610
    %4832 = vmatprep.subr.bf16.mxu0 %v4603
    %4833 = vmatpush2.bf16.msra.mxu0 %v4602
    %4834 = vmatprep.subr.bf16.mxu0 %v4595
    %4835 = vmatpush2.bf16.msra.mxu0 %v4594
    %4836 = vmatprep.subr.bf16.mxu0 %v4587
    %4837 = vmatpush2.bf16.msra.mxu0 %v4586
    %4838 = vmatprep.subr.bf16.mxu0 %v4579
    %4839 = vmatpush2.bf16.msra.mxu0 %v4578
    %4840 = vmatprep.mubr.bf16.mxu0 %v4125
    %4841 = vmatmul.mubr.bf16.gmra.mxu0 %v4124
    %v4842 = vpop.f32.mrf.mxu0
    %v4843 = vadd.f32 0.0, %v4842
    %v4844 = vpop.f32.mrf.mxu0
    %v4845 = vadd.f32 0.0, %v4844
    %v4846 = vpop.f32.mrf.mxu0
    %v4847 = vpop.f32.mrf.mxu0
    %4848 = vdwg.mxu0
    %4849 = vmatprep.subr.bf16.mxu0 %v4573
    %4850 = vmatpush1.bf16.msra.mxu0 %v4572
    %4851 = vmatprep.subr.bf16.mxu0 %v4565
    %4852 = vmatpush1.bf16.msra.mxu0 %v4564
    %4853 = vmatprep.subr.bf16.mxu0 %v4557
    %4854 = vmatpush1.bf16.msra.mxu0 %v4556
    %4855 = vmatprep.subr.bf16.mxu0 %v4549
    %4856 = vmatpush1.bf16.msra.mxu0 %v4548
    %4857 = vmatprep.subr.bf16.mxu0 %v4541
    %4858 = vmatpush1.bf16.msra.mxu0 %v4540
    %4859 = vmatprep.subr.bf16.mxu0 %v4533
    %4860 = vmatpush1.bf16.msra.mxu0 %v4532
    %4861 = vmatprep.subr.bf16.mxu0 %v4525
    %4862 = vmatpush1.bf16.msra.mxu0 %v4524
    %4863 = vmatprep.subr.bf16.mxu0 %v4517
    %4864 = vmatpush1.bf16.msra.mxu0 %v4516
    %4865 = vmatprep.subr.bf16.mxu0 %v4637
    %4866 = vmatpush2.bf16.msra.mxu0 %v4636
    %4867 = vmatprep.subr.bf16.mxu0 %v4629
    %4868 = vmatpush2.bf16.msra.mxu0 %v4628
    %4869 = vmatprep.subr.bf16.mxu0 %v4621
    %4870 = vmatpush2.bf16.msra.mxu0 %v4620
    %4871 = vmatprep.subr.bf16.mxu0 %v4613
    %4872 = vmatpush2.bf16.msra.mxu0 %v4612
    %4873 = vmatprep.subr.bf16.mxu0 %v4605
    %4874 = vmatpush2.bf16.msra.mxu0 %v4604
    %4875 = vmatprep.subr.bf16.mxu0 %v4597
    %4876 = vmatpush2.bf16.msra.mxu0 %v4596
    %4877 = vmatprep.subr.bf16.mxu0 %v4589
    %4878 = vmatpush2.bf16.msra.mxu0 %v4588
    %4879 = vmatprep.subr.bf16.mxu0 %v4581
    %4880 = vmatpush2.bf16.msra.mxu0 %v4580
    %4881 = vmatprep.mubr.bf16.mxu0 %v4125
    %4882 = vmatmul.mubr.bf16.gmra.mxu0 %v4124
    %v4883 = vpop.f32.mrf.mxu0
    %v4884 = vadd.f32 0.0, %v4883
    %v4885 = vpop.f32.mrf.mxu0
    %v4886 = vpop.f32.mrf.mxu0
    %v4887 = vpop.f32.mrf.mxu0
    %4888 = vdwg.mxu0
    %4889 = vmatprep.subr.bf16.mxu0 %v4575
    %4890 = vmatpush1.bf16.msra.mxu0 %v4574
    %4891 = vmatprep.subr.bf16.mxu0 %v4567
    %4892 = vmatpush1.bf16.msra.mxu0 %v4566
    %4893 = vmatprep.subr.bf16.mxu0 %v4559
    %4894 = vmatpush1.bf16.msra.mxu0 %v4558
    %4895 = vmatprep.subr.bf16.mxu0 %v4551
    %4896 = vmatpush1.bf16.msra.mxu0 %v4550
    %4897 = vmatprep.subr.bf16.mxu0 %v4543
    %4898 = vmatpush1.bf16.msra.mxu0 %v4542
    %4899 = vmatprep.subr.bf16.mxu0 %v4535
    %4900 = vmatpush1.bf16.msra.mxu0 %v4534
    %4901 = vmatprep.subr.bf16.mxu0 %v4527
    %4902 = vmatpush1.bf16.msra.mxu0 %v4526
    %4903 = vmatprep.subr.bf16.mxu0 %v4519
    %4904 = vmatpush1.bf16.msra.mxu0 %v4518
    %4905 = vmatprep.subr.bf16.mxu0 %v4639
    %4906 = vmatpush2.bf16.msra.mxu0 %v4638
    %4907 = vmatprep.subr.bf16.mxu0 %v4631
    %4908 = vmatpush2.bf16.msra.mxu0 %v4630
    %4909 = vmatprep.subr.bf16.mxu0 %v4623
    %4910 = vmatpush2.bf16.msra.mxu0 %v4622
    %4911 = vmatprep.subr.bf16.mxu0 %v4615
    %4912 = vmatpush2.bf16.msra.mxu0 %v4614
    %4913 = vmatprep.subr.bf16.mxu0 %v4607
    %4914 = vmatpush2.bf16.msra.mxu0 %v4606
    %4915 = vmatprep.subr.bf16.mxu0 %v4599
    %4916 = vmatpush2.bf16.msra.mxu0 %v4598
    %4917 = vmatprep.subr.bf16.mxu0 %v4591
    %4918 = vmatpush2.bf16.msra.mxu0 %v4590
    %4919 = vmatprep.subr.bf16.mxu0 %v4583
    %4920 = vmatpush2.bf16.msra.mxu0 %v4582
    %4921 = vmatprep.mubr.bf16.mxu0 %v4125
    %4922 = vmatmul.mubr.bf16.gmra.mxu0 %v4124
    %v4923 = vpop.f32.mrf.mxu0
    %v4924 = vadd.f32 0.0, %v4923
    %v4925 = vpop.f32.mrf.mxu0
    %v4926 = vadd.f32 0.0, %v4925
    %v4927 = vpop.f32.mrf.mxu0
    %v4928 = vpop.f32.mrf.mxu0
    %4929 = vdwg.mxu0
    %v4931 = vlaneseq
    %v4932 = vshrl.u32 %v4931, 7
    %v4933 = vsub.s32 0, %v4932
    %v4934 = vrot.slane %v3980, %v4933
    %v4935 = vlaneseq
    %v4936 = vshrl.u32 %v4935, 7
    %v4937 = vsub.s32 2, %v4936
    %v4938 = vrot.slane %v3980, %v4937
    %v4939 = vlaneseq
    %v4940 = vshrl.u32 %v4939, 7
    %v4941 = vsub.s32 3, %v4940
    %v4942 = vrot.slane %v3980, %v4941
    %v4943 = vlaneseq
    %v4944 = vshrl.u32 %v4943, 7
    %v4945 = vsub.s32 4, %v4944
    %v4946 = vrot.slane %v3980, %v4945
    %v4947 = vlaneseq
    %v4948 = vshrl.u32 %v4947, 7
    %v4949 = vsub.s32 6, %v4948
    %v4950 = vrot.slane %v3980, %v4949
    %v4951 = vlaneseq
    %v4952 = vshrl.u32 %v4951, 7
    %v4953 = vsub.s32 7, %v4952
    %v4954 = vrot.slane %v3980, %v4953
    %v4961 = vadd.f32 %v4934, %v4803
    %v4962 = vadd.f32 %v4938, %v4843
    %v4963 = vadd.f32 %v4942, %v4845
    %v4964 = vadd.f32 %v4946, %v4884
    %v4965 = vadd.f32 %v4950, %v4924
    %v4966 = vadd.f32 %v4954, %v4926
    %v4967 = vpack.c.bf16 %v3750, %v3750
    %v4968 = vpack.c.bf16 %v3758, %v3758
    %v4969 = vpack.c.bf16 %v3766, %v3766
    %v4970 = vpack.c.bf16 %v3774, %v3774
    %v4971 = vld [vmem:[#allocation32 + $0x400] sm:$0xff]
    %v4972 = vld [vmem:[#allocation32 + $0x408] sm:$0xff]
    %v4973 = vld [vmem:[#allocation32 + $0x410] sm:$0xff]
    %v4974 = vld [vmem:[#allocation32 + $0x418] sm:$0xff]
    %v4975 = vld [vmem:[#allocation32 + $0x420] sm:$0xff]
    %v4976 = vld [vmem:[#allocation32 + $0x428] sm:$0xff]
    %v4977 = vld [vmem:[#allocation32 + $0x430] sm:$0xff]
    %v4978 = vld [vmem:[#allocation32 + $0x438] sm:$0xff]
    %v4979 = vld [vmem:[#allocation32 + $0x440] sm:$0xff]
    %v4980 = vld [vmem:[#allocation32 + $0x448] sm:$0xff]
    %v4981 = vld [vmem:[#allocation32 + $0x450] sm:$0xff]
    %v4982 = vld [vmem:[#allocation32 + $0x458] sm:$0xff]
    %v4983 = vld [vmem:[#allocation32 + $0x460] sm:$0xff]
    %v4984 = vld [vmem:[#allocation32 + $0x468] sm:$0xff]
    %v4985 = vld [vmem:[#allocation32 + $0x470] sm:$0xff]
    %v4986 = vld [vmem:[#allocation32 + $0x478] sm:$0xff]
    %v4987 = vld [vmem:[#allocation32 + $0x480] sm:$0xff]
    %v4988 = vld [vmem:[#allocation32 + $0x488] sm:$0xff]
    %v4989 = vld [vmem:[#allocation32 + $0x490] sm:$0xff]
    %v4990 = vld [vmem:[#allocation32 + $0x498] sm:$0xff]
    %v4991 = vld [vmem:[#allocation32 + $0x4a0] sm:$0xff]
    %v4992 = vld [vmem:[#allocation32 + $0x4a8] sm:$0xff]
    %v4993 = vld [vmem:[#allocation32 + $0x4b0] sm:$0xff]
    %v4994 = vld [vmem:[#allocation32 + $0x4b8] sm:$0xff]
    %v4995 = vld [vmem:[#allocation32 + $0x4c0] sm:$0xff]
    %v4996 = vld [vmem:[#allocation32 + $0x4c8] sm:$0xff]
    %v4997 = vld [vmem:[#allocation32 + $0x4d0] sm:$0xff]
    %v4998 = vld [vmem:[#allocation32 + $0x4d8] sm:$0xff]
    %v4999 = vld [vmem:[#allocation32 + $0x4e0] sm:$0xff]
    %v5000 = vld [vmem:[#allocation32 + $0x4e8] sm:$0xff]
    %v5001 = vld [vmem:[#allocation32 + $0x4f0] sm:$0xff]
    %v5002 = vld [vmem:[#allocation32 + $0x4f8] sm:$0xff]
    %v5003 = vld [vmem:[#allocation32 + $0x500] sm:$0xff]
    %v5004 = vld [vmem:[#allocation32 + $0x508] sm:$0xff]
    %v5005 = vld [vmem:[#allocation32 + $0x510] sm:$0xff]
    %v5006 = vld [vmem:[#allocation32 + $0x518] sm:$0xff]
    %v5007 = vld [vmem:[#allocation32 + $0x520] sm:$0xff]
    %v5008 = vld [vmem:[#allocation32 + $0x528] sm:$0xff]
    %v5009 = vld [vmem:[#allocation32 + $0x530] sm:$0xff]
    %v5010 = vld [vmem:[#allocation32 + $0x538] sm:$0xff]
    %v5011 = vld [vmem:[#allocation32 + $0x540] sm:$0xff]
    %v5012 = vld [vmem:[#allocation32 + $0x548] sm:$0xff]
    %v5013 = vld [vmem:[#allocation32 + $0x550] sm:$0xff]
    %v5014 = vld [vmem:[#allocation32 + $0x558] sm:$0xff]
    %v5015 = vld [vmem:[#allocation32 + $0x560] sm:$0xff]
    %v5016 = vld [vmem:[#allocation32 + $0x568] sm:$0xff]
    %v5017 = vld [vmem:[#allocation32 + $0x570] sm:$0xff]
    %v5018 = vld [vmem:[#allocation32 + $0x578] sm:$0xff]
    %v5019 = vld [vmem:[#allocation32 + $0x580] sm:$0xff]
    %v5020 = vld [vmem:[#allocation32 + $0x588] sm:$0xff]
    %v5021 = vld [vmem:[#allocation32 + $0x590] sm:$0xff]
    %v5022 = vld [vmem:[#allocation32 + $0x598] sm:$0xff]
    %v5023 = vld [vmem:[#allocation32 + $0x5a0] sm:$0xff]
    %v5024 = vld [vmem:[#allocation32 + $0x5a8] sm:$0xff]
    %v5025 = vld [vmem:[#allocation32 + $0x5b0] sm:$0xff]
    %v5026 = vld [vmem:[#allocation32 + $0x5b8] sm:$0xff]
    %v5027 = vld [vmem:[#allocation32 + $0x5c0] sm:$0xff]
    %v5028 = vld [vmem:[#allocation32 + $0x5c8] sm:$0xff]
    %v5029 = vld [vmem:[#allocation32 + $0x5d0] sm:$0xff]
    %v5030 = vld [vmem:[#allocation32 + $0x5d8] sm:$0xff]
    %v5031 = vld [vmem:[#allocation32 + $0x5e0] sm:$0xff]
    %v5032 = vld [vmem:[#allocation32 + $0x5e8] sm:$0xff]
    %v5033 = vld [vmem:[#allocation32 + $0x5f0] sm:$0xff]
    %v5034 = vld [vmem:[#allocation32 + $0x5f8] sm:$0xff]
    %v5035 = vld [vmem:[#allocation32 + $0x600] sm:$0xff]
    %v5036 = vld [vmem:[#allocation32 + $0x608] sm:$0xff]
    %v5037 = vld [vmem:[#allocation32 + $0x610] sm:$0xff]
    %v5038 = vld [vmem:[#allocation32 + $0x618] sm:$0xff]
    %v5039 = vld [vmem:[#allocation32 + $0x620] sm:$0xff]
    %v5040 = vld [vmem:[#allocation32 + $0x628] sm:$0xff]
    %v5041 = vld [vmem:[#allocation32 + $0x630] sm:$0xff]
    %v5042 = vld [vmem:[#allocation32 + $0x638] sm:$0xff]
    %v5043 = vld [vmem:[#allocation32 + $0x640] sm:$0xff]
    %v5044 = vld [vmem:[#allocation32 + $0x648] sm:$0xff]
    %v5045 = vld [vmem:[#allocation32 + $0x650] sm:$0xff]
    %v5046 = vld [vmem:[#allocation32 + $0x658] sm:$0xff]
    %v5047 = vld [vmem:[#allocation32 + $0x660] sm:$0xff]
    %v5048 = vld [vmem:[#allocation32 + $0x668] sm:$0xff]
    %v5049 = vld [vmem:[#allocation32 + $0x670] sm:$0xff]
    %v5050 = vld [vmem:[#allocation32 + $0x678] sm:$0xff]
    %v5051 = vld [vmem:[#allocation32 + $0x680] sm:$0xff]
    %v5052 = vld [vmem:[#allocation32 + $0x688] sm:$0xff]
    %v5053 = vld [vmem:[#allocation32 + $0x690] sm:$0xff]
    %v5054 = vld [vmem:[#allocation32 + $0x698] sm:$0xff]
    %v5055 = vld [vmem:[#allocation32 + $0x6a0] sm:$0xff]
    %v5056 = vld [vmem:[#allocation32 + $0x6a8] sm:$0xff]
    %v5057 = vld [vmem:[#allocation32 + $0x6b0] sm:$0xff]
    %v5058 = vld [vmem:[#allocation32 + $0x6b8] sm:$0xff]
    %v5059 = vld [vmem:[#allocation32 + $0x6c0] sm:$0xff]
    %v5060 = vld [vmem:[#allocation32 + $0x6c8] sm:$0xff]
    %v5061 = vld [vmem:[#allocation32 + $0x6d0] sm:$0xff]
    %v5062 = vld [vmem:[#allocation32 + $0x6d8] sm:$0xff]
    %v5063 = vld [vmem:[#allocation32 + $0x6e0] sm:$0xff]
    %v5064 = vld [vmem:[#allocation32 + $0x6e8] sm:$0xff]
    %v5065 = vld [vmem:[#allocation32 + $0x6f0] sm:$0xff]
    %v5066 = vld [vmem:[#allocation32 + $0x6f8] sm:$0xff]
    %v5067 = vld [vmem:[#allocation32 + $0x700] sm:$0xff]
    %v5068 = vld [vmem:[#allocation32 + $0x708] sm:$0xff]
    %v5069 = vld [vmem:[#allocation32 + $0x710] sm:$0xff]
    %v5070 = vld [vmem:[#allocation32 + $0x718] sm:$0xff]
    %v5071 = vld [vmem:[#allocation32 + $0x720] sm:$0xff]
    %v5072 = vld [vmem:[#allocation32 + $0x728] sm:$0xff]
    %v5073 = vld [vmem:[#allocation32 + $0x730] sm:$0xff]
    %v5074 = vld [vmem:[#allocation32 + $0x738] sm:$0xff]
    %v5075 = vld [vmem:[#allocation32 + $0x740] sm:$0xff]
    %v5076 = vld [vmem:[#allocation32 + $0x748] sm:$0xff]
    %v5077 = vld [vmem:[#allocation32 + $0x750] sm:$0xff]
    %v5078 = vld [vmem:[#allocation32 + $0x758] sm:$0xff]
    %v5079 = vld [vmem:[#allocation32 + $0x760] sm:$0xff]
    %v5080 = vld [vmem:[#allocation32 + $0x768] sm:$0xff]
    %v5081 = vld [vmem:[#allocation32 + $0x770] sm:$0xff]
    %v5082 = vld [vmem:[#allocation32 + $0x778] sm:$0xff]
    %v5083 = vld [vmem:[#allocation32 + $0x780] sm:$0xff]
    %v5084 = vld [vmem:[#allocation32 + $0x788] sm:$0xff]
    %v5085 = vld [vmem:[#allocation32 + $0x790] sm:$0xff]
    %v5086 = vld [vmem:[#allocation32 + $0x798] sm:$0xff]
    %v5087 = vld [vmem:[#allocation32 + $0x7a0] sm:$0xff]
    %v5088 = vld [vmem:[#allocation32 + $0x7a8] sm:$0xff]
    %v5089 = vld [vmem:[#allocation32 + $0x7b0] sm:$0xff]
    %v5090 = vld [vmem:[#allocation32 + $0x7b8] sm:$0xff]
    %v5091 = vld [vmem:[#allocation32 + $0x7c0] sm:$0xff]
    %v5092 = vld [vmem:[#allocation32 + $0x7c8] sm:$0xff]
    %v5093 = vld [vmem:[#allocation32 + $0x7d0] sm:$0xff]
    %v5094 = vld [vmem:[#allocation32 + $0x7d8] sm:$0xff]
    %v5095 = vld [vmem:[#allocation32 + $0x7e0] sm:$0xff]
    %v5096 = vld [vmem:[#allocation32 + $0x7e8] sm:$0xff]
    %v5097 = vld [vmem:[#allocation32 + $0x7f0] sm:$0xff]
    %v5098 = vld [vmem:[#allocation32 + $0x7f8] sm:$0xff]
    %v5103 = vunpack.c.l.b16 %v4967
    %v5104 = vunpack.c.l.b16 %v4968
    %v5105 = vunpack.c.l.b16 %v4969
    %v5106 = vunpack.c.l.b16 %v4970
    %v5107 = vsel %vm4121, %v5105, %v5103
    %v5108 = vsel %vm4121, %v5106, %v5104
    %v5109 = vpack.c.b16 %v5107, %v5107
    %v5110 = vpack.c.b16 %v5108, %v5108
    %v5241 = vunpack.c.l.b16 %v4971
    %v5242 = vunpack.c.h.b16 %v4971
    %v5243 = vunpack.c.l.b16 %v4972
    %v5244 = vunpack.c.h.b16 %v4972
    %v5245 = vunpack.c.l.b16 %v4973
    %v5246 = vunpack.c.h.b16 %v4973
    %v5247 = vunpack.c.l.b16 %v4974
    %v5248 = vunpack.c.h.b16 %v4974
    %v5249 = vunpack.c.l.b16 %v4975
    %v5250 = vunpack.c.h.b16 %v4975
    %v5251 = vunpack.c.l.b16 %v4976
    %v5252 = vunpack.c.h.b16 %v4976
    %v5253 = vunpack.c.l.b16 %v4977
    %v5254 = vunpack.c.h.b16 %v4977
    %v5255 = vunpack.c.l.b16 %v4978
    %v5256 = vunpack.c.h.b16 %v4978
    %v5257 = vunpack.c.l.b16 %v4979
    %v5258 = vunpack.c.h.b16 %v4979
    %v5259 = vunpack.c.l.b16 %v4980
    %v5260 = vunpack.c.h.b16 %v4980
    %v5261 = vunpack.c.l.b16 %v4981
    %v5262 = vunpack.c.h.b16 %v4981
    %v5263 = vunpack.c.l.b16 %v4982
    %v5264 = vunpack.c.h.b16 %v4982
    %v5265 = vunpack.c.l.b16 %v4983
    %v5266 = vunpack.c.h.b16 %v4983
    %v5267 = vunpack.c.l.b16 %v4984
    %v5268 = vunpack.c.h.b16 %v4984
    %v5269 = vunpack.c.l.b16 %v4985
    %v5270 = vunpack.c.h.b16 %v4985
    %v5271 = vunpack.c.l.b16 %v4986
    %v5272 = vunpack.c.h.b16 %v4986
    %v5273 = vunpack.c.l.b16 %v4987
    %v5274 = vunpack.c.h.b16 %v4987
    %v5275 = vunpack.c.l.b16 %v4988
    %v5276 = vunpack.c.h.b16 %v4988
    %v5277 = vunpack.c.l.b16 %v4989
    %v5278 = vunpack.c.h.b16 %v4989
    %v5279 = vunpack.c.l.b16 %v4990
    %v5280 = vunpack.c.h.b16 %v4990
    %v5281 = vunpack.c.l.b16 %v4991
    %v5282 = vunpack.c.h.b16 %v4991
    %v5283 = vunpack.c.l.b16 %v4992
    %v5284 = vunpack.c.h.b16 %v4992
    %v5285 = vunpack.c.l.b16 %v4993
    %v5286 = vunpack.c.h.b16 %v4993
    %v5287 = vunpack.c.l.b16 %v4994
    %v5288 = vunpack.c.h.b16 %v4994
    %v5289 = vunpack.c.l.b16 %v4995
    %v5290 = vunpack.c.h.b16 %v4995
    %v5291 = vunpack.c.l.b16 %v4996
    %v5292 = vunpack.c.h.b16 %v4996
    %v5293 = vunpack.c.l.b16 %v4997
    %v5294 = vunpack.c.h.b16 %v4997
    %v5295 = vunpack.c.l.b16 %v4998
    %v5296 = vunpack.c.h.b16 %v4998
    %v5297 = vunpack.c.l.b16 %v4999
    %v5298 = vunpack.c.h.b16 %v4999
    %v5299 = vunpack.c.l.b16 %v5000
    %v5300 = vunpack.c.h.b16 %v5000
    %v5301 = vunpack.c.l.b16 %v5001
    %v5302 = vunpack.c.h.b16 %v5001
    %v5303 = vunpack.c.l.b16 %v5002
    %v5304 = vunpack.c.h.b16 %v5002
    %v5305 = vunpack.c.l.b16 %v5003
    %v5306 = vunpack.c.h.b16 %v5003
    %v5307 = vunpack.c.l.b16 %v5004
    %v5308 = vunpack.c.h.b16 %v5004
    %v5309 = vunpack.c.l.b16 %v5005
    %v5310 = vunpack.c.h.b16 %v5005
    %v5311 = vunpack.c.l.b16 %v5006
    %v5312 = vunpack.c.h.b16 %v5006
    %v5313 = vunpack.c.l.b16 %v5007
    %v5314 = vunpack.c.h.b16 %v5007
    %v5315 = vunpack.c.l.b16 %v5008
    %v5316 = vunpack.c.h.b16 %v5008
    %v5317 = vunpack.c.l.b16 %v5009
    %v5318 = vunpack.c.h.b16 %v5009
    %v5319 = vunpack.c.l.b16 %v5010
    %v5320 = vunpack.c.h.b16 %v5010
    %v5321 = vunpack.c.l.b16 %v5011
    %v5322 = vunpack.c.h.b16 %v5011
    %v5323 = vunpack.c.l.b16 %v5012
    %v5324 = vunpack.c.h.b16 %v5012
    %v5325 = vunpack.c.l.b16 %v5013
    %v5326 = vunpack.c.h.b16 %v5013
    %v5327 = vunpack.c.l.b16 %v5014
    %v5328 = vunpack.c.h.b16 %v5014
    %v5329 = vunpack.c.l.b16 %v5015
    %v5330 = vunpack.c.h.b16 %v5015
    %v5331 = vunpack.c.l.b16 %v5016
    %v5332 = vunpack.c.h.b16 %v5016
    %v5333 = vunpack.c.l.b16 %v5017
    %v5334 = vunpack.c.h.b16 %v5017
    %v5335 = vunpack.c.l.b16 %v5018
    %v5336 = vunpack.c.h.b16 %v5018
    %v5337 = vunpack.c.l.b16 %v5019
    %v5338 = vunpack.c.h.b16 %v5019
    %v5339 = vunpack.c.l.b16 %v5020
    %v5340 = vunpack.c.h.b16 %v5020
    %v5341 = vunpack.c.l.b16 %v5021
    %v5342 = vunpack.c.h.b16 %v5021
    %v5343 = vunpack.c.l.b16 %v5022
    %v5344 = vunpack.c.h.b16 %v5022
    %v5345 = vunpack.c.l.b16 %v5023
    %v5346 = vunpack.c.h.b16 %v5023
    %v5347 = vunpack.c.l.b16 %v5024
    %v5348 = vunpack.c.h.b16 %v5024
    %v5349 = vunpack.c.l.b16 %v5025
    %v5350 = vunpack.c.h.b16 %v5025
    %v5351 = vunpack.c.l.b16 %v5026
    %v5352 = vunpack.c.h.b16 %v5026
    %v5353 = vunpack.c.l.b16 %v5027
    %v5354 = vunpack.c.h.b16 %v5027
    %v5355 = vunpack.c.l.b16 %v5028
    %v5356 = vunpack.c.h.b16 %v5028
    %v5357 = vunpack.c.l.b16 %v5029
    %v5358 = vunpack.c.h.b16 %v5029
    %v5359 = vunpack.c.l.b16 %v5030
    %v5360 = vunpack.c.h.b16 %v5030
    %v5361 = vunpack.c.l.b16 %v5031
    %v5362 = vunpack.c.h.b16 %v5031
    %v5363 = vunpack.c.l.b16 %v5032
    %v5364 = vunpack.c.h.b16 %v5032
    %v5365 = vunpack.c.l.b16 %v5033
    %v5366 = vunpack.c.h.b16 %v5033
    %v5367 = vunpack.c.l.b16 %v5034
    %v5368 = vunpack.c.h.b16 %v5034
    %v5369 = vunpack.c.l.b16 %v5035
    %v5370 = vunpack.c.h.b16 %v5035
    %v5371 = vunpack.c.l.b16 %v5036
    %v5372 = vunpack.c.h.b16 %v5036
    %v5373 = vunpack.c.l.b16 %v5037
    %v5374 = vunpack.c.h.b16 %v5037
    %v5375 = vunpack.c.l.b16 %v5038
    %v5376 = vunpack.c.h.b16 %v5038
    %v5377 = vunpack.c.l.b16 %v5039
    %v5378 = vunpack.c.h.b16 %v5039
    %v5379 = vunpack.c.l.b16 %v5040
    %v5380 = vunpack.c.h.b16 %v5040
    %v5381 = vunpack.c.l.b16 %v5041
    %v5382 = vunpack.c.h.b16 %v5041
    %v5383 = vunpack.c.l.b16 %v5042
    %v5384 = vunpack.c.h.b16 %v5042
    %v5385 = vunpack.c.l.b16 %v5043
    %v5386 = vunpack.c.h.b16 %v5043
    %v5387 = vunpack.c.l.b16 %v5044
    %v5388 = vunpack.c.h.b16 %v5044
    %v5389 = vunpack.c.l.b16 %v5045
    %v5390 = vunpack.c.h.b16 %v5045
    %v5391 = vunpack.c.l.b16 %v5046
    %v5392 = vunpack.c.h.b16 %v5046
    %v5393 = vunpack.c.l.b16 %v5047
    %v5394 = vunpack.c.h.b16 %v5047
    %v5395 = vunpack.c.l.b16 %v5048
    %v5396 = vunpack.c.h.b16 %v5048
    %v5397 = vunpack.c.l.b16 %v5049
    %v5398 = vunpack.c.h.b16 %v5049
    %v5399 = vunpack.c.l.b16 %v5050
    %v5400 = vunpack.c.h.b16 %v5050
    %v5401 = vunpack.c.l.b16 %v5051
    %v5402 = vunpack.c.h.b16 %v5051
    %v5403 = vunpack.c.l.b16 %v5052
    %v5404 = vunpack.c.h.b16 %v5052
    %v5405 = vunpack.c.l.b16 %v5053
    %v5406 = vunpack.c.h.b16 %v5053
    %v5407 = vunpack.c.l.b16 %v5054
    %v5408 = vunpack.c.h.b16 %v5054
    %v5409 = vunpack.c.l.b16 %v5055
    %v5410 = vunpack.c.h.b16 %v5055
    %v5411 = vunpack.c.l.b16 %v5056
    %v5412 = vunpack.c.h.b16 %v5056
    %v5413 = vunpack.c.l.b16 %v5057
    %v5414 = vunpack.c.h.b16 %v5057
    %v5415 = vunpack.c.l.b16 %v5058
    %v5416 = vunpack.c.h.b16 %v5058
    %v5417 = vunpack.c.l.b16 %v5059
    %v5418 = vunpack.c.h.b16 %v5059
    %v5419 = vunpack.c.l.b16 %v5060
    %v5420 = vunpack.c.h.b16 %v5060
    %v5421 = vunpack.c.l.b16 %v5061
    %v5422 = vunpack.c.h.b16 %v5061
    %v5423 = vunpack.c.l.b16 %v5062
    %v5424 = vunpack.c.h.b16 %v5062
    %v5425 = vunpack.c.l.b16 %v5063
    %v5426 = vunpack.c.h.b16 %v5063
    %v5427 = vunpack.c.l.b16 %v5064
    %v5428 = vunpack.c.h.b16 %v5064
    %v5429 = vunpack.c.l.b16 %v5065
    %v5430 = vunpack.c.h.b16 %v5065
    %v5431 = vunpack.c.l.b16 %v5066
    %v5432 = vunpack.c.h.b16 %v5066
    %v5433 = vunpack.c.l.b16 %v5067
    %v5434 = vunpack.c.h.b16 %v5067
    %v5435 = vunpack.c.l.b16 %v5068
    %v5436 = vunpack.c.h.b16 %v5068
    %v5437 = vunpack.c.l.b16 %v5069
    %v5438 = vunpack.c.h.b16 %v5069
    %v5439 = vunpack.c.l.b16 %v5070
    %v5440 = vunpack.c.h.b16 %v5070
    %v5441 = vunpack.c.l.b16 %v5071
    %v5442 = vunpack.c.h.b16 %v5071
    %v5443 = vunpack.c.l.b16 %v5072
    %v5444 = vunpack.c.h.b16 %v5072
    %v5445 = vunpack.c.l.b16 %v5073
    %v5446 = vunpack.c.h.b16 %v5073
    %v5447 = vunpack.c.l.b16 %v5074
    %v5448 = vunpack.c.h.b16 %v5074
    %v5449 = vunpack.c.l.b16 %v5075
    %v5450 = vunpack.c.h.b16 %v5075
    %v5451 = vunpack.c.l.b16 %v5076
    %v5452 = vunpack.c.h.b16 %v5076
    %v5453 = vunpack.c.l.b16 %v5077
    %v5454 = vunpack.c.h.b16 %v5077
    %v5455 = vunpack.c.l.b16 %v5078
    %v5456 = vunpack.c.h.b16 %v5078
    %v5457 = vunpack.c.l.b16 %v5079
    %v5458 = vunpack.c.h.b16 %v5079
    %v5459 = vunpack.c.l.b16 %v5080
    %v5460 = vunpack.c.h.b16 %v5080
    %v5461 = vunpack.c.l.b16 %v5081
    %v5462 = vunpack.c.h.b16 %v5081
    %v5463 = vunpack.c.l.b16 %v5082
    %v5464 = vunpack.c.h.b16 %v5082
    %v5465 = vunpack.c.l.b16 %v5083
    %v5466 = vunpack.c.h.b16 %v5083
    %v5467 = vunpack.c.l.b16 %v5084
    %v5468 = vunpack.c.h.b16 %v5084
    %v5469 = vunpack.c.l.b16 %v5085
    %v5470 = vunpack.c.h.b16 %v5085
    %v5471 = vunpack.c.l.b16 %v5086
    %v5472 = vunpack.c.h.b16 %v5086
    %v5473 = vunpack.c.l.b16 %v5087
    %v5474 = vunpack.c.h.b16 %v5087
    %v5475 = vunpack.c.l.b16 %v5088
    %v5476 = vunpack.c.h.b16 %v5088
    %v5477 = vunpack.c.l.b16 %v5089
    %v5478 = vunpack.c.h.b16 %v5089
    %v5479 = vunpack.c.l.b16 %v5090
    %v5480 = vunpack.c.h.b16 %v5090
    %v5481 = vunpack.c.l.b16 %v5091
    %v5482 = vunpack.c.h.b16 %v5091
    %v5483 = vunpack.c.l.b16 %v5092
    %v5484 = vunpack.c.h.b16 %v5092
    %v5485 = vunpack.c.l.b16 %v5093
    %v5486 = vunpack.c.h.b16 %v5093
    %v5487 = vunpack.c.l.b16 %v5094
    %v5488 = vunpack.c.h.b16 %v5094
    %v5489 = vunpack.c.l.b16 %v5095
    %v5490 = vunpack.c.h.b16 %v5095
    %v5491 = vunpack.c.l.b16 %v5096
    %v5492 = vunpack.c.h.b16 %v5096
    %v5493 = vunpack.c.l.b16 %v5097
    %v5494 = vunpack.c.h.b16 %v5097
    %v5495 = vunpack.c.l.b16 %v5098
    %v5496 = vunpack.c.h.b16 %v5098
    %v5497 = vpack.c.b16 %v5249, %v5241
    %v5498 = vpack.c.b16 %v5250, %v5242
    %v5499 = vpack.c.b16 %v5251, %v5243
    %v5500 = vpack.c.b16 %v5252, %v5244
    %v5501 = vpack.c.b16 %v5253, %v5245
    %v5502 = vpack.c.b16 %v5254, %v5246
    %v5503 = vpack.c.b16 %v5255, %v5247
    %v5504 = vpack.c.b16 %v5256, %v5248
    %v5505 = vpack.c.b16 %v5265, %v5257
    %v5506 = vpack.c.b16 %v5266, %v5258
    %v5507 = vpack.c.b16 %v5267, %v5259
    %v5508 = vpack.c.b16 %v5268, %v5260
    %v5509 = vpack.c.b16 %v5269, %v5261
    %v5510 = vpack.c.b16 %v5270, %v5262
    %v5511 = vpack.c.b16 %v5271, %v5263
    %v5512 = vpack.c.b16 %v5272, %v5264
    %v5513 = vpack.c.b16 %v5281, %v5273
    %v5514 = vpack.c.b16 %v5282, %v5274
    %v5515 = vpack.c.b16 %v5283, %v5275
    %v5516 = vpack.c.b16 %v5284, %v5276
    %v5517 = vpack.c.b16 %v5285, %v5277
    %v5518 = vpack.c.b16 %v5286, %v5278
    %v5519 = vpack.c.b16 %v5287, %v5279
    %v5520 = vpack.c.b16 %v5288, %v5280
    %v5521 = vpack.c.b16 %v5297, %v5289
    %v5522 = vpack.c.b16 %v5298, %v5290
    %v5523 = vpack.c.b16 %v5299, %v5291
    %v5524 = vpack.c.b16 %v5300, %v5292
    %v5525 = vpack.c.b16 %v5301, %v5293
    %v5526 = vpack.c.b16 %v5302, %v5294
    %v5527 = vpack.c.b16 %v5303, %v5295
    %v5528 = vpack.c.b16 %v5304, %v5296
    %v5529 = vpack.c.b16 %v5313, %v5305
    %v5530 = vpack.c.b16 %v5314, %v5306
    %v5531 = vpack.c.b16 %v5315, %v5307
    %v5532 = vpack.c.b16 %v5316, %v5308
    %v5533 = vpack.c.b16 %v5317, %v5309
    %v5534 = vpack.c.b16 %v5318, %v5310
    %v5535 = vpack.c.b16 %v5319, %v5311
    %v5536 = vpack.c.b16 %v5320, %v5312
    %v5537 = vpack.c.b16 %v5329, %v5321
    %v5538 = vpack.c.b16 %v5330, %v5322
    %v5539 = vpack.c.b16 %v5331, %v5323
    %v5540 = vpack.c.b16 %v5332, %v5324
    %v5541 = vpack.c.b16 %v5333, %v5325
    %v5542 = vpack.c.b16 %v5334, %v5326
    %v5543 = vpack.c.b16 %v5335, %v5327
    %v5544 = vpack.c.b16 %v5336, %v5328
    %v5545 = vpack.c.b16 %v5345, %v5337
    %v5546 = vpack.c.b16 %v5346, %v5338
    %v5547 = vpack.c.b16 %v5347, %v5339
    %v5548 = vpack.c.b16 %v5348, %v5340
    %v5549 = vpack.c.b16 %v5349, %v5341
    %v5550 = vpack.c.b16 %v5350, %v5342
    %v5551 = vpack.c.b16 %v5351, %v5343
    %v5552 = vpack.c.b16 %v5352, %v5344
    %v5553 = vpack.c.b16 %v5361, %v5353
    %v5554 = vpack.c.b16 %v5362, %v5354
    %v5555 = vpack.c.b16 %v5363, %v5355
    %v5556 = vpack.c.b16 %v5364, %v5356
    %v5557 = vpack.c.b16 %v5365, %v5357
    %v5558 = vpack.c.b16 %v5366, %v5358
    %v5559 = vpack.c.b16 %v5367, %v5359
    %v5560 = vpack.c.b16 %v5368, %v5360
    %v5561 = vpack.c.b16 %v5377, %v5369
    %v5562 = vpack.c.b16 %v5378, %v5370
    %v5563 = vpack.c.b16 %v5379, %v5371
    %v5564 = vpack.c.b16 %v5380, %v5372
    %v5565 = vpack.c.b16 %v5381, %v5373
    %v5566 = vpack.c.b16 %v5382, %v5374
    %v5567 = vpack.c.b16 %v5383, %v5375
    %v5568 = vpack.c.b16 %v5384, %v5376
    %v5569 = vpack.c.b16 %v5393, %v5385
    %v5570 = vpack.c.b16 %v5394, %v5386
    %v5571 = vpack.c.b16 %v5395, %v5387
    %v5572 = vpack.c.b16 %v5396, %v5388
    %v5573 = vpack.c.b16 %v5397, %v5389
    %v5574 = vpack.c.b16 %v5398, %v5390
    %v5575 = vpack.c.b16 %v5399, %v5391
    %v5576 = vpack.c.b16 %v5400, %v5392
    %v5577 = vpack.c.b16 %v5409, %v5401
    %v5578 = vpack.c.b16 %v5410, %v5402
    %v5579 = vpack.c.b16 %v5411, %v5403
    %v5580 = vpack.c.b16 %v5412, %v5404
    %v5581 = vpack.c.b16 %v5413, %v5405
    %v5582 = vpack.c.b16 %v5414, %v5406
    %v5583 = vpack.c.b16 %v5415, %v5407
    %v5584 = vpack.c.b16 %v5416, %v5408
    %v5585 = vpack.c.b16 %v5425, %v5417
    %v5586 = vpack.c.b16 %v5426, %v5418
    %v5587 = vpack.c.b16 %v5427, %v5419
    %v5588 = vpack.c.b16 %v5428, %v5420
    %v5589 = vpack.c.b16 %v5429, %v5421
    %v5590 = vpack.c.b16 %v5430, %v5422
    %v5591 = vpack.c.b16 %v5431, %v5423
    %v5592 = vpack.c.b16 %v5432, %v5424
    %v5593 = vpack.c.b16 %v5441, %v5433
    %v5594 = vpack.c.b16 %v5442, %v5434
    %v5595 = vpack.c.b16 %v5443, %v5435
    %v5596 = vpack.c.b16 %v5444, %v5436
    %v5597 = vpack.c.b16 %v5445, %v5437
    %v5598 = vpack.c.b16 %v5446, %v5438
    %v5599 = vpack.c.b16 %v5447, %v5439
    %v5600 = vpack.c.b16 %v5448, %v5440
    %v5601 = vpack.c.b16 %v5457, %v5449
    %v5602 = vpack.c.b16 %v5458, %v5450
    %v5603 = vpack.c.b16 %v5459, %v5451
    %v5604 = vpack.c.b16 %v5460, %v5452
    %v5605 = vpack.c.b16 %v5461, %v5453
    %v5606 = vpack.c.b16 %v5462, %v5454
    %v5607 = vpack.c.b16 %v5463, %v5455
    %v5608 = vpack.c.b16 %v5464, %v5456
    %v5609 = vpack.c.b16 %v5473, %v5465
    %v5610 = vpack.c.b16 %v5474, %v5466
    %v5611 = vpack.c.b16 %v5475, %v5467
    %v5612 = vpack.c.b16 %v5476, %v5468
    %v5613 = vpack.c.b16 %v5477, %v5469
    %v5614 = vpack.c.b16 %v5478, %v5470
    %v5615 = vpack.c.b16 %v5479, %v5471
    %v5616 = vpack.c.b16 %v5480, %v5472
    %v5617 = vpack.c.b16 %v5489, %v5481
    %v5618 = vpack.c.b16 %v5490, %v5482
    %v5619 = vpack.c.b16 %v5491, %v5483
    %v5620 = vpack.c.b16 %v5492, %v5484
    %v5621 = vpack.c.b16 %v5493, %v5485
    %v5622 = vpack.c.b16 %v5494, %v5486
    %v5623 = vpack.c.b16 %v5495, %v5487
    %v5624 = vpack.c.b16 %v5496, %v5488
    %5753 = vmatprep.subr.bf16.mxu0 %v5554
    %5754 = vmatpush1.bf16.msra.mxu0 %v5553
    %5755 = vmatprep.subr.bf16.mxu0 %v5546
    %5756 = vmatpush1.bf16.msra.mxu0 %v5545
    %5757 = vmatprep.subr.bf16.mxu0 %v5538
    %5758 = vmatpush1.bf16.msra.mxu0 %v5537
    %5759 = vmatprep.subr.bf16.mxu0 %v5530
    %5760 = vmatpush1.bf16.msra.mxu0 %v5529
    %5761 = vmatprep.subr.bf16.mxu0 %v5522
    %5762 = vmatpush1.bf16.msra.mxu0 %v5521
    %5763 = vmatprep.subr.bf16.mxu0 %v5514
    %5764 = vmatpush1.bf16.msra.mxu0 %v5513
    %5765 = vmatprep.subr.bf16.mxu0 %v5506
    %5766 = vmatpush1.bf16.msra.mxu0 %v5505
    %5767 = vmatprep.subr.bf16.mxu0 %v5498
    %5768 = vmatpush1.bf16.msra.mxu0 %v5497
    %5769 = vmatprep.subr.bf16.mxu0 %v5618
    %5770 = vmatpush2.bf16.msra.mxu0 %v5617
    %5771 = vmatprep.subr.bf16.mxu0 %v5610
    %5772 = vmatpush2.bf16.msra.mxu0 %v5609
    %5773 = vmatprep.subr.bf16.mxu0 %v5602
    %5774 = vmatpush2.bf16.msra.mxu0 %v5601
    %5775 = vmatprep.subr.bf16.mxu0 %v5594
    %5776 = vmatpush2.bf16.msra.mxu0 %v5593
    %5777 = vmatprep.subr.bf16.mxu0 %v5586
    %5778 = vmatpush2.bf16.msra.mxu0 %v5585
    %5779 = vmatprep.subr.bf16.mxu0 %v5578
    %5780 = vmatpush2.bf16.msra.mxu0 %v5577
    %5781 = vmatprep.subr.bf16.mxu0 %v5570
    %5782 = vmatpush2.bf16.msra.mxu0 %v5569
    %5783 = vmatprep.subr.bf16.mxu0 %v5562
    %5784 = vmatpush2.bf16.msra.mxu0 %v5561
    %5785 = vmatprep.mubr.bf16.mxu0 %v5110
    %5786 = vmatmul.mubr.bf16.gmra.mxu0 %v5109
    %v5787 = vpop.f32.mrf.mxu0
    %v5788 = vadd.f32 0.0, %v5787
    %v5789 = vpop.f32.mrf.mxu0
    %v5790 = vpop.f32.mrf.mxu0
    %v5791 = vpop.f32.mrf.mxu0
    %5792 = vdwg.mxu0
    %5793 = vmatprep.subr.bf16.mxu0 %v5556
    %5794 = vmatpush1.bf16.msra.mxu0 %v5555
    %5795 = vmatprep.subr.bf16.mxu0 %v5548
    %5796 = vmatpush1.bf16.msra.mxu0 %v5547
    %5797 = vmatprep.subr.bf16.mxu0 %v5540
    %5798 = vmatpush1.bf16.msra.mxu0 %v5539
    %5799 = vmatprep.subr.bf16.mxu0 %v5532
    %5800 = vmatpush1.bf16.msra.mxu0 %v5531
    %5801 = vmatprep.subr.bf16.mxu0 %v5524
    %5802 = vmatpush1.bf16.msra.mxu0 %v5523
    %5803 = vmatprep.subr.bf16.mxu0 %v5516
    %5804 = vmatpush1.bf16.msra.mxu0 %v5515
    %5805 = vmatprep.subr.bf16.mxu0 %v5508
    %5806 = vmatpush1.bf16.msra.mxu0 %v5507
    %5807 = vmatprep.subr.bf16.mxu0 %v5500
    %5808 = vmatpush1.bf16.msra.mxu0 %v5499
    %5809 = vmatprep.subr.bf16.mxu0 %v5620
    %5810 = vmatpush2.bf16.msra.mxu0 %v5619
    %5811 = vmatprep.subr.bf16.mxu0 %v5612
    %5812 = vmatpush2.bf16.msra.mxu0 %v5611
    %5813 = vmatprep.subr.bf16.mxu0 %v5604
    %5814 = vmatpush2.bf16.msra.mxu0 %v5603
    %5815 = vmatprep.subr.bf16.mxu0 %v5596
    %5816 = vmatpush2.bf16.msra.mxu0 %v5595
    %5817 = vmatprep.subr.bf16.mxu0 %v5588
    %5818 = vmatpush2.bf16.msra.mxu0 %v5587
    %5819 = vmatprep.subr.bf16.mxu0 %v5580
    %5820 = vmatpush2.bf16.msra.mxu0 %v5579
    %5821 = vmatprep.subr.bf16.mxu0 %v5572
    %5822 = vmatpush2.bf16.msra.mxu0 %v5571
    %5823 = vmatprep.subr.bf16.mxu0 %v5564
    %5824 = vmatpush2.bf16.msra.mxu0 %v5563
    %5825 = vmatprep.mubr.bf16.mxu0 %v5110
    %5826 = vmatmul.mubr.bf16.gmra.mxu0 %v5109
    %v5827 = vpop.f32.mrf.mxu0
    %v5828 = vadd.f32 0.0, %v5827
    %v5829 = vpop.f32.mrf.mxu0
    %v5830 = vadd.f32 0.0, %v5829
    %v5831 = vpop.f32.mrf.mxu0
    %v5832 = vpop.f32.mrf.mxu0
    %5833 = vdwg.mxu0
    %5834 = vmatprep.subr.bf16.mxu0 %v5558
    %5835 = vmatpush1.bf16.msra.mxu0 %v5557
    %5836 = vmatprep.subr.bf16.mxu0 %v5550
    %5837 = vmatpush1.bf16.msra.mxu0 %v5549
    %5838 = vmatprep.subr.bf16.mxu0 %v5542
    %5839 = vmatpush1.bf16.msra.mxu0 %v5541
    %5840 = vmatprep.subr.bf16.mxu0 %v5534
    %5841 = vmatpush1.bf16.msra.mxu0 %v5533
    %5842 = vmatprep.subr.bf16.mxu0 %v5526
    %5843 = vmatpush1.bf16.msra.mxu0 %v5525
    %5844 = vmatprep.subr.bf16.mxu0 %v5518
    %5845 = vmatpush1.bf16.msra.mxu0 %v5517
    %5846 = vmatprep.subr.bf16.mxu0 %v5510
    %5847 = vmatpush1.bf16.msra.mxu0 %v5509
    %5848 = vmatprep.subr.bf16.mxu0 %v5502
    %5849 = vmatpush1.bf16.msra.mxu0 %v5501
    %5850 = vmatprep.subr.bf16.mxu0 %v5622
    %5851 = vmatpush2.bf16.msra.mxu0 %v5621
    %5852 = vmatprep.subr.bf16.mxu0 %v5614
    %5853 = vmatpush2.bf16.msra.mxu0 %v5613
    %5854 = vmatprep.subr.bf16.mxu0 %v5606
    %5855 = vmatpush2.bf16.msra.mxu0 %v5605
    %5856 = vmatprep.subr.bf16.mxu0 %v5598
    %5857 = vmatpush2.bf16.msra.mxu0 %v5597
    %5858 = vmatprep.subr.bf16.mxu0 %v5590
    %5859 = vmatpush2.bf16.msra.mxu0 %v5589
    %5860 = vmatprep.subr.bf16.mxu0 %v5582
    %5861 = vmatpush2.bf16.msra.mxu0 %v5581
    %5862 = vmatprep.subr.bf16.mxu0 %v5574
    %5863 = vmatpush2.bf16.msra.mxu0 %v5573
    %5864 = vmatprep.subr.bf16.mxu0 %v5566
    %5865 = vmatpush2.bf16.msra.mxu0 %v5565
    %5866 = vmatprep.mubr.bf16.mxu0 %v5110
    %5867 = vmatmul.mubr.bf16.gmra.mxu0 %v5109
    %v5868 = vpop.f32.mrf.mxu0
    %v5869 = vadd.f32 0.0, %v5868
    %v5870 = vpop.f32.mrf.mxu0
    %v5871 = vpop.f32.mrf.mxu0
    %v5872 = vpop.f32.mrf.mxu0
    %5873 = vdwg.mxu0
    %5874 = vmatprep.subr.bf16.mxu0 %v5560
    %5875 = vmatpush1.bf16.msra.mxu0 %v5559
    %5876 = vmatprep.subr.bf16.mxu0 %v5552
    %5877 = vmatpush1.bf16.msra.mxu0 %v5551
    %5878 = vmatprep.subr.bf16.mxu0 %v5544
    %5879 = vmatpush1.bf16.msra.mxu0 %v5543
    %5880 = vmatprep.subr.bf16.mxu0 %v5536
    %5881 = vmatpush1.bf16.msra.mxu0 %v5535
    %5882 = vmatprep.subr.bf16.mxu0 %v5528
    %5883 = vmatpush1.bf16.msra.mxu0 %v5527
    %5884 = vmatprep.subr.bf16.mxu0 %v5520
    %5885 = vmatpush1.bf16.msra.mxu0 %v5519
    %5886 = vmatprep.subr.bf16.mxu0 %v5512
    %5887 = vmatpush1.bf16.msra.mxu0 %v5511
    %5888 = vmatprep.subr.bf16.mxu0 %v5504
    %5889 = vmatpush1.bf16.msra.mxu0 %v5503
    %5890 = vmatprep.subr.bf16.mxu0 %v5624
    %5891 = vmatpush2.bf16.msra.mxu0 %v5623
    %5892 = vmatprep.subr.bf16.mxu0 %v5616
    %5893 = vmatpush2.bf16.msra.mxu0 %v5615
    %5894 = vmatprep.subr.bf16.mxu0 %v5608
    %5895 = vmatpush2.bf16.msra.mxu0 %v5607
    %5896 = vmatprep.subr.bf16.mxu0 %v5600
    %5897 = vmatpush2.bf16.msra.mxu0 %v5599
    %5898 = vmatprep.subr.bf16.mxu0 %v5592
    %5899 = vmatpush2.bf16.msra.mxu0 %v5591
    %5900 = vmatprep.subr.bf16.mxu0 %v5584
    %5901 = vmatpush2.bf16.msra.mxu0 %v5583
    %5902 = vmatprep.subr.bf16.mxu0 %v5576
    %5903 = vmatpush2.bf16.msra.mxu0 %v5575
    %5904 = vmatprep.subr.bf16.mxu0 %v5568
    %5905 = vmatpush2.bf16.msra.mxu0 %v5567
    %5906 = vmatprep.mubr.bf16.mxu0 %v5110
    %5907 = vmatmul.mubr.bf16.gmra.mxu0 %v5109
    %v5908 = vpop.f32.mrf.mxu0
    %v5909 = vadd.f32 0.0, %v5908
    %v5910 = vpop.f32.mrf.mxu0
    %v5911 = vadd.f32 0.0, %v5910
    %v5912 = vpop.f32.mrf.mxu0
    %v5913 = vpop.f32.mrf.mxu0
    %5914 = vdwg.mxu0
    %v5915 = vadd.f32 %v4961, %v5788
    %v5916 = vadd.f32 %v4962, %v5828
    %v5917 = vadd.f32 %v4963, %v5830
    %v5918 = vadd.f32 %v4964, %v5869
    %v5919 = vadd.f32 %v4965, %v5909
    %v5920 = vadd.f32 %v4966, %v5911
    %v5921 = vpack.c.bf16 %v3955, %v3955
    %v5922 = vpack.c.bf16 %v3963, %v3963
    %v5923 = vpack.c.bf16 %v3971, %v3971
    %v5924 = vpack.c.bf16 %v3979, %v3979
    %v5925 = vld [vmem:[#allocation32 + $0x800] sm:$0xff]
    %v5926 = vld [vmem:[#allocation32 + $0x808] sm:$0xff]
    %v5927 = vld [vmem:[#allocation32 + $0x810] sm:$0xff]
    %v5928 = vld [vmem:[#allocation32 + $0x818] sm:$0xff]
    %v5929 = vld [vmem:[#allocation32 + $0x820] sm:$0xff]
    %v5930 = vld [vmem:[#allocation32 + $0x828] sm:$0xff]
    %v5931 = vld [vmem:[#allocation32 + $0x830] sm:$0xff]
    %v5932 = vld [vmem:[#allocation32 + $0x838] sm:$0xff]
    %v5933 = vld [vmem:[#allocation32 + $0x840] sm:$0xff]
    %v5934 = vld [vmem:[#allocation32 + $0x848] sm:$0xff]
    %v5935 = vld [vmem:[#allocation32 + $0x850] sm:$0xff]
    %v5936 = vld [vmem:[#allocation32 + $0x858] sm:$0xff]
    %v5937 = vld [vmem:[#allocation32 + $0x860] sm:$0xff]
    %v5938 = vld [vmem:[#allocation32 + $0x868] sm:$0xff]
    %v5939 = vld [vmem:[#allocation32 + $0x870] sm:$0xff]
    %v5940 = vld [vmem:[#allocation32 + $0x878] sm:$0xff]
    %v5941 = vld [vmem:[#allocation32 + $0x880] sm:$0xff]
    %v5942 = vld [vmem:[#allocation32 + $0x888] sm:$0xff]
    %v5943 = vld [vmem:[#allocation32 + $0x890] sm:$0xff]
    %v5944 = vld [vmem:[#allocation32 + $0x898] sm:$0xff]
    %v5945 = vld [vmem:[#allocation32 + $0x8a0] sm:$0xff]
    %v5946 = vld [vmem:[#allocation32 + $0x8a8] sm:$0xff]
    %v5947 = vld [vmem:[#allocation32 + $0x8b0] sm:$0xff]
    %v5948 = vld [vmem:[#allocation32 + $0x8b8] sm:$0xff]
    %v5949 = vld [vmem:[#allocation32 + $0x8c0] sm:$0xff]
    %v5950 = vld [vmem:[#allocation32 + $0x8c8] sm:$0xff]
    %v5951 = vld [vmem:[#allocation32 + $0x8d0] sm:$0xff]
    %v5952 = vld [vmem:[#allocation32 + $0x8d8] sm:$0xff]
    %v5953 = vld [vmem:[#allocation32 + $0x8e0] sm:$0xff]
    %v5954 = vld [vmem:[#allocation32 + $0x8e8] sm:$0xff]
    %v5955 = vld [vmem:[#allocation32 + $0x8f0] sm:$0xff]
    %v5956 = vld [vmem:[#allocation32 + $0x8f8] sm:$0xff]
    %v5957 = vld [vmem:[#allocation32 + $0x900] sm:$0xff]
    %v5958 = vld [vmem:[#allocation32 + $0x908] sm:$0xff]
    %v5959 = vld [vmem:[#allocation32 + $0x910] sm:$0xff]
    %v5960 = vld [vmem:[#allocation32 + $0x918] sm:$0xff]
    %v5961 = vld [vmem:[#allocation32 + $0x920] sm:$0xff]
    %v5962 = vld [vmem:[#allocation32 + $0x928] sm:$0xff]
    %v5963 = vld [vmem:[#allocation32 + $0x930] sm:$0xff]
    %v5964 = vld [vmem:[#allocation32 + $0x938] sm:$0xff]
    %v5965 = vld [vmem:[#allocation32 + $0x940] sm:$0xff]
    %v5966 = vld [vmem:[#allocation32 + $0x948] sm:$0xff]
    %v5967 = vld [vmem:[#allocation32 + $0x950] sm:$0xff]
    %v5968 = vld [vmem:[#allocation32 + $0x958] sm:$0xff]
    %v5969 = vld [vmem:[#allocation32 + $0x960] sm:$0xff]
    %v5970 = vld [vmem:[#allocation32 + $0x968] sm:$0xff]
    %v5971 = vld [vmem:[#allocation32 + $0x970] sm:$0xff]
    %v5972 = vld [vmem:[#allocation32 + $0x978] sm:$0xff]
    %v5973 = vld [vmem:[#allocation32 + $0x980] sm:$0xff]
    %v5974 = vld [vmem:[#allocation32 + $0x988] sm:$0xff]
    %v5975 = vld [vmem:[#allocation32 + $0x990] sm:$0xff]
    %v5976 = vld [vmem:[#allocation32 + $0x998] sm:$0xff]
    %v5977 = vld [vmem:[#allocation32 + $0x9a0] sm:$0xff]
    %v5978 = vld [vmem:[#allocation32 + $0x9a8] sm:$0xff]
    %v5979 = vld [vmem:[#allocation32 + $0x9b0] sm:$0xff]
    %v5980 = vld [vmem:[#allocation32 + $0x9b8] sm:$0xff]
    %v5981 = vld [vmem:[#allocation32 + $0x9c0] sm:$0xff]
    %v5982 = vld [vmem:[#allocation32 + $0x9c8] sm:$0xff]
    %v5983 = vld [vmem:[#allocation32 + $0x9d0] sm:$0xff]
    %v5984 = vld [vmem:[#allocation32 + $0x9d8] sm:$0xff]
    %v5985 = vld [vmem:[#allocation32 + $0x9e0] sm:$0xff]
    %v5986 = vld [vmem:[#allocation32 + $0x9e8] sm:$0xff]
    %v5987 = vld [vmem:[#allocation32 + $0x9f0] sm:$0xff]
    %v5988 = vld [vmem:[#allocation32 + $0x9f8] sm:$0xff]
    %v5989 = vld [vmem:[#allocation32 + $0xa00] sm:$0xff]
    %v5990 = vld [vmem:[#allocation32 + $0xa08] sm:$0xff]
    %v5991 = vld [vmem:[#allocation32 + $0xa10] sm:$0xff]
    %v5992 = vld [vmem:[#allocation32 + $0xa18] sm:$0xff]
    %v5993 = vld [vmem:[#allocation32 + $0xa20] sm:$0xff]
    %v5994 = vld [vmem:[#allocation32 + $0xa28] sm:$0xff]
    %v5995 = vld [vmem:[#allocation32 + $0xa30] sm:$0xff]
    %v5996 = vld [vmem:[#allocation32 + $0xa38] sm:$0xff]
    %v5997 = vld [vmem:[#allocation32 + $0xa40] sm:$0xff]
    %v5998 = vld [vmem:[#allocation32 + $0xa48] sm:$0xff]
    %v5999 = vld [vmem:[#allocation32 + $0xa50] sm:$0xff]
    %v6000 = vld [vmem:[#allocation32 + $0xa58] sm:$0xff]
    %v6001 = vld [vmem:[#allocation32 + $0xa60] sm:$0xff]
    %v6002 = vld [vmem:[#allocation32 + $0xa68] sm:$0xff]
    %v6003 = vld [vmem:[#allocation32 + $0xa70] sm:$0xff]
    %v6004 = vld [vmem:[#allocation32 + $0xa78] sm:$0xff]
    %v6005 = vld [vmem:[#allocation32 + $0xa80] sm:$0xff]
    %v6006 = vld [vmem:[#allocation32 + $0xa88] sm:$0xff]
    %v6007 = vld [vmem:[#allocation32 + $0xa90] sm:$0xff]
    %v6008 = vld [vmem:[#allocation32 + $0xa98] sm:$0xff]
    %v6009 = vld [vmem:[#allocation32 + $0xaa0] sm:$0xff]
    %v6010 = vld [vmem:[#allocation32 + $0xaa8] sm:$0xff]
    %v6011 = vld [vmem:[#allocation32 + $0xab0] sm:$0xff]
    %v6012 = vld [vmem:[#allocation32 + $0xab8] sm:$0xff]
    %v6013 = vld [vmem:[#allocation32 + $0xac0] sm:$0xff]
    %v6014 = vld [vmem:[#allocation32 + $0xac8] sm:$0xff]
    %v6015 = vld [vmem:[#allocation32 + $0xad0] sm:$0xff]
    %v6016 = vld [vmem:[#allocation32 + $0xad8] sm:$0xff]
    %v6017 = vld [vmem:[#allocation32 + $0xae0] sm:$0xff]
    %v6018 = vld [vmem:[#allocation32 + $0xae8] sm:$0xff]
    %v6019 = vld [vmem:[#allocation32 + $0xaf0] sm:$0xff]
    %v6020 = vld [vmem:[#allocation32 + $0xaf8] sm:$0xff]
    %v6021 = vld [vmem:[#allocation32 + $0xb00] sm:$0xff]
    %v6022 = vld [vmem:[#allocation32 + $0xb08] sm:$0xff]
    %v6023 = vld [vmem:[#allocation32 + $0xb10] sm:$0xff]
    %v6024 = vld [vmem:[#allocation32 + $0xb18] sm:$0xff]
    %v6025 = vld [vmem:[#allocation32 + $0xb20] sm:$0xff]
    %v6026 = vld [vmem:[#allocation32 + $0xb28] sm:$0xff]
    %v6027 = vld [vmem:[#allocation32 + $0xb30] sm:$0xff]
    %v6028 = vld [vmem:[#allocation32 + $0xb38] sm:$0xff]
    %v6029 = vld [vmem:[#allocation32 + $0xb40] sm:$0xff]
    %v6030 = vld [vmem:[#allocation32 + $0xb48] sm:$0xff]
    %v6031 = vld [vmem:[#allocation32 + $0xb50] sm:$0xff]
    %v6032 = vld [vmem:[#allocation32 + $0xb58] sm:$0xff]
    %v6033 = vld [vmem:[#allocation32 + $0xb60] sm:$0xff]
    %v6034 = vld [vmem:[#allocation32 + $0xb68] sm:$0xff]
    %v6035 = vld [vmem:[#allocation32 + $0xb70] sm:$0xff]
    %v6036 = vld [vmem:[#allocation32 + $0xb78] sm:$0xff]
    %v6037 = vld [vmem:[#allocation32 + $0xb80] sm:$0xff]
    %v6038 = vld [vmem:[#allocation32 + $0xb88] sm:$0xff]
    %v6039 = vld [vmem:[#allocation32 + $0xb90] sm:$0xff]
    %v6040 = vld [vmem:[#allocation32 + $0xb98] sm:$0xff]
    %v6041 = vld [vmem:[#allocation32 + $0xba0] sm:$0xff]
    %v6042 = vld [vmem:[#allocation32 + $0xba8] sm:$0xff]
    %v6043 = vld [vmem:[#allocation32 + $0xbb0] sm:$0xff]
    %v6044 = vld [vmem:[#allocation32 + $0xbb8] sm:$0xff]
    %v6045 = vld [vmem:[#allocation32 + $0xbc0] sm:$0xff]
    %v6046 = vld [vmem:[#allocation32 + $0xbc8] sm:$0xff]
    %v6047 = vld [vmem:[#allocation32 + $0xbd0] sm:$0xff]
    %v6048 = vld [vmem:[#allocation32 + $0xbd8] sm:$0xff]
    %v6049 = vld [vmem:[#allocation32 + $0xbe0] sm:$0xff]
    %v6050 = vld [vmem:[#allocation32 + $0xbe8] sm:$0xff]
    %v6051 = vld [vmem:[#allocation32 + $0xbf0] sm:$0xff]
    %v6052 = vld [vmem:[#allocation32 + $0xbf8] sm:$0xff]
    %v6057 = vunpack.c.l.b16 %v5921
    %v6058 = vunpack.c.l.b16 %v5922
    %v6059 = vunpack.c.l.b16 %v5923
    %v6060 = vunpack.c.l.b16 %v5924
    %v6061 = vsel %vm4121, %v6059, %v6057
    %v6062 = vsel %vm4121, %v6060, %v6058
    %v6063 = vpack.c.b16 %v6061, %v6061
    %v6064 = vpack.c.b16 %v6062, %v6062
    %v6195 = vunpack.c.l.b16 %v5925
    %v6196 = vunpack.c.h.b16 %v5925
    %v6197 = vunpack.c.l.b16 %v5926
    %v6198 = vunpack.c.h.b16 %v5926
    %v6199 = vunpack.c.l.b16 %v5927
    %v6200 = vunpack.c.h.b16 %v5927
    %v6201 = vunpack.c.l.b16 %v5928
    %v6202 = vunpack.c.h.b16 %v5928
    %v6203 = vunpack.c.l.b16 %v5929
    %v6204 = vunpack.c.h.b16 %v5929
    %v6205 = vunpack.c.l.b16 %v5930
    %v6206 = vunpack.c.h.b16 %v5930
    %v6207 = vunpack.c.l.b16 %v5931
    %v6208 = vunpack.c.h.b16 %v5931
    %v6209 = vunpack.c.l.b16 %v5932
    %v6210 = vunpack.c.h.b16 %v5932
    %v6211 = vunpack.c.l.b16 %v5933
    %v6212 = vunpack.c.h.b16 %v5933
    %v6213 = vunpack.c.l.b16 %v5934
    %v6214 = vunpack.c.h.b16 %v5934
    %v6215 = vunpack.c.l.b16 %v5935
    %v6216 = vunpack.c.h.b16 %v5935
    %v6217 = vunpack.c.l.b16 %v5936
    %v6218 = vunpack.c.h.b16 %v5936
    %v6219 = vunpack.c.l.b16 %v5937
    %v6220 = vunpack.c.h.b16 %v5937
    %v6221 = vunpack.c.l.b16 %v5938
    %v6222 = vunpack.c.h.b16 %v5938
    %v6223 = vunpack.c.l.b16 %v5939
    %v6224 = vunpack.c.h.b16 %v5939
    %v6225 = vunpack.c.l.b16 %v5940
    %v6226 = vunpack.c.h.b16 %v5940
    %v6227 = vunpack.c.l.b16 %v5941
    %v6228 = vunpack.c.h.b16 %v5941
    %v6229 = vunpack.c.l.b16 %v5942
    %v6230 = vunpack.c.h.b16 %v5942
    %v6231 = vunpack.c.l.b16 %v5943
    %v6232 = vunpack.c.h.b16 %v5943
    %v6233 = vunpack.c.l.b16 %v5944
    %v6234 = vunpack.c.h.b16 %v5944
    %v6235 = vunpack.c.l.b16 %v5945
    %v6236 = vunpack.c.h.b16 %v5945
    %v6237 = vunpack.c.l.b16 %v5946
    %v6238 = vunpack.c.h.b16 %v5946
    %v6239 = vunpack.c.l.b16 %v5947
    %v6240 = vunpack.c.h.b16 %v5947
    %v6241 = vunpack.c.l.b16 %v5948
    %v6242 = vunpack.c.h.b16 %v5948
    %v6243 = vunpack.c.l.b16 %v5949
    %v6244 = vunpack.c.h.b16 %v5949
    %v6245 = vunpack.c.l.b16 %v5950
    %v6246 = vunpack.c.h.b16 %v5950
    %v6247 = vunpack.c.l.b16 %v5951
    %v6248 = vunpack.c.h.b16 %v5951
    %v6249 = vunpack.c.l.b16 %v5952
    %v6250 = vunpack.c.h.b16 %v5952
    %v6251 = vunpack.c.l.b16 %v5953
    %v6252 = vunpack.c.h.b16 %v5953
    %v6253 = vunpack.c.l.b16 %v5954
    %v6254 = vunpack.c.h.b16 %v5954
    %v6255 = vunpack.c.l.b16 %v5955
    %v6256 = vunpack.c.h.b16 %v5955
    %v6257 = vunpack.c.l.b16 %v5956
    %v6258 = vunpack.c.h.b16 %v5956
    %v6259 = vunpack.c.l.b16 %v5957
    %v6260 = vunpack.c.h.b16 %v5957
    %v6261 = vunpack.c.l.b16 %v5958
    %v6262 = vunpack.c.h.b16 %v5958
    %v6263 = vunpack.c.l.b16 %v5959
    %v6264 = vunpack.c.h.b16 %v5959
    %v6265 = vunpack.c.l.b16 %v5960
    %v6266 = vunpack.c.h.b16 %v5960
    %v6267 = vunpack.c.l.b16 %v5961
    %v6268 = vunpack.c.h.b16 %v5961
    %v6269 = vunpack.c.l.b16 %v5962
    %v6270 = vunpack.c.h.b16 %v5962
    %v6271 = vunpack.c.l.b16 %v5963
    %v6272 = vunpack.c.h.b16 %v5963
    %v6273 = vunpack.c.l.b16 %v5964
    %v6274 = vunpack.c.h.b16 %v5964
    %v6275 = vunpack.c.l.b16 %v5965
    %v6276 = vunpack.c.h.b16 %v5965
    %v6277 = vunpack.c.l.b16 %v5966
    %v6278 = vunpack.c.h.b16 %v5966
    %v6279 = vunpack.c.l.b16 %v5967
    %v6280 = vunpack.c.h.b16 %v5967
    %v6281 = vunpack.c.l.b16 %v5968
    %v6282 = vunpack.c.h.b16 %v5968
    %v6283 = vunpack.c.l.b16 %v5969
    %v6284 = vunpack.c.h.b16 %v5969
    %v6285 = vunpack.c.l.b16 %v5970
    %v6286 = vunpack.c.h.b16 %v5970
    %v6287 = vunpack.c.l.b16 %v5971
    %v6288 = vunpack.c.h.b16 %v5971
    %v6289 = vunpack.c.l.b16 %v5972
    %v6290 = vunpack.c.h.b16 %v5972
    %v6291 = vunpack.c.l.b16 %v5973
    %v6292 = vunpack.c.h.b16 %v5973
    %v6293 = vunpack.c.l.b16 %v5974
    %v6294 = vunpack.c.h.b16 %v5974
    %v6295 = vunpack.c.l.b16 %v5975
    %v6296 = vunpack.c.h.b16 %v5975
    %v6297 = vunpack.c.l.b16 %v5976
    %v6298 = vunpack.c.h.b16 %v5976
    %v6299 = vunpack.c.l.b16 %v5977
    %v6300 = vunpack.c.h.b16 %v5977
    %v6301 = vunpack.c.l.b16 %v5978
    %v6302 = vunpack.c.h.b16 %v5978
    %v6303 = vunpack.c.l.b16 %v5979
    %v6304 = vunpack.c.h.b16 %v5979
    %v6305 = vunpack.c.l.b16 %v5980
    %v6306 = vunpack.c.h.b16 %v5980
    %v6307 = vunpack.c.l.b16 %v5981
    %v6308 = vunpack.c.h.b16 %v5981
    %v6309 = vunpack.c.l.b16 %v5982
    %v6310 = vunpack.c.h.b16 %v5982
    %v6311 = vunpack.c.l.b16 %v5983
    %v6312 = vunpack.c.h.b16 %v5983
    %v6313 = vunpack.c.l.b16 %v5984
    %v6314 = vunpack.c.h.b16 %v5984
    %v6315 = vunpack.c.l.b16 %v5985
    %v6316 = vunpack.c.h.b16 %v5985
    %v6317 = vunpack.c.l.b16 %v5986
    %v6318 = vunpack.c.h.b16 %v5986
    %v6319 = vunpack.c.l.b16 %v5987
    %v6320 = vunpack.c.h.b16 %v5987
    %v6321 = vunpack.c.l.b16 %v5988
    %v6322 = vunpack.c.h.b16 %v5988
    %v6323 = vunpack.c.l.b16 %v5989
    %v6324 = vunpack.c.h.b16 %v5989
    %v6325 = vunpack.c.l.b16 %v5990
    %v6326 = vunpack.c.h.b16 %v5990
    %v6327 = vunpack.c.l.b16 %v5991
    %v6328 = vunpack.c.h.b16 %v5991
    %v6329 = vunpack.c.l.b16 %v5992
    %v6330 = vunpack.c.h.b16 %v5992
    %v6331 = vunpack.c.l.b16 %v5993
    %v6332 = vunpack.c.h.b16 %v5993
    %v6333 = vunpack.c.l.b16 %v5994
    %v6334 = vunpack.c.h.b16 %v5994
    %v6335 = vunpack.c.l.b16 %v5995
    %v6336 = vunpack.c.h.b16 %v5995
    %v6337 = vunpack.c.l.b16 %v5996
    %v6338 = vunpack.c.h.b16 %v5996
    %v6339 = vunpack.c.l.b16 %v5997
    %v6340 = vunpack.c.h.b16 %v5997
    %v6341 = vunpack.c.l.b16 %v5998
    %v6342 = vunpack.c.h.b16 %v5998
    %v6343 = vunpack.c.l.b16 %v5999
    %v6344 = vunpack.c.h.b16 %v5999
    %v6345 = vunpack.c.l.b16 %v6000
    %v6346 = vunpack.c.h.b16 %v6000
    %v6347 = vunpack.c.l.b16 %v6001
    %v6348 = vunpack.c.h.b16 %v6001
    %v6349 = vunpack.c.l.b16 %v6002
    %v6350 = vunpack.c.h.b16 %v6002
    %v6351 = vunpack.c.l.b16 %v6003
    %v6352 = vunpack.c.h.b16 %v6003
    %v6353 = vunpack.c.l.b16 %v6004
    %v6354 = vunpack.c.h.b16 %v6004
    %v6355 = vunpack.c.l.b16 %v6005
    %v6356 = vunpack.c.h.b16 %v6005
    %v6357 = vunpack.c.l.b16 %v6006
    %v6358 = vunpack.c.h.b16 %v6006
    %v6359 = vunpack.c.l.b16 %v6007
    %v6360 = vunpack.c.h.b16 %v6007
    %v6361 = vunpack.c.l.b16 %v6008
    %v6362 = vunpack.c.h.b16 %v6008
    %v6363 = vunpack.c.l.b16 %v6009
    %v6364 = vunpack.c.h.b16 %v6009
    %v6365 = vunpack.c.l.b16 %v6010
    %v6366 = vunpack.c.h.b16 %v6010
    %v6367 = vunpack.c.l.b16 %v6011
    %v6368 = vunpack.c.h.b16 %v6011
    %v6369 = vunpack.c.l.b16 %v6012
    %v6370 = vunpack.c.h.b16 %v6012
    %v6371 = vunpack.c.l.b16 %v6013
    %v6372 = vunpack.c.h.b16 %v6013
    %v6373 = vunpack.c.l.b16 %v6014
    %v6374 = vunpack.c.h.b16 %v6014
    %v6375 = vunpack.c.l.b16 %v6015
    %v6376 = vunpack.c.h.b16 %v6015
    %v6377 = vunpack.c.l.b16 %v6016
    %v6378 = vunpack.c.h.b16 %v6016
    %v6379 = vunpack.c.l.b16 %v6017
    %v6380 = vunpack.c.h.b16 %v6017
    %v6381 = vunpack.c.l.b16 %v6018
    %v6382 = vunpack.c.h.b16 %v6018
    %v6383 = vunpack.c.l.b16 %v6019
    %v6384 = vunpack.c.h.b16 %v6019
    %v6385 = vunpack.c.l.b16 %v6020
    %v6386 = vunpack.c.h.b16 %v6020
    %v6387 = vunpack.c.l.b16 %v6021
    %v6388 = vunpack.c.h.b16 %v6021
    %v6389 = vunpack.c.l.b16 %v6022
    %v6390 = vunpack.c.h.b16 %v6022
    %v6391 = vunpack.c.l.b16 %v6023
    %v6392 = vunpack.c.h.b16 %v6023
    %v6393 = vunpack.c.l.b16 %v6024
    %v6394 = vunpack.c.h.b16 %v6024
    %v6395 = vunpack.c.l.b16 %v6025
    %v6396 = vunpack.c.h.b16 %v6025
    %v6397 = vunpack.c.l.b16 %v6026
    %v6398 = vunpack.c.h.b16 %v6026
    %v6399 = vunpack.c.l.b16 %v6027
    %v6400 = vunpack.c.h.b16 %v6027
    %v6401 = vunpack.c.l.b16 %v6028
    %v6402 = vunpack.c.h.b16 %v6028
    %v6403 = vunpack.c.l.b16 %v6029
    %v6404 = vunpack.c.h.b16 %v6029
    %v6405 = vunpack.c.l.b16 %v6030
    %v6406 = vunpack.c.h.b16 %v6030
    %v6407 = vunpack.c.l.b16 %v6031
    %v6408 = vunpack.c.h.b16 %v6031
    %v6409 = vunpack.c.l.b16 %v6032
    %v6410 = vunpack.c.h.b16 %v6032
    %v6411 = vunpack.c.l.b16 %v6033
    %v6412 = vunpack.c.h.b16 %v6033
    %v6413 = vunpack.c.l.b16 %v6034
    %v6414 = vunpack.c.h.b16 %v6034
    %v6415 = vunpack.c.l.b16 %v6035
    %v6416 = vunpack.c.h.b16 %v6035
    %v6417 = vunpack.c.l.b16 %v6036
    %v6418 = vunpack.c.h.b16 %v6036
    %v6419 = vunpack.c.l.b16 %v6037
    %v6420 = vunpack.c.h.b16 %v6037
    %v6421 = vunpack.c.l.b16 %v6038
    %v6422 = vunpack.c.h.b16 %v6038
    %v6423 = vunpack.c.l.b16 %v6039
    %v6424 = vunpack.c.h.b16 %v6039
    %v6425 = vunpack.c.l.b16 %v6040
    %v6426 = vunpack.c.h.b16 %v6040
    %v6427 = vunpack.c.l.b16 %v6041
    %v6428 = vunpack.c.h.b16 %v6041
    %v6429 = vunpack.c.l.b16 %v6042
    %v6430 = vunpack.c.h.b16 %v6042
    %v6431 = vunpack.c.l.b16 %v6043
    %v6432 = vunpack.c.h.b16 %v6043
    %v6433 = vunpack.c.l.b16 %v6044
    %v6434 = vunpack.c.h.b16 %v6044
    %v6435 = vunpack.c.l.b16 %v6045
    %v6436 = vunpack.c.h.b16 %v6045
    %v6437 = vunpack.c.l.b16 %v6046
    %v6438 = vunpack.c.h.b16 %v6046
    %v6439 = vunpack.c.l.b16 %v6047
    %v6440 = vunpack.c.h.b16 %v6047
    %v6441 = vunpack.c.l.b16 %v6048
    %v6442 = vunpack.c.h.b16 %v6048
    %v6443 = vunpack.c.l.b16 %v6049
    %v6444 = vunpack.c.h.b16 %v6049
    %v6445 = vunpack.c.l.b16 %v6050
    %v6446 = vunpack.c.h.b16 %v6050
    %v6447 = vunpack.c.l.b16 %v6051
    %v6448 = vunpack.c.h.b16 %v6051
    %v6449 = vunpack.c.l.b16 %v6052
    %v6450 = vunpack.c.h.b16 %v6052
    %v6451 = vpack.c.b16 %v6203, %v6195
    %v6452 = vpack.c.b16 %v6204, %v6196
    %v6453 = vpack.c.b16 %v6205, %v6197
    %v6454 = vpack.c.b16 %v6206, %v6198
    %v6455 = vpack.c.b16 %v6207, %v6199
    %v6456 = vpack.c.b16 %v6208, %v6200
    %v6457 = vpack.c.b16 %v6209, %v6201
    %v6458 = vpack.c.b16 %v6210, %v6202
    %v6459 = vpack.c.b16 %v6219, %v6211
    %v6460 = vpack.c.b16 %v6220, %v6212
    %v6461 = vpack.c.b16 %v6221, %v6213
    %v6462 = vpack.c.b16 %v6222, %v6214
    %v6463 = vpack.c.b16 %v6223, %v6215
    %v6464 = vpack.c.b16 %v6224, %v6216
    %v6465 = vpack.c.b16 %v6225, %v6217
    %v6466 = vpack.c.b16 %v6226, %v6218
    %v6467 = vpack.c.b16 %v6235, %v6227
    %v6468 = vpack.c.b16 %v6236, %v6228
    %v6469 = vpack.c.b16 %v6237, %v6229
    %v6470 = vpack.c.b16 %v6238, %v6230
    %v6471 = vpack.c.b16 %v6239, %v6231
    %v6472 = vpack.c.b16 %v6240, %v6232
    %v6473 = vpack.c.b16 %v6241, %v6233
    %v6474 = vpack.c.b16 %v6242, %v6234
    %v6475 = vpack.c.b16 %v6251, %v6243
    %v6476 = vpack.c.b16 %v6252, %v6244
    %v6477 = vpack.c.b16 %v6253, %v6245
    %v6478 = vpack.c.b16 %v6254, %v6246
    %v6479 = vpack.c.b16 %v6255, %v6247
    %v6480 = vpack.c.b16 %v6256, %v6248
    %v6481 = vpack.c.b16 %v6257, %v6249
    %v6482 = vpack.c.b16 %v6258, %v6250
    %v6483 = vpack.c.b16 %v6267, %v6259
    %v6484 = vpack.c.b16 %v6268, %v6260
    %v6485 = vpack.c.b16 %v6269, %v6261
    %v6486 = vpack.c.b16 %v6270, %v6262
    %v6487 = vpack.c.b16 %v6271, %v6263
    %v6488 = vpack.c.b16 %v6272, %v6264
    %v6489 = vpack.c.b16 %v6273, %v6265
    %v6490 = vpack.c.b16 %v6274, %v6266
    %v6491 = vpack.c.b16 %v6283, %v6275
    %v6492 = vpack.c.b16 %v6284, %v6276
    %v6493 = vpack.c.b16 %v6285, %v6277
    %v6494 = vpack.c.b16 %v6286, %v6278
    %v6495 = vpack.c.b16 %v6287, %v6279
    %v6496 = vpack.c.b16 %v6288, %v6280
    %v6497 = vpack.c.b16 %v6289, %v6281
    %v6498 = vpack.c.b16 %v6290, %v6282
    %v6499 = vpack.c.b16 %v6299, %v6291
    %v6500 = vpack.c.b16 %v6300, %v6292
    %v6501 = vpack.c.b16 %v6301, %v6293
    %v6502 = vpack.c.b16 %v6302, %v6294
    %v6503 = vpack.c.b16 %v6303, %v6295
    %v6504 = vpack.c.b16 %v6304, %v6296
    %v6505 = vpack.c.b16 %v6305, %v6297
    %v6506 = vpack.c.b16 %v6306, %v6298
    %v6507 = vpack.c.b16 %v6315, %v6307
    %v6508 = vpack.c.b16 %v6316, %v6308
    %v6509 = vpack.c.b16 %v6317, %v6309
    %v6510 = vpack.c.b16 %v6318, %v6310
    %v6511 = vpack.c.b16 %v6319, %v6311
    %v6512 = vpack.c.b16 %v6320, %v6312
    %v6513 = vpack.c.b16 %v6321, %v6313
    %v6514 = vpack.c.b16 %v6322, %v6314
    %v6515 = vpack.c.b16 %v6331, %v6323
    %v6516 = vpack.c.b16 %v6332, %v6324
    %v6517 = vpack.c.b16 %v6333, %v6325
    %v6518 = vpack.c.b16 %v6334, %v6326
    %v6519 = vpack.c.b16 %v6335, %v6327
    %v6520 = vpack.c.b16 %v6336, %v6328
    %v6521 = vpack.c.b16 %v6337, %v6329
    %v6522 = vpack.c.b16 %v6338, %v6330
    %v6523 = vpack.c.b16 %v6347, %v6339
    %v6524 = vpack.c.b16 %v6348, %v6340
    %v6525 = vpack.c.b16 %v6349, %v6341
    %v6526 = vpack.c.b16 %v6350, %v6342
    %v6527 = vpack.c.b16 %v6351, %v6343
    %v6528 = vpack.c.b16 %v6352, %v6344
    %v6529 = vpack.c.b16 %v6353, %v6345
    %v6530 = vpack.c.b16 %v6354, %v6346
    %v6531 = vpack.c.b16 %v6363, %v6355
    %v6532 = vpack.c.b16 %v6364, %v6356
    %v6533 = vpack.c.b16 %v6365, %v6357
    %v6534 = vpack.c.b16 %v6366, %v6358
    %v6535 = vpack.c.b16 %v6367, %v6359
    %v6536 = vpack.c.b16 %v6368, %v6360
    %v6537 = vpack.c.b16 %v6369, %v6361
    %v6538 = vpack.c.b16 %v6370, %v6362
    %v6539 = vpack.c.b16 %v6379, %v6371
    %v6540 = vpack.c.b16 %v6380, %v6372
    %v6541 = vpack.c.b16 %v6381, %v6373
    %v6542 = vpack.c.b16 %v6382, %v6374
    %v6543 = vpack.c.b16 %v6383, %v6375
    %v6544 = vpack.c.b16 %v6384, %v6376
    %v6545 = vpack.c.b16 %v6385, %v6377
    %v6546 = vpack.c.b16 %v6386, %v6378
    %v6547 = vpack.c.b16 %v6395, %v6387
    %v6548 = vpack.c.b16 %v6396, %v6388
    %v6549 = vpack.c.b16 %v6397, %v6389
    %v6550 = vpack.c.b16 %v6398, %v6390
    %v6551 = vpack.c.b16 %v6399, %v6391
    %v6552 = vpack.c.b16 %v6400, %v6392
    %v6553 = vpack.c.b16 %v6401, %v6393
    %v6554 = vpack.c.b16 %v6402, %v6394
    %v6555 = vpack.c.b16 %v6411, %v6403
    %v6556 = vpack.c.b16 %v6412, %v6404
    %v6557 = vpack.c.b16 %v6413, %v6405
    %v6558 = vpack.c.b16 %v6414, %v6406
    %v6559 = vpack.c.b16 %v6415, %v6407
    %v6560 = vpack.c.b16 %v6416, %v6408
    %v6561 = vpack.c.b16 %v6417, %v6409
    %v6562 = vpack.c.b16 %v6418, %v6410
    %v6563 = vpack.c.b16 %v6427, %v6419
    %v6564 = vpack.c.b16 %v6428, %v6420
    %v6565 = vpack.c.b16 %v6429, %v6421
    %v6566 = vpack.c.b16 %v6430, %v6422
    %v6567 = vpack.c.b16 %v6431, %v6423
    %v6568 = vpack.c.b16 %v6432, %v6424
    %v6569 = vpack.c.b16 %v6433, %v6425
    %v6570 = vpack.c.b16 %v6434, %v6426
    %v6571 = vpack.c.b16 %v6443, %v6435
    %v6572 = vpack.c.b16 %v6444, %v6436
    %v6573 = vpack.c.b16 %v6445, %v6437
    %v6574 = vpack.c.b16 %v6446, %v6438
    %v6575 = vpack.c.b16 %v6447, %v6439
    %v6576 = vpack.c.b16 %v6448, %v6440
    %v6577 = vpack.c.b16 %v6449, %v6441
    %v6578 = vpack.c.b16 %v6450, %v6442
    %6707 = vmatprep.subr.bf16.mxu0 %v6508
    %6708 = vmatpush1.bf16.msra.mxu0 %v6507
    %6709 = vmatprep.subr.bf16.mxu0 %v6500
    %6710 = vmatpush1.bf16.msra.mxu0 %v6499
    %6711 = vmatprep.subr.bf16.mxu0 %v6492
    %6712 = vmatpush1.bf16.msra.mxu0 %v6491
    %6713 = vmatprep.subr.bf16.mxu0 %v6484
    %6714 = vmatpush1.bf16.msra.mxu0 %v6483
    %6715 = vmatprep.subr.bf16.mxu0 %v6476
    %6716 = vmatpush1.bf16.msra.mxu0 %v6475
    %6717 = vmatprep.subr.bf16.mxu0 %v6468
    %6718 = vmatpush1.bf16.msra.mxu0 %v6467
    %6719 = vmatprep.subr.bf16.mxu0 %v6460
    %6720 = vmatpush1.bf16.msra.mxu0 %v6459
    %6721 = vmatprep.subr.bf16.mxu0 %v6452
    %6722 = vmatpush1.bf16.msra.mxu0 %v6451
    %6723 = vmatprep.subr.bf16.mxu0 %v6572
    %6724 = vmatpush2.bf16.msra.mxu0 %v6571
    %6725 = vmatprep.subr.bf16.mxu0 %v6564
    %6726 = vmatpush2.bf16.msra.mxu0 %v6563
    %6727 = vmatprep.subr.bf16.mxu0 %v6556
    %6728 = vmatpush2.bf16.msra.mxu0 %v6555
    %6729 = vmatprep.subr.bf16.mxu0 %v6548
    %6730 = vmatpush2.bf16.msra.mxu0 %v6547
    %6731 = vmatprep.subr.bf16.mxu0 %v6540
    %6732 = vmatpush2.bf16.msra.mxu0 %v6539
    %6733 = vmatprep.subr.bf16.mxu0 %v6532
    %6734 = vmatpush2.bf16.msra.mxu0 %v6531
    %6735 = vmatprep.subr.bf16.mxu0 %v6524
    %6736 = vmatpush2.bf16.msra.mxu0 %v6523
    %6737 = vmatprep.subr.bf16.mxu0 %v6516
    %6738 = vmatpush2.bf16.msra.mxu0 %v6515
    %6739 = vmatprep.mubr.bf16.mxu0 %v6064
    %6740 = vmatmul.mubr.bf16.gmra.mxu0 %v6063
    %v6741 = vpop.f32.mrf.mxu0
    %v6742 = vadd.f32 0.0, %v6741
    %v6743 = vpop.f32.mrf.mxu0
    %v6744 = vpop.f32.mrf.mxu0
    %v6745 = vpop.f32.mrf.mxu0
    %6746 = vdwg.mxu0
    %6747 = vmatprep.subr.bf16.mxu0 %v6510
    %6748 = vmatpush1.bf16.msra.mxu0 %v6509
    %6749 = vmatprep.subr.bf16.mxu0 %v6502
    %6750 = vmatpush1.bf16.msra.mxu0 %v6501
    %6751 = vmatprep.subr.bf16.mxu0 %v6494
    %6752 = vmatpush1.bf16.msra.mxu0 %v6493
    %6753 = vmatprep.subr.bf16.mxu0 %v6486
    %6754 = vmatpush1.bf16.msra.mxu0 %v6485
    %6755 = vmatprep.subr.bf16.mxu0 %v6478
    %6756 = vmatpush1.bf16.msra.mxu0 %v6477
    %6757 = vmatprep.subr.bf16.mxu0 %v6470
    %6758 = vmatpush1.bf16.msra.mxu0 %v6469
    %6759 = vmatprep.subr.bf16.mxu0 %v6462
    %6760 = vmatpush1.bf16.msra.mxu0 %v6461
    %6761 = vmatprep.subr.bf16.mxu0 %v6454
    %6762 = vmatpush1.bf16.msra.mxu0 %v6453
    %6763 = vmatprep.subr.bf16.mxu0 %v6574
    %6764 = vmatpush2.bf16.msra.mxu0 %v6573
    %6765 = vmatprep.subr.bf16.mxu0 %v6566
    %6766 = vmatpush2.bf16.msra.mxu0 %v6565
    %6767 = vmatprep.subr.bf16.mxu0 %v6558
    %6768 = vmatpush2.bf16.msra.mxu0 %v6557
    %6769 = vmatprep.subr.bf16.mxu0 %v6550
    %6770 = vmatpush2.bf16.msra.mxu0 %v6549
    %6771 = vmatprep.subr.bf16.mxu0 %v6542
    %6772 = vmatpush2.bf16.msra.mxu0 %v6541
    %6773 = vmatprep.subr.bf16.mxu0 %v6534
    %6774 = vmatpush2.bf16.msra.mxu0 %v6533
    %6775 = vmatprep.subr.bf16.mxu0 %v6526
    %6776 = vmatpush2.bf16.msra.mxu0 %v6525
    %6777 = vmatprep.subr.bf16.mxu0 %v6518
    %6778 = vmatpush2.bf16.msra.mxu0 %v6517
    %6779 = vmatprep.mubr.bf16.mxu0 %v6064
    %6780 = vmatmul.mubr.bf16.gmra.mxu0 %v6063
    %v6781 = vpop.f32.mrf.mxu0
    %v6782 = vadd.f32 0.0, %v6781
    %v6783 = vpop.f32.mrf.mxu0
    %v6784 = vadd.f32 0.0, %v6783
    %v6785 = vpop.f32.mrf.mxu0
    %v6786 = vpop.f32.mrf.mxu0
    %6787 = vdwg.mxu0
    %6788 = vmatprep.subr.bf16.mxu0 %v6512
    %6789 = vmatpush1.bf16.msra.mxu0 %v6511
    %6790 = vmatprep.subr.bf16.mxu0 %v6504
    %6791 = vmatpush1.bf16.msra.mxu0 %v6503
    %6792 = vmatprep.subr.bf16.mxu0 %v6496
    %6793 = vmatpush1.bf16.msra.mxu0 %v6495
    %6794 = vmatprep.subr.bf16.mxu0 %v6488
    %6795 = vmatpush1.bf16.msra.mxu0 %v6487
    %6796 = vmatprep.subr.bf16.mxu0 %v6480
    %6797 = vmatpush1.bf16.msra.mxu0 %v6479
    %6798 = vmatprep.subr.bf16.mxu0 %v6472
    %6799 = vmatpush1.bf16.msra.mxu0 %v6471
    %6800 = vmatprep.subr.bf16.mxu0 %v6464
    %6801 = vmatpush1.bf16.msra.mxu0 %v6463
    %6802 = vmatprep.subr.bf16.mxu0 %v6456
    %6803 = vmatpush1.bf16.msra.mxu0 %v6455
    %6804 = vmatprep.subr.bf16.mxu0 %v6576
    %6805 = vmatpush2.bf16.msra.mxu0 %v6575
    %6806 = vmatprep.subr.bf16.mxu0 %v6568
    %6807 = vmatpush2.bf16.msra.mxu0 %v6567
    %6808 = vmatprep.subr.bf16.mxu0 %v6560
    %6809 = vmatpush2.bf16.msra.mxu0 %v6559
    %6810 = vmatprep.subr.bf16.mxu0 %v6552
    %6811 = vmatpush2.bf16.msra.mxu0 %v6551
    %6812 = vmatprep.subr.bf16.mxu0 %v6544
    %6813 = vmatpush2.bf16.msra.mxu0 %v6543
    %6814 = vmatprep.subr.bf16.mxu0 %v6536
    %6815 = vmatpush2.bf16.msra.mxu0 %v6535
    %6816 = vmatprep.subr.bf16.mxu0 %v6528
    %6817 = vmatpush2.bf16.msra.mxu0 %v6527
    %6818 = vmatprep.subr.bf16.mxu0 %v6520
    %6819 = vmatpush2.bf16.msra.mxu0 %v6519
    %6820 = vmatprep.mubr.bf16.mxu0 %v6064
    %6821 = vmatmul.mubr.bf16.gmra.mxu0 %v6063
    %v6822 = vpop.f32.mrf.mxu0
    %v6823 = vadd.f32 0.0, %v6822
    %v6824 = vpop.f32.mrf.mxu0
    %v6825 = vpop.f32.mrf.mxu0
    %v6826 = vpop.f32.mrf.mxu0
    %6827 = vdwg.mxu0
    %6828 = vmatprep.subr.bf16.mxu0 %v6514
    %6829 = vmatpush1.bf16.msra.mxu0 %v6513
    %6830 = vmatprep.subr.bf16.mxu0 %v6506
    %6831 = vmatpush1.bf16.msra.mxu0 %v6505
    %6832 = vmatprep.subr.bf16.mxu0 %v6498
    %6833 = vmatpush1.bf16.msra.mxu0 %v6497
    %6834 = vmatprep.subr.bf16.mxu0 %v6490
    %6835 = vmatpush1.bf16.msra.mxu0 %v6489
    %6836 = vmatprep.subr.bf16.mxu0 %v6482
    %6837 = vmatpush1.bf16.msra.mxu0 %v6481
    %6838 = vmatprep.subr.bf16.mxu0 %v6474
    %6839 = vmatpush1.bf16.msra.mxu0 %v6473
    %6840 = vmatprep.subr.bf16.mxu0 %v6466
    %6841 = vmatpush1.bf16.msra.mxu0 %v6465
    %6842 = vmatprep.subr.bf16.mxu0 %v6458
    %6843 = vmatpush1.bf16.msra.mxu0 %v6457
    %6844 = vmatprep.subr.bf16.mxu0 %v6578
    %6845 = vmatpush2.bf16.msra.mxu0 %v6577
    %6846 = vmatprep.subr.bf16.mxu0 %v6570
    %6847 = vmatpush2.bf16.msra.mxu0 %v6569
    %6848 = vmatprep.subr.bf16.mxu0 %v6562
    %6849 = vmatpush2.bf16.msra.mxu0 %v6561
    %6850 = vmatprep.subr.bf16.mxu0 %v6554
    %6851 = vmatpush2.bf16.msra.mxu0 %v6553
    %6852 = vmatprep.subr.bf16.mxu0 %v6546
    %6853 = vmatpush2.bf16.msra.mxu0 %v6545
    %6854 = vmatprep.subr.bf16.mxu0 %v6538
    %6855 = vmatpush2.bf16.msra.mxu0 %v6537
    %6856 = vmatprep.subr.bf16.mxu0 %v6530
    %6857 = vmatpush2.bf16.msra.mxu0 %v6529
    %6858 = vmatprep.subr.bf16.mxu0 %v6522
    %6859 = vmatpush2.bf16.msra.mxu0 %v6521
    %6860 = vmatprep.mubr.bf16.mxu0 %v6064
    %6861 = vmatmul.mubr.bf16.gmra.mxu0 %v6063
    %v6862 = vpop.f32.mrf.mxu0
    %v6863 = vadd.f32 0.0, %v6862
    %v6864 = vpop.f32.mrf.mxu0
    %v6865 = vadd.f32 0.0, %v6864
    %v6866 = vpop.f32.mrf.mxu0
    %v6867 = vpop.f32.mrf.mxu0
    %6868 = vdwg.mxu0
    %v6869 = vadd.f32 %v5915, %v6742
    %v6870 = vadd.f32 %v5916, %v6782
    %v6871 = vadd.f32 %v5917, %v6784
    %v6872 = vadd.f32 %v5918, %v6823
    %v6873 = vadd.f32 %v5919, %v6863
    %v6874 = vadd.f32 %v5920, %v6865
    %v6875 = vxor.u32 %v6869, 2147483648
    %v6876 = vmul.f32 %v6875, 1.442695
    %v6877 = vpow.pop %v6876
    %v6878 = vadd.f32 %v6877, 1.0
    %v6879 = vrcp.pop %v6878
    %v6880 = vmul.f32 1.0, %v6879
    %v6881 = vtanh.pop %v6870
    %v6882 = vxor.u32 %v6871, 2147483648
    %v6883 = vmul.f32 %v6882, 1.442695
    %v6884 = vpow.pop %v6883
    %v6885 = vadd.f32 %v6884, 1.0
    %v6886 = vrcp.pop %v6885
    %v6887 = vmul.f32 1.0, %v6886
    %v6888 = vmul.f32 %v6880, %v6881
    %v6889 = vtanh.pop %v6888
    %v6890 = vmul.f32 %v6887, %v6889
    %v6891 = vxor.u32 %v6872, 2147483648
    %v6892 = vmul.f32 %v6891, 1.442695
    %v6893 = vpow.pop %v6892
    %v6894 = vadd.f32 %v6893, 1.0
    %v6895 = vrcp.pop %v6894
    %v6896 = vmul.f32 1.0, %v6895
    %v6897 = vtanh.pop %v6873
    %v6898 = vxor.u32 %v6874, 2147483648
    %v6899 = vmul.f32 %v6898, 1.442695
    %v6900 = vpow.pop %v6899
    %v6901 = vadd.f32 %v6900, 1.0
    %v6902 = vrcp.pop %v6901
    %v6903 = vmul.f32 1.0, %v6902
    %v6904 = vmul.f32 %v6896, %v6897
    %v6905 = vtanh.pop %v6904
    %v6906 = vmul.f32 %v6903, %v6905
    %v6907 = vpack.c.bf16 %v6890, %v6890
    %v6908 = vld [vmem:[#allocation35] sm:$0xf]
    %v6909 = vld [vmem:[#allocation35 + $0x4] sm:$0xf]
    %v6910 = vld [vmem:[#allocation35 + $0x8] sm:$0xf]
    %v6911 = vld [vmem:[#allocation35 + $0xc] sm:$0xf]
    %v6912 = vld [vmem:[#allocation35 + $0x10] sm:$0xf]
    %v6913 = vld [vmem:[#allocation35 + $0x14] sm:$0xf]
    %v6914 = vld [vmem:[#allocation35 + $0x18] sm:$0xf]
    %v6915 = vld [vmem:[#allocation35 + $0x1c] sm:$0xf]
    %v6916 = vld [vmem:[#allocation35 + $0x20] sm:$0xf]
    %v6917 = vld [vmem:[#allocation35 + $0x24] sm:$0xf]
    %v6918 = vld [vmem:[#allocation35 + $0x28] sm:$0xf]
    %v6919 = vld [vmem:[#allocation35 + $0x2c] sm:$0xf]
    %v6920 = vld [vmem:[#allocation35 + $0x30] sm:$0xf]
    %v6921 = vld [vmem:[#allocation35 + $0x34] sm:$0xf]
    %v6922 = vld [vmem:[#allocation35 + $0x38] sm:$0xf]
    %v6923 = vld [vmem:[#allocation35 + $0x3c] sm:$0xf]
    %v6924 = vpack.c.bf16 %v6906, %v6906
    %v6925 = vld [vmem:[#allocation35 + $0x40] sm:$0xf]
    %v6926 = vld [vmem:[#allocation35 + $0x44] sm:$0xf]
    %v6927 = vld [vmem:[#allocation35 + $0x48] sm:$0xf]
    %v6928 = vld [vmem:[#allocation35 + $0x4c] sm:$0xf]
    %v6929 = vld [vmem:[#allocation35 + $0x50] sm:$0xf]
    %v6930 = vld [vmem:[#allocation35 + $0x54] sm:$0xf]
    %v6931 = vld [vmem:[#allocation35 + $0x58] sm:$0xf]
    %v6932 = vld [vmem:[#allocation35 + $0x5c] sm:$0xf]
    %v6933 = vld [vmem:[#allocation35 + $0x60] sm:$0xf]
    %v6934 = vld [vmem:[#allocation35 + $0x64] sm:$0xf]
    %v6935 = vld [vmem:[#allocation35 + $0x68] sm:$0xf]
    %v6936 = vld [vmem:[#allocation35 + $0x6c] sm:$0xf]
    %v6937 = vld [vmem:[#allocation35 + $0x70] sm:$0xf]
    %v6938 = vld [vmem:[#allocation35 + $0x74] sm:$0xf]
    %v6939 = vld [vmem:[#allocation35 + $0x78] sm:$0xf]
    %v6940 = vld [vmem:[#allocation35 + $0x7c] sm:$0xf]
    %v6957 = vunpack.c.l.b16 %v6925
    %v6958 = vunpack.c.l.b16 %v6926
    %v6959 = vunpack.c.l.b16 %v6927
    %v6960 = vunpack.c.l.b16 %v6928
    %v6961 = vunpack.c.l.b16 %v6929
    %v6962 = vunpack.c.l.b16 %v6930
    %v6963 = vunpack.c.l.b16 %v6931
    %v6964 = vunpack.c.l.b16 %v6932
    %v6965 = vunpack.c.l.b16 %v6933
    %v6966 = vunpack.c.l.b16 %v6934
    %v6967 = vunpack.c.l.b16 %v6935
    %v6968 = vunpack.c.l.b16 %v6936
    %v6969 = vunpack.c.l.b16 %v6937
    %v6970 = vunpack.c.l.b16 %v6938
    %v6971 = vunpack.c.l.b16 %v6939
    %v6972 = vunpack.c.l.b16 %v6940
    %v6973 = vpack.c.b16 %v6958, %v6957
    %v6974 = vpack.c.b16 %v6960, %v6959
    %v6975 = vpack.c.b16 %v6962, %v6961
    %v6976 = vpack.c.b16 %v6964, %v6963
    %v6977 = vpack.c.b16 %v6966, %v6965
    %v6978 = vpack.c.b16 %v6968, %v6967
    %v6979 = vpack.c.b16 %v6970, %v6969
    %v6980 = vpack.c.b16 %v6972, %v6971
    %6989 = vmatprep.subr.bf16.mxu0 0
    %6990 = vmatpush1.bf16.msra.mxu0 %v6980
    %6991 = vmatprep.subr.bf16.mxu0 0
    %6992 = vmatpush1.bf16.msra.mxu0 %v6979
    %6993 = vmatprep.subr.bf16.mxu0 0
    %6994 = vmatpush1.bf16.msra.mxu0 %v6978
    %6995 = vmatprep.subr.bf16.mxu0 0
    %6996 = vmatpush1.bf16.msra.mxu0 %v6977
    %6997 = vmatprep.subr.bf16.mxu0 0
    %6998 = vmatpush1.bf16.msra.mxu0 %v6976
    %6999 = vmatprep.subr.bf16.mxu0 0
    %7000 = vmatpush1.bf16.msra.mxu0 %v6975
    %7001 = vmatprep.subr.bf16.mxu0 0
    %7002 = vmatpush1.bf16.msra.mxu0 %v6974
    %7003 = vmatprep.subr.bf16.mxu0 0
    %7004 = vmatpush1.bf16.msra.mxu0 %v6973
    %7005 = vmatprep.subr.bf16.mxu0 0
    %7006 = vmatpush2.bf16.msra.mxu0 0
    %7007 = vmatprep.subr.bf16.mxu0 0
    %7008 = vmatpush2.bf16.msra.mxu0 0
    %7009 = vmatprep.subr.bf16.mxu0 0
    %7010 = vmatpush2.bf16.msra.mxu0 0
    %7011 = vmatprep.subr.bf16.mxu0 0
    %7012 = vmatpush2.bf16.msra.mxu0 0
    %7013 = vmatprep.subr.bf16.mxu0 0
    %7014 = vmatpush2.bf16.msra.mxu0 0
    %7015 = vmatprep.subr.bf16.mxu0 0
    %7016 = vmatpush2.bf16.msra.mxu0 0
    %7017 = vmatprep.subr.bf16.mxu0 0
    %7018 = vmatpush2.bf16.msra.mxu0 0
    %7019 = vmatprep.subr.bf16.mxu0 0
    %7020 = vmatpush2.bf16.msra.mxu0 0
    %7021 = vmatprep.mubr.bf16.mxu0 0
    %7022 = vmatmul.mubr.bf16.gmra.mxu0 %v6924
    %v7023 = vpop.f32.mrf.mxu0
    %v7024 = vadd.f32 0.0, %v7023
    %v7025 = vpop.f32.mrf.mxu0
    %v7026 = vpop.f32.mrf.mxu0
    %v7027 = vpop.f32.mrf.mxu0
    %7028 = vdwg.mxu0
    %v7045 = vunpack.c.l.b16 %v6908
    %v7046 = vunpack.c.l.b16 %v6909
    %v7047 = vunpack.c.l.b16 %v6910
    %v7048 = vunpack.c.l.b16 %v6911
    %v7049 = vunpack.c.l.b16 %v6912
    %v7050 = vunpack.c.l.b16 %v6913
    %v7051 = vunpack.c.l.b16 %v6914
    %v7052 = vunpack.c.l.b16 %v6915
    %v7053 = vunpack.c.l.b16 %v6916
    %v7054 = vunpack.c.l.b16 %v6917
    %v7055 = vunpack.c.l.b16 %v6918
    %v7056 = vunpack.c.l.b16 %v6919
    %v7057 = vunpack.c.l.b16 %v6920
    %v7058 = vunpack.c.l.b16 %v6921
    %v7059 = vunpack.c.l.b16 %v6922
    %v7060 = vunpack.c.l.b16 %v6923
    %v7061 = vpack.c.b16 %v7046, %v7045
    %v7062 = vpack.c.b16 %v7048, %v7047
    %v7063 = vpack.c.b16 %v7050, %v7049
    %v7064 = vpack.c.b16 %v7052, %v7051
    %v7065 = vpack.c.b16 %v7054, %v7053
    %v7066 = vpack.c.b16 %v7056, %v7055
    %v7067 = vpack.c.b16 %v7058, %v7057
    %v7068 = vpack.c.b16 %v7060, %v7059
    %7077 = vmatprep.subr.bf16.mxu0 0
    %7078 = vmatpush1.bf16.msra.mxu0 %v7068
    %7079 = vmatprep.subr.bf16.mxu0 0
    %7080 = vmatpush1.bf16.msra.mxu0 %v7067
    %7081 = vmatprep.subr.bf16.mxu0 0
    %7082 = vmatpush1.bf16.msra.mxu0 %v7066
    %7083 = vmatprep.subr.bf16.mxu0 0
    %7084 = vmatpush1.bf16.msra.mxu0 %v7065
    %7085 = vmatprep.subr.bf16.mxu0 0
    %7086 = vmatpush1.bf16.msra.mxu0 %v7064
    %7087 = vmatprep.subr.bf16.mxu0 0
    %7088 = vmatpush1.bf16.msra.mxu0 %v7063
    %7089 = vmatprep.subr.bf16.mxu0 0
    %7090 = vmatpush1.bf16.msra.mxu0 %v7062
    %7091 = vmatprep.subr.bf16.mxu0 0
    %7092 = vmatpush1.bf16.msra.mxu0 %v7061
    %7093 = vmatprep.subr.bf16.mxu0 0
    %7094 = vmatpush2.bf16.msra.mxu0 0
    %7095 = vmatprep.subr.bf16.mxu0 0
    %7096 = vmatpush2.bf16.msra.mxu0 0
    %7097 = vmatprep.subr.bf16.mxu0 0
    %7098 = vmatpush2.bf16.msra.mxu0 0
    %7099 = vmatprep.subr.bf16.mxu0 0
    %7100 = vmatpush2.bf16.msra.mxu0 0
    %7101 = vmatprep.subr.bf16.mxu0 0
    %7102 = vmatpush2.bf16.msra.mxu0 0
    %7103 = vmatprep.subr.bf16.mxu0 0
    %7104 = vmatpush2.bf16.msra.mxu0 0
    %7105 = vmatprep.subr.bf16.mxu0 0
    %7106 = vmatpush2.bf16.msra.mxu0 0
    %7107 = vmatprep.subr.bf16.mxu0 0
    %7108 = vmatpush2.bf16.msra.mxu0 0
    %7109 = vmatprep.mubr.bf16.mxu0 0
    %7110 = vmatmul.mubr.bf16.gmra.mxu0 %v6907
    %v7111 = vpop.f32.mrf.mxu0
    %v7112 = vadd.f32 %v7024, %v7111
    %v7113 = vpop.f32.mrf.mxu0
    %v7114 = vpop.f32.mrf.mxu0
    %v7115 = vpop.f32.mrf.mxu0
    %7116 = vdwg.mxu0
    %v7117 = vld [vmem:[#allocation37] sm:$0x1]
    %v7119 = vlaneseq
    %v7120 = vshrl.u32 %v7119, 7
    %v7121 = vsub.s32 0, %v7120
    %v7122 = vrot.slane %v7117, %v7121
    %v7124 = vadd.f32 %v7112, %v7122
    %7125 = vst [vmem:[#allocation38] sm:$0x3] %v7124
    // Predicated region
    $region190: #{bert_cnn_bilstm_forward.1} parent=1 // pred_check
      _
    $region191: #{bert_cnn_bilstm_forward.1} parent=1 // pred_check_branch
      %7127 = sbr.rel (0) target = $region193
    $region192: #{bert_cnn_bilstm_forward.1} parent=1 // pred_region
      %s7129 = ssub.s32 32, 32
      %7130 = vsyncadd [#allocation4], %s7129
      %s7132 = sshll.u32 [#allocation38], 4
      %s7133 = int_to_ptr.vmem [resolvable:$true] %s7132
      %7135 = dma.vmem_to_hbm [thread:$0]  %s7133, 32, %s24, [#allocation4]
    $region193: #{bert_cnn_bilstm_forward.1} parent=1 // pred_fallthru
      _
    // Predicated region
    $region194: #{bert_cnn_bilstm_forward.1} parent=1 // pred_check
      _
    $region195: #{bert_cnn_bilstm_forward.1} parent=1 // pred_check_branch
      %7137 = sbr.rel (0) target = $region197
    $region196: #{bert_cnn_bilstm_forward.1} parent=1 // pred_region
      %7138 = dma.done [#allocation4], 32
    $region197: #{bert_cnn_bilstm_forward.1} parent=1 // pred_fallthru
      _
    %7139 = vsyncpa [#allocation3], 1
    %7140 = vsyncpa [#allocation6], 1
    %7141 = vsyncpa [#allocation9], 1
    %7142 = vsyncpa [#allocation12], 1
    %7143 = vsyncpa [#allocation15], 1
    %7144 = vsyncpa [#allocation18], 1
    %7145 = vsyncpa [#allocation21], 1
    %7146 = vsyncpa [#allocation24], 1
    %7147 = vsyncpa [#allocation27], 1
    %7148 = vsyncpa [#allocation30], 1
    %7149 = vsyncpa [#allocation33], 1
    %7150 = vsyncpa [#allocation36], 1
    %7151 = vsyncpa [#allocation4], 1

</llo_original>
